<compile_context>
chip_gen: v7x
topology: tpu7x:2x2x1
jax: 0.10.0
libtpu: 0.0.40
codegen_flags: <defaults>
</compile_context>

<pallas_src>
import functools

import jax
import jax.numpy as jnp
import numpy as np
from jax import lax
from jax.experimental import pallas as pl
from jax.experimental.pallas import tpu as pltpu

LEAKY_SLOPE = 0.01   # nn.LeakyReLU default
NORM_EPS = 1e-12     # F.normalize default eps


def _round_up(x, m):
    return (x + m - 1) // m * m


def _orthogonalizer_block_kernel(
    x_ref, h0_ref, c0_ref,
    wih0_ref, whh0_ref, bg0_ref,     # LSTM layer 0: [Kp,4H], [H,4H] bf16, bias [1,4H] f32
    wih1_ref, whh1_ref, bg1_ref,     # LSTM layer 1: [H,4H], [H,4H] bf16, bias [1,4H] f32
    wt1x_ref, wt1h_ref, b1_ref,      # Linear(K+H -> H) split into x-part / ctx-part
    w2_ref, b2_ref,                  # Linear(H -> H)
    w3_ref, b3_ref,                  # Linear(H -> Kp); padded output columns are zero
    keys_ref, h_ref, c_ref,
    gx_scr, h2_scr,
    *, t_total,
):
    tb = pl.program_id(0)
    Bp = h_ref.shape[1]
    H = h_ref.shape[2]
    Tb = x_ref.shape[0] // Bp
    f32 = jnp.float32
    bf16 = jnp.bfloat16

    # h_ref / c_ref have constant output block indices -> VMEM resident across
    # the whole time grid; they double as the recurrent carry between blocks.
    @pl.when(tb == 0)
    def _():
        h_ref[...] = h0_ref[...]
        c_ref[...] = c0_ref[...]

    # ---- Prologue (batched, MXU-friendly M = Tb*Bp): non-recurrent half of
    # the LSTM layer-0 gates, x_t @ W_ih0^T + (b_ih + b_hh), for all steps.
    x2d = x_ref[...].astype(bf16)                               # [Tb*Bp, Kp]
    gx_scr[...] = (jnp.dot(x2d, wih0_ref[...], preferred_element_type=f32)
                   + bg0_ref[...])                              # [Tb*Bp, 4H]

    # ---- Serial recurrence: only the recurrent dots live on this chain.
    # Trace-time fully unrolled; big per-step operands come from VMEM scratch
    # so only ~6 small carry tiles stay live between steps.
    h0f = h_ref[0]
    c0f = c_ref[0]
    h1f = h_ref[1]
    c1f = c_ref[1]
    h0b = h0f.astype(bf16)           # bf16 shadows (avoid re-casting per use)
    h1b = h1f.astype(bf16)
    base = tb * Tb

    def gates(pre):
        # Gate columns packed as [i | f | o | g]: one wide sigmoid, one tanh.
        s = jax.nn.sigmoid(pre[:, :3 * H])
        g = jnp.tanh(pre[:, 3 * H:])
        return s[:, :H], s[:, H:2 * H], s[:, 2 * H:3 * H], g

    for t in range(Tb):
        row = t * Bp

        # LSTM layer 0: precomputed x contribution + recurrent contribution.
        g0 = (gx_scr[pl.ds(row, Bp), :]
              + jnp.dot(h0b, whh0_ref[...], preferred_element_type=f32))
        i0, f0, o0, gg0 = gates(g0)
        c0n = f0 * c0f + i0 * gg0
        h0n = o0 * jnp.tanh(c0n)
        h0bn = h0n.astype(bf16)

        # LSTM layer 1: two accumulating dots (no lane concat on the hot path).
        g1 = (bg1_ref[...]
              + jnp.dot(h0bn, wih1_ref[...], preferred_element_type=f32)
              + jnp.dot(h1b, whh1_ref[...], preferred_element_type=f32))
        i1, f1, o1, gg1 = gates(g1)
        c1n = f1 * c1f + i1 * gg1
        h1n = o1 * jnp.tanh(c1n)
        h1bn = h1n.astype(bf16)

        # Stash the LSTM context; the MLP tail runs batched after the loop.
        h2_scr[pl.ds(row, Bp), :] = h1n

        if t_total is None:
            h0f, c0f, h0b = h0n, c0n, h0bn
            h1f, c1f, h1b = h1n, c1n, h1bn
        else:
            # Tail block of a zero-padded sequence: freeze state on pad steps.
            valid = (base + t) < t_total
            h0f = jnp.where(valid, h0n, h0f)
            c0f = jnp.where(valid, c0n, c0f)
            h0b = jnp.where(valid, h0bn, h0b)
            h1f = jnp.where(valid, h1n, h1f)
            c1f = jnp.where(valid, c1n, c1f)
            h1b = jnp.where(valid, h1bn, h1b)

    h_ref[0] = h0f
    h_ref[1] = h1f
    c_ref[0] = c0f
    c_ref[1] = c1f

    # ---- Epilogue (batched, off the recurrence path): key_transformer MLP on
    # concat([x_t, lstm_ctx_t]) as two accumulating dots, then L2-normalize.
    def leaky(v):
        return jnp.maximum(v, LEAKY_SLOPE * v)

    h2 = h2_scr[...].astype(bf16)                               # [Tb*Bp, H]
    t1 = leaky(jnp.dot(x2d, wt1x_ref[...], preferred_element_type=f32)
               + jnp.dot(h2, wt1h_ref[...], preferred_element_type=f32)
               + b1_ref[...])
    t2 = leaky(jnp.dot(t1.astype(bf16), w2_ref[...], preferred_element_type=f32)
               + b2_ref[...])
    out = (jnp.dot(t2.astype(bf16), w3_ref[...], preferred_element_type=f32)
           + b3_ref[...])                                       # [Tb*Bp, Kp]

    # Padded key columns of W3/b3 are exactly zero, so the lane reduction over
    # Kp equals the L2 norm over the true K columns.  F.normalize(p=2, dim=1).
    ss = jnp.sum(out * out, axis=1, keepdims=True)
    keys_ref[...] = out * lax.rsqrt(jnp.maximum(ss, NORM_EPS * NORM_EPS))


@functools.partial(jax.jit, static_argnames=("block_t",))
def stateful_key_orthogonalizer_sequence(keys_seq, hidden_state, cell_state, packed,
                                         block_t=8):
    """Runs T recurrent forward steps of the module in one Pallas kernel.

    keys_seq:     [T, B, K]   one candidate key per step
    hidden_state: [L, B, H]   LSTM hidden state (L = 2)
    cell_state:   [L, B, H]   LSTM cell state
    Returns (transformed_keys [T, B, K], new_hidden [L, B, H], new_cell [L, B, H]).
    """
    T, B, K = keys_seq.shape
    L, _, H = hidden_state.shape
    Kp = packed["W3"].shape[1]               # key dim padded to a multiple of 128
    assert H % 128 == 0, "hidden_dim must be a multiple of the 128-lane width"
    Bp = _round_up(max(B, 8), 8)             # sublane-dense batch
    Tb = max(1, min(int(block_t), T))        # time steps per grid block
    num_blocks = pl.cdiv(T, Tb)
    Tp = num_blocks * Tb

    x = jnp.pad(keys_seq.astype(jnp.float32),
                ((0, Tp - T), (0, Bp - B), (0, Kp - K)))
    x = x.reshape(Tp * Bp, Kp)               # lane-dense 2-D slab, no in-kernel reshape
    h0 = jnp.pad(hidden_state.astype(jnp.float32), ((0, 0), (0, Bp - B), (0, 0)))
    c0 = jnp.pad(cell_state.astype(jnp.float32), ((0, 0), (0, Bp - B), (0, 0)))

    def const_spec(shape):
        nd = len(shape)
        return pl.BlockSpec(shape, lambda tb, _n=nd: (0,) * _n)   # VMEM resident

    weights = (packed["Wih0"], packed["Whh0"], packed["bg0"],
               packed["Wih1"], packed["Whh1"], packed["bg1"],
               packed["Wt1x"], packed["Wt1h"], packed["b1"],
               packed["W2"], packed["b2"], packed["W3"], packed["b3"])

    in_specs = (
        [pl.BlockSpec((Tb * Bp, Kp), lambda tb: (tb, 0)),   # Tb candidate keys / block
         const_spec((L, Bp, H)),                            # initial hidden
         const_spec((L, Bp, H))]                            # initial cell
        + [const_spec(w.shape) for w in weights]            # weights: resident
    )
    out_specs = (
        pl.BlockSpec((Tb * Bp, Kp), lambda tb: (tb, 0)),    # keys (lane dense)
        const_spec((L, Bp, H)),                             # final hidden (carry)
        const_spec((L, Bp, H)),                             # final cell (carry)
    )
    out_shape = (
        jax.ShapeDtypeStruct((Tp * Bp, Kp), jnp.float32),
        jax.ShapeDtypeStruct((L, Bp, H), jnp.float32),
        jax.ShapeDtypeStruct((L, Bp, H), jnp.float32),
    )

    kernel = functools.partial(_orthogonalizer_block_kernel,
                               t_total=(T if Tp != T else None))

    keys_out, h_out, c_out = pl.pallas_call(
        kernel,
        out_shape=out_shape,
        grid_spec=pltpu.PrefetchScalarGridSpec(
            num_scalar_prefetch=0,
            grid=(num_blocks,),
            in_specs=in_specs,
            out_specs=out_specs,
            scratch_shapes=[
                pltpu.VMEM((Tb * Bp, 4 * H), jnp.float32),   # precomputed x-gates
                pltpu.VMEM((Tb * Bp, H), jnp.float32),       # per-step LSTM context
            ],
        ),
        input_output_aliases={1: 1, 2: 2},   # old state buffers -> new state buffers
        compiler_params=pltpu.CompilerParams(
            dimension_semantics=("arbitrary",),   # time blocks form a recurrence
            vmem_limit_bytes=8 * 1024 * 1024,     # footprint ~2 MiB; don't hog VMEM
        ),
    )(x, h0, c0, *weights)

    keys_out = keys_out.reshape(Tp, Bp, Kp)
    return keys_out[:T, :B, :K], h_out[:, :B], c_out[:, :B]


def stateful_key_orthogonalizer_step(candidate_key, hidden_state, cell_state, packed):
    """Single-step forward(), matching the PyTorch module's forward signature.

    NOTE: a T=1 launch is dominated by pallas_call launch + weight-DMA cost;
    callers iterating over many keys should use the *_sequence entry point.
    """
    keys, h, c = stateful_key_orthogonalizer_sequence(
        candidate_key[None], hidden_state, cell_state, packed)
    return keys[0], h, c


def init_raw_params(key_dim, hidden_dim, seed=0):
    """PyTorch-layout parameters with nn.LSTM / nn.Linear default init scaling."""
    H, K = hidden_dim, key_dim
    ks = iter(jax.random.split(jax.random.PRNGKey(seed), 20))

    def u(shape, fan_in):
        bound = 1.0 / np.sqrt(fan_in)
        return jax.random.uniform(next(ks), shape, jnp.float32, -bound, bound)

    return {
        # LSTM layer 0: W_ih [4H, K], W_hh [4H, H]  (gate rows ordered i,f,g,o)
        "w_ih0": u((4 * H, K), H), "w_hh0": u((4 * H, H), H),
        "b_ih0": u((4 * H,), H), "b_hh0": u((4 * H,), H),
        # LSTM layer 1: W_ih [4H, H], W_hh [4H, H]
        "w_ih1": u((4 * H, H), H), "w_hh1": u((4 * H, H), H),
        "b_ih1": u((4 * H,), H), "b_hh1": u((4 * H,), H),
        # key_transformer: Linear(K+H->H), Linear(H->H), Linear(H->K)
        "w_l1": u((H, H + K), H + K), "b_l1": u((H,), H + K),
        "w_l2": u((H, H), H), "b_l2": u((H,), H),
        "w_l3": u((K, H), H), "b_l3": u((K,), H),
    }


def pack_params(raw, key_dim):
    """Transpose / permute / pad PyTorch-layout weights into the kernel layout.

    * LSTM gate columns reordered i,f,g,o -> i,f,o,g (sigmoid gates contiguous).
    * W_ih0^T key-rows zero-padded K -> Kp (multiple of 128); biases fused.
    * Linear(K+H -> H) split into x-part [Kp, H] and ctx-part [H, H].
    * Linear(H -> K) output columns zero-padded K -> Kp (padded outputs stay 0).
    * Matmul weights stored bf16 (f32 accumulate in-kernel); biases stay f32.
    """
    K = key_dim
    H = raw["w_hh0"].shape[1]
    Kp = _round_up(K, 128)

    def bf(a):
        return a.astype(jnp.bfloat16)

    def perm_rows(w):   # [4H, ...] gate row-groups i,f,g,o -> i,f,o,g
        return jnp.concatenate([w[:H], w[H:2 * H], w[3 * H:], w[2 * H:3 * H]], axis=0)

    wih0_t = jnp.pad(perm_rows(raw["w_ih0"]).T, ((0, Kp - K), (0, 0)))   # [Kp, 4H]
    w1_t = raw["w_l1"].T                                                 # [K+H, H]
    return {
        "Wih0": bf(wih0_t),
        "Whh0": bf(perm_rows(raw["w_hh0"]).T),                                   # [H, 4H]
        "bg0": (perm_rows(raw["b_ih0"]) + perm_rows(raw["b_hh0"]))[None, :],     # [1, 4H]
        "Wih1": bf(perm_rows(raw["w_ih1"]).T),                                   # [H, 4H]
        "Whh1": bf(perm_rows(raw["w_hh1"]).T),                                   # [H, 4H]
        "bg1": (perm_rows(raw["b_ih1"]) + perm_rows(raw["b_hh1"]))[None, :],
        "Wt1x": bf(jnp.pad(w1_t[:K], ((0, Kp - K), (0, 0)))),                    # [Kp, H]
        "Wt1h": bf(w1_t[K:]),                                                    # [H, H]
        "b1": raw["b_l1"][None, :],
        "W2": bf(raw["w_l2"].T), "b2": raw["b_l2"][None, :],                     # [H, H]
        "W3": bf(jnp.pad(raw["w_l3"].T, ((0, 0), (0, Kp - K)))),                 # [H, Kp]
        "b3": jnp.pad(raw["b_l3"], (0, Kp - K))[None, :],                        # [1, Kp]
    }


def reference_sequence(keys_seq, hidden_state, cell_state, raw, key_dim):
    """Pure-JAX f32 reference in PyTorch layout/gate order.

    Weight matrices are rounded through bf16 (same effective weights as the
    kernel) so the comparison isolates activation-precision differences.
    """
    f32 = jnp.float32
    hp = lax.Precision.HIGHEST
    H = hidden_state.shape[-1]

    def wbf(a):
        return a.astype(jnp.bfloat16).astype(f32)

    def leaky(v):
        return jnp.where(v > 0, v, LEAKY_SLOPE * v)

    def lstm_cell(x, h, c, w_ih, w_hh, b_ih, b_hh):
        g = (jnp.dot(x, wbf(w_ih).T, precision=hp)
             + jnp.dot(h, wbf(w_hh).T, precision=hp) + b_ih + b_hh)
        i = jax.nn.sigmoid(g[:, :H]); f = jax.nn.sigmoid(g[:, H:2 * H])
        gg = jnp.tanh(g[:, 2 * H:3 * H]); o = jax.nn.sigmoid(g[:, 3 * H:])
        c_new = f * c + i * gg
        return o * jnp.tanh(c_new), c_new

    h, c = hidden_state, cell_state
    outs = []
    for t in range(keys_seq.shape[0]):
        x = keys_seq[t]
        h1, c1 = lstm_cell(x, h[0], c[0], raw["w_ih0"], raw["w_hh0"],
                           raw["b_ih0"], raw["b_hh0"])
        h2, c2 = lstm_cell(h1, h[1], c[1], raw["w_ih1"], raw["w_hh1"],
                           raw["b_ih1"], raw["b_hh1"])
        h, c = jnp.stack([h1, h2]), jnp.stack([c1, c2])
        comb = jnp.concatenate([x, h2], axis=1)
        t1 = leaky(jnp.dot(comb, wbf(raw["w_l1"]).T, precision=hp) + raw["b_l1"])
        t2 = leaky(jnp.dot(t1, wbf(raw["w_l2"]).T, precision=hp) + raw["b_l2"])
        out = jnp.dot(t2, wbf(raw["w_l3"]).T, precision=hp) + raw["b_l3"]
        nrm = jnp.linalg.norm(out, axis=1, keepdims=True)
        outs.append(out / jnp.maximum(nrm, NORM_EPS))
    return jnp.stack(outs), h, c


if __name__ == "__main__":
    # Small shapes: seq_len=8, batch=8 (one sublane tile), key_dim=32, hidden=128.
    T, B, K, H, L = 8, 8, 32, 128, 2

    raw = init_raw_params(K, H, seed=0)
    packed = pack_params(raw, K)

    rng = jax.random.PRNGKey(0)
    r1, r2, r3 = jax.random.split(rng, 3)
    keys_seq = jax.random.normal(r1, (T, B, K), jnp.float32)
    keys_seq = keys_seq / jnp.linalg.norm(keys_seq, axis=-1, keepdims=True)
    # Non-zero states to exercise the recurrent path (reset_state() gives zeros).
    hidden_state = 0.1 * jax.random.normal(r2, (L, B, H), jnp.float32)
    cell_state = 0.1 * jax.random.normal(r3, (L, B, H), jnp.float32)

    keys_out, h_out, c_out = stateful_key_orthogonalizer_sequence(
        keys_seq, hidden_state, cell_state, packed)
    jax.block_until_ready((keys_out, h_out, c_out))

    ref_keys, ref_h, ref_c = reference_sequence(
        keys_seq, hidden_state, cell_state, raw, K)
    np.testing.assert_allclose(np.asarray(keys_out), np.asarray(ref_keys),
                               rtol=1e-2, atol=1e-2)
    np.testing.assert_allclose(np.asarray(h_out), np.asarray(ref_h),
                               rtol=1e-2, atol=1e-2)
    np.testing.assert_allclose(np.asarray(c_out), np.asarray(ref_c),
                               rtol=1e-2, atol=1e-2)

    # Single-step API (same semantics as the PyTorch module's forward()).
    key1, _, _ = stateful_key_orthogonalizer_step(
        keys_seq[0], hidden_state, cell_state, packed)
    jax.block_until_ready(key1)
    np.testing.assert_allclose(np.asarray(key1), np.asarray(ref_keys[0]),
                               rtol=1e-2, atol=1e-2)

    # Non-divisible T exercises the padded tail block (masked state updates).
    keys5, h5, c5 = stateful_key_orthogonalizer_sequence(
        keys_seq[:5], hidden_state, cell_state, packed, block_t=4)
    jax.block_until_ready((keys5, h5, c5))
    ref_keys5, ref_h5, ref_c5 = reference_sequence(
        keys_seq[:5], hidden_state, cell_state, raw, K)
    np.testing.assert_allclose(np.asarray(keys5), np.asarray(ref_keys5),
                               rtol=1e-2, atol=1e-2)
    np.testing.assert_allclose(np.asarray(h5), np.asarray(ref_h5),
                               rtol=1e-2, atol=1e-2)
    np.testing.assert_allclose(np.asarray(c5), np.asarray(ref_c5),
                               rtol=1e-2, atol=1e-2)

    print("KERNEL_OK")
</pallas_src>

<mosaic_0001>
module attributes {stable_mosaic.version = 11 : i64} {
  func.func @_orthogonalizer_block_kernel(%arg0: i32, %arg1: memref<64x128xf32, #tpu.memory_space<vmem>>, %arg2: memref<2x8x128xf32, #tpu.memory_space<vmem>>, %arg3: memref<2x8x128xf32, #tpu.memory_space<vmem>>, %arg4: memref<128x512xbf16, #tpu.memory_space<vmem>>, %arg5: memref<128x512xbf16, #tpu.memory_space<vmem>>, %arg6: memref<1x512xf32, #tpu.memory_space<vmem>>, %arg7: memref<128x512xbf16, #tpu.memory_space<vmem>>, %arg8: memref<128x512xbf16, #tpu.memory_space<vmem>>, %arg9: memref<1x512xf32, #tpu.memory_space<vmem>>, %arg10: memref<128x128xbf16, #tpu.memory_space<vmem>>, %arg11: memref<128x128xbf16, #tpu.memory_space<vmem>>, %arg12: memref<1x128xf32, #tpu.memory_space<vmem>>, %arg13: memref<128x128xbf16, #tpu.memory_space<vmem>>, %arg14: memref<1x128xf32, #tpu.memory_space<vmem>>, %arg15: memref<128x128xbf16, #tpu.memory_space<vmem>>, %arg16: memref<1x128xf32, #tpu.memory_space<vmem>>, %arg17: memref<64x128xf32, #tpu.memory_space<vmem>>, %arg18: memref<2x8x128xf32, #tpu.memory_space<vmem>>, %arg19: memref<2x8x128xf32, #tpu.memory_space<vmem>>, %arg20: memref<64x512xf32, #tpu.memory_space<vmem>>, %arg21: memref<64x128xf32, #tpu.memory_space<vmem>>) attributes {dimension_semantics = [#tpu.dimension_semantics<arbitrary>], iteration_bounds = array<i64: 1>, scalar_prefetch = 0 : i64, scratch_operands = 2 : i64, tpu.core_type = #tpu.core_type<tc>, window_params = [{transform_indices = @transform_0, window_bounds = array<i64: 64, 128>}, {pipeline_mode = #tpu.pipeline_mode<synchronous>, transform_indices = @transform_1, window_bounds = array<i64: 2, 8, 128>}, {pipeline_mode = #tpu.pipeline_mode<synchronous>, transform_indices = @transform_2, window_bounds = array<i64: 2, 8, 128>}, {pipeline_mode = #tpu.pipeline_mode<synchronous>, transform_indices = @transform_3, window_bounds = array<i64: 128, 512>}, {pipeline_mode = #tpu.pipeline_mode<synchronous>, transform_indices = @transform_4, window_bounds = array<i64: 128, 512>}, {pipeline_mode = #tpu.pipeline_mode<synchronous>, transform_indices = @transform_5, window_bounds = array<i64: 1, 512>}, {pipeline_mode = #tpu.pipeline_mode<synchronous>, transform_indices = @transform_6, window_bounds = array<i64: 128, 512>}, {pipeline_mode = #tpu.pipeline_mode<synchronous>, transform_indices = @transform_7, window_bounds = array<i64: 128, 512>}, {pipeline_mode = #tpu.pipeline_mode<synchronous>, transform_indices = @transform_8, window_bounds = array<i64: 1, 512>}, {pipeline_mode = #tpu.pipeline_mode<synchronous>, transform_indices = @transform_9, window_bounds = array<i64: 128, 128>}, {pipeline_mode = #tpu.pipeline_mode<synchronous>, transform_indices = @transform_10, window_bounds = array<i64: 128, 128>}, {pipeline_mode = #tpu.pipeline_mode<synchronous>, transform_indices = @transform_11, window_bounds = array<i64: 1, 128>}, {pipeline_mode = #tpu.pipeline_mode<synchronous>, transform_indices = @transform_12, window_bounds = array<i64: 128, 128>}, {pipeline_mode = #tpu.pipeline_mode<synchronous>, transform_indices = @transform_13, window_bounds = array<i64: 1, 128>}, {pipeline_mode = #tpu.pipeline_mode<synchronous>, transform_indices = @transform_14, window_bounds = array<i64: 128, 128>}, {pipeline_mode = #tpu.pipeline_mode<synchronous>, transform_indices = @transform_15, window_bounds = array<i64: 1, 128>}, {transform_indices = @transform_16, window_bounds = array<i64: 64, 128>}, {pipeline_mode = #tpu.pipeline_mode<synchronous>, transform_indices = @transform_17, window_bounds = array<i64: 2, 8, 128>}, {pipeline_mode = #tpu.pipeline_mode<synchronous>, transform_indices = @transform_18, window_bounds = array<i64: 2, 8, 128>}]} {
    %c0_i32 = arith.constant 0 : i32
    %0 = arith.cmpi eq, %arg0, %c0_i32 : i32
    %1 = arith.extui %0 : i1 to i32
    %c0_i32_0 = arith.constant 0 : i32
    %2 = arith.cmpi ne, %1, %c0_i32_0 : i32
    scf.if %2 {
      %c0_186 = arith.constant 0 : index
      %c0_187 = arith.constant 0 : index
      %c0_188 = arith.constant 0 : index
      %445 = vector.load %arg2[%c0_186, %c0_187, %c0_188] : memref<2x8x128xf32, #tpu.memory_space<vmem>>, vector<2x8x128xf32>
      %c0_189 = arith.constant 0 : index
      %c0_190 = arith.constant 0 : index
      %c0_191 = arith.constant 0 : index
      %446 = vector.load %arg18[%c0_189, %c0_190, %c0_191] : memref<2x8x128xf32, #tpu.memory_space<vmem>>, vector<2x8x128xf32>
      tpu.vector_store %arg18[%c0_189, %c0_190, %c0_191], %445 {strides = array<i32>} : memref<2x8x128xf32, #tpu.memory_space<vmem>>, vector<2x8x128xf32>,
      %c0_192 = arith.constant 0 : index
      %c0_193 = arith.constant 0 : index
      %c0_194 = arith.constant 0 : index
      %447 = vector.load %arg3[%c0_192, %c0_193, %c0_194] : memref<2x8x128xf32, #tpu.memory_space<vmem>>, vector<2x8x128xf32>
      %c0_195 = arith.constant 0 : index
      %c0_196 = arith.constant 0 : index
      %c0_197 = arith.constant 0 : index
      %448 = vector.load %arg19[%c0_195, %c0_196, %c0_197] : memref<2x8x128xf32, #tpu.memory_space<vmem>>, vector<2x8x128xf32>
      tpu.vector_store %arg19[%c0_195, %c0_196, %c0_197], %447 {strides = array<i32>} : memref<2x8x128xf32, #tpu.memory_space<vmem>>, vector<2x8x128xf32>,
    } else {
    }
    %c0 = arith.constant 0 : index
    %c0_1 = arith.constant 0 : index
    %3 = vector.load %arg1[%c0, %c0_1] : memref<64x128xf32, #tpu.memory_space<vmem>>, vector<64x128xf32>
    %4 = arith.truncf %3 : vector<64x128xf32> to vector<64x128xbf16>
    %c0_2 = arith.constant 0 : index
    %c0_3 = arith.constant 0 : index
    %5 = vector.load %arg4[%c0_2, %c0_3] : memref<128x512xbf16, #tpu.memory_space<vmem>>, vector<128x512xbf16>
    %cst = arith.constant dense<0.000000e+00> : vector<64x512xf32>
    %6 = tpu.matmul %4, %5, %cst {dimension_numbers = #tpu.dot_dimension_numbers<[1], [0], [0], [1], [0, 0, 1, 1], [], []>} : vector<64x128xbf16>, vector<128x512xbf16>, vector<64x512xf32> -> vector<64x512xf32>
    %c0_4 = arith.constant 0 : index
    %c0_5 = arith.constant 0 : index
    %7 = vector.load %arg6[%c0_4, %c0_5] : memref<1x512xf32, #tpu.memory_space<vmem>>, vector<1x512xf32>
    %8 = vector.broadcast %7 : vector<1x512xf32> to vector<64x512xf32>
    %9 = arith.addf %6, %8 : vector<64x512xf32>
    %c0_6 = arith.constant 0 : index
    %c0_7 = arith.constant 0 : index
    %10 = vector.load %arg20[%c0_6, %c0_7] : memref<64x512xf32, #tpu.memory_space<vmem>>, vector<64x512xf32>
    tpu.vector_store %arg20[%c0_6, %c0_7], %9 {strides = array<i32>} : memref<64x512xf32, #tpu.memory_space<vmem>>, vector<64x512xf32>,
    %c0_8 = arith.constant 0 : index
    %c0_9 = arith.constant 0 : index
    %c0_10 = arith.constant 0 : index
    %11 = vector.load %arg18[%c0_8, %c0_9, %c0_10] : memref<2x8x128xf32, #tpu.memory_space<vmem>>, vector<1x8x128xf32>
    %12 = vector.shape_cast %11 : vector<1x8x128xf32> to vector<8x128xf32>
    %c0_11 = arith.constant 0 : index
    %c0_12 = arith.constant 0 : index
    %c0_13 = arith.constant 0 : index
    %13 = vector.load %arg19[%c0_11, %c0_12, %c0_13] : memref<2x8x128xf32, #tpu.memory_space<vmem>>, vector<1x8x128xf32>
    %14 = vector.shape_cast %13 : vector<1x8x128xf32> to vector<8x128xf32>
    %c1 = arith.constant 1 : index
    %c0_14 = arith.constant 0 : index
    %c0_15 = arith.constant 0 : index
    %15 = vector.load %arg18[%c1, %c0_14, %c0_15] : memref<2x8x128xf32, #tpu.memory_space<vmem>>, vector<1x8x128xf32>
    %16 = vector.shape_cast %15 : vector<1x8x128xf32> to vector<8x128xf32>
    %c1_16 = arith.constant 1 : index
    %c0_17 = arith.constant 0 : index
    %c0_18 = arith.constant 0 : index
    %17 = vector.load %arg19[%c1_16, %c0_17, %c0_18] : memref<2x8x128xf32, #tpu.memory_space<vmem>>, vector<1x8x128xf32>
    %18 = vector.shape_cast %17 : vector<1x8x128xf32> to vector<8x128xf32>
    %19 = arith.truncf %12 : vector<8x128xf32> to vector<8x128xbf16>
    %20 = arith.truncf %16 : vector<8x128xf32> to vector<8x128xbf16>
    %c0_19 = arith.constant 0 : index
    %c0_20 = arith.constant 0 : index
    %21 = vector.load %arg20[%c0_19, %c0_20] : memref<64x512xf32, #tpu.memory_space<vmem>>, vector<8x512xf32>
    %c0_21 = arith.constant 0 : index
    %c0_22 = arith.constant 0 : index
    %22 = vector.load %arg5[%c0_21, %c0_22] : memref<128x512xbf16, #tpu.memory_space<vmem>>, vector<128x512xbf16>
    %cst_23 = arith.constant dense<0.000000e+00> : vector<8x512xf32>
    %23 = tpu.matmul %19, %22, %cst_23 {dimension_numbers = #tpu.dot_dimension_numbers<[1], [0], [0], [1], [0, 0, 1, 1], [], []>} : vector<8x128xbf16>, vector<128x512xbf16>, vector<8x512xf32> -> vector<8x512xf32>
    %24 = arith.addf %21, %23 : vector<8x512xf32>
    %25 = vector.extract_strided_slice %24 {offsets = [0, 0], sizes = [8, 384], strides = [1, 1]} : vector<8x512xf32> to vector<8x384xf32>
    %26 = arith.negf %25 : vector<8x384xf32>
    %27 = math.exp %26 : vector<8x384xf32>
    %cst_24 = arith.constant 1.000000e+00 : f32
    %28 = vector.broadcast %cst_24 : f32 to vector<8x384xf32>
    %29 = arith.addf %28, %27 : vector<8x384xf32>
    %30 = arith.divf %28, %29 : vector<8x384xf32>
    %31 = vector.extract_strided_slice %24 {offsets = [0, 384], sizes = [8, 128], strides = [1, 1]} : vector<8x512xf32> to vector<8x128xf32>
    %32 = math.tanh %31 : vector<8x128xf32>
    %33 = vector.extract_strided_slice %30 {offsets = [0, 0], sizes = [8, 128], strides = [1, 1]} : vector<8x384xf32> to vector<8x128xf32>
    %34 = vector.extract_strided_slice %30 {offsets = [0, 128], sizes = [8, 128], strides = [1, 1]} : vector<8x384xf32> to vector<8x128xf32>
    %35 = vector.extract_strided_slice %30 {offsets = [0, 256], sizes = [8, 128], strides = [1, 1]} : vector<8x384xf32> to vector<8x128xf32>
    %36 = arith.mulf %34, %14 : vector<8x128xf32>
    %37 = arith.mulf %33, %32 : vector<8x128xf32>
    %38 = arith.addf %36, %37 : vector<8x128xf32>
    %39 = math.tanh %38 : vector<8x128xf32>
    %40 = arith.mulf %35, %39 : vector<8x128xf32>
    %41 = arith.truncf %40 : vector<8x128xf32> to vector<8x128xbf16>
    %c0_25 = arith.constant 0 : index
    %c0_26 = arith.constant 0 : index
    %42 = vector.load %arg9[%c0_25, %c0_26] : memref<1x512xf32, #tpu.memory_space<vmem>>, vector<1x512xf32>
    %c0_27 = arith.constant 0 : index
    %c0_28 = arith.constant 0 : index
    %43 = vector.load %arg7[%c0_27, %c0_28] : memref<128x512xbf16, #tpu.memory_space<vmem>>, vector<128x512xbf16>
    %cst_29 = arith.constant dense<0.000000e+00> : vector<8x512xf32>
    %44 = tpu.matmul %41, %43, %cst_29 {dimension_numbers = #tpu.dot_dimension_numbers<[1], [0], [0], [1], [0, 0, 1, 1], [], []>} : vector<8x128xbf16>, vector<128x512xbf16>, vector<8x512xf32> -> vector<8x512xf32>
    %45 = vector.broadcast %42 : vector<1x512xf32> to vector<8x512xf32>
    %46 = arith.addf %45, %44 : vector<8x512xf32>
    %c0_30 = arith.constant 0 : index
    %c0_31 = arith.constant 0 : index
    %47 = vector.load %arg8[%c0_30, %c0_31] : memref<128x512xbf16, #tpu.memory_space<vmem>>, vector<128x512xbf16>
    %cst_32 = arith.constant dense<0.000000e+00> : vector<8x512xf32>
    %48 = tpu.matmul %20, %47, %cst_32 {dimension_numbers = #tpu.dot_dimension_numbers<[1], [0], [0], [1], [0, 0, 1, 1], [], []>} : vector<8x128xbf16>, vector<128x512xbf16>, vector<8x512xf32> -> vector<8x512xf32>
    %49 = arith.addf %46, %48 : vector<8x512xf32>
    %50 = vector.extract_strided_slice %49 {offsets = [0, 0], sizes = [8, 384], strides = [1, 1]} : vector<8x512xf32> to vector<8x384xf32>
    %51 = arith.negf %50 : vector<8x384xf32>
    %52 = math.exp %51 : vector<8x384xf32>
    %cst_33 = arith.constant 1.000000e+00 : f32
    %53 = vector.broadcast %cst_33 : f32 to vector<8x384xf32>
    %54 = arith.addf %53, %52 : vector<8x384xf32>
    %55 = arith.divf %53, %54 : vector<8x384xf32>
    %56 = vector.extract_strided_slice %49 {offsets = [0, 384], sizes = [8, 128], strides = [1, 1]} : vector<8x512xf32> to vector<8x128xf32>
    %57 = math.tanh %56 : vector<8x128xf32>
    %58 = vector.extract_strided_slice %55 {offsets = [0, 0], sizes = [8, 128], strides = [1, 1]} : vector<8x384xf32> to vector<8x128xf32>
    %59 = vector.extract_strided_slice %55 {offsets = [0, 128], sizes = [8, 128], strides = [1, 1]} : vector<8x384xf32> to vector<8x128xf32>
    %60 = vector.extract_strided_slice %55 {offsets = [0, 256], sizes = [8, 128], strides = [1, 1]} : vector<8x384xf32> to vector<8x128xf32>
    %61 = arith.mulf %59, %18 : vector<8x128xf32>
    %62 = arith.mulf %58, %57 : vector<8x128xf32>
    %63 = arith.addf %61, %62 : vector<8x128xf32>
    %64 = math.tanh %63 : vector<8x128xf32>
    %65 = arith.mulf %60, %64 : vector<8x128xf32>
    %66 = arith.truncf %65 : vector<8x128xf32> to vector<8x128xbf16>
    %c0_34 = arith.constant 0 : index
    %c0_35 = arith.constant 0 : index
    %67 = vector.load %arg21[%c0_34, %c0_35] : memref<64x128xf32, #tpu.memory_space<vmem>>, vector<8x128xf32>
    tpu.vector_store %arg21[%c0_34, %c0_35], %65 {strides = array<i32>} : memref<64x128xf32, #tpu.memory_space<vmem>>, vector<8x128xf32>,
    %c8 = arith.constant 8 : index
    %c0_36 = arith.constant 0 : index
    %68 = vector.load %arg20[%c8, %c0_36] : memref<64x512xf32, #tpu.memory_space<vmem>>, vector<8x512xf32>
    %c0_37 = arith.constant 0 : index
    %c0_38 = arith.constant 0 : index
    %69 = vector.load %arg5[%c0_37, %c0_38] : memref<128x512xbf16, #tpu.memory_space<vmem>>, vector<128x512xbf16>
    %cst_39 = arith.constant dense<0.000000e+00> : vector<8x512xf32>
    %70 = tpu.matmul %41, %69, %cst_39 {dimension_numbers = #tpu.dot_dimension_numbers<[1], [0], [0], [1], [0, 0, 1, 1], [], []>} : vector<8x128xbf16>, vector<128x512xbf16>, vector<8x512xf32> -> vector<8x512xf32>
    %71 = arith.addf %68, %70 : vector<8x512xf32>
    %72 = vector.extract_strided_slice %71 {offsets = [0, 0], sizes = [8, 384], strides = [1, 1]} : vector<8x512xf32> to vector<8x384xf32>
    %73 = arith.negf %72 : vector<8x384xf32>
    %74 = math.exp %73 : vector<8x384xf32>
    %cst_40 = arith.constant 1.000000e+00 : f32
    %75 = vector.broadcast %cst_40 : f32 to vector<8x384xf32>
    %76 = arith.addf %75, %74 : vector<8x384xf32>
    %77 = arith.divf %75, %76 : vector<8x384xf32>
    %78 = vector.extract_strided_slice %71 {offsets = [0, 384], sizes = [8, 128], strides = [1, 1]} : vector<8x512xf32> to vector<8x128xf32>
    %79 = math.tanh %78 : vector<8x128xf32>
    %80 = vector.extract_strided_slice %77 {offsets = [0, 0], sizes = [8, 128], strides = [1, 1]} : vector<8x384xf32> to vector<8x128xf32>
    %81 = vector.extract_strided_slice %77 {offsets = [0, 128], sizes = [8, 128], strides = [1, 1]} : vector<8x384xf32> to vector<8x128xf32>
    %82 = vector.extract_strided_slice %77 {offsets = [0, 256], sizes = [8, 128], strides = [1, 1]} : vector<8x384xf32> to vector<8x128xf32>
    %83 = arith.mulf %81, %38 : vector<8x128xf32>
    %84 = arith.mulf %80, %79 : vector<8x128xf32>
    %85 = arith.addf %83, %84 : vector<8x128xf32>
    %86 = math.tanh %85 : vector<8x128xf32>
    %87 = arith.mulf %82, %86 : vector<8x128xf32>
    %88 = arith.truncf %87 : vector<8x128xf32> to vector<8x128xbf16>
    %c0_41 = arith.constant 0 : index
    %c0_42 = arith.constant 0 : index
    %89 = vector.load %arg9[%c0_41, %c0_42] : memref<1x512xf32, #tpu.memory_space<vmem>>, vector<1x512xf32>
    %c0_43 = arith.constant 0 : index
    %c0_44 = arith.constant 0 : index
    %90 = vector.load %arg7[%c0_43, %c0_44] : memref<128x512xbf16, #tpu.memory_space<vmem>>, vector<128x512xbf16>
    %cst_45 = arith.constant dense<0.000000e+00> : vector<8x512xf32>
    %91 = tpu.matmul %88, %90, %cst_45 {dimension_numbers = #tpu.dot_dimension_numbers<[1], [0], [0], [1], [0, 0, 1, 1], [], []>} : vector<8x128xbf16>, vector<128x512xbf16>, vector<8x512xf32> -> vector<8x512xf32>
    %92 = vector.broadcast %89 : vector<1x512xf32> to vector<8x512xf32>
    %93 = arith.addf %92, %91 : vector<8x512xf32>
    %c0_46 = arith.constant 0 : index
    %c0_47 = arith.constant 0 : index
    %94 = vector.load %arg8[%c0_46, %c0_47] : memref<128x512xbf16, #tpu.memory_space<vmem>>, vector<128x512xbf16>
    %cst_48 = arith.constant dense<0.000000e+00> : vector<8x512xf32>
    %95 = tpu.matmul %66, %94, %cst_48 {dimension_numbers = #tpu.dot_dimension_numbers<[1], [0], [0], [1], [0, 0, 1, 1], [], []>} : vector<8x128xbf16>, vector<128x512xbf16>, vector<8x512xf32> -> vector<8x512xf32>
    %96 = arith.addf %93, %95 : vector<8x512xf32>
    %97 = vector.extract_strided_slice %96 {offsets = [0, 0], sizes = [8, 384], strides = [1, 1]} : vector<8x512xf32> to vector<8x384xf32>
    %98 = arith.negf %97 : vector<8x384xf32>
    %99 = math.exp %98 : vector<8x384xf32>
    %cst_49 = arith.constant 1.000000e+00 : f32
    %100 = vector.broadcast %cst_49 : f32 to vector<8x384xf32>
    %101 = arith.addf %100, %99 : vector<8x384xf32>
    %102 = arith.divf %100, %101 : vector<8x384xf32>
    %103 = vector.extract_strided_slice %96 {offsets = [0, 384], sizes = [8, 128], strides = [1, 1]} : vector<8x512xf32> to vector<8x128xf32>
    %104 = math.tanh %103 : vector<8x128xf32>
    %105 = vector.extract_strided_slice %102 {offsets = [0, 0], sizes = [8, 128], strides = [1, 1]} : vector<8x384xf32> to vector<8x128xf32>
    %106 = vector.extract_strided_slice %102 {offsets = [0, 128], sizes = [8, 128], strides = [1, 1]} : vector<8x384xf32> to vector<8x128xf32>
    %107 = vector.extract_strided_slice %102 {offsets = [0, 256], sizes = [8, 128], strides = [1, 1]} : vector<8x384xf32> to vector<8x128xf32>
    %108 = arith.mulf %106, %63 : vector<8x128xf32>
    %109 = arith.mulf %105, %104 : vector<8x128xf32>
    %110 = arith.addf %108, %109 : vector<8x128xf32>
    %111 = math.tanh %110 : vector<8x128xf32>
    %112 = arith.mulf %107, %111 : vector<8x128xf32>
    %113 = arith.truncf %112 : vector<8x128xf32> to vector<8x128xbf16>
    %c8_50 = arith.constant 8 : index
    %c0_51 = arith.constant 0 : index
    %114 = vector.load %arg21[%c8_50, %c0_51] : memref<64x128xf32, #tpu.memory_space<vmem>>, vector<8x128xf32>
    tpu.vector_store %arg21[%c8_50, %c0_51], %112 {strides = array<i32>} : memref<64x128xf32, #tpu.memory_space<vmem>>, vector<8x128xf32>,
    %c16 = arith.constant 16 : index
    %c0_52 = arith.constant 0 : index
    %115 = vector.load %arg20[%c16, %c0_52] : memref<64x512xf32, #tpu.memory_space<vmem>>, vector<8x512xf32>
    %c0_53 = arith.constant 0 : index
    %c0_54 = arith.constant 0 : index
    %116 = vector.load %arg5[%c0_53, %c0_54] : memref<128x512xbf16, #tpu.memory_space<vmem>>, vector<128x512xbf16>
    %cst_55 = arith.constant dense<0.000000e+00> : vector<8x512xf32>
    %117 = tpu.matmul %88, %116, %cst_55 {dimension_numbers = #tpu.dot_dimension_numbers<[1], [0], [0], [1], [0, 0, 1, 1], [], []>} : vector<8x128xbf16>, vector<128x512xbf16>, vector<8x512xf32> -> vector<8x512xf32>
    %118 = arith.addf %115, %117 : vector<8x512xf32>
    %119 = vector.extract_strided_slice %118 {offsets = [0, 0], sizes = [8, 384], strides = [1, 1]} : vector<8x512xf32> to vector<8x384xf32>
    %120 = arith.negf %119 : vector<8x384xf32>
    %121 = math.exp %120 : vector<8x384xf32>
    %cst_56 = arith.constant 1.000000e+00 : f32
    %122 = vector.broadcast %cst_56 : f32 to vector<8x384xf32>
    %123 = arith.addf %122, %121 : vector<8x384xf32>
    %124 = arith.divf %122, %123 : vector<8x384xf32>
    %125 = vector.extract_strided_slice %118 {offsets = [0, 384], sizes = [8, 128], strides = [1, 1]} : vector<8x512xf32> to vector<8x128xf32>
    %126 = math.tanh %125 : vector<8x128xf32>
    %127 = vector.extract_strided_slice %124 {offsets = [0, 0], sizes = [8, 128], strides = [1, 1]} : vector<8x384xf32> to vector<8x128xf32>
    %128 = vector.extract_strided_slice %124 {offsets = [0, 128], sizes = [8, 128], strides = [1, 1]} : vector<8x384xf32> to vector<8x128xf32>
    %129 = vector.extract_strided_slice %124 {offsets = [0, 256], sizes = [8, 128], strides = [1, 1]} : vector<8x384xf32> to vector<8x128xf32>
    %130 = arith.mulf %128, %85 : vector<8x128xf32>
    %131 = arith.mulf %127, %126 : vector<8x128xf32>
    %132 = arith.addf %130, %131 : vector<8x128xf32>
    %133 = math.tanh %132 : vector<8x128xf32>
    %134 = arith.mulf %129, %133 : vector<8x128xf32>
    %135 = arith.truncf %134 : vector<8x128xf32> to vector<8x128xbf16>
    %c0_57 = arith.constant 0 : index
    %c0_58 = arith.constant 0 : index
    %136 = vector.load %arg9[%c0_57, %c0_58] : memref<1x512xf32, #tpu.memory_space<vmem>>, vector<1x512xf32>
    %c0_59 = arith.constant 0 : index
    %c0_60 = arith.constant 0 : index
    %137 = vector.load %arg7[%c0_59, %c0_60] : memref<128x512xbf16, #tpu.memory_space<vmem>>, vector<128x512xbf16>
    %cst_61 = arith.constant dense<0.000000e+00> : vector<8x512xf32>
    %138 = tpu.matmul %135, %137, %cst_61 {dimension_numbers = #tpu.dot_dimension_numbers<[1], [0], [0], [1], [0, 0, 1, 1], [], []>} : vector<8x128xbf16>, vector<128x512xbf16>, vector<8x512xf32> -> vector<8x512xf32>
    %139 = vector.broadcast %136 : vector<1x512xf32> to vector<8x512xf32>
    %140 = arith.addf %139, %138 : vector<8x512xf32>
    %c0_62 = arith.constant 0 : index
    %c0_63 = arith.constant 0 : index
    %141 = vector.load %arg8[%c0_62, %c0_63] : memref<128x512xbf16, #tpu.memory_space<vmem>>, vector<128x512xbf16>
    %cst_64 = arith.constant dense<0.000000e+00> : vector<8x512xf32>
    %142 = tpu.matmul %113, %141, %cst_64 {dimension_numbers = #tpu.dot_dimension_numbers<[1], [0], [0], [1], [0, 0, 1, 1], [], []>} : vector<8x128xbf16>, vector<128x512xbf16>, vector<8x512xf32> -> vector<8x512xf32>
    %143 = arith.addf %140, %142 : vector<8x512xf32>
    %144 = vector.extract_strided_slice %143 {offsets = [0, 0], sizes = [8, 384], strides = [1, 1]} : vector<8x512xf32> to vector<8x384xf32>
    %145 = arith.negf %144 : vector<8x384xf32>
    %146 = math.exp %145 : vector<8x384xf32>
    %cst_65 = arith.constant 1.000000e+00 : f32
    %147 = vector.broadcast %cst_65 : f32 to vector<8x384xf32>
    %148 = arith.addf %147, %146 : vector<8x384xf32>
    %149 = arith.divf %147, %148 : vector<8x384xf32>
    %150 = vector.extract_strided_slice %143 {offsets = [0, 384], sizes = [8, 128], strides = [1, 1]} : vector<8x512xf32> to vector<8x128xf32>
    %151 = math.tanh %150 : vector<8x128xf32>
    %152 = vector.extract_strided_slice %149 {offsets = [0, 0], sizes = [8, 128], strides = [1, 1]} : vector<8x384xf32> to vector<8x128xf32>
    %153 = vector.extract_strided_slice %149 {offsets = [0, 128], sizes = [8, 128], strides = [1, 1]} : vector<8x384xf32> to vector<8x128xf32>
    %154 = vector.extract_strided_slice %149 {offsets = [0, 256], sizes = [8, 128], strides = [1, 1]} : vector<8x384xf32> to vector<8x128xf32>
    %155 = arith.mulf %153, %110 : vector<8x128xf32>
    %156 = arith.mulf %152, %151 : vector<8x128xf32>
    %157 = arith.addf %155, %156 : vector<8x128xf32>
    %158 = math.tanh %157 : vector<8x128xf32>
    %159 = arith.mulf %154, %158 : vector<8x128xf32>
    %160 = arith.truncf %159 : vector<8x128xf32> to vector<8x128xbf16>
    %c16_66 = arith.constant 16 : index
    %c0_67 = arith.constant 0 : index
    %161 = vector.load %arg21[%c16_66, %c0_67] : memref<64x128xf32, #tpu.memory_space<vmem>>, vector<8x128xf32>
    tpu.vector_store %arg21[%c16_66, %c0_67], %159 {strides = array<i32>} : memref<64x128xf32, #tpu.memory_space<vmem>>, vector<8x128xf32>,
    %c24 = arith.constant 24 : index
    %c0_68 = arith.constant 0 : index
    %162 = vector.load %arg20[%c24, %c0_68] : memref<64x512xf32, #tpu.memory_space<vmem>>, vector<8x512xf32>
    %c0_69 = arith.constant 0 : index
    %c0_70 = arith.constant 0 : index
    %163 = vector.load %arg5[%c0_69, %c0_70] : memref<128x512xbf16, #tpu.memory_space<vmem>>, vector<128x512xbf16>
    %cst_71 = arith.constant dense<0.000000e+00> : vector<8x512xf32>
    %164 = tpu.matmul %135, %163, %cst_71 {dimension_numbers = #tpu.dot_dimension_numbers<[1], [0], [0], [1], [0, 0, 1, 1], [], []>} : vector<8x128xbf16>, vector<128x512xbf16>, vector<8x512xf32> -> vector<8x512xf32>
    %165 = arith.addf %162, %164 : vector<8x512xf32>
    %166 = vector.extract_strided_slice %165 {offsets = [0, 0], sizes = [8, 384], strides = [1, 1]} : vector<8x512xf32> to vector<8x384xf32>
    %167 = arith.negf %166 : vector<8x384xf32>
    %168 = math.exp %167 : vector<8x384xf32>
    %cst_72 = arith.constant 1.000000e+00 : f32
    %169 = vector.broadcast %cst_72 : f32 to vector<8x384xf32>
    %170 = arith.addf %169, %168 : vector<8x384xf32>
    %171 = arith.divf %169, %170 : vector<8x384xf32>
    %172 = vector.extract_strided_slice %165 {offsets = [0, 384], sizes = [8, 128], strides = [1, 1]} : vector<8x512xf32> to vector<8x128xf32>
    %173 = math.tanh %172 : vector<8x128xf32>
    %174 = vector.extract_strided_slice %171 {offsets = [0, 0], sizes = [8, 128], strides = [1, 1]} : vector<8x384xf32> to vector<8x128xf32>
    %175 = vector.extract_strided_slice %171 {offsets = [0, 128], sizes = [8, 128], strides = [1, 1]} : vector<8x384xf32> to vector<8x128xf32>
    %176 = vector.extract_strided_slice %171 {offsets = [0, 256], sizes = [8, 128], strides = [1, 1]} : vector<8x384xf32> to vector<8x128xf32>
    %177 = arith.mulf %175, %132 : vector<8x128xf32>
    %178 = arith.mulf %174, %173 : vector<8x128xf32>
    %179 = arith.addf %177, %178 : vector<8x128xf32>
    %180 = math.tanh %179 : vector<8x128xf32>
    %181 = arith.mulf %176, %180 : vector<8x128xf32>
    %182 = arith.truncf %181 : vector<8x128xf32> to vector<8x128xbf16>
    %c0_73 = arith.constant 0 : index
    %c0_74 = arith.constant 0 : index
    %183 = vector.load %arg9[%c0_73, %c0_74] : memref<1x512xf32, #tpu.memory_space<vmem>>, vector<1x512xf32>
    %c0_75 = arith.constant 0 : index
    %c0_76 = arith.constant 0 : index
    %184 = vector.load %arg7[%c0_75, %c0_76] : memref<128x512xbf16, #tpu.memory_space<vmem>>, vector<128x512xbf16>
    %cst_77 = arith.constant dense<0.000000e+00> : vector<8x512xf32>
    %185 = tpu.matmul %182, %184, %cst_77 {dimension_numbers = #tpu.dot_dimension_numbers<[1], [0], [0], [1], [0, 0, 1, 1], [], []>} : vector<8x128xbf16>, vector<128x512xbf16>, vector<8x512xf32> -> vector<8x512xf32>
    %186 = vector.broadcast %183 : vector<1x512xf32> to vector<8x512xf32>
    %187 = arith.addf %186, %185 : vector<8x512xf32>
    %c0_78 = arith.constant 0 : index
    %c0_79 = arith.constant 0 : index
    %188 = vector.load %arg8[%c0_78, %c0_79] : memref<128x512xbf16, #tpu.memory_space<vmem>>, vector<128x512xbf16>
    %cst_80 = arith.constant dense<0.000000e+00> : vector<8x512xf32>
    %189 = tpu.matmul %160, %188, %cst_80 {dimension_numbers = #tpu.dot_dimension_numbers<[1], [0], [0], [1], [0, 0, 1, 1], [], []>} : vector<8x128xbf16>, vector<128x512xbf16>, vector<8x512xf32> -> vector<8x512xf32>
    %190 = arith.addf %187, %189 : vector<8x512xf32>
    %191 = vector.extract_strided_slice %190 {offsets = [0, 0], sizes = [8, 384], strides = [1, 1]} : vector<8x512xf32> to vector<8x384xf32>
    %192 = arith.negf %191 : vector<8x384xf32>
    %193 = math.exp %192 : vector<8x384xf32>
    %cst_81 = arith.constant 1.000000e+00 : f32
    %194 = vector.broadcast %cst_81 : f32 to vector<8x384xf32>
    %195 = arith.addf %194, %193 : vector<8x384xf32>
    %196 = arith.divf %194, %195 : vector<8x384xf32>
    %197 = vector.extract_strided_slice %190 {offsets = [0, 384], sizes = [8, 128], strides = [1, 1]} : vector<8x512xf32> to vector<8x128xf32>
    %198 = math.tanh %197 : vector<8x128xf32>
    %199 = vector.extract_strided_slice %196 {offsets = [0, 0], sizes = [8, 128], strides = [1, 1]} : vector<8x384xf32> to vector<8x128xf32>
    %200 = vector.extract_strided_slice %196 {offsets = [0, 128], sizes = [8, 128], strides = [1, 1]} : vector<8x384xf32> to vector<8x128xf32>
    %201 = vector.extract_strided_slice %196 {offsets = [0, 256], sizes = [8, 128], strides = [1, 1]} : vector<8x384xf32> to vector<8x128xf32>
    %202 = arith.mulf %200, %157 : vector<8x128xf32>
    %203 = arith.mulf %199, %198 : vector<8x128xf32>
    %204 = arith.addf %202, %203 : vector<8x128xf32>
    %205 = math.tanh %204 : vector<8x128xf32>
    %206 = arith.mulf %201, %205 : vector<8x128xf32>
    %207 = arith.truncf %206 : vector<8x128xf32> to vector<8x128xbf16>
    %c24_82 = arith.constant 24 : index
    %c0_83 = arith.constant 0 : index
    %208 = vector.load %arg21[%c24_82, %c0_83] : memref<64x128xf32, #tpu.memory_space<vmem>>, vector<8x128xf32>
    tpu.vector_store %arg21[%c24_82, %c0_83], %206 {strides = array<i32>} : memref<64x128xf32, #tpu.memory_space<vmem>>, vector<8x128xf32>,
    %c32 = arith.constant 32 : index
    %c0_84 = arith.constant 0 : index
    %209 = vector.load %arg20[%c32, %c0_84] : memref<64x512xf32, #tpu.memory_space<vmem>>, vector<8x512xf32>
    %c0_85 = arith.constant 0 : index
    %c0_86 = arith.constant 0 : index
    %210 = vector.load %arg5[%c0_85, %c0_86] : memref<128x512xbf16, #tpu.memory_space<vmem>>, vector<128x512xbf16>
    %cst_87 = arith.constant dense<0.000000e+00> : vector<8x512xf32>
    %211 = tpu.matmul %182, %210, %cst_87 {dimension_numbers = #tpu.dot_dimension_numbers<[1], [0], [0], [1], [0, 0, 1, 1], [], []>} : vector<8x128xbf16>, vector<128x512xbf16>, vector<8x512xf32> -> vector<8x512xf32>
    %212 = arith.addf %209, %211 : vector<8x512xf32>
    %213 = vector.extract_strided_slice %212 {offsets = [0, 0], sizes = [8, 384], strides = [1, 1]} : vector<8x512xf32> to vector<8x384xf32>
    %214 = arith.negf %213 : vector<8x384xf32>
    %215 = math.exp %214 : vector<8x384xf32>
    %cst_88 = arith.constant 1.000000e+00 : f32
    %216 = vector.broadcast %cst_88 : f32 to vector<8x384xf32>
    %217 = arith.addf %216, %215 : vector<8x384xf32>
    %218 = arith.divf %216, %217 : vector<8x384xf32>
    %219 = vector.extract_strided_slice %212 {offsets = [0, 384], sizes = [8, 128], strides = [1, 1]} : vector<8x512xf32> to vector<8x128xf32>
    %220 = math.tanh %219 : vector<8x128xf32>
    %221 = vector.extract_strided_slice %218 {offsets = [0, 0], sizes = [8, 128], strides = [1, 1]} : vector<8x384xf32> to vector<8x128xf32>
    %222 = vector.extract_strided_slice %218 {offsets = [0, 128], sizes = [8, 128], strides = [1, 1]} : vector<8x384xf32> to vector<8x128xf32>
    %223 = vector.extract_strided_slice %218 {offsets = [0, 256], sizes = [8, 128], strides = [1, 1]} : vector<8x384xf32> to vector<8x128xf32>
    %224 = arith.mulf %222, %179 : vector<8x128xf32>
    %225 = arith.mulf %221, %220 : vector<8x128xf32>
    %226 = arith.addf %224, %225 : vector<8x128xf32>
    %227 = math.tanh %226 : vector<8x128xf32>
    %228 = arith.mulf %223, %227 : vector<8x128xf32>
    %229 = arith.truncf %228 : vector<8x128xf32> to vector<8x128xbf16>
    %c0_89 = arith.constant 0 : index
    %c0_90 = arith.constant 0 : index
    %230 = vector.load %arg9[%c0_89, %c0_90] : memref<1x512xf32, #tpu.memory_space<vmem>>, vector<1x512xf32>
    %c0_91 = arith.constant 0 : index
    %c0_92 = arith.constant 0 : index
    %231 = vector.load %arg7[%c0_91, %c0_92] : memref<128x512xbf16, #tpu.memory_space<vmem>>, vector<128x512xbf16>
    %cst_93 = arith.constant dense<0.000000e+00> : vector<8x512xf32>
    %232 = tpu.matmul %229, %231, %cst_93 {dimension_numbers = #tpu.dot_dimension_numbers<[1], [0], [0], [1], [0, 0, 1, 1], [], []>} : vector<8x128xbf16>, vector<128x512xbf16>, vector<8x512xf32> -> vector<8x512xf32>
    %233 = vector.broadcast %230 : vector<1x512xf32> to vector<8x512xf32>
    %234 = arith.addf %233, %232 : vector<8x512xf32>
    %c0_94 = arith.constant 0 : index
    %c0_95 = arith.constant 0 : index
    %235 = vector.load %arg8[%c0_94, %c0_95] : memref<128x512xbf16, #tpu.memory_space<vmem>>, vector<128x512xbf16>
    %cst_96 = arith.constant dense<0.000000e+00> : vector<8x512xf32>
    %236 = tpu.matmul %207, %235, %cst_96 {dimension_numbers = #tpu.dot_dimension_numbers<[1], [0], [0], [1], [0, 0, 1, 1], [], []>} : vector<8x128xbf16>, vector<128x512xbf16>, vector<8x512xf32> -> vector<8x512xf32>
    %237 = arith.addf %234, %236 : vector<8x512xf32>
    %238 = vector.extract_strided_slice %237 {offsets = [0, 0], sizes = [8, 384], strides = [1, 1]} : vector<8x512xf32> to vector<8x384xf32>
    %239 = arith.negf %238 : vector<8x384xf32>
    %240 = math.exp %239 : vector<8x384xf32>
    %cst_97 = arith.constant 1.000000e+00 : f32
    %241 = vector.broadcast %cst_97 : f32 to vector<8x384xf32>
    %242 = arith.addf %241, %240 : vector<8x384xf32>
    %243 = arith.divf %241, %242 : vector<8x384xf32>
    %244 = vector.extract_strided_slice %237 {offsets = [0, 384], sizes = [8, 128], strides = [1, 1]} : vector<8x512xf32> to vector<8x128xf32>
    %245 = math.tanh %244 : vector<8x128xf32>
    %246 = vector.extract_strided_slice %243 {offsets = [0, 0], sizes = [8, 128], strides = [1, 1]} : vector<8x384xf32> to vector<8x128xf32>
    %247 = vector.extract_strided_slice %243 {offsets = [0, 128], sizes = [8, 128], strides = [1, 1]} : vector<8x384xf32> to vector<8x128xf32>
    %248 = vector.extract_strided_slice %243 {offsets = [0, 256], sizes = [8, 128], strides = [1, 1]} : vector<8x384xf32> to vector<8x128xf32>
    %249 = arith.mulf %247, %204 : vector<8x128xf32>
    %250 = arith.mulf %246, %245 : vector<8x128xf32>
    %251 = arith.addf %249, %250 : vector<8x128xf32>
    %252 = math.tanh %251 : vector<8x128xf32>
    %253 = arith.mulf %248, %252 : vector<8x128xf32>
    %254 = arith.truncf %253 : vector<8x128xf32> to vector<8x128xbf16>
    %c32_98 = arith.constant 32 : index
    %c0_99 = arith.constant 0 : index
    %255 = vector.load %arg21[%c32_98, %c0_99] : memref<64x128xf32, #tpu.memory_space<vmem>>, vector<8x128xf32>
    tpu.vector_store %arg21[%c32_98, %c0_99], %253 {strides = array<i32>} : memref<64x128xf32, #tpu.memory_space<vmem>>, vector<8x128xf32>,
    %c40 = arith.constant 40 : index
    %c0_100 = arith.constant 0 : index
    %256 = vector.load %arg20[%c40, %c0_100] : memref<64x512xf32, #tpu.memory_space<vmem>>, vector<8x512xf32>
    %c0_101 = arith.constant 0 : index
    %c0_102 = arith.constant 0 : index
    %257 = vector.load %arg5[%c0_101, %c0_102] : memref<128x512xbf16, #tpu.memory_space<vmem>>, vector<128x512xbf16>
    %cst_103 = arith.constant dense<0.000000e+00> : vector<8x512xf32>
    %258 = tpu.matmul %229, %257, %cst_103 {dimension_numbers = #tpu.dot_dimension_numbers<[1], [0], [0], [1], [0, 0, 1, 1], [], []>} : vector<8x128xbf16>, vector<128x512xbf16>, vector<8x512xf32> -> vector<8x512xf32>
    %259 = arith.addf %256, %258 : vector<8x512xf32>
    %260 = vector.extract_strided_slice %259 {offsets = [0, 0], sizes = [8, 384], strides = [1, 1]} : vector<8x512xf32> to vector<8x384xf32>
    %261 = arith.negf %260 : vector<8x384xf32>
    %262 = math.exp %261 : vector<8x384xf32>
    %cst_104 = arith.constant 1.000000e+00 : f32
    %263 = vector.broadcast %cst_104 : f32 to vector<8x384xf32>
    %264 = arith.addf %263, %262 : vector<8x384xf32>
    %265 = arith.divf %263, %264 : vector<8x384xf32>
    %266 = vector.extract_strided_slice %259 {offsets = [0, 384], sizes = [8, 128], strides = [1, 1]} : vector<8x512xf32> to vector<8x128xf32>
    %267 = math.tanh %266 : vector<8x128xf32>
    %268 = vector.extract_strided_slice %265 {offsets = [0, 0], sizes = [8, 128], strides = [1, 1]} : vector<8x384xf32> to vector<8x128xf32>
    %269 = vector.extract_strided_slice %265 {offsets = [0, 128], sizes = [8, 128], strides = [1, 1]} : vector<8x384xf32> to vector<8x128xf32>
    %270 = vector.extract_strided_slice %265 {offsets = [0, 256], sizes = [8, 128], strides = [1, 1]} : vector<8x384xf32> to vector<8x128xf32>
    %271 = arith.mulf %269, %226 : vector<8x128xf32>
    %272 = arith.mulf %268, %267 : vector<8x128xf32>
    %273 = arith.addf %271, %272 : vector<8x128xf32>
    %274 = math.tanh %273 : vector<8x128xf32>
    %275 = arith.mulf %270, %274 : vector<8x128xf32>
    %276 = arith.truncf %275 : vector<8x128xf32> to vector<8x128xbf16>
    %c0_105 = arith.constant 0 : index
    %c0_106 = arith.constant 0 : index
    %277 = vector.load %arg9[%c0_105, %c0_106] : memref<1x512xf32, #tpu.memory_space<vmem>>, vector<1x512xf32>
    %c0_107 = arith.constant 0 : index
    %c0_108 = arith.constant 0 : index
    %278 = vector.load %arg7[%c0_107, %c0_108] : memref<128x512xbf16, #tpu.memory_space<vmem>>, vector<128x512xbf16>
    %cst_109 = arith.constant dense<0.000000e+00> : vector<8x512xf32>
    %279 = tpu.matmul %276, %278, %cst_109 {dimension_numbers = #tpu.dot_dimension_numbers<[1], [0], [0], [1], [0, 0, 1, 1], [], []>} : vector<8x128xbf16>, vector<128x512xbf16>, vector<8x512xf32> -> vector<8x512xf32>
    %280 = vector.broadcast %277 : vector<1x512xf32> to vector<8x512xf32>
    %281 = arith.addf %280, %279 : vector<8x512xf32>
    %c0_110 = arith.constant 0 : index
    %c0_111 = arith.constant 0 : index
    %282 = vector.load %arg8[%c0_110, %c0_111] : memref<128x512xbf16, #tpu.memory_space<vmem>>, vector<128x512xbf16>
    %cst_112 = arith.constant dense<0.000000e+00> : vector<8x512xf32>
    %283 = tpu.matmul %254, %282, %cst_112 {dimension_numbers = #tpu.dot_dimension_numbers<[1], [0], [0], [1], [0, 0, 1, 1], [], []>} : vector<8x128xbf16>, vector<128x512xbf16>, vector<8x512xf32> -> vector<8x512xf32>
    %284 = arith.addf %281, %283 : vector<8x512xf32>
    %285 = vector.extract_strided_slice %284 {offsets = [0, 0], sizes = [8, 384], strides = [1, 1]} : vector<8x512xf32> to vector<8x384xf32>
    %286 = arith.negf %285 : vector<8x384xf32>
    %287 = math.exp %286 : vector<8x384xf32>
    %cst_113 = arith.constant 1.000000e+00 : f32
    %288 = vector.broadcast %cst_113 : f32 to vector<8x384xf32>
    %289 = arith.addf %288, %287 : vector<8x384xf32>
    %290 = arith.divf %288, %289 : vector<8x384xf32>
    %291 = vector.extract_strided_slice %284 {offsets = [0, 384], sizes = [8, 128], strides = [1, 1]} : vector<8x512xf32> to vector<8x128xf32>
    %292 = math.tanh %291 : vector<8x128xf32>
    %293 = vector.extract_strided_slice %290 {offsets = [0, 0], sizes = [8, 128], strides = [1, 1]} : vector<8x384xf32> to vector<8x128xf32>
    %294 = vector.extract_strided_slice %290 {offsets = [0, 128], sizes = [8, 128], strides = [1, 1]} : vector<8x384xf32> to vector<8x128xf32>
    %295 = vector.extract_strided_slice %290 {offsets = [0, 256], sizes = [8, 128], strides = [1, 1]} : vector<8x384xf32> to vector<8x128xf32>
    %296 = arith.mulf %294, %251 : vector<8x128xf32>
    %297 = arith.mulf %293, %292 : vector<8x128xf32>
    %298 = arith.addf %296, %297 : vector<8x128xf32>
    %299 = math.tanh %298 : vector<8x128xf32>
    %300 = arith.mulf %295, %299 : vector<8x128xf32>
    %301 = arith.truncf %300 : vector<8x128xf32> to vector<8x128xbf16>
    %c40_114 = arith.constant 40 : index
    %c0_115 = arith.constant 0 : index
    %302 = vector.load %arg21[%c40_114, %c0_115] : memref<64x128xf32, #tpu.memory_space<vmem>>, vector<8x128xf32>
    tpu.vector_store %arg21[%c40_114, %c0_115], %300 {strides = array<i32>} : memref<64x128xf32, #tpu.memory_space<vmem>>, vector<8x128xf32>,
    %c48 = arith.constant 48 : index
    %c0_116 = arith.constant 0 : index
    %303 = vector.load %arg20[%c48, %c0_116] : memref<64x512xf32, #tpu.memory_space<vmem>>, vector<8x512xf32>
    %c0_117 = arith.constant 0 : index
    %c0_118 = arith.constant 0 : index
    %304 = vector.load %arg5[%c0_117, %c0_118] : memref<128x512xbf16, #tpu.memory_space<vmem>>, vector<128x512xbf16>
    %cst_119 = arith.constant dense<0.000000e+00> : vector<8x512xf32>
    %305 = tpu.matmul %276, %304, %cst_119 {dimension_numbers = #tpu.dot_dimension_numbers<[1], [0], [0], [1], [0, 0, 1, 1], [], []>} : vector<8x128xbf16>, vector<128x512xbf16>, vector<8x512xf32> -> vector<8x512xf32>
    %306 = arith.addf %303, %305 : vector<8x512xf32>
    %307 = vector.extract_strided_slice %306 {offsets = [0, 0], sizes = [8, 384], strides = [1, 1]} : vector<8x512xf32> to vector<8x384xf32>
    %308 = arith.negf %307 : vector<8x384xf32>
    %309 = math.exp %308 : vector<8x384xf32>
    %cst_120 = arith.constant 1.000000e+00 : f32
    %310 = vector.broadcast %cst_120 : f32 to vector<8x384xf32>
    %311 = arith.addf %310, %309 : vector<8x384xf32>
    %312 = arith.divf %310, %311 : vector<8x384xf32>
    %313 = vector.extract_strided_slice %306 {offsets = [0, 384], sizes = [8, 128], strides = [1, 1]} : vector<8x512xf32> to vector<8x128xf32>
    %314 = math.tanh %313 : vector<8x128xf32>
    %315 = vector.extract_strided_slice %312 {offsets = [0, 0], sizes = [8, 128], strides = [1, 1]} : vector<8x384xf32> to vector<8x128xf32>
    %316 = vector.extract_strided_slice %312 {offsets = [0, 128], sizes = [8, 128], strides = [1, 1]} : vector<8x384xf32> to vector<8x128xf32>
    %317 = vector.extract_strided_slice %312 {offsets = [0, 256], sizes = [8, 128], strides = [1, 1]} : vector<8x384xf32> to vector<8x128xf32>
    %318 = arith.mulf %316, %273 : vector<8x128xf32>
    %319 = arith.mulf %315, %314 : vector<8x128xf32>
    %320 = arith.addf %318, %319 : vector<8x128xf32>
    %321 = math.tanh %320 : vector<8x128xf32>
    %322 = arith.mulf %317, %321 : vector<8x128xf32>
    %323 = arith.truncf %322 : vector<8x128xf32> to vector<8x128xbf16>
    %c0_121 = arith.constant 0 : index
    %c0_122 = arith.constant 0 : index
    %324 = vector.load %arg9[%c0_121, %c0_122] : memref<1x512xf32, #tpu.memory_space<vmem>>, vector<1x512xf32>
    %c0_123 = arith.constant 0 : index
    %c0_124 = arith.constant 0 : index
    %325 = vector.load %arg7[%c0_123, %c0_124] : memref<128x512xbf16, #tpu.memory_space<vmem>>, vector<128x512xbf16>
    %cst_125 = arith.constant dense<0.000000e+00> : vector<8x512xf32>
    %326 = tpu.matmul %323, %325, %cst_125 {dimension_numbers = #tpu.dot_dimension_numbers<[1], [0], [0], [1], [0, 0, 1, 1], [], []>} : vector<8x128xbf16>, vector<128x512xbf16>, vector<8x512xf32> -> vector<8x512xf32>
    %327 = vector.broadcast %324 : vector<1x512xf32> to vector<8x512xf32>
    %328 = arith.addf %327, %326 : vector<8x512xf32>
    %c0_126 = arith.constant 0 : index
    %c0_127 = arith.constant 0 : index
    %329 = vector.load %arg8[%c0_126, %c0_127] : memref<128x512xbf16, #tpu.memory_space<vmem>>, vector<128x512xbf16>
    %cst_128 = arith.constant dense<0.000000e+00> : vector<8x512xf32>
    %330 = tpu.matmul %301, %329, %cst_128 {dimension_numbers = #tpu.dot_dimension_numbers<[1], [0], [0], [1], [0, 0, 1, 1], [], []>} : vector<8x128xbf16>, vector<128x512xbf16>, vector<8x512xf32> -> vector<8x512xf32>
    %331 = arith.addf %328, %330 : vector<8x512xf32>
    %332 = vector.extract_strided_slice %331 {offsets = [0, 0], sizes = [8, 384], strides = [1, 1]} : vector<8x512xf32> to vector<8x384xf32>
    %333 = arith.negf %332 : vector<8x384xf32>
    %334 = math.exp %333 : vector<8x384xf32>
    %cst_129 = arith.constant 1.000000e+00 : f32
    %335 = vector.broadcast %cst_129 : f32 to vector<8x384xf32>
    %336 = arith.addf %335, %334 : vector<8x384xf32>
    %337 = arith.divf %335, %336 : vector<8x384xf32>
    %338 = vector.extract_strided_slice %331 {offsets = [0, 384], sizes = [8, 128], strides = [1, 1]} : vector<8x512xf32> to vector<8x128xf32>
    %339 = math.tanh %338 : vector<8x128xf32>
    %340 = vector.extract_strided_slice %337 {offsets = [0, 0], sizes = [8, 128], strides = [1, 1]} : vector<8x384xf32> to vector<8x128xf32>
    %341 = vector.extract_strided_slice %337 {offsets = [0, 128], sizes = [8, 128], strides = [1, 1]} : vector<8x384xf32> to vector<8x128xf32>
    %342 = vector.extract_strided_slice %337 {offsets = [0, 256], sizes = [8, 128], strides = [1, 1]} : vector<8x384xf32> to vector<8x128xf32>
    %343 = arith.mulf %341, %298 : vector<8x128xf32>
    %344 = arith.mulf %340, %339 : vector<8x128xf32>
    %345 = arith.addf %343, %344 : vector<8x128xf32>
    %346 = math.tanh %345 : vector<8x128xf32>
    %347 = arith.mulf %342, %346 : vector<8x128xf32>
    %348 = arith.truncf %347 : vector<8x128xf32> to vector<8x128xbf16>
    %c48_130 = arith.constant 48 : index
    %c0_131 = arith.constant 0 : index
    %349 = vector.load %arg21[%c48_130, %c0_131] : memref<64x128xf32, #tpu.memory_space<vmem>>, vector<8x128xf32>
    tpu.vector_store %arg21[%c48_130, %c0_131], %347 {strides = array<i32>} : memref<64x128xf32, #tpu.memory_space<vmem>>, vector<8x128xf32>,
    %c56 = arith.constant 56 : index
    %c0_132 = arith.constant 0 : index
    %350 = vector.load %arg20[%c56, %c0_132] : memref<64x512xf32, #tpu.memory_space<vmem>>, vector<8x512xf32>
    %c0_133 = arith.constant 0 : index
    %c0_134 = arith.constant 0 : index
    %351 = vector.load %arg5[%c0_133, %c0_134] : memref<128x512xbf16, #tpu.memory_space<vmem>>, vector<128x512xbf16>
    %cst_135 = arith.constant dense<0.000000e+00> : vector<8x512xf32>
    %352 = tpu.matmul %323, %351, %cst_135 {dimension_numbers = #tpu.dot_dimension_numbers<[1], [0], [0], [1], [0, 0, 1, 1], [], []>} : vector<8x128xbf16>, vector<128x512xbf16>, vector<8x512xf32> -> vector<8x512xf32>
    %353 = arith.addf %350, %352 : vector<8x512xf32>
    %354 = vector.extract_strided_slice %353 {offsets = [0, 0], sizes = [8, 384], strides = [1, 1]} : vector<8x512xf32> to vector<8x384xf32>
    %355 = arith.negf %354 : vector<8x384xf32>
    %356 = math.exp %355 : vector<8x384xf32>
    %cst_136 = arith.constant 1.000000e+00 : f32
    %357 = vector.broadcast %cst_136 : f32 to vector<8x384xf32>
    %358 = arith.addf %357, %356 : vector<8x384xf32>
    %359 = arith.divf %357, %358 : vector<8x384xf32>
    %360 = vector.extract_strided_slice %353 {offsets = [0, 384], sizes = [8, 128], strides = [1, 1]} : vector<8x512xf32> to vector<8x128xf32>
    %361 = math.tanh %360 : vector<8x128xf32>
    %362 = vector.extract_strided_slice %359 {offsets = [0, 0], sizes = [8, 128], strides = [1, 1]} : vector<8x384xf32> to vector<8x128xf32>
    %363 = vector.extract_strided_slice %359 {offsets = [0, 128], sizes = [8, 128], strides = [1, 1]} : vector<8x384xf32> to vector<8x128xf32>
    %364 = vector.extract_strided_slice %359 {offsets = [0, 256], sizes = [8, 128], strides = [1, 1]} : vector<8x384xf32> to vector<8x128xf32>
    %365 = arith.mulf %363, %320 : vector<8x128xf32>
    %366 = arith.mulf %362, %361 : vector<8x128xf32>
    %367 = arith.addf %365, %366 : vector<8x128xf32>
    %368 = math.tanh %367 : vector<8x128xf32>
    %369 = arith.mulf %364, %368 : vector<8x128xf32>
    %370 = arith.truncf %369 : vector<8x128xf32> to vector<8x128xbf16>
    %c0_137 = arith.constant 0 : index
    %c0_138 = arith.constant 0 : index
    %371 = vector.load %arg9[%c0_137, %c0_138] : memref<1x512xf32, #tpu.memory_space<vmem>>, vector<1x512xf32>
    %c0_139 = arith.constant 0 : index
    %c0_140 = arith.constant 0 : index
    %372 = vector.load %arg7[%c0_139, %c0_140] : memref<128x512xbf16, #tpu.memory_space<vmem>>, vector<128x512xbf16>
    %cst_141 = arith.constant dense<0.000000e+00> : vector<8x512xf32>
    %373 = tpu.matmul %370, %372, %cst_141 {dimension_numbers = #tpu.dot_dimension_numbers<[1], [0], [0], [1], [0, 0, 1, 1], [], []>} : vector<8x128xbf16>, vector<128x512xbf16>, vector<8x512xf32> -> vector<8x512xf32>
    %374 = vector.broadcast %371 : vector<1x512xf32> to vector<8x512xf32>
    %375 = arith.addf %374, %373 : vector<8x512xf32>
    %c0_142 = arith.constant 0 : index
    %c0_143 = arith.constant 0 : index
    %376 = vector.load %arg8[%c0_142, %c0_143] : memref<128x512xbf16, #tpu.memory_space<vmem>>, vector<128x512xbf16>
    %cst_144 = arith.constant dense<0.000000e+00> : vector<8x512xf32>
    %377 = tpu.matmul %348, %376, %cst_144 {dimension_numbers = #tpu.dot_dimension_numbers<[1], [0], [0], [1], [0, 0, 1, 1], [], []>} : vector<8x128xbf16>, vector<128x512xbf16>, vector<8x512xf32> -> vector<8x512xf32>
    %378 = arith.addf %375, %377 : vector<8x512xf32>
    %379 = vector.extract_strided_slice %378 {offsets = [0, 0], sizes = [8, 384], strides = [1, 1]} : vector<8x512xf32> to vector<8x384xf32>
    %380 = arith.negf %379 : vector<8x384xf32>
    %381 = math.exp %380 : vector<8x384xf32>
    %cst_145 = arith.constant 1.000000e+00 : f32
    %382 = vector.broadcast %cst_145 : f32 to vector<8x384xf32>
    %383 = arith.addf %382, %381 : vector<8x384xf32>
    %384 = arith.divf %382, %383 : vector<8x384xf32>
    %385 = vector.extract_strided_slice %378 {offsets = [0, 384], sizes = [8, 128], strides = [1, 1]} : vector<8x512xf32> to vector<8x128xf32>
    %386 = math.tanh %385 : vector<8x128xf32>
    %387 = vector.extract_strided_slice %384 {offsets = [0, 0], sizes = [8, 128], strides = [1, 1]} : vector<8x384xf32> to vector<8x128xf32>
    %388 = vector.extract_strided_slice %384 {offsets = [0, 128], sizes = [8, 128], strides = [1, 1]} : vector<8x384xf32> to vector<8x128xf32>
    %389 = vector.extract_strided_slice %384 {offsets = [0, 256], sizes = [8, 128], strides = [1, 1]} : vector<8x384xf32> to vector<8x128xf32>
    %390 = arith.mulf %388, %345 : vector<8x128xf32>
    %391 = arith.mulf %387, %386 : vector<8x128xf32>
    %392 = arith.addf %390, %391 : vector<8x128xf32>
    %393 = math.tanh %392 : vector<8x128xf32>
    %394 = arith.mulf %389, %393 : vector<8x128xf32>
    %c56_146 = arith.constant 56 : index
    %c0_147 = arith.constant 0 : index
    %395 = vector.load %arg21[%c56_146, %c0_147] : memref<64x128xf32, #tpu.memory_space<vmem>>, vector<8x128xf32>
    tpu.vector_store %arg21[%c56_146, %c0_147], %394 {strides = array<i32>} : memref<64x128xf32, #tpu.memory_space<vmem>>, vector<8x128xf32>,
    %c0_148 = arith.constant 0 : index
    %c0_149 = arith.constant 0 : index
    %c0_150 = arith.constant 0 : index
    %396 = vector.load %arg18[%c0_148, %c0_149, %c0_150] : memref<2x8x128xf32, #tpu.memory_space<vmem>>, vector<1x8x128xf32>
    %397 = vector.shape_cast %396 : vector<1x8x128xf32> to vector<8x128xf32>
    %398 = vector.shape_cast %369 : vector<8x128xf32> to vector<1x8x128xf32>
    tpu.vector_store %arg18[%c0_148, %c0_149, %c0_150], %398 {strides = array<i32>} : memref<2x8x128xf32, #tpu.memory_space<vmem>>, vector<1x8x128xf32>,
    %c1_151 = arith.constant 1 : index
    %c0_152 = arith.constant 0 : index
    %c0_153 = arith.constant 0 : index
    %399 = vector.load %arg18[%c1_151, %c0_152, %c0_153] : memref<2x8x128xf32, #tpu.memory_space<vmem>>, vector<1x8x128xf32>
    %400 = vector.shape_cast %399 : vector<1x8x128xf32> to vector<8x128xf32>
    %401 = vector.shape_cast %394 : vector<8x128xf32> to vector<1x8x128xf32>
    tpu.vector_store %arg18[%c1_151, %c0_152, %c0_153], %401 {strides = array<i32>} : memref<2x8x128xf32, #tpu.memory_space<vmem>>, vector<1x8x128xf32>,
    %c0_154 = arith.constant 0 : index
    %c0_155 = arith.constant 0 : index
    %c0_156 = arith.constant 0 : index
    %402 = vector.load %arg19[%c0_154, %c0_155, %c0_156] : memref<2x8x128xf32, #tpu.memory_space<vmem>>, vector<1x8x128xf32>
    %403 = vector.shape_cast %402 : vector<1x8x128xf32> to vector<8x128xf32>
    %404 = vector.shape_cast %367 : vector<8x128xf32> to vector<1x8x128xf32>
    tpu.vector_store %arg19[%c0_154, %c0_155, %c0_156], %404 {strides = array<i32>} : memref<2x8x128xf32, #tpu.memory_space<vmem>>, vector<1x8x128xf32>,
    %c1_157 = arith.constant 1 : index
    %c0_158 = arith.constant 0 : index
    %c0_159 = arith.constant 0 : index
    %405 = vector.load %arg19[%c1_157, %c0_158, %c0_159] : memref<2x8x128xf32, #tpu.memory_space<vmem>>, vector<1x8x128xf32>
    %406 = vector.shape_cast %405 : vector<1x8x128xf32> to vector<8x128xf32>
    %407 = vector.shape_cast %392 : vector<8x128xf32> to vector<1x8x128xf32>
    tpu.vector_store %arg19[%c1_157, %c0_158, %c0_159], %407 {strides = array<i32>} : memref<2x8x128xf32, #tpu.memory_space<vmem>>, vector<1x8x128xf32>,
    %c0_160 = arith.constant 0 : index
    %c0_161 = arith.constant 0 : index
    %408 = vector.load %arg21[%c0_160, %c0_161] : memref<64x128xf32, #tpu.memory_space<vmem>>, vector<64x128xf32>
    %409 = arith.truncf %408 : vector<64x128xf32> to vector<64x128xbf16>
    %c0_162 = arith.constant 0 : index
    %c0_163 = arith.constant 0 : index
    %410 = vector.load %arg10[%c0_162, %c0_163] : memref<128x128xbf16, #tpu.memory_space<vmem>>, vector<128x128xbf16>
    %cst_164 = arith.constant dense<0.000000e+00> : vector<64x128xf32>
    %411 = tpu.matmul %4, %410, %cst_164 {dimension_numbers = #tpu.dot_dimension_numbers<[1], [0], [0], [1], [0, 0, 1, 1], [], []>} : vector<64x128xbf16>, vector<128x128xbf16>, vector<64x128xf32> -> vector<64x128xf32>
    %c0_165 = arith.constant 0 : index
    %c0_166 = arith.constant 0 : index
    %412 = vector.load %arg11[%c0_165, %c0_166] : memref<128x128xbf16, #tpu.memory_space<vmem>>, vector<128x128xbf16>
    %cst_167 = arith.constant dense<0.000000e+00> : vector<64x128xf32>
    %413 = tpu.matmul %409, %412, %cst_167 {dimension_numbers = #tpu.dot_dimension_numbers<[1], [0], [0], [1], [0, 0, 1, 1], [], []>} : vector<64x128xbf16>, vector<128x128xbf16>, vector<64x128xf32> -> vector<64x128xf32>
    %414 = arith.addf %411, %413 : vector<64x128xf32>
    %c0_168 = arith.constant 0 : index
    %c0_169 = arith.constant 0 : index
    %415 = vector.load %arg12[%c0_168, %c0_169] : memref<1x128xf32, #tpu.memory_space<vmem>>, vector<1x128xf32>
    %416 = vector.broadcast %415 : vector<1x128xf32> to vector<64x128xf32>
    %417 = arith.addf %414, %416 : vector<64x128xf32>
    %cst_170 = arith.constant 0.00999999977 : f32
    %418 = vector.broadcast %cst_170 : f32 to vector<64x128xf32>
    %419 = arith.mulf %418, %417 : vector<64x128xf32>
    %420 = arith.maximumf %417, %419 : vector<64x128xf32>
    %421 = arith.truncf %420 : vector<64x128xf32> to vector<64x128xbf16>
    %c0_171 = arith.constant 0 : index
    %c0_172 = arith.constant 0 : index
    %422 = vector.load %arg13[%c0_171, %c0_172] : memref<128x128xbf16, #tpu.memory_space<vmem>>, vector<128x128xbf16>
    %cst_173 = arith.constant dense<0.000000e+00> : vector<64x128xf32>
    %423 = tpu.matmul %421, %422, %cst_173 {dimension_numbers = #tpu.dot_dimension_numbers<[1], [0], [0], [1], [0, 0, 1, 1], [], []>} : vector<64x128xbf16>, vector<128x128xbf16>, vector<64x128xf32> -> vector<64x128xf32>
    %c0_174 = arith.constant 0 : index
    %c0_175 = arith.constant 0 : index
    %424 = vector.load %arg14[%c0_174, %c0_175] : memref<1x128xf32, #tpu.memory_space<vmem>>, vector<1x128xf32>
    %425 = vector.broadcast %424 : vector<1x128xf32> to vector<64x128xf32>
    %426 = arith.addf %423, %425 : vector<64x128xf32>
    %cst_176 = arith.constant 0.00999999977 : f32
    %427 = vector.broadcast %cst_176 : f32 to vector<64x128xf32>
    %428 = arith.mulf %427, %426 : vector<64x128xf32>
    %429 = arith.maximumf %426, %428 : vector<64x128xf32>
    %430 = arith.truncf %429 : vector<64x128xf32> to vector<64x128xbf16>
    %c0_177 = arith.constant 0 : index
    %c0_178 = arith.constant 0 : index
    %431 = vector.load %arg15[%c0_177, %c0_178] : memref<128x128xbf16, #tpu.memory_space<vmem>>, vector<128x128xbf16>
    %cst_179 = arith.constant dense<0.000000e+00> : vector<64x128xf32>
    %432 = tpu.matmul %430, %431, %cst_179 {dimension_numbers = #tpu.dot_dimension_numbers<[1], [0], [0], [1], [0, 0, 1, 1], [], []>} : vector<64x128xbf16>, vector<128x128xbf16>, vector<64x128xf32> -> vector<64x128xf32>
    %c0_180 = arith.constant 0 : index
    %c0_181 = arith.constant 0 : index
    %433 = vector.load %arg16[%c0_180, %c0_181] : memref<1x128xf32, #tpu.memory_space<vmem>>, vector<1x128xf32>
    %434 = vector.broadcast %433 : vector<1x128xf32> to vector<64x128xf32>
    %435 = arith.addf %432, %434 : vector<64x128xf32>
    %436 = arith.mulf %435, %435 : vector<64x128xf32>
    %cst_182 = arith.constant dense<0.000000e+00> : vector<64xf32>
    %437 = vector.multi_reduction <add>, %436, %cst_182 [1] : vector<64x128xf32> to vector<64xf32>
    %438 = vector.shape_cast %437 : vector<64xf32> to vector<64x1xf32>
    %cst_183 = arith.constant 1.000000e-24 : f32
    %439 = vector.broadcast %cst_183 : f32 to vector<64x1xf32>
    %440 = arith.maximumf %438, %439 : vector<64x1xf32>
    %441 = math.rsqrt %440 : vector<64x1xf32>
    %442 = vector.broadcast %441 : vector<64x1xf32> to vector<64x128xf32>
    %443 = arith.mulf %435, %442 : vector<64x128xf32>
    %c0_184 = arith.constant 0 : index
    %c0_185 = arith.constant 0 : index
    %444 = vector.load %arg17[%c0_184, %c0_185] : memref<64x128xf32, #tpu.memory_space<vmem>>, vector<64x128xf32>
    tpu.vector_store %arg17[%c0_184, %c0_185], %443 {strides = array<i32>} : memref<64x128xf32, #tpu.memory_space<vmem>>, vector<64x128xf32>,
    return
  }
  func.func @transform_0(%arg0: i32) -> (i32, i32) {
    %c0_i32 = arith.constant 0 : i32
    %c0_i32_0 = arith.constant 0 : i32
    return %arg0, %c0_i32 : i32, i32
  }
  func.func @transform_1(%arg0: i32) -> (i32, i32, i32) {
    %c0_i32 = arith.constant 0 : i32
    %c0_i32_0 = arith.constant 0 : i32
    %c0_i32_1 = arith.constant 0 : i32
    %c0_i32_2 = arith.constant 0 : i32
    return %c0_i32, %c0_i32_0, %c0_i32_1 : i32, i32, i32
  }
  func.func @transform_2(%arg0: i32) -> (i32, i32, i32) {
    %c0_i32 = arith.constant 0 : i32
    %c0_i32_0 = arith.constant 0 : i32
    %c0_i32_1 = arith.constant 0 : i32
    %c0_i32_2 = arith.constant 0 : i32
    return %c0_i32, %c0_i32_0, %c0_i32_1 : i32, i32, i32
  }
  func.func @transform_3(%arg0: i32) -> (i32, i32) {
    %c0_i32 = arith.constant 0 : i32
    %c0_i32_0 = arith.constant 0 : i32
    %c0_i32_1 = arith.constant 0 : i32
    return %c0_i32, %c0_i32_0 : i32, i32
  }
  func.func @transform_4(%arg0: i32) -> (i32, i32) {
    %c0_i32 = arith.constant 0 : i32
    %c0_i32_0 = arith.constant 0 : i32
    %c0_i32_1 = arith.constant 0 : i32
    return %c0_i32, %c0_i32_0 : i32, i32
  }
  func.func @transform_5(%arg0: i32) -> (i32, i32) {
    %c0_i32 = arith.constant 0 : i32
    %c0_i32_0 = arith.constant 0 : i32
    %c0_i32_1 = arith.constant 0 : i32
    return %c0_i32, %c0_i32_0 : i32, i32
  }
  func.func @transform_6(%arg0: i32) -> (i32, i32) {
    %c0_i32 = arith.constant 0 : i32
    %c0_i32_0 = arith.constant 0 : i32
    %c0_i32_1 = arith.constant 0 : i32
    return %c0_i32, %c0_i32_0 : i32, i32
  }
  func.func @transform_7(%arg0: i32) -> (i32, i32) {
    %c0_i32 = arith.constant 0 : i32
    %c0_i32_0 = arith.constant 0 : i32
    %c0_i32_1 = arith.constant 0 : i32
    return %c0_i32, %c0_i32_0 : i32, i32
  }
  func.func @transform_8(%arg0: i32) -> (i32, i32) {
    %c0_i32 = arith.constant 0 : i32
    %c0_i32_0 = arith.constant 0 : i32
    %c0_i32_1 = arith.constant 0 : i32
    return %c0_i32, %c0_i32_0 : i32, i32
  }
  func.func @transform_9(%arg0: i32) -> (i32, i32) {
    %c0_i32 = arith.constant 0 : i32
    %c0_i32_0 = arith.constant 0 : i32
    %c0_i32_1 = arith.constant 0 : i32
    return %c0_i32, %c0_i32_0 : i32, i32
  }
  func.func @transform_10(%arg0: i32) -> (i32, i32) {
    %c0_i32 = arith.constant 0 : i32
    %c0_i32_0 = arith.constant 0 : i32
    %c0_i32_1 = arith.constant 0 : i32
    return %c0_i32, %c0_i32_0 : i32, i32
  }
  func.func @transform_11(%arg0: i32) -> (i32, i32) {
    %c0_i32 = arith.constant 0 : i32
    %c0_i32_0 = arith.constant 0 : i32
    %c0_i32_1 = arith.constant 0 : i32
    return %c0_i32, %c0_i32_0 : i32, i32
  }
  func.func @transform_12(%arg0: i32) -> (i32, i32) {
    %c0_i32 = arith.constant 0 : i32
    %c0_i32_0 = arith.constant 0 : i32
    %c0_i32_1 = arith.constant 0 : i32
    return %c0_i32, %c0_i32_0 : i32, i32
  }
  func.func @transform_13(%arg0: i32) -> (i32, i32) {
    %c0_i32 = arith.constant 0 : i32
    %c0_i32_0 = arith.constant 0 : i32
    %c0_i32_1 = arith.constant 0 : i32
    return %c0_i32, %c0_i32_0 : i32, i32
  }
  func.func @transform_14(%arg0: i32) -> (i32, i32) {
    %c0_i32 = arith.constant 0 : i32
    %c0_i32_0 = arith.constant 0 : i32
    %c0_i32_1 = arith.constant 0 : i32
    return %c0_i32, %c0_i32_0 : i32, i32
  }
  func.func @transform_15(%arg0: i32) -> (i32, i32) {
    %c0_i32 = arith.constant 0 : i32
    %c0_i32_0 = arith.constant 0 : i32
    %c0_i32_1 = arith.constant 0 : i32
    return %c0_i32, %c0_i32_0 : i32, i32
  }
  func.func @transform_16(%arg0: i32) -> (i32, i32) {
    %c0_i32 = arith.constant 0 : i32
    %c0_i32_0 = arith.constant 0 : i32
    return %arg0, %c0_i32 : i32, i32
  }
  func.func @transform_17(%arg0: i32) -> (i32, i32, i32) {
    %c0_i32 = arith.constant 0 : i32
    %c0_i32_0 = arith.constant 0 : i32
    %c0_i32_1 = arith.constant 0 : i32
    %c0_i32_2 = arith.constant 0 : i32
    return %c0_i32, %c0_i32_0, %c0_i32_1 : i32, i32, i32
  }
  func.func @transform_18(%arg0: i32) -> (i32, i32, i32) {
    %c0_i32 = arith.constant 0 : i32
    %c0_i32_0 = arith.constant 0 : i32
    %c0_i32_1 = arith.constant 0 : i32
    %c0_i32_2 = arith.constant 0 : i32
    return %c0_i32, %c0_i32_0, %c0_i32_1 : i32, i32, i32
  }
}

</mosaic_0001>

<llo_original>
// kernel: stateful_key_orthogonalizer_sequence.1
$region0: #{stateful_key_orthogonalizer_sequence.1}
  #allocation0 [shape = 'u32[]', space=smem, size = 0x4, offset = 0x4, fixed_abs, tag = 'smem constant byte address 0x4 - core index']
  #allocation1 [shape = 'u32[144,128]{1,0:T(1,128)}', space=vmem, size = 0x12000, scoped, tag = 'internal scratch']
  #allocation2 [shape = 'f32[64,512]{1,0:T(8,128)}', space=vmem, size = 0x20000, scoped, tag = 'scratch operand']
  #allocation3 [shape = 'f32[64,128]{1,0:T(8,128)}', space=vmem, size = 0x8000, scoped, tag = 'scratch operand']
  %s0 = inlined_call_operand.vmem [shape: f32[64,128], index: 0, kind: input, shape index: {}]
  %s1 = inlined_call_operand.vmem [shape: f32[2,8,128], index: 1, kind: input, shape index: {}, may-alias: {1,17}]
  %s2 = inlined_call_operand.vmem [shape: f32[2,8,128], index: 2, kind: input, shape index: {}, may-alias: {2,18}]
  %s3 = inlined_call_operand.hbm [shape: bf16[128,512], index: 3, kind: input, shape index: {}]
  %s4 = inlined_call_operand.hbm [shape: bf16[128,512], index: 4, kind: input, shape index: {}]
  %s5 = inlined_call_operand.hbm [shape: f32[1,512], index: 5, kind: input, shape index: {}]
  %s6 = inlined_call_operand.hbm [shape: bf16[128,512], index: 6, kind: input, shape index: {}]
  %s7 = inlined_call_operand.hbm [shape: bf16[128,512], index: 7, kind: input, shape index: {}]
  %s8 = inlined_call_operand.hbm [shape: f32[1,512], index: 8, kind: input, shape index: {}]
  %s9 = inlined_call_operand.vmem [shape: bf16[128,128], index: 9, kind: input, shape index: {}]
  %s10 = inlined_call_operand.vmem [shape: bf16[128,128], index: 10, kind: input, shape index: {}]
  %s11 = inlined_call_operand.vmem [shape: f32[1,128], index: 11, kind: input, shape index: {}]
  %s12 = inlined_call_operand.vmem [shape: bf16[128,128], index: 12, kind: input, shape index: {}]
  %s13 = inlined_call_operand.vmem [shape: f32[1,128], index: 13, kind: input, shape index: {}]
  %s14 = inlined_call_operand.hbm [shape: bf16[128,128], index: 14, kind: input, shape index: {}]
  %s15 = inlined_call_operand.hbm [shape: f32[1,128], index: 15, kind: input, shape index: {}]
  %s16 = inlined_call_operand.hbm [shape: f32[64,128], index: 16, kind: output, shape index: {0}]
  %s17 = inlined_call_operand.vmem [shape: f32[2,8,128], index: 17, kind: output, shape index: {1}, may-alias: {1,17}]
  %s18 = inlined_call_operand.vmem [shape: f32[2,8,128], index: 18, kind: output, shape index: {2}, may-alias: {2,18}]
  %19 = xla_tuple %s16, %s17, %s18
  %s20 = sld [smem:[#allocation0]]
  $region126: #{stateful_key_orthogonalizer_sequence.1} parent=0
    _
  %s22 = ssub.s32 1, %s20
  %s23 = scalar_select 0, %s22, %s20
  $region1: #{stateful_key_orthogonalizer_sequence.1} parent=0
    #allocation4 [shape = 'u8[131072]{0}', space=vmem, size = 0x20000, scoped, tag = 'input window, operand 3, single buffered']
    #allocation5 [shape = 's32[1]{0}', space=sflag, size = 0x4, scoped, tag = 'scoped memory for stateful_key_orthogonalizer_sequence.1']
    #allocation6 [shape = 's32[1]{0}', space=sflag, size = 0x4, scoped, tag = 'scoped memory for stateful_key_orthogonalizer_sequence.1']
    #allocation7 [shape = 'u8[131072]{0}', space=vmem, size = 0x20000, scoped, tag = 'input window, operand 4, single buffered']
    #allocation8 [shape = 's32[1]{0}', space=sflag, size = 0x4, scoped, tag = 'scoped memory for stateful_key_orthogonalizer_sequence.1']
    #allocation9 [shape = 'u8[2048]{0}', space=vmem, size = 0x800, scoped, tag = 'input window, operand 5, single buffered']
    #allocation10 [shape = 'u8[131072]{0}', space=vmem, size = 0x20000, scoped, tag = 'input window, operand 6, single buffered']
    #allocation11 [shape = 's32[1]{0}', space=sflag, size = 0x4, scoped, tag = 'scoped memory for stateful_key_orthogonalizer_sequence.1']
    #allocation12 [shape = 'u8[131072]{0}', space=vmem, size = 0x20000, scoped, tag = 'input window, operand 7, single buffered']
    #allocation13 [shape = 'u8[2048]{0}', space=vmem, size = 0x800, scoped, tag = 'input window, operand 8, single buffered']
    #allocation14 [shape = 's32[1]{0}', space=sflag, size = 0x4, scoped, tag = 'scoped memory for stateful_key_orthogonalizer_sequence.1']
    #allocation15 [shape = 'u8[32768]{0}', space=vmem, size = 0x8000, scoped, tag = 'input window, operand 14, single buffered']
    #allocation16 [shape = 'u8[512]{0}', space=vmem, size = 0x400, scoped, tag = 'input window, operand 15, single buffered']
    #allocation17 [shape = 's32[1]{0}', space=sflag, size = 0x4, scoped, tag = 'scoped memory for stateful_key_orthogonalizer_sequence.1']
    #allocation18 [shape = 'u8[32768]{0}', space=vmem, size = 0x8000, scoped, tag = 'output window, operand 0, single buffered']
    %24 = vsyncpa [#allocation5], 0
    %25 = vsyncpa [#allocation8], 0
    %26 = vsyncpa [#allocation11], 0
    %27 = vsyncpa [#allocation14], 0
    %28 = vsyncpa [#allocation17], 0
    %29 = vsyncpa [#allocation6], 0
    // Predicated region
    $region2: #{stateful_key_orthogonalizer_sequence.1} parent=1 // pred_check
      _
    $region3: #{stateful_key_orthogonalizer_sequence.1} parent=1 // pred_check_branch
      %31 = sbr.rel (0) target = $region5
    $region4: #{stateful_key_orthogonalizer_sequence.1} parent=1 // pred_region
      _
    $region5: #{stateful_key_orthogonalizer_sequence.1} parent=1 // pred_fallthru
      _
    // Predicated region
    $region6: #{stateful_key_orthogonalizer_sequence.1} parent=1 // pred_check
      _
    $region7: #{stateful_key_orthogonalizer_sequence.1} parent=1 // pred_check_branch
      %33 = sbr.rel (0) target = $region9
    $region8: #{stateful_key_orthogonalizer_sequence.1} parent=1 // pred_region
      _
    $region9: #{stateful_key_orthogonalizer_sequence.1} parent=1 // pred_fallthru
      _
    // Predicated region
    $region10: #{stateful_key_orthogonalizer_sequence.1} parent=1 // pred_check
      _
    $region11: #{stateful_key_orthogonalizer_sequence.1} parent=1 // pred_check_branch
      %35 = sbr.rel (0) target = $region13
    $region12: #{stateful_key_orthogonalizer_sequence.1} parent=1 // pred_region
      _
    $region13: #{stateful_key_orthogonalizer_sequence.1} parent=1 // pred_fallthru
      _
    // Predicated region
    $region14: #{stateful_key_orthogonalizer_sequence.1} parent=1 // pred_check
      _
    $region15: #{stateful_key_orthogonalizer_sequence.1} parent=1 // pred_check_branch
      %37 = sbr.rel (0) target = $region17
    $region16: #{stateful_key_orthogonalizer_sequence.1} parent=1 // pred_region
      %s39 = ssub.s32 4096, 4096
      %40 = vsyncadd [#allocation5], %s39
      %s41 = sshll.u32 [#allocation4], 4
      %s42 = int_to_ptr.vmem [resolvable:$true] %s41
      %47 = dma.hbm_to_vmem [thread:$0]  %s3, 4096, %s42, [#allocation5], 256, 256, 16
    $region17: #{stateful_key_orthogonalizer_sequence.1} parent=1 // pred_fallthru
      _
    // Predicated region
    $region18: #{stateful_key_orthogonalizer_sequence.1} parent=1 // pred_check
      _
    $region19: #{stateful_key_orthogonalizer_sequence.1} parent=1 // pred_check_branch
      %49 = sbr.rel (0) target = $region21
    $region20: #{stateful_key_orthogonalizer_sequence.1} parent=1 // pred_region
      %s51 = ssub.s32 4096, 4096
      %52 = vsyncadd [#allocation8], %s51
      %s53 = sshll.u32 [#allocation7], 4
      %s54 = int_to_ptr.vmem [resolvable:$true] %s53
      %59 = dma.hbm_to_vmem [thread:$0]  %s4, 4096, %s54, [#allocation8], 256, 256, 16
    $region21: #{stateful_key_orthogonalizer_sequence.1} parent=1 // pred_fallthru
      _
    // Predicated region
    $region22: #{stateful_key_orthogonalizer_sequence.1} parent=1 // pred_check
      _
    $region23: #{stateful_key_orthogonalizer_sequence.1} parent=1 // pred_check_branch
      %61 = sbr.rel (0) target = $region25
    $region24: #{stateful_key_orthogonalizer_sequence.1} parent=1 // pred_region
      %s63 = ssub.s32 64, 64
      %64 = vsyncadd [#allocation8], %s63
      %s66 = sshll.u32 [#allocation9], 4
      %s67 = int_to_ptr.vmem [resolvable:$true] %s66
      %69 = dma.hbm_to_vmem [thread:$0]  %s5, 64, %s67, [#allocation8]
    $region25: #{stateful_key_orthogonalizer_sequence.1} parent=1 // pred_fallthru
      _
    // Predicated region
    $region26: #{stateful_key_orthogonalizer_sequence.1} parent=1 // pred_check
      _
    $region27: #{stateful_key_orthogonalizer_sequence.1} parent=1 // pred_check_branch
      %71 = sbr.rel (0) target = $region29
    $region28: #{stateful_key_orthogonalizer_sequence.1} parent=1 // pred_region
      %s73 = ssub.s32 4096, 4096
      %74 = vsyncadd [#allocation11], %s73
      %s75 = sshll.u32 [#allocation10], 4
      %s76 = int_to_ptr.vmem [resolvable:$true] %s75
      %81 = dma.hbm_to_vmem [thread:$0]  %s6, 4096, %s76, [#allocation11], 256, 256, 16
    $region29: #{stateful_key_orthogonalizer_sequence.1} parent=1 // pred_fallthru
      _
    // Predicated region
    $region30: #{stateful_key_orthogonalizer_sequence.1} parent=1 // pred_check
      _
    $region31: #{stateful_key_orthogonalizer_sequence.1} parent=1 // pred_check_branch
      %83 = sbr.rel (0) target = $region33
    $region32: #{stateful_key_orthogonalizer_sequence.1} parent=1 // pred_region
      %s85 = ssub.s32 4096, 4096
      %86 = vsyncadd [#allocation11], %s85
      %s87 = sshll.u32 [#allocation12], 4
      %s88 = int_to_ptr.vmem [resolvable:$true] %s87
      %93 = dma.hbm_to_vmem [thread:$0]  %s7, 4096, %s88, [#allocation11], 256, 256, 16
    $region33: #{stateful_key_orthogonalizer_sequence.1} parent=1 // pred_fallthru
      _
    // Predicated region
    $region34: #{stateful_key_orthogonalizer_sequence.1} parent=1 // pred_check
      _
    $region35: #{stateful_key_orthogonalizer_sequence.1} parent=1 // pred_check_branch
      %95 = sbr.rel (0) target = $region37
    $region36: #{stateful_key_orthogonalizer_sequence.1} parent=1 // pred_region
      %s97 = ssub.s32 64, 64
      %98 = vsyncadd [#allocation14], %s97
      %s100 = sshll.u32 [#allocation13], 4
      %s101 = int_to_ptr.vmem [resolvable:$true] %s100
      %103 = dma.hbm_to_vmem [thread:$0]  %s8, 64, %s101, [#allocation14]
    $region37: #{stateful_key_orthogonalizer_sequence.1} parent=1 // pred_fallthru
      _
    // Predicated region
    $region38: #{stateful_key_orthogonalizer_sequence.1} parent=1 // pred_check
      _
    $region39: #{stateful_key_orthogonalizer_sequence.1} parent=1 // pred_check_branch
      %105 = sbr.rel (0) target = $region41
    $region40: #{stateful_key_orthogonalizer_sequence.1} parent=1 // pred_region
      _
    $region41: #{stateful_key_orthogonalizer_sequence.1} parent=1 // pred_fallthru
      _
    // Predicated region
    $region42: #{stateful_key_orthogonalizer_sequence.1} parent=1 // pred_check
      _
    $region43: #{stateful_key_orthogonalizer_sequence.1} parent=1 // pred_check_branch
      %107 = sbr.rel (0) target = $region45
    $region44: #{stateful_key_orthogonalizer_sequence.1} parent=1 // pred_region
      _
    $region45: #{stateful_key_orthogonalizer_sequence.1} parent=1 // pred_fallthru
      _
    // Predicated region
    $region46: #{stateful_key_orthogonalizer_sequence.1} parent=1 // pred_check
      _
    $region47: #{stateful_key_orthogonalizer_sequence.1} parent=1 // pred_check_branch
      %109 = sbr.rel (0) target = $region49
    $region48: #{stateful_key_orthogonalizer_sequence.1} parent=1 // pred_region
      _
    $region49: #{stateful_key_orthogonalizer_sequence.1} parent=1 // pred_fallthru
      _
    // Predicated region
    $region50: #{stateful_key_orthogonalizer_sequence.1} parent=1 // pred_check
      _
    $region51: #{stateful_key_orthogonalizer_sequence.1} parent=1 // pred_check_branch
      %111 = sbr.rel (0) target = $region53
    $region52: #{stateful_key_orthogonalizer_sequence.1} parent=1 // pred_region
      _
    $region53: #{stateful_key_orthogonalizer_sequence.1} parent=1 // pred_fallthru
      _
    // Predicated region
    $region54: #{stateful_key_orthogonalizer_sequence.1} parent=1 // pred_check
      _
    $region55: #{stateful_key_orthogonalizer_sequence.1} parent=1 // pred_check_branch
      %113 = sbr.rel (0) target = $region57
    $region56: #{stateful_key_orthogonalizer_sequence.1} parent=1 // pred_region
      _
    $region57: #{stateful_key_orthogonalizer_sequence.1} parent=1 // pred_fallthru
      _
    // Predicated region
    $region58: #{stateful_key_orthogonalizer_sequence.1} parent=1 // pred_check
      _
    $region59: #{stateful_key_orthogonalizer_sequence.1} parent=1 // pred_check_branch
      %115 = sbr.rel (0) target = $region61
    $region60: #{stateful_key_orthogonalizer_sequence.1} parent=1 // pred_region
      %s117 = ssub.s32 1024, 1024
      %118 = vsyncadd [#allocation14], %s117
      %s119 = sshll.u32 [#allocation15], 4
      %s120 = int_to_ptr.vmem [resolvable:$true] %s119
      %125 = dma.hbm_to_vmem [thread:$0]  %s14, 1024, %s120, [#allocation14], 64, 64, 4
    $region61: #{stateful_key_orthogonalizer_sequence.1} parent=1 // pred_fallthru
      _
    // Predicated region
    $region62: #{stateful_key_orthogonalizer_sequence.1} parent=1 // pred_check
      _
    $region63: #{stateful_key_orthogonalizer_sequence.1} parent=1 // pred_check_branch
      %127 = sbr.rel (0) target = $region65
    $region64: #{stateful_key_orthogonalizer_sequence.1} parent=1 // pred_region
      %s129 = ssub.s32 16, 16
      %130 = vsyncadd [#allocation17], %s129
      %s132 = sshll.u32 [#allocation16], 4
      %s133 = int_to_ptr.vmem [resolvable:$true] %s132
      %135 = dma.hbm_to_vmem [thread:$0]  %s15, 16, %s133, [#allocation17]
    $region65: #{stateful_key_orthogonalizer_sequence.1} parent=1 // pred_fallthru
      _
    // Predicated region
    $region66: #{stateful_key_orthogonalizer_sequence.1} parent=1 // pred_check
      _
    $region67: #{stateful_key_orthogonalizer_sequence.1} parent=1 // pred_check_branch
      %137 = sbr.rel (0) target = $region69
    $region68: #{stateful_key_orthogonalizer_sequence.1} parent=1 // pred_region
      %138 = dma.done [#allocation5], 4096
    $region69: #{stateful_key_orthogonalizer_sequence.1} parent=1 // pred_fallthru
      _
    // Predicated region
    $region70: #{stateful_key_orthogonalizer_sequence.1} parent=1 // pred_check
      _
    $region71: #{stateful_key_orthogonalizer_sequence.1} parent=1 // pred_check_branch
      %140 = sbr.rel (0) target = $region73
    $region72: #{stateful_key_orthogonalizer_sequence.1} parent=1 // pred_region
      %141 = dma.done [#allocation8], 4096
    $region73: #{stateful_key_orthogonalizer_sequence.1} parent=1 // pred_fallthru
      _
    // Predicated region
    $region74: #{stateful_key_orthogonalizer_sequence.1} parent=1 // pred_check
      _
    $region75: #{stateful_key_orthogonalizer_sequence.1} parent=1 // pred_check_branch
      %143 = sbr.rel (0) target = $region77
    $region76: #{stateful_key_orthogonalizer_sequence.1} parent=1 // pred_region
      %144 = dma.done [#allocation8], 64
    $region77: #{stateful_key_orthogonalizer_sequence.1} parent=1 // pred_fallthru
      _
    // Predicated region
    $region78: #{stateful_key_orthogonalizer_sequence.1} parent=1 // pred_check
      _
    $region79: #{stateful_key_orthogonalizer_sequence.1} parent=1 // pred_check_branch
      %146 = sbr.rel (0) target = $region81
    $region80: #{stateful_key_orthogonalizer_sequence.1} parent=1 // pred_region
      %147 = dma.done [#allocation11], 4096
    $region81: #{stateful_key_orthogonalizer_sequence.1} parent=1 // pred_fallthru
      _
    // Predicated region
    $region82: #{stateful_key_orthogonalizer_sequence.1} parent=1 // pred_check
      _
    $region83: #{stateful_key_orthogonalizer_sequence.1} parent=1 // pred_check_branch
      %149 = sbr.rel (0) target = $region85
    $region84: #{stateful_key_orthogonalizer_sequence.1} parent=1 // pred_region
      %150 = dma.done [#allocation11], 4096
    $region85: #{stateful_key_orthogonalizer_sequence.1} parent=1 // pred_fallthru
      _
    // Predicated region
    $region86: #{stateful_key_orthogonalizer_sequence.1} parent=1 // pred_check
      _
    $region87: #{stateful_key_orthogonalizer_sequence.1} parent=1 // pred_check_branch
      %152 = sbr.rel (0) target = $region89
    $region88: #{stateful_key_orthogonalizer_sequence.1} parent=1 // pred_region
      %153 = dma.done [#allocation14], 64
    $region89: #{stateful_key_orthogonalizer_sequence.1} parent=1 // pred_fallthru
      _
    // Predicated region
    $region90: #{stateful_key_orthogonalizer_sequence.1} parent=1 // pred_check
      _
    $region91: #{stateful_key_orthogonalizer_sequence.1} parent=1 // pred_check_branch
      %155 = sbr.rel (0) target = $region93
    $region92: #{stateful_key_orthogonalizer_sequence.1} parent=1 // pred_region
      %156 = dma.done [#allocation14], 1024
    $region93: #{stateful_key_orthogonalizer_sequence.1} parent=1 // pred_fallthru
      _
    // Predicated region
    $region94: #{stateful_key_orthogonalizer_sequence.1} parent=1 // pred_check
      _
    $region95: #{stateful_key_orthogonalizer_sequence.1} parent=1 // pred_check_branch
      %158 = sbr.rel (0) target = $region97
    $region96: #{stateful_key_orthogonalizer_sequence.1} parent=1 // pred_region
      %159 = dma.done [#allocation17], 16
    $region97: #{stateful_key_orthogonalizer_sequence.1} parent=1 // pred_fallthru
      _
    %p161 = scmp.eq.s32.totalorder 0, 0
    // Predicated region
    $region98: #{stateful_key_orthogonalizer_sequence.1} parent=1 // pred_check
      %p162 = pneg %p161
    $region99: #{stateful_key_orthogonalizer_sequence.1} parent=1 // pred_check_branch
      %164 = sbr.rel (%p162) target = $region101
    $region100: #{stateful_key_orthogonalizer_sequence.1} parent=1 // pred_region
      %v165 = vld [vmem:[%s1] sm:$0xff]
      %v166 = vld [vmem:[%s1 + $0x8] sm:$0xff]
      %167 = vst [vmem:[%s17] sm:$0xff] %v165
      %168 = vst [vmem:[%s17 + $0x8] sm:$0xff] %v166
      %v169 = vld [vmem:[%s2] sm:$0xff]
      %v170 = vld [vmem:[%s2 + $0x8] sm:$0xff]
      %171 = vst [vmem:[%s18] sm:$0xff] %v169
      %172 = vst [vmem:[%s18 + $0x8] sm:$0xff] %v170
    $region101: #{stateful_key_orthogonalizer_sequence.1} parent=1 // pred_fallthru
      _
    %v173 = vld [vmem:[%s0] sm:$0xff]
    %v174 = vld [vmem:[%s0 + $0x8] sm:$0xff]
    %v175 = vld [vmem:[%s0 + $0x10] sm:$0xff]
    %v176 = vld [vmem:[%s0 + $0x18] sm:$0xff]
    %v177 = vld [vmem:[%s0 + $0x20] sm:$0xff]
    %v178 = vld [vmem:[%s0 + $0x28] sm:$0xff]
    %v179 = vld [vmem:[%s0 + $0x30] sm:$0xff]
    %v180 = vld [vmem:[%s0 + $0x38] sm:$0xff]
    %v181 = vpack.c.bf16 %v174, %v173
    %v182 = vpack.c.bf16 %v176, %v175
    %v183 = vpack.c.bf16 %v178, %v177
    %v184 = vpack.c.bf16 %v180, %v179
    %v185 = vld [vmem:[#allocation4] sm:$0xff]
    %v186 = vld [vmem:[#allocation4 + $0x8] sm:$0xff]
    %v187 = vld [vmem:[#allocation4 + $0x10] sm:$0xff]
    %v188 = vld [vmem:[#allocation4 + $0x18] sm:$0xff]
    %v189 = vld [vmem:[#allocation4 + $0x20] sm:$0xff]
    %v190 = vld [vmem:[#allocation4 + $0x28] sm:$0xff]
    %v191 = vld [vmem:[#allocation4 + $0x30] sm:$0xff]
    %v192 = vld [vmem:[#allocation4 + $0x38] sm:$0xff]
    %v193 = vld [vmem:[#allocation4 + $0x40] sm:$0xff]
    %v194 = vld [vmem:[#allocation4 + $0x48] sm:$0xff]
    %v195 = vld [vmem:[#allocation4 + $0x50] sm:$0xff]
    %v196 = vld [vmem:[#allocation4 + $0x58] sm:$0xff]
    %v197 = vld [vmem:[#allocation4 + $0x60] sm:$0xff]
    %v198 = vld [vmem:[#allocation4 + $0x68] sm:$0xff]
    %v199 = vld [vmem:[#allocation4 + $0x70] sm:$0xff]
    %v200 = vld [vmem:[#allocation4 + $0x78] sm:$0xff]
    %v201 = vld [vmem:[#allocation4 + $0x80] sm:$0xff]
    %v202 = vld [vmem:[#allocation4 + $0x88] sm:$0xff]
    %v203 = vld [vmem:[#allocation4 + $0x90] sm:$0xff]
    %v204 = vld [vmem:[#allocation4 + $0x98] sm:$0xff]
    %v205 = vld [vmem:[#allocation4 + $0xa0] sm:$0xff]
    %v206 = vld [vmem:[#allocation4 + $0xa8] sm:$0xff]
    %v207 = vld [vmem:[#allocation4 + $0xb0] sm:$0xff]
    %v208 = vld [vmem:[#allocation4 + $0xb8] sm:$0xff]
    %v209 = vld [vmem:[#allocation4 + $0xc0] sm:$0xff]
    %v210 = vld [vmem:[#allocation4 + $0xc8] sm:$0xff]
    %v211 = vld [vmem:[#allocation4 + $0xd0] sm:$0xff]
    %v212 = vld [vmem:[#allocation4 + $0xd8] sm:$0xff]
    %v213 = vld [vmem:[#allocation4 + $0xe0] sm:$0xff]
    %v214 = vld [vmem:[#allocation4 + $0xe8] sm:$0xff]
    %v215 = vld [vmem:[#allocation4 + $0xf0] sm:$0xff]
    %v216 = vld [vmem:[#allocation4 + $0xf8] sm:$0xff]
    %v217 = vld [vmem:[#allocation9] sm:$0xf]
    %v219 = vlaneseq
    %v220 = vshrl.u32 %v219, 7
    %v221 = vsub.s32 0, %v220
    %v222 = vrot.slane %v217, %v221
    %v223 = vlaneseq
    %v224 = vshrl.u32 %v223, 7
    %v225 = vsub.s32 1, %v224
    %v226 = vrot.slane %v217, %v225
    %v227 = vlaneseq
    %v228 = vshrl.u32 %v227, 7
    %v229 = vsub.s32 2, %v228
    %v230 = vrot.slane %v217, %v229
    %v231 = vlaneseq
    %v232 = vshrl.u32 %v231, 7
    %v233 = vsub.s32 3, %v232
    %v234 = vrot.slane %v217, %v233
    %v271 = vunpack.c.l.b16 %v185
    %v272 = vunpack.c.h.b16 %v185
    %v273 = vunpack.c.l.b16 %v186
    %v274 = vunpack.c.h.b16 %v186
    %v275 = vunpack.c.l.b16 %v187
    %v276 = vunpack.c.h.b16 %v187
    %v277 = vunpack.c.l.b16 %v188
    %v278 = vunpack.c.h.b16 %v188
    %v279 = vunpack.c.l.b16 %v189
    %v280 = vunpack.c.h.b16 %v189
    %v281 = vunpack.c.l.b16 %v190
    %v282 = vunpack.c.h.b16 %v190
    %v283 = vunpack.c.l.b16 %v191
    %v284 = vunpack.c.h.b16 %v191
    %v285 = vunpack.c.l.b16 %v192
    %v286 = vunpack.c.h.b16 %v192
    %v287 = vunpack.c.l.b16 %v193
    %v288 = vunpack.c.h.b16 %v193
    %v289 = vunpack.c.l.b16 %v194
    %v290 = vunpack.c.h.b16 %v194
    %v291 = vunpack.c.l.b16 %v195
    %v292 = vunpack.c.h.b16 %v195
    %v293 = vunpack.c.l.b16 %v196
    %v294 = vunpack.c.h.b16 %v196
    %v295 = vunpack.c.l.b16 %v197
    %v296 = vunpack.c.h.b16 %v197
    %v297 = vunpack.c.l.b16 %v198
    %v298 = vunpack.c.h.b16 %v198
    %v299 = vunpack.c.l.b16 %v199
    %v300 = vunpack.c.h.b16 %v199
    %v301 = vunpack.c.l.b16 %v200
    %v302 = vunpack.c.h.b16 %v200
    %v303 = vunpack.c.l.b16 %v201
    %v304 = vunpack.c.h.b16 %v201
    %v305 = vunpack.c.l.b16 %v202
    %v306 = vunpack.c.h.b16 %v202
    %v307 = vunpack.c.l.b16 %v203
    %v308 = vunpack.c.h.b16 %v203
    %v309 = vunpack.c.l.b16 %v204
    %v310 = vunpack.c.h.b16 %v204
    %v311 = vunpack.c.l.b16 %v205
    %v312 = vunpack.c.h.b16 %v205
    %v313 = vunpack.c.l.b16 %v206
    %v314 = vunpack.c.h.b16 %v206
    %v315 = vunpack.c.l.b16 %v207
    %v316 = vunpack.c.h.b16 %v207
    %v317 = vunpack.c.l.b16 %v208
    %v318 = vunpack.c.h.b16 %v208
    %v319 = vunpack.c.l.b16 %v209
    %v320 = vunpack.c.h.b16 %v209
    %v321 = vunpack.c.l.b16 %v210
    %v322 = vunpack.c.h.b16 %v210
    %v323 = vunpack.c.l.b16 %v211
    %v324 = vunpack.c.h.b16 %v211
    %v325 = vunpack.c.l.b16 %v212
    %v326 = vunpack.c.h.b16 %v212
    %v327 = vunpack.c.l.b16 %v213
    %v328 = vunpack.c.h.b16 %v213
    %v329 = vunpack.c.l.b16 %v214
    %v330 = vunpack.c.h.b16 %v214
    %v331 = vunpack.c.l.b16 %v215
    %v332 = vunpack.c.h.b16 %v215
    %v333 = vunpack.c.l.b16 %v216
    %v334 = vunpack.c.h.b16 %v216
    %v335 = vpack.c.b16 %v275, %v271
    %v336 = vpack.c.b16 %v276, %v272
    %v337 = vpack.c.b16 %v277, %v273
    %v338 = vpack.c.b16 %v278, %v274
    %v339 = vpack.c.b16 %v283, %v279
    %v340 = vpack.c.b16 %v284, %v280
    %v341 = vpack.c.b16 %v285, %v281
    %v342 = vpack.c.b16 %v286, %v282
    %v343 = vpack.c.b16 %v291, %v287
    %v344 = vpack.c.b16 %v292, %v288
    %v345 = vpack.c.b16 %v293, %v289
    %v346 = vpack.c.b16 %v294, %v290
    %v347 = vpack.c.b16 %v299, %v295
    %v348 = vpack.c.b16 %v300, %v296
    %v349 = vpack.c.b16 %v301, %v297
    %v350 = vpack.c.b16 %v302, %v298
    %v351 = vpack.c.b16 %v307, %v303
    %v352 = vpack.c.b16 %v308, %v304
    %v353 = vpack.c.b16 %v309, %v305
    %v354 = vpack.c.b16 %v310, %v306
    %v355 = vpack.c.b16 %v315, %v311
    %v356 = vpack.c.b16 %v316, %v312
    %v357 = vpack.c.b16 %v317, %v313
    %v358 = vpack.c.b16 %v318, %v314
    %v359 = vpack.c.b16 %v323, %v319
    %v360 = vpack.c.b16 %v324, %v320
    %v361 = vpack.c.b16 %v325, %v321
    %v362 = vpack.c.b16 %v326, %v322
    %v363 = vpack.c.b16 %v331, %v327
    %v364 = vpack.c.b16 %v332, %v328
    %v365 = vpack.c.b16 %v333, %v329
    %v366 = vpack.c.b16 %v334, %v330
    %399 = vmatprep.subr.bf16.mxu0 %v336
    %400 = vmatpush1.bf16.msra.mxu0 %v335
    %401 = vmatprep.subr.bf16.mxu0 %v340
    %402 = vmatpush1.bf16.msra.mxu0 %v339
    %403 = vmatprep.subr.bf16.mxu0 %v344
    %404 = vmatpush1.bf16.msra.mxu0 %v343
    %405 = vmatprep.subr.bf16.mxu0 %v348
    %406 = vmatpush1.bf16.msra.mxu0 %v347
    %407 = vmatprep.subr.bf16.mxu0 %v352
    %408 = vmatpush1.bf16.msra.mxu0 %v351
    %409 = vmatprep.subr.bf16.mxu0 %v356
    %410 = vmatpush1.bf16.msra.mxu0 %v355
    %411 = vmatprep.subr.bf16.mxu0 %v360
    %412 = vmatpush1.bf16.msra.mxu0 %v359
    %413 = vmatprep.subr.bf16.mxu0 %v364
    %414 = vmatpush1.bf16.msra.mxu0 %v363
    %415 = vmatprep.subr.bf16.mxu0 0
    %416 = vmatpush1.bf16.msra.mxu0 0
    %417 = vmatprep.subr.bf16.mxu0 0
    %418 = vmatpush1.bf16.msra.mxu0 0
    %419 = vmatprep.subr.bf16.mxu0 0
    %420 = vmatpush1.bf16.msra.mxu0 0
    %421 = vmatprep.subr.bf16.mxu0 0
    %422 = vmatpush1.bf16.msra.mxu0 0
    %423 = vmatprep.subr.bf16.mxu0 0
    %424 = vmatpush1.bf16.msra.mxu0 0
    %425 = vmatprep.subr.bf16.mxu0 0
    %426 = vmatpush1.bf16.msra.mxu0 0
    %427 = vmatprep.subr.bf16.mxu0 0
    %428 = vmatpush1.bf16.msra.mxu0 0
    %429 = vmatprep.subr.bf16.mxu0 0
    %430 = vmatpush1.bf16.msra.mxu0 0
    %431 = vmatprep.mubr.bf16.mxu0 0
    %432 = vmatmul.mubr.bf16.gmra.mrb[0].mxu0 %v181
    %v433 = vpop.f32.mrb[0].mxu0
    %v434 = vadd.f32 %v222, %v433
    %v435 = vpop.f32.mrb[0].mxu0
    %v436 = vadd.f32 %v226, %v435
    %v437 = vpop.f32.mrb[0].mxu0
    %v438 = vadd.f32 %v222, %v437
    %v439 = vpop.f32.mrb[0].mxu0
    %v440 = vadd.f32 %v226, %v439
    %441 = vmatprep.mubr.bf16.mxu0 0
    %442 = vmatmul.mubr.bf16.gmra.mrb[0].mxu0 %v182
    %v443 = vpop.f32.mrb[0].mxu0
    %v444 = vadd.f32 %v222, %v443
    %v445 = vpop.f32.mrb[0].mxu0
    %v446 = vadd.f32 %v226, %v445
    %v447 = vpop.f32.mrb[0].mxu0
    %v448 = vadd.f32 %v222, %v447
    %v449 = vpop.f32.mrb[0].mxu0
    %v450 = vadd.f32 %v226, %v449
    %451 = vmatprep.mubr.bf16.mxu0 0
    %452 = vmatmul.mubr.bf16.gmra.mrb[0].mxu0 %v183
    %v453 = vpop.f32.mrb[0].mxu0
    %v454 = vadd.f32 %v222, %v453
    %v455 = vpop.f32.mrb[0].mxu0
    %v456 = vadd.f32 %v226, %v455
    %v457 = vpop.f32.mrb[0].mxu0
    %v458 = vadd.f32 %v222, %v457
    %v459 = vpop.f32.mrb[0].mxu0
    %v460 = vadd.f32 %v226, %v459
    %461 = vmatprep.mubr.bf16.mxu0 0
    %462 = vmatmul.mubr.bf16.gmra.mrb[0].mxu0 %v184
    %v463 = vpop.f32.mrb[0].mxu0
    %v464 = vadd.f32 %v222, %v463
    %v465 = vpop.f32.mrb[0].mxu0
    %v466 = vadd.f32 %v226, %v465
    %v467 = vpop.f32.mrb[0].mxu0
    %v468 = vadd.f32 %v222, %v467
    %v469 = vpop.f32.mrb[0].mxu0
    %v470 = vadd.f32 %v226, %v469
    %471 = vdwg.mxu0
    %472 = vmatprep.subr.bf16.mxu0 %v338
    %473 = vmatpush1.bf16.msra.mxu0 %v337
    %474 = vmatprep.subr.bf16.mxu0 %v342
    %475 = vmatpush1.bf16.msra.mxu0 %v341
    %476 = vmatprep.subr.bf16.mxu0 %v346
    %477 = vmatpush1.bf16.msra.mxu0 %v345
    %478 = vmatprep.subr.bf16.mxu0 %v350
    %479 = vmatpush1.bf16.msra.mxu0 %v349
    %480 = vmatprep.subr.bf16.mxu0 %v354
    %481 = vmatpush1.bf16.msra.mxu0 %v353
    %482 = vmatprep.subr.bf16.mxu0 %v358
    %483 = vmatpush1.bf16.msra.mxu0 %v357
    %484 = vmatprep.subr.bf16.mxu0 %v362
    %485 = vmatpush1.bf16.msra.mxu0 %v361
    %486 = vmatprep.subr.bf16.mxu0 %v366
    %487 = vmatpush1.bf16.msra.mxu0 %v365
    %488 = vmatprep.subr.bf16.mxu0 0
    %489 = vmatpush1.bf16.msra.mxu0 0
    %490 = vmatprep.subr.bf16.mxu0 0
    %491 = vmatpush1.bf16.msra.mxu0 0
    %492 = vmatprep.subr.bf16.mxu0 0
    %493 = vmatpush1.bf16.msra.mxu0 0
    %494 = vmatprep.subr.bf16.mxu0 0
    %495 = vmatpush1.bf16.msra.mxu0 0
    %496 = vmatprep.subr.bf16.mxu0 0
    %497 = vmatpush1.bf16.msra.mxu0 0
    %498 = vmatprep.subr.bf16.mxu0 0
    %499 = vmatpush1.bf16.msra.mxu0 0
    %500 = vmatprep.subr.bf16.mxu0 0
    %501 = vmatpush1.bf16.msra.mxu0 0
    %502 = vmatprep.subr.bf16.mxu0 0
    %503 = vmatpush1.bf16.msra.mxu0 0
    %504 = vmatprep.mubr.bf16.mxu0 0
    %505 = vmatmul.mubr.bf16.gmra.mrb[0].mxu0 %v181
    %v506 = vpop.f32.mrb[0].mxu0
    %v507 = vadd.f32 %v230, %v506
    %v508 = vpop.f32.mrb[0].mxu0
    %v509 = vadd.f32 %v234, %v508
    %v510 = vpop.f32.mrb[0].mxu0
    %v511 = vadd.f32 %v230, %v510
    %v512 = vpop.f32.mrb[0].mxu0
    %v513 = vadd.f32 %v234, %v512
    %514 = vmatprep.mubr.bf16.mxu0 0
    %515 = vmatmul.mubr.bf16.gmra.mrb[0].mxu0 %v182
    %v516 = vpop.f32.mrb[0].mxu0
    %v517 = vadd.f32 %v230, %v516
    %v518 = vpop.f32.mrb[0].mxu0
    %v519 = vadd.f32 %v234, %v518
    %v520 = vpop.f32.mrb[0].mxu0
    %v521 = vadd.f32 %v230, %v520
    %v522 = vpop.f32.mrb[0].mxu0
    %v523 = vadd.f32 %v234, %v522
    %524 = vmatprep.mubr.bf16.mxu0 0
    %525 = vmatmul.mubr.bf16.gmra.mrb[0].mxu0 %v183
    %v526 = vpop.f32.mrb[0].mxu0
    %v527 = vadd.f32 %v230, %v526
    %v528 = vpop.f32.mrb[0].mxu0
    %v529 = vadd.f32 %v234, %v528
    %v530 = vpop.f32.mrb[0].mxu0
    %v531 = vadd.f32 %v230, %v530
    %v532 = vpop.f32.mrb[0].mxu0
    %v533 = vadd.f32 %v234, %v532
    %534 = vmatprep.mubr.bf16.mxu0 0
    %535 = vmatmul.mubr.bf16.gmra.mrb[0].mxu0 %v184
    %v536 = vpop.f32.mrb[0].mxu0
    %v537 = vadd.f32 %v230, %v536
    %v538 = vpop.f32.mrb[0].mxu0
    %v539 = vadd.f32 %v234, %v538
    %v540 = vpop.f32.mrb[0].mxu0
    %v541 = vadd.f32 %v230, %v540
    %v542 = vpop.f32.mrb[0].mxu0
    %v543 = vadd.f32 %v234, %v542
    %544 = vdwg.mxu0
    %545 = vst [vmem:[#allocation2] sm:$0xff] %v434
    %546 = vst [vmem:[#allocation2 + $0x8] sm:$0xff] %v436
    %547 = vst [vmem:[#allocation2 + $0x10] sm:$0xff] %v507
    %548 = vst [vmem:[#allocation2 + $0x18] sm:$0xff] %v509
    %549 = vst [vmem:[#allocation2 + $0x20] sm:$0xff] %v438
    %550 = vst [vmem:[#allocation2 + $0x28] sm:$0xff] %v440
    %551 = vst [vmem:[#allocation2 + $0x30] sm:$0xff] %v511
    %552 = vst [vmem:[#allocation2 + $0x38] sm:$0xff] %v513
    %553 = vst [vmem:[#allocation2 + $0x40] sm:$0xff] %v444
    %554 = vst [vmem:[#allocation2 + $0x48] sm:$0xff] %v446
    %555 = vst [vmem:[#allocation2 + $0x50] sm:$0xff] %v517
    %556 = vst [vmem:[#allocation2 + $0x58] sm:$0xff] %v519
    %557 = vst [vmem:[#allocation2 + $0x60] sm:$0xff] %v448
    %558 = vst [vmem:[#allocation2 + $0x68] sm:$0xff] %v450
    %559 = vst [vmem:[#allocation2 + $0x70] sm:$0xff] %v521
    %560 = vst [vmem:[#allocation2 + $0x78] sm:$0xff] %v523
    %561 = vst [vmem:[#allocation2 + $0x80] sm:$0xff] %v454
    %562 = vst [vmem:[#allocation2 + $0x88] sm:$0xff] %v456
    %563 = vst [vmem:[#allocation2 + $0x90] sm:$0xff] %v527
    %564 = vst [vmem:[#allocation2 + $0x98] sm:$0xff] %v529
    %565 = vst [vmem:[#allocation2 + $0xa0] sm:$0xff] %v458
    %566 = vst [vmem:[#allocation2 + $0xa8] sm:$0xff] %v460
    %567 = vst [vmem:[#allocation2 + $0xb0] sm:$0xff] %v531
    %568 = vst [vmem:[#allocation2 + $0xb8] sm:$0xff] %v533
    %569 = vst [vmem:[#allocation2 + $0xc0] sm:$0xff] %v464
    %570 = vst [vmem:[#allocation2 + $0xc8] sm:$0xff] %v466
    %571 = vst [vmem:[#allocation2 + $0xd0] sm:$0xff] %v537
    %572 = vst [vmem:[#allocation2 + $0xd8] sm:$0xff] %v539
    %573 = vst [vmem:[#allocation2 + $0xe0] sm:$0xff] %v468
    %574 = vst [vmem:[#allocation2 + $0xe8] sm:$0xff] %v470
    %575 = vst [vmem:[#allocation2 + $0xf0] sm:$0xff] %v541
    %576 = vst [vmem:[#allocation2 + $0xf8] sm:$0xff] %v543
    %v577 = vld [vmem:[%s17] sm:$0xff]
    %v578 = vld [vmem:[%s18] sm:$0xff]
    %s579 = scalar_lea.vmem %s17, 8
    %v580 = vld [vmem:[%s579] sm:$0xff]
    %s581 = scalar_lea.vmem %s18, 8
    %v582 = vld [vmem:[%s581] sm:$0xff]
    %v583 = vpack.c.bf16 %v577, %v577
    %v584 = vpack.c.bf16 %v580, %v580
    %v585 = vld [vmem:[#allocation2] sm:$0xff]
    %v586 = vld [vmem:[#allocation2 + $0x8] sm:$0xff]
    %v587 = vld [vmem:[#allocation2 + $0x10] sm:$0xff]
    %v588 = vld [vmem:[#allocation2 + $0x18] sm:$0xff]
    %v589 = vld [vmem:[#allocation7] sm:$0xff]
    %v590 = vld [vmem:[#allocation7 + $0x8] sm:$0xff]
    %v591 = vld [vmem:[#allocation7 + $0x10] sm:$0xff]
    %v592 = vld [vmem:[#allocation7 + $0x18] sm:$0xff]
    %v593 = vld [vmem:[#allocation7 + $0x20] sm:$0xff]
    %v594 = vld [vmem:[#allocation7 + $0x28] sm:$0xff]
    %v595 = vld [vmem:[#allocation7 + $0x30] sm:$0xff]
    %v596 = vld [vmem:[#allocation7 + $0x38] sm:$0xff]
    %v597 = vld [vmem:[#allocation7 + $0x40] sm:$0xff]
    %v598 = vld [vmem:[#allocation7 + $0x48] sm:$0xff]
    %v599 = vld [vmem:[#allocation7 + $0x50] sm:$0xff]
    %v600 = vld [vmem:[#allocation7 + $0x58] sm:$0xff]
    %v601 = vld [vmem:[#allocation7 + $0x60] sm:$0xff]
    %v602 = vld [vmem:[#allocation7 + $0x68] sm:$0xff]
    %v603 = vld [vmem:[#allocation7 + $0x70] sm:$0xff]
    %v604 = vld [vmem:[#allocation7 + $0x78] sm:$0xff]
    %v605 = vld [vmem:[#allocation7 + $0x80] sm:$0xff]
    %v606 = vld [vmem:[#allocation7 + $0x88] sm:$0xff]
    %v607 = vld [vmem:[#allocation7 + $0x90] sm:$0xff]
    %v608 = vld [vmem:[#allocation7 + $0x98] sm:$0xff]
    %v609 = vld [vmem:[#allocation7 + $0xa0] sm:$0xff]
    %v610 = vld [vmem:[#allocation7 + $0xa8] sm:$0xff]
    %v611 = vld [vmem:[#allocation7 + $0xb0] sm:$0xff]
    %v612 = vld [vmem:[#allocation7 + $0xb8] sm:$0xff]
    %v613 = vld [vmem:[#allocation7 + $0xc0] sm:$0xff]
    %v614 = vld [vmem:[#allocation7 + $0xc8] sm:$0xff]
    %v615 = vld [vmem:[#allocation7 + $0xd0] sm:$0xff]
    %v616 = vld [vmem:[#allocation7 + $0xd8] sm:$0xff]
    %v617 = vld [vmem:[#allocation7 + $0xe0] sm:$0xff]
    %v618 = vld [vmem:[#allocation7 + $0xe8] sm:$0xff]
    %v619 = vld [vmem:[#allocation7 + $0xf0] sm:$0xff]
    %v620 = vld [vmem:[#allocation7 + $0xf8] sm:$0xff]
    %v653 = vunpack.c.l.b16 %v589
    %v654 = vunpack.c.h.b16 %v589
    %v655 = vunpack.c.l.b16 %v590
    %v656 = vunpack.c.h.b16 %v590
    %v657 = vunpack.c.l.b16 %v591
    %v658 = vunpack.c.h.b16 %v591
    %v659 = vunpack.c.l.b16 %v592
    %v660 = vunpack.c.h.b16 %v592
    %v661 = vunpack.c.l.b16 %v593
    %v662 = vunpack.c.h.b16 %v593
    %v663 = vunpack.c.l.b16 %v594
    %v664 = vunpack.c.h.b16 %v594
    %v665 = vunpack.c.l.b16 %v595
    %v666 = vunpack.c.h.b16 %v595
    %v667 = vunpack.c.l.b16 %v596
    %v668 = vunpack.c.h.b16 %v596
    %v669 = vunpack.c.l.b16 %v597
    %v670 = vunpack.c.h.b16 %v597
    %v671 = vunpack.c.l.b16 %v598
    %v672 = vunpack.c.h.b16 %v598
    %v673 = vunpack.c.l.b16 %v599
    %v674 = vunpack.c.h.b16 %v599
    %v675 = vunpack.c.l.b16 %v600
    %v676 = vunpack.c.h.b16 %v600
    %v677 = vunpack.c.l.b16 %v601
    %v678 = vunpack.c.h.b16 %v601
    %v679 = vunpack.c.l.b16 %v602
    %v680 = vunpack.c.h.b16 %v602
    %v681 = vunpack.c.l.b16 %v603
    %v682 = vunpack.c.h.b16 %v603
    %v683 = vunpack.c.l.b16 %v604
    %v684 = vunpack.c.h.b16 %v604
    %v685 = vunpack.c.l.b16 %v605
    %v686 = vunpack.c.h.b16 %v605
    %v687 = vunpack.c.l.b16 %v606
    %v688 = vunpack.c.h.b16 %v606
    %v689 = vunpack.c.l.b16 %v607
    %v690 = vunpack.c.h.b16 %v607
    %v691 = vunpack.c.l.b16 %v608
    %v692 = vunpack.c.h.b16 %v608
    %v693 = vunpack.c.l.b16 %v609
    %v694 = vunpack.c.h.b16 %v609
    %v695 = vunpack.c.l.b16 %v610
    %v696 = vunpack.c.h.b16 %v610
    %v697 = vunpack.c.l.b16 %v611
    %v698 = vunpack.c.h.b16 %v611
    %v699 = vunpack.c.l.b16 %v612
    %v700 = vunpack.c.h.b16 %v612
    %v701 = vunpack.c.l.b16 %v613
    %v702 = vunpack.c.h.b16 %v613
    %v703 = vunpack.c.l.b16 %v614
    %v704 = vunpack.c.h.b16 %v614
    %v705 = vunpack.c.l.b16 %v615
    %v706 = vunpack.c.h.b16 %v615
    %v707 = vunpack.c.l.b16 %v616
    %v708 = vunpack.c.h.b16 %v616
    %v709 = vunpack.c.l.b16 %v617
    %v710 = vunpack.c.h.b16 %v617
    %v711 = vunpack.c.l.b16 %v618
    %v712 = vunpack.c.h.b16 %v618
    %v713 = vunpack.c.l.b16 %v619
    %v714 = vunpack.c.h.b16 %v619
    %v715 = vunpack.c.l.b16 %v620
    %v716 = vunpack.c.h.b16 %v620
    %v717 = vpack.c.b16 %v657, %v653
    %v718 = vpack.c.b16 %v658, %v654
    %v719 = vpack.c.b16 %v659, %v655
    %v720 = vpack.c.b16 %v660, %v656
    %v721 = vpack.c.b16 %v665, %v661
    %v722 = vpack.c.b16 %v666, %v662
    %v723 = vpack.c.b16 %v667, %v663
    %v724 = vpack.c.b16 %v668, %v664
    %v725 = vpack.c.b16 %v673, %v669
    %v726 = vpack.c.b16 %v674, %v670
    %v727 = vpack.c.b16 %v675, %v671
    %v728 = vpack.c.b16 %v676, %v672
    %v729 = vpack.c.b16 %v681, %v677
    %v730 = vpack.c.b16 %v682, %v678
    %v731 = vpack.c.b16 %v683, %v679
    %v732 = vpack.c.b16 %v684, %v680
    %v733 = vpack.c.b16 %v689, %v685
    %v734 = vpack.c.b16 %v690, %v686
    %v735 = vpack.c.b16 %v691, %v687
    %v736 = vpack.c.b16 %v692, %v688
    %v737 = vpack.c.b16 %v697, %v693
    %v738 = vpack.c.b16 %v698, %v694
    %v739 = vpack.c.b16 %v699, %v695
    %v740 = vpack.c.b16 %v700, %v696
    %v741 = vpack.c.b16 %v705, %v701
    %v742 = vpack.c.b16 %v706, %v702
    %v743 = vpack.c.b16 %v707, %v703
    %v744 = vpack.c.b16 %v708, %v704
    %v745 = vpack.c.b16 %v713, %v709
    %v746 = vpack.c.b16 %v714, %v710
    %v747 = vpack.c.b16 %v715, %v711
    %v748 = vpack.c.b16 %v716, %v712
    %781 = vmatprep.subr.bf16.mxu0 %v718
    %782 = vmatpush1.bf16.msra.mxu0 %v717
    %783 = vmatprep.subr.bf16.mxu0 %v722
    %784 = vmatpush1.bf16.msra.mxu0 %v721
    %785 = vmatprep.subr.bf16.mxu0 %v726
    %786 = vmatpush1.bf16.msra.mxu0 %v725
    %787 = vmatprep.subr.bf16.mxu0 %v730
    %788 = vmatpush1.bf16.msra.mxu0 %v729
    %789 = vmatprep.subr.bf16.mxu0 %v734
    %790 = vmatpush1.bf16.msra.mxu0 %v733
    %791 = vmatprep.subr.bf16.mxu0 %v738
    %792 = vmatpush1.bf16.msra.mxu0 %v737
    %793 = vmatprep.subr.bf16.mxu0 %v742
    %794 = vmatpush1.bf16.msra.mxu0 %v741
    %795 = vmatprep.subr.bf16.mxu0 %v746
    %796 = vmatpush1.bf16.msra.mxu0 %v745
    %797 = vmatprep.subr.bf16.mxu0 0
    %798 = vmatpush1.bf16.msra.mxu0 0
    %799 = vmatprep.subr.bf16.mxu0 0
    %800 = vmatpush1.bf16.msra.mxu0 0
    %801 = vmatprep.subr.bf16.mxu0 0
    %802 = vmatpush1.bf16.msra.mxu0 0
    %803 = vmatprep.subr.bf16.mxu0 0
    %804 = vmatpush1.bf16.msra.mxu0 0
    %805 = vmatprep.subr.bf16.mxu0 0
    %806 = vmatpush1.bf16.msra.mxu0 0
    %807 = vmatprep.subr.bf16.mxu0 0
    %808 = vmatpush1.bf16.msra.mxu0 0
    %809 = vmatprep.subr.bf16.mxu0 0
    %810 = vmatpush1.bf16.msra.mxu0 0
    %811 = vmatprep.subr.bf16.mxu0 0
    %812 = vmatpush1.bf16.msra.mxu0 0
    %813 = vmatprep.mubr.bf16.mxu0 0
    %814 = vmatmul.mubr.bf16.gmra.mrb[0].mxu0 %v583
    %v815 = vpop.f32.mrb[0].mxu0
    %v816 = vadd.f32 0.0, %v815
    %v817 = vpop.f32.mrb[0].mxu0
    %v818 = vadd.f32 0.0, %v817
    %v819 = vpop.f32.mrb[0].mxu0
    %v820 = vpop.f32.mrb[0].mxu0
    %821 = vdwg.mxu0
    %822 = vmatprep.subr.bf16.mxu0 %v720
    %823 = vmatpush1.bf16.msra.mxu0 %v719
    %824 = vmatprep.subr.bf16.mxu0 %v724
    %825 = vmatpush1.bf16.msra.mxu0 %v723
    %826 = vmatprep.subr.bf16.mxu0 %v728
    %827 = vmatpush1.bf16.msra.mxu0 %v727
    %828 = vmatprep.subr.bf16.mxu0 %v732
    %829 = vmatpush1.bf16.msra.mxu0 %v731
    %830 = vmatprep.subr.bf16.mxu0 %v736
    %831 = vmatpush1.bf16.msra.mxu0 %v735
    %832 = vmatprep.subr.bf16.mxu0 %v740
    %833 = vmatpush1.bf16.msra.mxu0 %v739
    %834 = vmatprep.subr.bf16.mxu0 %v744
    %835 = vmatpush1.bf16.msra.mxu0 %v743
    %836 = vmatprep.subr.bf16.mxu0 %v748
    %837 = vmatpush1.bf16.msra.mxu0 %v747
    %838 = vmatprep.subr.bf16.mxu0 0
    %839 = vmatpush1.bf16.msra.mxu0 0
    %840 = vmatprep.subr.bf16.mxu0 0
    %841 = vmatpush1.bf16.msra.mxu0 0
    %842 = vmatprep.subr.bf16.mxu0 0
    %843 = vmatpush1.bf16.msra.mxu0 0
    %844 = vmatprep.subr.bf16.mxu0 0
    %845 = vmatpush1.bf16.msra.mxu0 0
    %846 = vmatprep.subr.bf16.mxu0 0
    %847 = vmatpush1.bf16.msra.mxu0 0
    %848 = vmatprep.subr.bf16.mxu0 0
    %849 = vmatpush1.bf16.msra.mxu0 0
    %850 = vmatprep.subr.bf16.mxu0 0
    %851 = vmatpush1.bf16.msra.mxu0 0
    %852 = vmatprep.subr.bf16.mxu0 0
    %853 = vmatpush1.bf16.msra.mxu0 0
    %854 = vmatprep.mubr.bf16.mxu0 0
    %855 = vmatmul.mubr.bf16.gmra.mrb[0].mxu0 %v583
    %v856 = vpop.f32.mrb[0].mxu0
    %v857 = vadd.f32 0.0, %v856
    %v858 = vpop.f32.mrb[0].mxu0
    %v859 = vadd.f32 0.0, %v858
    %v860 = vpop.f32.mrb[0].mxu0
    %v861 = vpop.f32.mrb[0].mxu0
    %862 = vdwg.mxu0
    %v863 = vadd.f32 %v585, %v816
    %v864 = vadd.f32 %v586, %v818
    %v865 = vadd.f32 %v587, %v857
    %v866 = vadd.f32 %v588, %v859
    %v867 = vxor.u32 %v863, 2147483648
    %v868 = vxor.u32 %v864, 2147483648
    %v869 = vxor.u32 %v865, 2147483648
    %v870 = vmul.f32 %v867, 1.442695
    %v871 = vpow.pop %v870
    %v872 = vmul.f32 %v868, 1.442695
    %v873 = vpow.pop %v872
    %v874 = vmul.f32 %v869, 1.442695
    %v875 = vpow.pop %v874
    %v876 = vadd.f32 %v871, 1.0
    %v877 = vadd.f32 %v873, 1.0
    %v878 = vadd.f32 %v875, 1.0
    %v879 = vrcp.pop %v876
    %v880 = vmul.f32 1.0, %v879
    %v881 = vrcp.pop %v877
    %v882 = vmul.f32 1.0, %v881
    %v883 = vrcp.pop %v878
    %v884 = vmul.f32 1.0, %v883
    %v885 = vtanh.pop %v866
    %v886 = vmul.f32 %v882, %v578
    %v887 = vmul.f32 %v880, %v885
    %v888 = vadd.f32 %v886, %v887
    %v889 = vtanh.pop %v888
    %v890 = vmul.f32 %v884, %v889
    %v891 = vpack.c.bf16 %v890, %v890
    %v892 = vld [vmem:[#allocation13] sm:$0xf]
    %v893 = vld [vmem:[#allocation10] sm:$0xff]
    %v894 = vld [vmem:[#allocation10 + $0x8] sm:$0xff]
    %v895 = vld [vmem:[#allocation10 + $0x10] sm:$0xff]
    %v896 = vld [vmem:[#allocation10 + $0x18] sm:$0xff]
    %v897 = vld [vmem:[#allocation10 + $0x20] sm:$0xff]
    %v898 = vld [vmem:[#allocation10 + $0x28] sm:$0xff]
    %v899 = vld [vmem:[#allocation10 + $0x30] sm:$0xff]
    %v900 = vld [vmem:[#allocation10 + $0x38] sm:$0xff]
    %v901 = vld [vmem:[#allocation10 + $0x40] sm:$0xff]
    %v902 = vld [vmem:[#allocation10 + $0x48] sm:$0xff]
    %v903 = vld [vmem:[#allocation10 + $0x50] sm:$0xff]
    %v904 = vld [vmem:[#allocation10 + $0x58] sm:$0xff]
    %v905 = vld [vmem:[#allocation10 + $0x60] sm:$0xff]
    %v906 = vld [vmem:[#allocation10 + $0x68] sm:$0xff]
    %v907 = vld [vmem:[#allocation10 + $0x70] sm:$0xff]
    %v908 = vld [vmem:[#allocation10 + $0x78] sm:$0xff]
    %v909 = vld [vmem:[#allocation10 + $0x80] sm:$0xff]
    %v910 = vld [vmem:[#allocation10 + $0x88] sm:$0xff]
    %v911 = vld [vmem:[#allocation10 + $0x90] sm:$0xff]
    %v912 = vld [vmem:[#allocation10 + $0x98] sm:$0xff]
    %v913 = vld [vmem:[#allocation10 + $0xa0] sm:$0xff]
    %v914 = vld [vmem:[#allocation10 + $0xa8] sm:$0xff]
    %v915 = vld [vmem:[#allocation10 + $0xb0] sm:$0xff]
    %v916 = vld [vmem:[#allocation10 + $0xb8] sm:$0xff]
    %v917 = vld [vmem:[#allocation10 + $0xc0] sm:$0xff]
    %v918 = vld [vmem:[#allocation10 + $0xc8] sm:$0xff]
    %v919 = vld [vmem:[#allocation10 + $0xd0] sm:$0xff]
    %v920 = vld [vmem:[#allocation10 + $0xd8] sm:$0xff]
    %v921 = vld [vmem:[#allocation10 + $0xe0] sm:$0xff]
    %v922 = vld [vmem:[#allocation10 + $0xe8] sm:$0xff]
    %v923 = vld [vmem:[#allocation10 + $0xf0] sm:$0xff]
    %v924 = vld [vmem:[#allocation10 + $0xf8] sm:$0xff]
    %v957 = vunpack.c.l.b16 %v893
    %v958 = vunpack.c.h.b16 %v893
    %v959 = vunpack.c.l.b16 %v894
    %v960 = vunpack.c.h.b16 %v894
    %v961 = vunpack.c.l.b16 %v895
    %v962 = vunpack.c.h.b16 %v895
    %v963 = vunpack.c.l.b16 %v896
    %v964 = vunpack.c.h.b16 %v896
    %v965 = vunpack.c.l.b16 %v897
    %v966 = vunpack.c.h.b16 %v897
    %v967 = vunpack.c.l.b16 %v898
    %v968 = vunpack.c.h.b16 %v898
    %v969 = vunpack.c.l.b16 %v899
    %v970 = vunpack.c.h.b16 %v899
    %v971 = vunpack.c.l.b16 %v900
    %v972 = vunpack.c.h.b16 %v900
    %v973 = vunpack.c.l.b16 %v901
    %v974 = vunpack.c.h.b16 %v901
    %v975 = vunpack.c.l.b16 %v902
    %v976 = vunpack.c.h.b16 %v902
    %v977 = vunpack.c.l.b16 %v903
    %v978 = vunpack.c.h.b16 %v903
    %v979 = vunpack.c.l.b16 %v904
    %v980 = vunpack.c.h.b16 %v904
    %v981 = vunpack.c.l.b16 %v905
    %v982 = vunpack.c.h.b16 %v905
    %v983 = vunpack.c.l.b16 %v906
    %v984 = vunpack.c.h.b16 %v906
    %v985 = vunpack.c.l.b16 %v907
    %v986 = vunpack.c.h.b16 %v907
    %v987 = vunpack.c.l.b16 %v908
    %v988 = vunpack.c.h.b16 %v908
    %v989 = vunpack.c.l.b16 %v909
    %v990 = vunpack.c.h.b16 %v909
    %v991 = vunpack.c.l.b16 %v910
    %v992 = vunpack.c.h.b16 %v910
    %v993 = vunpack.c.l.b16 %v911
    %v994 = vunpack.c.h.b16 %v911
    %v995 = vunpack.c.l.b16 %v912
    %v996 = vunpack.c.h.b16 %v912
    %v997 = vunpack.c.l.b16 %v913
    %v998 = vunpack.c.h.b16 %v913
    %v999 = vunpack.c.l.b16 %v914
    %v1000 = vunpack.c.h.b16 %v914
    %v1001 = vunpack.c.l.b16 %v915
    %v1002 = vunpack.c.h.b16 %v915
    %v1003 = vunpack.c.l.b16 %v916
    %v1004 = vunpack.c.h.b16 %v916
    %v1005 = vunpack.c.l.b16 %v917
    %v1006 = vunpack.c.h.b16 %v917
    %v1007 = vunpack.c.l.b16 %v918
    %v1008 = vunpack.c.h.b16 %v918
    %v1009 = vunpack.c.l.b16 %v919
    %v1010 = vunpack.c.h.b16 %v919
    %v1011 = vunpack.c.l.b16 %v920
    %v1012 = vunpack.c.h.b16 %v920
    %v1013 = vunpack.c.l.b16 %v921
    %v1014 = vunpack.c.h.b16 %v921
    %v1015 = vunpack.c.l.b16 %v922
    %v1016 = vunpack.c.h.b16 %v922
    %v1017 = vunpack.c.l.b16 %v923
    %v1018 = vunpack.c.h.b16 %v923
    %v1019 = vunpack.c.l.b16 %v924
    %v1020 = vunpack.c.h.b16 %v924
    %v1021 = vpack.c.b16 %v961, %v957
    %v1022 = vpack.c.b16 %v962, %v958
    %v1023 = vpack.c.b16 %v963, %v959
    %v1024 = vpack.c.b16 %v964, %v960
    %v1025 = vpack.c.b16 %v969, %v965
    %v1026 = vpack.c.b16 %v970, %v966
    %v1027 = vpack.c.b16 %v971, %v967
    %v1028 = vpack.c.b16 %v972, %v968
    %v1029 = vpack.c.b16 %v977, %v973
    %v1030 = vpack.c.b16 %v978, %v974
    %v1031 = vpack.c.b16 %v979, %v975
    %v1032 = vpack.c.b16 %v980, %v976
    %v1033 = vpack.c.b16 %v985, %v981
    %v1034 = vpack.c.b16 %v986, %v982
    %v1035 = vpack.c.b16 %v987, %v983
    %v1036 = vpack.c.b16 %v988, %v984
    %v1037 = vpack.c.b16 %v993, %v989
    %v1038 = vpack.c.b16 %v994, %v990
    %v1039 = vpack.c.b16 %v995, %v991
    %v1040 = vpack.c.b16 %v996, %v992
    %v1041 = vpack.c.b16 %v1001, %v997
    %v1042 = vpack.c.b16 %v1002, %v998
    %v1043 = vpack.c.b16 %v1003, %v999
    %v1044 = vpack.c.b16 %v1004, %v1000
    %v1045 = vpack.c.b16 %v1009, %v1005
    %v1046 = vpack.c.b16 %v1010, %v1006
    %v1047 = vpack.c.b16 %v1011, %v1007
    %v1048 = vpack.c.b16 %v1012, %v1008
    %v1049 = vpack.c.b16 %v1017, %v1013
    %v1050 = vpack.c.b16 %v1018, %v1014
    %v1051 = vpack.c.b16 %v1019, %v1015
    %v1052 = vpack.c.b16 %v1020, %v1016
    %1085 = vmatprep.subr.bf16.mxu0 %v1022
    %1086 = vmatpush1.bf16.msra.mxu0 %v1021
    %1087 = vmatprep.subr.bf16.mxu0 %v1026
    %1088 = vmatpush1.bf16.msra.mxu0 %v1025
    %1089 = vmatprep.subr.bf16.mxu0 %v1030
    %1090 = vmatpush1.bf16.msra.mxu0 %v1029
    %1091 = vmatprep.subr.bf16.mxu0 %v1034
    %1092 = vmatpush1.bf16.msra.mxu0 %v1033
    %1093 = vmatprep.subr.bf16.mxu0 %v1038
    %1094 = vmatpush1.bf16.msra.mxu0 %v1037
    %1095 = vmatprep.subr.bf16.mxu0 %v1042
    %1096 = vmatpush1.bf16.msra.mxu0 %v1041
    %1097 = vmatprep.subr.bf16.mxu0 %v1046
    %1098 = vmatpush1.bf16.msra.mxu0 %v1045
    %1099 = vmatprep.subr.bf16.mxu0 %v1050
    %1100 = vmatpush1.bf16.msra.mxu0 %v1049
    %1101 = vmatprep.subr.bf16.mxu0 0
    %1102 = vmatpush1.bf16.msra.mxu0 0
    %1103 = vmatprep.subr.bf16.mxu0 0
    %1104 = vmatpush1.bf16.msra.mxu0 0
    %1105 = vmatprep.subr.bf16.mxu0 0
    %1106 = vmatpush1.bf16.msra.mxu0 0
    %1107 = vmatprep.subr.bf16.mxu0 0
    %1108 = vmatpush1.bf16.msra.mxu0 0
    %1109 = vmatprep.subr.bf16.mxu0 0
    %1110 = vmatpush1.bf16.msra.mxu0 0
    %1111 = vmatprep.subr.bf16.mxu0 0
    %1112 = vmatpush1.bf16.msra.mxu0 0
    %1113 = vmatprep.subr.bf16.mxu0 0
    %1114 = vmatpush1.bf16.msra.mxu0 0
    %1115 = vmatprep.subr.bf16.mxu0 0
    %1116 = vmatpush1.bf16.msra.mxu0 0
    %1117 = vmatprep.mubr.bf16.mxu0 0
    %1118 = vmatmul.mubr.bf16.gmra.mrb[0].mxu0 %v891
    %v1119 = vpop.f32.mrb[0].mxu0
    %v1120 = vadd.f32 0.0, %v1119
    %v1121 = vpop.f32.mrb[0].mxu0
    %v1122 = vadd.f32 0.0, %v1121
    %v1123 = vpop.f32.mrb[0].mxu0
    %v1124 = vpop.f32.mrb[0].mxu0
    %1125 = vdwg.mxu0
    %1126 = vmatprep.subr.bf16.mxu0 %v1024
    %1127 = vmatpush1.bf16.msra.mxu0 %v1023
    %1128 = vmatprep.subr.bf16.mxu0 %v1028
    %1129 = vmatpush1.bf16.msra.mxu0 %v1027
    %1130 = vmatprep.subr.bf16.mxu0 %v1032
    %1131 = vmatpush1.bf16.msra.mxu0 %v1031
    %1132 = vmatprep.subr.bf16.mxu0 %v1036
    %1133 = vmatpush1.bf16.msra.mxu0 %v1035
    %1134 = vmatprep.subr.bf16.mxu0 %v1040
    %1135 = vmatpush1.bf16.msra.mxu0 %v1039
    %1136 = vmatprep.subr.bf16.mxu0 %v1044
    %1137 = vmatpush1.bf16.msra.mxu0 %v1043
    %1138 = vmatprep.subr.bf16.mxu0 %v1048
    %1139 = vmatpush1.bf16.msra.mxu0 %v1047
    %1140 = vmatprep.subr.bf16.mxu0 %v1052
    %1141 = vmatpush1.bf16.msra.mxu0 %v1051
    %1142 = vmatprep.subr.bf16.mxu0 0
    %1143 = vmatpush1.bf16.msra.mxu0 0
    %1144 = vmatprep.subr.bf16.mxu0 0
    %1145 = vmatpush1.bf16.msra.mxu0 0
    %1146 = vmatprep.subr.bf16.mxu0 0
    %1147 = vmatpush1.bf16.msra.mxu0 0
    %1148 = vmatprep.subr.bf16.mxu0 0
    %1149 = vmatpush1.bf16.msra.mxu0 0
    %1150 = vmatprep.subr.bf16.mxu0 0
    %1151 = vmatpush1.bf16.msra.mxu0 0
    %1152 = vmatprep.subr.bf16.mxu0 0
    %1153 = vmatpush1.bf16.msra.mxu0 0
    %1154 = vmatprep.subr.bf16.mxu0 0
    %1155 = vmatpush1.bf16.msra.mxu0 0
    %1156 = vmatprep.subr.bf16.mxu0 0
    %1157 = vmatpush1.bf16.msra.mxu0 0
    %1158 = vmatprep.mubr.bf16.mxu0 0
    %1159 = vmatmul.mubr.bf16.gmra.mrb[0].mxu0 %v891
    %v1160 = vpop.f32.mrb[0].mxu0
    %v1161 = vadd.f32 0.0, %v1160
    %v1162 = vpop.f32.mrb[0].mxu0
    %v1163 = vadd.f32 0.0, %v1162
    %v1164 = vpop.f32.mrb[0].mxu0
    %v1165 = vpop.f32.mrb[0].mxu0
    %1166 = vdwg.mxu0
    %v1168 = vlaneseq
    %v1169 = vshrl.u32 %v1168, 7
    %v1170 = vsub.s32 0, %v1169
    %v1171 = vrot.slane %v892, %v1170
    %v1172 = vlaneseq
    %v1173 = vshrl.u32 %v1172, 7
    %v1174 = vsub.s32 1, %v1173
    %v1175 = vrot.slane %v892, %v1174
    %v1176 = vlaneseq
    %v1177 = vshrl.u32 %v1176, 7
    %v1178 = vsub.s32 2, %v1177
    %v1179 = vrot.slane %v892, %v1178
    %v1180 = vlaneseq
    %v1181 = vshrl.u32 %v1180, 7
    %v1182 = vsub.s32 3, %v1181
    %v1183 = vrot.slane %v892, %v1182
    %v1188 = vadd.f32 %v1171, %v1120
    %v1189 = vadd.f32 %v1175, %v1122
    %v1190 = vadd.f32 %v1179, %v1161
    %v1191 = vadd.f32 %v1183, %v1163
    %v1192 = vld [vmem:[#allocation12] sm:$0xff]
    %v1193 = vld [vmem:[#allocation12 + $0x8] sm:$0xff]
    %v1194 = vld [vmem:[#allocation12 + $0x10] sm:$0xff]
    %v1195 = vld [vmem:[#allocation12 + $0x18] sm:$0xff]
    %v1196 = vld [vmem:[#allocation12 + $0x20] sm:$0xff]
    %v1197 = vld [vmem:[#allocation12 + $0x28] sm:$0xff]
    %v1198 = vld [vmem:[#allocation12 + $0x30] sm:$0xff]
    %v1199 = vld [vmem:[#allocation12 + $0x38] sm:$0xff]
    %v1200 = vld [vmem:[#allocation12 + $0x40] sm:$0xff]
    %v1201 = vld [vmem:[#allocation12 + $0x48] sm:$0xff]
    %v1202 = vld [vmem:[#allocation12 + $0x50] sm:$0xff]
    %v1203 = vld [vmem:[#allocation12 + $0x58] sm:$0xff]
    %v1204 = vld [vmem:[#allocation12 + $0x60] sm:$0xff]
    %v1205 = vld [vmem:[#allocation12 + $0x68] sm:$0xff]
    %v1206 = vld [vmem:[#allocation12 + $0x70] sm:$0xff]
    %v1207 = vld [vmem:[#allocation12 + $0x78] sm:$0xff]
    %v1208 = vld [vmem:[#allocation12 + $0x80] sm:$0xff]
    %v1209 = vld [vmem:[#allocation12 + $0x88] sm:$0xff]
    %v1210 = vld [vmem:[#allocation12 + $0x90] sm:$0xff]
    %v1211 = vld [vmem:[#allocation12 + $0x98] sm:$0xff]
    %v1212 = vld [vmem:[#allocation12 + $0xa0] sm:$0xff]
    %v1213 = vld [vmem:[#allocation12 + $0xa8] sm:$0xff]
    %v1214 = vld [vmem:[#allocation12 + $0xb0] sm:$0xff]
    %v1215 = vld [vmem:[#allocation12 + $0xb8] sm:$0xff]
    %v1216 = vld [vmem:[#allocation12 + $0xc0] sm:$0xff]
    %v1217 = vld [vmem:[#allocation12 + $0xc8] sm:$0xff]
    %v1218 = vld [vmem:[#allocation12 + $0xd0] sm:$0xff]
    %v1219 = vld [vmem:[#allocation12 + $0xd8] sm:$0xff]
    %v1220 = vld [vmem:[#allocation12 + $0xe0] sm:$0xff]
    %v1221 = vld [vmem:[#allocation12 + $0xe8] sm:$0xff]
    %v1222 = vld [vmem:[#allocation12 + $0xf0] sm:$0xff]
    %v1223 = vld [vmem:[#allocation12 + $0xf8] sm:$0xff]
    %v1256 = vunpack.c.l.b16 %v1192
    %v1257 = vunpack.c.h.b16 %v1192
    %v1258 = vunpack.c.l.b16 %v1193
    %v1259 = vunpack.c.h.b16 %v1193
    %v1260 = vunpack.c.l.b16 %v1194
    %v1261 = vunpack.c.h.b16 %v1194
    %v1262 = vunpack.c.l.b16 %v1195
    %v1263 = vunpack.c.h.b16 %v1195
    %v1264 = vunpack.c.l.b16 %v1196
    %v1265 = vunpack.c.h.b16 %v1196
    %v1266 = vunpack.c.l.b16 %v1197
    %v1267 = vunpack.c.h.b16 %v1197
    %v1268 = vunpack.c.l.b16 %v1198
    %v1269 = vunpack.c.h.b16 %v1198
    %v1270 = vunpack.c.l.b16 %v1199
    %v1271 = vunpack.c.h.b16 %v1199
    %v1272 = vunpack.c.l.b16 %v1200
    %v1273 = vunpack.c.h.b16 %v1200
    %v1274 = vunpack.c.l.b16 %v1201
    %v1275 = vunpack.c.h.b16 %v1201
    %v1276 = vunpack.c.l.b16 %v1202
    %v1277 = vunpack.c.h.b16 %v1202
    %v1278 = vunpack.c.l.b16 %v1203
    %v1279 = vunpack.c.h.b16 %v1203
    %v1280 = vunpack.c.l.b16 %v1204
    %v1281 = vunpack.c.h.b16 %v1204
    %v1282 = vunpack.c.l.b16 %v1205
    %v1283 = vunpack.c.h.b16 %v1205
    %v1284 = vunpack.c.l.b16 %v1206
    %v1285 = vunpack.c.h.b16 %v1206
    %v1286 = vunpack.c.l.b16 %v1207
    %v1287 = vunpack.c.h.b16 %v1207
    %v1288 = vunpack.c.l.b16 %v1208
    %v1289 = vunpack.c.h.b16 %v1208
    %v1290 = vunpack.c.l.b16 %v1209
    %v1291 = vunpack.c.h.b16 %v1209
    %v1292 = vunpack.c.l.b16 %v1210
    %v1293 = vunpack.c.h.b16 %v1210
    %v1294 = vunpack.c.l.b16 %v1211
    %v1295 = vunpack.c.h.b16 %v1211
    %v1296 = vunpack.c.l.b16 %v1212
    %v1297 = vunpack.c.h.b16 %v1212
    %v1298 = vunpack.c.l.b16 %v1213
    %v1299 = vunpack.c.h.b16 %v1213
    %v1300 = vunpack.c.l.b16 %v1214
    %v1301 = vunpack.c.h.b16 %v1214
    %v1302 = vunpack.c.l.b16 %v1215
    %v1303 = vunpack.c.h.b16 %v1215
    %v1304 = vunpack.c.l.b16 %v1216
    %v1305 = vunpack.c.h.b16 %v1216
    %v1306 = vunpack.c.l.b16 %v1217
    %v1307 = vunpack.c.h.b16 %v1217
    %v1308 = vunpack.c.l.b16 %v1218
    %v1309 = vunpack.c.h.b16 %v1218
    %v1310 = vunpack.c.l.b16 %v1219
    %v1311 = vunpack.c.h.b16 %v1219
    %v1312 = vunpack.c.l.b16 %v1220
    %v1313 = vunpack.c.h.b16 %v1220
    %v1314 = vunpack.c.l.b16 %v1221
    %v1315 = vunpack.c.h.b16 %v1221
    %v1316 = vunpack.c.l.b16 %v1222
    %v1317 = vunpack.c.h.b16 %v1222
    %v1318 = vunpack.c.l.b16 %v1223
    %v1319 = vunpack.c.h.b16 %v1223
    %v1320 = vpack.c.b16 %v1260, %v1256
    %v1321 = vpack.c.b16 %v1261, %v1257
    %v1322 = vpack.c.b16 %v1262, %v1258
    %v1323 = vpack.c.b16 %v1263, %v1259
    %v1324 = vpack.c.b16 %v1268, %v1264
    %v1325 = vpack.c.b16 %v1269, %v1265
    %v1326 = vpack.c.b16 %v1270, %v1266
    %v1327 = vpack.c.b16 %v1271, %v1267
    %v1328 = vpack.c.b16 %v1276, %v1272
    %v1329 = vpack.c.b16 %v1277, %v1273
    %v1330 = vpack.c.b16 %v1278, %v1274
    %v1331 = vpack.c.b16 %v1279, %v1275
    %v1332 = vpack.c.b16 %v1284, %v1280
    %v1333 = vpack.c.b16 %v1285, %v1281
    %v1334 = vpack.c.b16 %v1286, %v1282
    %v1335 = vpack.c.b16 %v1287, %v1283
    %v1336 = vpack.c.b16 %v1292, %v1288
    %v1337 = vpack.c.b16 %v1293, %v1289
    %v1338 = vpack.c.b16 %v1294, %v1290
    %v1339 = vpack.c.b16 %v1295, %v1291
    %v1340 = vpack.c.b16 %v1300, %v1296
    %v1341 = vpack.c.b16 %v1301, %v1297
    %v1342 = vpack.c.b16 %v1302, %v1298
    %v1343 = vpack.c.b16 %v1303, %v1299
    %v1344 = vpack.c.b16 %v1308, %v1304
    %v1345 = vpack.c.b16 %v1309, %v1305
    %v1346 = vpack.c.b16 %v1310, %v1306
    %v1347 = vpack.c.b16 %v1311, %v1307
    %v1348 = vpack.c.b16 %v1316, %v1312
    %v1349 = vpack.c.b16 %v1317, %v1313
    %v1350 = vpack.c.b16 %v1318, %v1314
    %v1351 = vpack.c.b16 %v1319, %v1315
    %1384 = vmatprep.subr.bf16.mxu0 %v1321
    %1385 = vmatpush1.bf16.msra.mxu0 %v1320
    %1386 = vmatprep.subr.bf16.mxu0 %v1325
    %1387 = vmatpush1.bf16.msra.mxu0 %v1324
    %1388 = vmatprep.subr.bf16.mxu0 %v1329
    %1389 = vmatpush1.bf16.msra.mxu0 %v1328
    %1390 = vmatprep.subr.bf16.mxu0 %v1333
    %1391 = vmatpush1.bf16.msra.mxu0 %v1332
    %1392 = vmatprep.subr.bf16.mxu0 %v1337
    %1393 = vmatpush1.bf16.msra.mxu0 %v1336
    %1394 = vmatprep.subr.bf16.mxu0 %v1341
    %1395 = vmatpush1.bf16.msra.mxu0 %v1340
    %1396 = vmatprep.subr.bf16.mxu0 %v1345
    %1397 = vmatpush1.bf16.msra.mxu0 %v1344
    %1398 = vmatprep.subr.bf16.mxu0 %v1349
    %1399 = vmatpush1.bf16.msra.mxu0 %v1348
    %1400 = vmatprep.subr.bf16.mxu0 0
    %1401 = vmatpush1.bf16.msra.mxu0 0
    %1402 = vmatprep.subr.bf16.mxu0 0
    %1403 = vmatpush1.bf16.msra.mxu0 0
    %1404 = vmatprep.subr.bf16.mxu0 0
    %1405 = vmatpush1.bf16.msra.mxu0 0
    %1406 = vmatprep.subr.bf16.mxu0 0
    %1407 = vmatpush1.bf16.msra.mxu0 0
    %1408 = vmatprep.subr.bf16.mxu0 0
    %1409 = vmatpush1.bf16.msra.mxu0 0
    %1410 = vmatprep.subr.bf16.mxu0 0
    %1411 = vmatpush1.bf16.msra.mxu0 0
    %1412 = vmatprep.subr.bf16.mxu0 0
    %1413 = vmatpush1.bf16.msra.mxu0 0
    %1414 = vmatprep.subr.bf16.mxu0 0
    %1415 = vmatpush1.bf16.msra.mxu0 0
    %1416 = vmatprep.mubr.bf16.mxu0 0
    %1417 = vmatmul.mubr.bf16.gmra.mrb[0].mxu0 %v584
    %v1418 = vpop.f32.mrb[0].mxu0
    %v1419 = vadd.f32 0.0, %v1418
    %v1420 = vpop.f32.mrb[0].mxu0
    %v1421 = vadd.f32 0.0, %v1420
    %v1422 = vpop.f32.mrb[0].mxu0
    %v1423 = vpop.f32.mrb[0].mxu0
    %1424 = vdwg.mxu0
    %1425 = vmatprep.subr.bf16.mxu0 %v1323
    %1426 = vmatpush1.bf16.msra.mxu0 %v1322
    %1427 = vmatprep.subr.bf16.mxu0 %v1327
    %1428 = vmatpush1.bf16.msra.mxu0 %v1326
    %1429 = vmatprep.subr.bf16.mxu0 %v1331
    %1430 = vmatpush1.bf16.msra.mxu0 %v1330
    %1431 = vmatprep.subr.bf16.mxu0 %v1335
    %1432 = vmatpush1.bf16.msra.mxu0 %v1334
    %1433 = vmatprep.subr.bf16.mxu0 %v1339
    %1434 = vmatpush1.bf16.msra.mxu0 %v1338
    %1435 = vmatprep.subr.bf16.mxu0 %v1343
    %1436 = vmatpush1.bf16.msra.mxu0 %v1342
    %1437 = vmatprep.subr.bf16.mxu0 %v1347
    %1438 = vmatpush1.bf16.msra.mxu0 %v1346
    %1439 = vmatprep.subr.bf16.mxu0 %v1351
    %1440 = vmatpush1.bf16.msra.mxu0 %v1350
    %1441 = vmatprep.subr.bf16.mxu0 0
    %1442 = vmatpush1.bf16.msra.mxu0 0
    %1443 = vmatprep.subr.bf16.mxu0 0
    %1444 = vmatpush1.bf16.msra.mxu0 0
    %1445 = vmatprep.subr.bf16.mxu0 0
    %1446 = vmatpush1.bf16.msra.mxu0 0
    %1447 = vmatprep.subr.bf16.mxu0 0
    %1448 = vmatpush1.bf16.msra.mxu0 0
    %1449 = vmatprep.subr.bf16.mxu0 0
    %1450 = vmatpush1.bf16.msra.mxu0 0
    %1451 = vmatprep.subr.bf16.mxu0 0
    %1452 = vmatpush1.bf16.msra.mxu0 0
    %1453 = vmatprep.subr.bf16.mxu0 0
    %1454 = vmatpush1.bf16.msra.mxu0 0
    %1455 = vmatprep.subr.bf16.mxu0 0
    %1456 = vmatpush1.bf16.msra.mxu0 0
    %1457 = vmatprep.mubr.bf16.mxu0 0
    %1458 = vmatmul.mubr.bf16.gmra.mrb[0].mxu0 %v584
    %v1459 = vpop.f32.mrb[0].mxu0
    %v1460 = vadd.f32 0.0, %v1459
    %v1461 = vpop.f32.mrb[0].mxu0
    %v1462 = vadd.f32 0.0, %v1461
    %v1463 = vpop.f32.mrb[0].mxu0
    %v1464 = vpop.f32.mrb[0].mxu0
    %1465 = vdwg.mxu0
    %v1466 = vadd.f32 %v1188, %v1419
    %v1467 = vadd.f32 %v1189, %v1421
    %v1468 = vadd.f32 %v1190, %v1460
    %v1469 = vadd.f32 %v1191, %v1462
    %v1470 = vxor.u32 %v1466, 2147483648
    %v1471 = vxor.u32 %v1467, 2147483648
    %v1472 = vxor.u32 %v1468, 2147483648
    %v1473 = vmul.f32 %v1470, 1.442695
    %v1474 = vpow.pop %v1473
    %v1475 = vmul.f32 %v1471, 1.442695
    %v1476 = vpow.pop %v1475
    %v1477 = vmul.f32 %v1472, 1.442695
    %v1478 = vpow.pop %v1477
    %v1479 = vadd.f32 %v1474, 1.0
    %v1480 = vadd.f32 %v1476, 1.0
    %v1481 = vadd.f32 %v1478, 1.0
    %v1482 = vrcp.pop %v1479
    %v1483 = vmul.f32 1.0, %v1482
    %v1484 = vrcp.pop %v1480
    %v1485 = vmul.f32 1.0, %v1484
    %v1486 = vrcp.pop %v1481
    %v1487 = vmul.f32 1.0, %v1486
    %v1488 = vtanh.pop %v1469
    %v1489 = vmul.f32 %v1485, %v582
    %v1490 = vmul.f32 %v1483, %v1488
    %v1491 = vadd.f32 %v1489, %v1490
    %v1492 = vtanh.pop %v1491
    %v1493 = vmul.f32 %v1487, %v1492
    %v1494 = vpack.c.bf16 %v1493, %v1493
    %1495 = vst [vmem:[#allocation3] sm:$0xff] %v1493
    %v1496 = vld [vmem:[#allocation2 + $0x20] sm:$0xff]
    %v1497 = vld [vmem:[#allocation2 + $0x28] sm:$0xff]
    %v1498 = vld [vmem:[#allocation2 + $0x30] sm:$0xff]
    %v1499 = vld [vmem:[#allocation2 + $0x38] sm:$0xff]
    %v1500 = vld [vmem:[#allocation7] sm:$0xff]
    %v1501 = vld [vmem:[#allocation7 + $0x8] sm:$0xff]
    %v1502 = vld [vmem:[#allocation7 + $0x10] sm:$0xff]
    %v1503 = vld [vmem:[#allocation7 + $0x18] sm:$0xff]
    %v1504 = vld [vmem:[#allocation7 + $0x20] sm:$0xff]
    %v1505 = vld [vmem:[#allocation7 + $0x28] sm:$0xff]
    %v1506 = vld [vmem:[#allocation7 + $0x30] sm:$0xff]
    %v1507 = vld [vmem:[#allocation7 + $0x38] sm:$0xff]
    %v1508 = vld [vmem:[#allocation7 + $0x40] sm:$0xff]
    %v1509 = vld [vmem:[#allocation7 + $0x48] sm:$0xff]
    %v1510 = vld [vmem:[#allocation7 + $0x50] sm:$0xff]
    %v1511 = vld [vmem:[#allocation7 + $0x58] sm:$0xff]
    %v1512 = vld [vmem:[#allocation7 + $0x60] sm:$0xff]
    %v1513 = vld [vmem:[#allocation7 + $0x68] sm:$0xff]
    %v1514 = vld [vmem:[#allocation7 + $0x70] sm:$0xff]
    %v1515 = vld [vmem:[#allocation7 + $0x78] sm:$0xff]
    %v1516 = vld [vmem:[#allocation7 + $0x80] sm:$0xff]
    %v1517 = vld [vmem:[#allocation7 + $0x88] sm:$0xff]
    %v1518 = vld [vmem:[#allocation7 + $0x90] sm:$0xff]
    %v1519 = vld [vmem:[#allocation7 + $0x98] sm:$0xff]
    %v1520 = vld [vmem:[#allocation7 + $0xa0] sm:$0xff]
    %v1521 = vld [vmem:[#allocation7 + $0xa8] sm:$0xff]
    %v1522 = vld [vmem:[#allocation7 + $0xb0] sm:$0xff]
    %v1523 = vld [vmem:[#allocation7 + $0xb8] sm:$0xff]
    %v1524 = vld [vmem:[#allocation7 + $0xc0] sm:$0xff]
    %v1525 = vld [vmem:[#allocation7 + $0xc8] sm:$0xff]
    %v1526 = vld [vmem:[#allocation7 + $0xd0] sm:$0xff]
    %v1527 = vld [vmem:[#allocation7 + $0xd8] sm:$0xff]
    %v1528 = vld [vmem:[#allocation7 + $0xe0] sm:$0xff]
    %v1529 = vld [vmem:[#allocation7 + $0xe8] sm:$0xff]
    %v1530 = vld [vmem:[#allocation7 + $0xf0] sm:$0xff]
    %v1531 = vld [vmem:[#allocation7 + $0xf8] sm:$0xff]
    %v1564 = vunpack.c.l.b16 %v1500
    %v1565 = vunpack.c.h.b16 %v1500
    %v1566 = vunpack.c.l.b16 %v1501
    %v1567 = vunpack.c.h.b16 %v1501
    %v1568 = vunpack.c.l.b16 %v1502
    %v1569 = vunpack.c.h.b16 %v1502
    %v1570 = vunpack.c.l.b16 %v1503
    %v1571 = vunpack.c.h.b16 %v1503
    %v1572 = vunpack.c.l.b16 %v1504
    %v1573 = vunpack.c.h.b16 %v1504
    %v1574 = vunpack.c.l.b16 %v1505
    %v1575 = vunpack.c.h.b16 %v1505
    %v1576 = vunpack.c.l.b16 %v1506
    %v1577 = vunpack.c.h.b16 %v1506
    %v1578 = vunpack.c.l.b16 %v1507
    %v1579 = vunpack.c.h.b16 %v1507
    %v1580 = vunpack.c.l.b16 %v1508
    %v1581 = vunpack.c.h.b16 %v1508
    %v1582 = vunpack.c.l.b16 %v1509
    %v1583 = vunpack.c.h.b16 %v1509
    %v1584 = vunpack.c.l.b16 %v1510
    %v1585 = vunpack.c.h.b16 %v1510
    %v1586 = vunpack.c.l.b16 %v1511
    %v1587 = vunpack.c.h.b16 %v1511
    %v1588 = vunpack.c.l.b16 %v1512
    %v1589 = vunpack.c.h.b16 %v1512
    %v1590 = vunpack.c.l.b16 %v1513
    %v1591 = vunpack.c.h.b16 %v1513
    %v1592 = vunpack.c.l.b16 %v1514
    %v1593 = vunpack.c.h.b16 %v1514
    %v1594 = vunpack.c.l.b16 %v1515
    %v1595 = vunpack.c.h.b16 %v1515
    %v1596 = vunpack.c.l.b16 %v1516
    %v1597 = vunpack.c.h.b16 %v1516
    %v1598 = vunpack.c.l.b16 %v1517
    %v1599 = vunpack.c.h.b16 %v1517
    %v1600 = vunpack.c.l.b16 %v1518
    %v1601 = vunpack.c.h.b16 %v1518
    %v1602 = vunpack.c.l.b16 %v1519
    %v1603 = vunpack.c.h.b16 %v1519
    %v1604 = vunpack.c.l.b16 %v1520
    %v1605 = vunpack.c.h.b16 %v1520
    %v1606 = vunpack.c.l.b16 %v1521
    %v1607 = vunpack.c.h.b16 %v1521
    %v1608 = vunpack.c.l.b16 %v1522
    %v1609 = vunpack.c.h.b16 %v1522
    %v1610 = vunpack.c.l.b16 %v1523
    %v1611 = vunpack.c.h.b16 %v1523
    %v1612 = vunpack.c.l.b16 %v1524
    %v1613 = vunpack.c.h.b16 %v1524
    %v1614 = vunpack.c.l.b16 %v1525
    %v1615 = vunpack.c.h.b16 %v1525
    %v1616 = vunpack.c.l.b16 %v1526
    %v1617 = vunpack.c.h.b16 %v1526
    %v1618 = vunpack.c.l.b16 %v1527
    %v1619 = vunpack.c.h.b16 %v1527
    %v1620 = vunpack.c.l.b16 %v1528
    %v1621 = vunpack.c.h.b16 %v1528
    %v1622 = vunpack.c.l.b16 %v1529
    %v1623 = vunpack.c.h.b16 %v1529
    %v1624 = vunpack.c.l.b16 %v1530
    %v1625 = vunpack.c.h.b16 %v1530
    %v1626 = vunpack.c.l.b16 %v1531
    %v1627 = vunpack.c.h.b16 %v1531
    %v1628 = vpack.c.b16 %v1568, %v1564
    %v1629 = vpack.c.b16 %v1569, %v1565
    %v1630 = vpack.c.b16 %v1570, %v1566
    %v1631 = vpack.c.b16 %v1571, %v1567
    %v1632 = vpack.c.b16 %v1576, %v1572
    %v1633 = vpack.c.b16 %v1577, %v1573
    %v1634 = vpack.c.b16 %v1578, %v1574
    %v1635 = vpack.c.b16 %v1579, %v1575
    %v1636 = vpack.c.b16 %v1584, %v1580
    %v1637 = vpack.c.b16 %v1585, %v1581
    %v1638 = vpack.c.b16 %v1586, %v1582
    %v1639 = vpack.c.b16 %v1587, %v1583
    %v1640 = vpack.c.b16 %v1592, %v1588
    %v1641 = vpack.c.b16 %v1593, %v1589
    %v1642 = vpack.c.b16 %v1594, %v1590
    %v1643 = vpack.c.b16 %v1595, %v1591
    %v1644 = vpack.c.b16 %v1600, %v1596
    %v1645 = vpack.c.b16 %v1601, %v1597
    %v1646 = vpack.c.b16 %v1602, %v1598
    %v1647 = vpack.c.b16 %v1603, %v1599
    %v1648 = vpack.c.b16 %v1608, %v1604
    %v1649 = vpack.c.b16 %v1609, %v1605
    %v1650 = vpack.c.b16 %v1610, %v1606
    %v1651 = vpack.c.b16 %v1611, %v1607
    %v1652 = vpack.c.b16 %v1616, %v1612
    %v1653 = vpack.c.b16 %v1617, %v1613
    %v1654 = vpack.c.b16 %v1618, %v1614
    %v1655 = vpack.c.b16 %v1619, %v1615
    %v1656 = vpack.c.b16 %v1624, %v1620
    %v1657 = vpack.c.b16 %v1625, %v1621
    %v1658 = vpack.c.b16 %v1626, %v1622
    %v1659 = vpack.c.b16 %v1627, %v1623
    %1692 = vmatprep.subr.bf16.mxu0 %v1629
    %1693 = vmatpush1.bf16.msra.mxu0 %v1628
    %1694 = vmatprep.subr.bf16.mxu0 %v1633
    %1695 = vmatpush1.bf16.msra.mxu0 %v1632
    %1696 = vmatprep.subr.bf16.mxu0 %v1637
    %1697 = vmatpush1.bf16.msra.mxu0 %v1636
    %1698 = vmatprep.subr.bf16.mxu0 %v1641
    %1699 = vmatpush1.bf16.msra.mxu0 %v1640
    %1700 = vmatprep.subr.bf16.mxu0 %v1645
    %1701 = vmatpush1.bf16.msra.mxu0 %v1644
    %1702 = vmatprep.subr.bf16.mxu0 %v1649
    %1703 = vmatpush1.bf16.msra.mxu0 %v1648
    %1704 = vmatprep.subr.bf16.mxu0 %v1653
    %1705 = vmatpush1.bf16.msra.mxu0 %v1652
    %1706 = vmatprep.subr.bf16.mxu0 %v1657
    %1707 = vmatpush1.bf16.msra.mxu0 %v1656
    %1708 = vmatprep.subr.bf16.mxu0 0
    %1709 = vmatpush1.bf16.msra.mxu0 0
    %1710 = vmatprep.subr.bf16.mxu0 0
    %1711 = vmatpush1.bf16.msra.mxu0 0
    %1712 = vmatprep.subr.bf16.mxu0 0
    %1713 = vmatpush1.bf16.msra.mxu0 0
    %1714 = vmatprep.subr.bf16.mxu0 0
    %1715 = vmatpush1.bf16.msra.mxu0 0
    %1716 = vmatprep.subr.bf16.mxu0 0
    %1717 = vmatpush1.bf16.msra.mxu0 0
    %1718 = vmatprep.subr.bf16.mxu0 0
    %1719 = vmatpush1.bf16.msra.mxu0 0
    %1720 = vmatprep.subr.bf16.mxu0 0
    %1721 = vmatpush1.bf16.msra.mxu0 0
    %1722 = vmatprep.subr.bf16.mxu0 0
    %1723 = vmatpush1.bf16.msra.mxu0 0
    %1724 = vmatprep.mubr.bf16.mxu0 0
    %1725 = vmatmul.mubr.bf16.gmra.mrb[0].mxu0 %v891
    %v1726 = vpop.f32.mrb[0].mxu0
    %v1727 = vadd.f32 0.0, %v1726
    %v1728 = vpop.f32.mrb[0].mxu0
    %v1729 = vadd.f32 0.0, %v1728
    %v1730 = vpop.f32.mrb[0].mxu0
    %v1731 = vpop.f32.mrb[0].mxu0
    %1732 = vdwg.mxu0
    %1733 = vmatprep.subr.bf16.mxu0 %v1631
    %1734 = vmatpush1.bf16.msra.mxu0 %v1630
    %1735 = vmatprep.subr.bf16.mxu0 %v1635
    %1736 = vmatpush1.bf16.msra.mxu0 %v1634
    %1737 = vmatprep.subr.bf16.mxu0 %v1639
    %1738 = vmatpush1.bf16.msra.mxu0 %v1638
    %1739 = vmatprep.subr.bf16.mxu0 %v1643
    %1740 = vmatpush1.bf16.msra.mxu0 %v1642
    %1741 = vmatprep.subr.bf16.mxu0 %v1647
    %1742 = vmatpush1.bf16.msra.mxu0 %v1646
    %1743 = vmatprep.subr.bf16.mxu0 %v1651
    %1744 = vmatpush1.bf16.msra.mxu0 %v1650
    %1745 = vmatprep.subr.bf16.mxu0 %v1655
    %1746 = vmatpush1.bf16.msra.mxu0 %v1654
    %1747 = vmatprep.subr.bf16.mxu0 %v1659
    %1748 = vmatpush1.bf16.msra.mxu0 %v1658
    %1749 = vmatprep.subr.bf16.mxu0 0
    %1750 = vmatpush1.bf16.msra.mxu0 0
    %1751 = vmatprep.subr.bf16.mxu0 0
    %1752 = vmatpush1.bf16.msra.mxu0 0
    %1753 = vmatprep.subr.bf16.mxu0 0
    %1754 = vmatpush1.bf16.msra.mxu0 0
    %1755 = vmatprep.subr.bf16.mxu0 0
    %1756 = vmatpush1.bf16.msra.mxu0 0
    %1757 = vmatprep.subr.bf16.mxu0 0
    %1758 = vmatpush1.bf16.msra.mxu0 0
    %1759 = vmatprep.subr.bf16.mxu0 0
    %1760 = vmatpush1.bf16.msra.mxu0 0
    %1761 = vmatprep.subr.bf16.mxu0 0
    %1762 = vmatpush1.bf16.msra.mxu0 0
    %1763 = vmatprep.subr.bf16.mxu0 0
    %1764 = vmatpush1.bf16.msra.mxu0 0
    %1765 = vmatprep.mubr.bf16.mxu0 0
    %1766 = vmatmul.mubr.bf16.gmra.mrb[0].mxu0 %v891
    %v1767 = vpop.f32.mrb[0].mxu0
    %v1768 = vadd.f32 0.0, %v1767
    %v1769 = vpop.f32.mrb[0].mxu0
    %v1770 = vadd.f32 0.0, %v1769
    %v1771 = vpop.f32.mrb[0].mxu0
    %v1772 = vpop.f32.mrb[0].mxu0
    %1773 = vdwg.mxu0
    %v1774 = vadd.f32 %v1496, %v1727
    %v1775 = vadd.f32 %v1497, %v1729
    %v1776 = vadd.f32 %v1498, %v1768
    %v1777 = vadd.f32 %v1499, %v1770
    %v1778 = vxor.u32 %v1774, 2147483648
    %v1779 = vxor.u32 %v1775, 2147483648
    %v1780 = vxor.u32 %v1776, 2147483648
    %v1781 = vmul.f32 %v1778, 1.442695
    %v1782 = vpow.pop %v1781
    %v1783 = vmul.f32 %v1779, 1.442695
    %v1784 = vpow.pop %v1783
    %v1785 = vmul.f32 %v1780, 1.442695
    %v1786 = vpow.pop %v1785
    %v1787 = vadd.f32 %v1782, 1.0
    %v1788 = vadd.f32 %v1784, 1.0
    %v1789 = vadd.f32 %v1786, 1.0
    %v1790 = vrcp.pop %v1787
    %v1791 = vmul.f32 1.0, %v1790
    %v1792 = vrcp.pop %v1788
    %v1793 = vmul.f32 1.0, %v1792
    %v1794 = vrcp.pop %v1789
    %v1795 = vmul.f32 1.0, %v1794
    %v1796 = vtanh.pop %v1777
    %v1797 = vmul.f32 %v1793, %v888
    %v1798 = vmul.f32 %v1791, %v1796
    %v1799 = vadd.f32 %v1797, %v1798
    %v1800 = vtanh.pop %v1799
    %v1801 = vmul.f32 %v1795, %v1800
    %v1802 = vpack.c.bf16 %v1801, %v1801
    %v1803 = vld [vmem:[#allocation13] sm:$0xf]
    %v1804 = vld [vmem:[#allocation10] sm:$0xff]
    %v1805 = vld [vmem:[#allocation10 + $0x8] sm:$0xff]
    %v1806 = vld [vmem:[#allocation10 + $0x10] sm:$0xff]
    %v1807 = vld [vmem:[#allocation10 + $0x18] sm:$0xff]
    %v1808 = vld [vmem:[#allocation10 + $0x20] sm:$0xff]
    %v1809 = vld [vmem:[#allocation10 + $0x28] sm:$0xff]
    %v1810 = vld [vmem:[#allocation10 + $0x30] sm:$0xff]
    %v1811 = vld [vmem:[#allocation10 + $0x38] sm:$0xff]
    %v1812 = vld [vmem:[#allocation10 + $0x40] sm:$0xff]
    %v1813 = vld [vmem:[#allocation10 + $0x48] sm:$0xff]
    %v1814 = vld [vmem:[#allocation10 + $0x50] sm:$0xff]
    %v1815 = vld [vmem:[#allocation10 + $0x58] sm:$0xff]
    %v1816 = vld [vmem:[#allocation10 + $0x60] sm:$0xff]
    %v1817 = vld [vmem:[#allocation10 + $0x68] sm:$0xff]
    %v1818 = vld [vmem:[#allocation10 + $0x70] sm:$0xff]
    %v1819 = vld [vmem:[#allocation10 + $0x78] sm:$0xff]
    %v1820 = vld [vmem:[#allocation10 + $0x80] sm:$0xff]
    %v1821 = vld [vmem:[#allocation10 + $0x88] sm:$0xff]
    %v1822 = vld [vmem:[#allocation10 + $0x90] sm:$0xff]
    %v1823 = vld [vmem:[#allocation10 + $0x98] sm:$0xff]
    %v1824 = vld [vmem:[#allocation10 + $0xa0] sm:$0xff]
    %v1825 = vld [vmem:[#allocation10 + $0xa8] sm:$0xff]
    %v1826 = vld [vmem:[#allocation10 + $0xb0] sm:$0xff]
    %v1827 = vld [vmem:[#allocation10 + $0xb8] sm:$0xff]
    %v1828 = vld [vmem:[#allocation10 + $0xc0] sm:$0xff]
    %v1829 = vld [vmem:[#allocation10 + $0xc8] sm:$0xff]
    %v1830 = vld [vmem:[#allocation10 + $0xd0] sm:$0xff]
    %v1831 = vld [vmem:[#allocation10 + $0xd8] sm:$0xff]
    %v1832 = vld [vmem:[#allocation10 + $0xe0] sm:$0xff]
    %v1833 = vld [vmem:[#allocation10 + $0xe8] sm:$0xff]
    %v1834 = vld [vmem:[#allocation10 + $0xf0] sm:$0xff]
    %v1835 = vld [vmem:[#allocation10 + $0xf8] sm:$0xff]
    %v1868 = vunpack.c.l.b16 %v1804
    %v1869 = vunpack.c.h.b16 %v1804
    %v1870 = vunpack.c.l.b16 %v1805
    %v1871 = vunpack.c.h.b16 %v1805
    %v1872 = vunpack.c.l.b16 %v1806
    %v1873 = vunpack.c.h.b16 %v1806
    %v1874 = vunpack.c.l.b16 %v1807
    %v1875 = vunpack.c.h.b16 %v1807
    %v1876 = vunpack.c.l.b16 %v1808
    %v1877 = vunpack.c.h.b16 %v1808
    %v1878 = vunpack.c.l.b16 %v1809
    %v1879 = vunpack.c.h.b16 %v1809
    %v1880 = vunpack.c.l.b16 %v1810
    %v1881 = vunpack.c.h.b16 %v1810
    %v1882 = vunpack.c.l.b16 %v1811
    %v1883 = vunpack.c.h.b16 %v1811
    %v1884 = vunpack.c.l.b16 %v1812
    %v1885 = vunpack.c.h.b16 %v1812
    %v1886 = vunpack.c.l.b16 %v1813
    %v1887 = vunpack.c.h.b16 %v1813
    %v1888 = vunpack.c.l.b16 %v1814
    %v1889 = vunpack.c.h.b16 %v1814
    %v1890 = vunpack.c.l.b16 %v1815
    %v1891 = vunpack.c.h.b16 %v1815
    %v1892 = vunpack.c.l.b16 %v1816
    %v1893 = vunpack.c.h.b16 %v1816
    %v1894 = vunpack.c.l.b16 %v1817
    %v1895 = vunpack.c.h.b16 %v1817
    %v1896 = vunpack.c.l.b16 %v1818
    %v1897 = vunpack.c.h.b16 %v1818
    %v1898 = vunpack.c.l.b16 %v1819
    %v1899 = vunpack.c.h.b16 %v1819
    %v1900 = vunpack.c.l.b16 %v1820
    %v1901 = vunpack.c.h.b16 %v1820
    %v1902 = vunpack.c.l.b16 %v1821
    %v1903 = vunpack.c.h.b16 %v1821
    %v1904 = vunpack.c.l.b16 %v1822
    %v1905 = vunpack.c.h.b16 %v1822
    %v1906 = vunpack.c.l.b16 %v1823
    %v1907 = vunpack.c.h.b16 %v1823
    %v1908 = vunpack.c.l.b16 %v1824
    %v1909 = vunpack.c.h.b16 %v1824
    %v1910 = vunpack.c.l.b16 %v1825
    %v1911 = vunpack.c.h.b16 %v1825
    %v1912 = vunpack.c.l.b16 %v1826
    %v1913 = vunpack.c.h.b16 %v1826
    %v1914 = vunpack.c.l.b16 %v1827
    %v1915 = vunpack.c.h.b16 %v1827
    %v1916 = vunpack.c.l.b16 %v1828
    %v1917 = vunpack.c.h.b16 %v1828
    %v1918 = vunpack.c.l.b16 %v1829
    %v1919 = vunpack.c.h.b16 %v1829
    %v1920 = vunpack.c.l.b16 %v1830
    %v1921 = vunpack.c.h.b16 %v1830
    %v1922 = vunpack.c.l.b16 %v1831
    %v1923 = vunpack.c.h.b16 %v1831
    %v1924 = vunpack.c.l.b16 %v1832
    %v1925 = vunpack.c.h.b16 %v1832
    %v1926 = vunpack.c.l.b16 %v1833
    %v1927 = vunpack.c.h.b16 %v1833
    %v1928 = vunpack.c.l.b16 %v1834
    %v1929 = vunpack.c.h.b16 %v1834
    %v1930 = vunpack.c.l.b16 %v1835
    %v1931 = vunpack.c.h.b16 %v1835
    %v1932 = vpack.c.b16 %v1872, %v1868
    %v1933 = vpack.c.b16 %v1873, %v1869
    %v1934 = vpack.c.b16 %v1874, %v1870
    %v1935 = vpack.c.b16 %v1875, %v1871
    %v1936 = vpack.c.b16 %v1880, %v1876
    %v1937 = vpack.c.b16 %v1881, %v1877
    %v1938 = vpack.c.b16 %v1882, %v1878
    %v1939 = vpack.c.b16 %v1883, %v1879
    %v1940 = vpack.c.b16 %v1888, %v1884
    %v1941 = vpack.c.b16 %v1889, %v1885
    %v1942 = vpack.c.b16 %v1890, %v1886
    %v1943 = vpack.c.b16 %v1891, %v1887
    %v1944 = vpack.c.b16 %v1896, %v1892
    %v1945 = vpack.c.b16 %v1897, %v1893
    %v1946 = vpack.c.b16 %v1898, %v1894
    %v1947 = vpack.c.b16 %v1899, %v1895
    %v1948 = vpack.c.b16 %v1904, %v1900
    %v1949 = vpack.c.b16 %v1905, %v1901
    %v1950 = vpack.c.b16 %v1906, %v1902
    %v1951 = vpack.c.b16 %v1907, %v1903
    %v1952 = vpack.c.b16 %v1912, %v1908
    %v1953 = vpack.c.b16 %v1913, %v1909
    %v1954 = vpack.c.b16 %v1914, %v1910
    %v1955 = vpack.c.b16 %v1915, %v1911
    %v1956 = vpack.c.b16 %v1920, %v1916
    %v1957 = vpack.c.b16 %v1921, %v1917
    %v1958 = vpack.c.b16 %v1922, %v1918
    %v1959 = vpack.c.b16 %v1923, %v1919
    %v1960 = vpack.c.b16 %v1928, %v1924
    %v1961 = vpack.c.b16 %v1929, %v1925
    %v1962 = vpack.c.b16 %v1930, %v1926
    %v1963 = vpack.c.b16 %v1931, %v1927
    %1996 = vmatprep.subr.bf16.mxu0 %v1933
    %1997 = vmatpush1.bf16.msra.mxu0 %v1932
    %1998 = vmatprep.subr.bf16.mxu0 %v1937
    %1999 = vmatpush1.bf16.msra.mxu0 %v1936
    %2000 = vmatprep.subr.bf16.mxu0 %v1941
    %2001 = vmatpush1.bf16.msra.mxu0 %v1940
    %2002 = vmatprep.subr.bf16.mxu0 %v1945
    %2003 = vmatpush1.bf16.msra.mxu0 %v1944
    %2004 = vmatprep.subr.bf16.mxu0 %v1949
    %2005 = vmatpush1.bf16.msra.mxu0 %v1948
    %2006 = vmatprep.subr.bf16.mxu0 %v1953
    %2007 = vmatpush1.bf16.msra.mxu0 %v1952
    %2008 = vmatprep.subr.bf16.mxu0 %v1957
    %2009 = vmatpush1.bf16.msra.mxu0 %v1956
    %2010 = vmatprep.subr.bf16.mxu0 %v1961
    %2011 = vmatpush1.bf16.msra.mxu0 %v1960
    %2012 = vmatprep.subr.bf16.mxu0 0
    %2013 = vmatpush1.bf16.msra.mxu0 0
    %2014 = vmatprep.subr.bf16.mxu0 0
    %2015 = vmatpush1.bf16.msra.mxu0 0
    %2016 = vmatprep.subr.bf16.mxu0 0
    %2017 = vmatpush1.bf16.msra.mxu0 0
    %2018 = vmatprep.subr.bf16.mxu0 0
    %2019 = vmatpush1.bf16.msra.mxu0 0
    %2020 = vmatprep.subr.bf16.mxu0 0
    %2021 = vmatpush1.bf16.msra.mxu0 0
    %2022 = vmatprep.subr.bf16.mxu0 0
    %2023 = vmatpush1.bf16.msra.mxu0 0
    %2024 = vmatprep.subr.bf16.mxu0 0
    %2025 = vmatpush1.bf16.msra.mxu0 0
    %2026 = vmatprep.subr.bf16.mxu0 0
    %2027 = vmatpush1.bf16.msra.mxu0 0
    %2028 = vmatprep.mubr.bf16.mxu0 0
    %2029 = vmatmul.mubr.bf16.gmra.mrb[0].mxu0 %v1802
    %v2030 = vpop.f32.mrb[0].mxu0
    %v2031 = vadd.f32 0.0, %v2030
    %v2032 = vpop.f32.mrb[0].mxu0
    %v2033 = vadd.f32 0.0, %v2032
    %v2034 = vpop.f32.mrb[0].mxu0
    %v2035 = vpop.f32.mrb[0].mxu0
    %2036 = vdwg.mxu0
    %2037 = vmatprep.subr.bf16.mxu0 %v1935
    %2038 = vmatpush1.bf16.msra.mxu0 %v1934
    %2039 = vmatprep.subr.bf16.mxu0 %v1939
    %2040 = vmatpush1.bf16.msra.mxu0 %v1938
    %2041 = vmatprep.subr.bf16.mxu0 %v1943
    %2042 = vmatpush1.bf16.msra.mxu0 %v1942
    %2043 = vmatprep.subr.bf16.mxu0 %v1947
    %2044 = vmatpush1.bf16.msra.mxu0 %v1946
    %2045 = vmatprep.subr.bf16.mxu0 %v1951
    %2046 = vmatpush1.bf16.msra.mxu0 %v1950
    %2047 = vmatprep.subr.bf16.mxu0 %v1955
    %2048 = vmatpush1.bf16.msra.mxu0 %v1954
    %2049 = vmatprep.subr.bf16.mxu0 %v1959
    %2050 = vmatpush1.bf16.msra.mxu0 %v1958
    %2051 = vmatprep.subr.bf16.mxu0 %v1963
    %2052 = vmatpush1.bf16.msra.mxu0 %v1962
    %2053 = vmatprep.subr.bf16.mxu0 0
    %2054 = vmatpush1.bf16.msra.mxu0 0
    %2055 = vmatprep.subr.bf16.mxu0 0
    %2056 = vmatpush1.bf16.msra.mxu0 0
    %2057 = vmatprep.subr.bf16.mxu0 0
    %2058 = vmatpush1.bf16.msra.mxu0 0
    %2059 = vmatprep.subr.bf16.mxu0 0
    %2060 = vmatpush1.bf16.msra.mxu0 0
    %2061 = vmatprep.subr.bf16.mxu0 0
    %2062 = vmatpush1.bf16.msra.mxu0 0
    %2063 = vmatprep.subr.bf16.mxu0 0
    %2064 = vmatpush1.bf16.msra.mxu0 0
    %2065 = vmatprep.subr.bf16.mxu0 0
    %2066 = vmatpush1.bf16.msra.mxu0 0
    %2067 = vmatprep.subr.bf16.mxu0 0
    %2068 = vmatpush1.bf16.msra.mxu0 0
    %2069 = vmatprep.mubr.bf16.mxu0 0
    %2070 = vmatmul.mubr.bf16.gmra.mrb[0].mxu0 %v1802
    %v2071 = vpop.f32.mrb[0].mxu0
    %v2072 = vadd.f32 0.0, %v2071
    %v2073 = vpop.f32.mrb[0].mxu0
    %v2074 = vadd.f32 0.0, %v2073
    %v2075 = vpop.f32.mrb[0].mxu0
    %v2076 = vpop.f32.mrb[0].mxu0
    %2077 = vdwg.mxu0
    %v2079 = vlaneseq
    %v2080 = vshrl.u32 %v2079, 7
    %v2081 = vsub.s32 0, %v2080
    %v2082 = vrot.slane %v1803, %v2081
    %v2083 = vlaneseq
    %v2084 = vshrl.u32 %v2083, 7
    %v2085 = vsub.s32 1, %v2084
    %v2086 = vrot.slane %v1803, %v2085
    %v2087 = vlaneseq
    %v2088 = vshrl.u32 %v2087, 7
    %v2089 = vsub.s32 2, %v2088
    %v2090 = vrot.slane %v1803, %v2089
    %v2091 = vlaneseq
    %v2092 = vshrl.u32 %v2091, 7
    %v2093 = vsub.s32 3, %v2092
    %v2094 = vrot.slane %v1803, %v2093
    %v2099 = vadd.f32 %v2082, %v2031
    %v2100 = vadd.f32 %v2086, %v2033
    %v2101 = vadd.f32 %v2090, %v2072
    %v2102 = vadd.f32 %v2094, %v2074
    %v2103 = vld [vmem:[#allocation12] sm:$0xff]
    %v2104 = vld [vmem:[#allocation12 + $0x8] sm:$0xff]
    %v2105 = vld [vmem:[#allocation12 + $0x10] sm:$0xff]
    %v2106 = vld [vmem:[#allocation12 + $0x18] sm:$0xff]
    %v2107 = vld [vmem:[#allocation12 + $0x20] sm:$0xff]
    %v2108 = vld [vmem:[#allocation12 + $0x28] sm:$0xff]
    %v2109 = vld [vmem:[#allocation12 + $0x30] sm:$0xff]
    %v2110 = vld [vmem:[#allocation12 + $0x38] sm:$0xff]
    %v2111 = vld [vmem:[#allocation12 + $0x40] sm:$0xff]
    %v2112 = vld [vmem:[#allocation12 + $0x48] sm:$0xff]
    %v2113 = vld [vmem:[#allocation12 + $0x50] sm:$0xff]
    %v2114 = vld [vmem:[#allocation12 + $0x58] sm:$0xff]
    %v2115 = vld [vmem:[#allocation12 + $0x60] sm:$0xff]
    %v2116 = vld [vmem:[#allocation12 + $0x68] sm:$0xff]
    %v2117 = vld [vmem:[#allocation12 + $0x70] sm:$0xff]
    %v2118 = vld [vmem:[#allocation12 + $0x78] sm:$0xff]
    %v2119 = vld [vmem:[#allocation12 + $0x80] sm:$0xff]
    %v2120 = vld [vmem:[#allocation12 + $0x88] sm:$0xff]
    %v2121 = vld [vmem:[#allocation12 + $0x90] sm:$0xff]
    %v2122 = vld [vmem:[#allocation12 + $0x98] sm:$0xff]
    %v2123 = vld [vmem:[#allocation12 + $0xa0] sm:$0xff]
    %v2124 = vld [vmem:[#allocation12 + $0xa8] sm:$0xff]
    %v2125 = vld [vmem:[#allocation12 + $0xb0] sm:$0xff]
    %v2126 = vld [vmem:[#allocation12 + $0xb8] sm:$0xff]
    %v2127 = vld [vmem:[#allocation12 + $0xc0] sm:$0xff]
    %v2128 = vld [vmem:[#allocation12 + $0xc8] sm:$0xff]
    %v2129 = vld [vmem:[#allocation12 + $0xd0] sm:$0xff]
    %v2130 = vld [vmem:[#allocation12 + $0xd8] sm:$0xff]
    %v2131 = vld [vmem:[#allocation12 + $0xe0] sm:$0xff]
    %v2132 = vld [vmem:[#allocation12 + $0xe8] sm:$0xff]
    %v2133 = vld [vmem:[#allocation12 + $0xf0] sm:$0xff]
    %v2134 = vld [vmem:[#allocation12 + $0xf8] sm:$0xff]
    %v2167 = vunpack.c.l.b16 %v2103
    %v2168 = vunpack.c.h.b16 %v2103
    %v2169 = vunpack.c.l.b16 %v2104
    %v2170 = vunpack.c.h.b16 %v2104
    %v2171 = vunpack.c.l.b16 %v2105
    %v2172 = vunpack.c.h.b16 %v2105
    %v2173 = vunpack.c.l.b16 %v2106
    %v2174 = vunpack.c.h.b16 %v2106
    %v2175 = vunpack.c.l.b16 %v2107
    %v2176 = vunpack.c.h.b16 %v2107
    %v2177 = vunpack.c.l.b16 %v2108
    %v2178 = vunpack.c.h.b16 %v2108
    %v2179 = vunpack.c.l.b16 %v2109
    %v2180 = vunpack.c.h.b16 %v2109
    %v2181 = vunpack.c.l.b16 %v2110
    %v2182 = vunpack.c.h.b16 %v2110
    %v2183 = vunpack.c.l.b16 %v2111
    %v2184 = vunpack.c.h.b16 %v2111
    %v2185 = vunpack.c.l.b16 %v2112
    %v2186 = vunpack.c.h.b16 %v2112
    %v2187 = vunpack.c.l.b16 %v2113
    %v2188 = vunpack.c.h.b16 %v2113
    %v2189 = vunpack.c.l.b16 %v2114
    %v2190 = vunpack.c.h.b16 %v2114
    %v2191 = vunpack.c.l.b16 %v2115
    %v2192 = vunpack.c.h.b16 %v2115
    %v2193 = vunpack.c.l.b16 %v2116
    %v2194 = vunpack.c.h.b16 %v2116
    %v2195 = vunpack.c.l.b16 %v2117
    %v2196 = vunpack.c.h.b16 %v2117
    %v2197 = vunpack.c.l.b16 %v2118
    %v2198 = vunpack.c.h.b16 %v2118
    %v2199 = vunpack.c.l.b16 %v2119
    %v2200 = vunpack.c.h.b16 %v2119
    %v2201 = vunpack.c.l.b16 %v2120
    %v2202 = vunpack.c.h.b16 %v2120
    %v2203 = vunpack.c.l.b16 %v2121
    %v2204 = vunpack.c.h.b16 %v2121
    %v2205 = vunpack.c.l.b16 %v2122
    %v2206 = vunpack.c.h.b16 %v2122
    %v2207 = vunpack.c.l.b16 %v2123
    %v2208 = vunpack.c.h.b16 %v2123
    %v2209 = vunpack.c.l.b16 %v2124
    %v2210 = vunpack.c.h.b16 %v2124
    %v2211 = vunpack.c.l.b16 %v2125
    %v2212 = vunpack.c.h.b16 %v2125
    %v2213 = vunpack.c.l.b16 %v2126
    %v2214 = vunpack.c.h.b16 %v2126
    %v2215 = vunpack.c.l.b16 %v2127
    %v2216 = vunpack.c.h.b16 %v2127
    %v2217 = vunpack.c.l.b16 %v2128
    %v2218 = vunpack.c.h.b16 %v2128
    %v2219 = vunpack.c.l.b16 %v2129
    %v2220 = vunpack.c.h.b16 %v2129
    %v2221 = vunpack.c.l.b16 %v2130
    %v2222 = vunpack.c.h.b16 %v2130
    %v2223 = vunpack.c.l.b16 %v2131
    %v2224 = vunpack.c.h.b16 %v2131
    %v2225 = vunpack.c.l.b16 %v2132
    %v2226 = vunpack.c.h.b16 %v2132
    %v2227 = vunpack.c.l.b16 %v2133
    %v2228 = vunpack.c.h.b16 %v2133
    %v2229 = vunpack.c.l.b16 %v2134
    %v2230 = vunpack.c.h.b16 %v2134
    %v2231 = vpack.c.b16 %v2171, %v2167
    %v2232 = vpack.c.b16 %v2172, %v2168
    %v2233 = vpack.c.b16 %v2173, %v2169
    %v2234 = vpack.c.b16 %v2174, %v2170
    %v2235 = vpack.c.b16 %v2179, %v2175
    %v2236 = vpack.c.b16 %v2180, %v2176
    %v2237 = vpack.c.b16 %v2181, %v2177
    %v2238 = vpack.c.b16 %v2182, %v2178
    %v2239 = vpack.c.b16 %v2187, %v2183
    %v2240 = vpack.c.b16 %v2188, %v2184
    %v2241 = vpack.c.b16 %v2189, %v2185
    %v2242 = vpack.c.b16 %v2190, %v2186
    %v2243 = vpack.c.b16 %v2195, %v2191
    %v2244 = vpack.c.b16 %v2196, %v2192
    %v2245 = vpack.c.b16 %v2197, %v2193
    %v2246 = vpack.c.b16 %v2198, %v2194
    %v2247 = vpack.c.b16 %v2203, %v2199
    %v2248 = vpack.c.b16 %v2204, %v2200
    %v2249 = vpack.c.b16 %v2205, %v2201
    %v2250 = vpack.c.b16 %v2206, %v2202
    %v2251 = vpack.c.b16 %v2211, %v2207
    %v2252 = vpack.c.b16 %v2212, %v2208
    %v2253 = vpack.c.b16 %v2213, %v2209
    %v2254 = vpack.c.b16 %v2214, %v2210
    %v2255 = vpack.c.b16 %v2219, %v2215
    %v2256 = vpack.c.b16 %v2220, %v2216
    %v2257 = vpack.c.b16 %v2221, %v2217
    %v2258 = vpack.c.b16 %v2222, %v2218
    %v2259 = vpack.c.b16 %v2227, %v2223
    %v2260 = vpack.c.b16 %v2228, %v2224
    %v2261 = vpack.c.b16 %v2229, %v2225
    %v2262 = vpack.c.b16 %v2230, %v2226
    %2295 = vmatprep.subr.bf16.mxu0 %v2232
    %2296 = vmatpush1.bf16.msra.mxu0 %v2231
    %2297 = vmatprep.subr.bf16.mxu0 %v2236
    %2298 = vmatpush1.bf16.msra.mxu0 %v2235
    %2299 = vmatprep.subr.bf16.mxu0 %v2240
    %2300 = vmatpush1.bf16.msra.mxu0 %v2239
    %2301 = vmatprep.subr.bf16.mxu0 %v2244
    %2302 = vmatpush1.bf16.msra.mxu0 %v2243
    %2303 = vmatprep.subr.bf16.mxu0 %v2248
    %2304 = vmatpush1.bf16.msra.mxu0 %v2247
    %2305 = vmatprep.subr.bf16.mxu0 %v2252
    %2306 = vmatpush1.bf16.msra.mxu0 %v2251
    %2307 = vmatprep.subr.bf16.mxu0 %v2256
    %2308 = vmatpush1.bf16.msra.mxu0 %v2255
    %2309 = vmatprep.subr.bf16.mxu0 %v2260
    %2310 = vmatpush1.bf16.msra.mxu0 %v2259
    %2311 = vmatprep.subr.bf16.mxu0 0
    %2312 = vmatpush1.bf16.msra.mxu0 0
    %2313 = vmatprep.subr.bf16.mxu0 0
    %2314 = vmatpush1.bf16.msra.mxu0 0
    %2315 = vmatprep.subr.bf16.mxu0 0
    %2316 = vmatpush1.bf16.msra.mxu0 0
    %2317 = vmatprep.subr.bf16.mxu0 0
    %2318 = vmatpush1.bf16.msra.mxu0 0
    %2319 = vmatprep.subr.bf16.mxu0 0
    %2320 = vmatpush1.bf16.msra.mxu0 0
    %2321 = vmatprep.subr.bf16.mxu0 0
    %2322 = vmatpush1.bf16.msra.mxu0 0
    %2323 = vmatprep.subr.bf16.mxu0 0
    %2324 = vmatpush1.bf16.msra.mxu0 0
    %2325 = vmatprep.subr.bf16.mxu0 0
    %2326 = vmatpush1.bf16.msra.mxu0 0
    %2327 = vmatprep.mubr.bf16.mxu0 0
    %2328 = vmatmul.mubr.bf16.gmra.mrb[0].mxu0 %v1494
    %v2329 = vpop.f32.mrb[0].mxu0
    %v2330 = vadd.f32 0.0, %v2329
    %v2331 = vpop.f32.mrb[0].mxu0
    %v2332 = vadd.f32 0.0, %v2331
    %v2333 = vpop.f32.mrb[0].mxu0
    %v2334 = vpop.f32.mrb[0].mxu0
    %2335 = vdwg.mxu0
    %2336 = vmatprep.subr.bf16.mxu0 %v2234
    %2337 = vmatpush1.bf16.msra.mxu0 %v2233
    %2338 = vmatprep.subr.bf16.mxu0 %v2238
    %2339 = vmatpush1.bf16.msra.mxu0 %v2237
    %2340 = vmatprep.subr.bf16.mxu0 %v2242
    %2341 = vmatpush1.bf16.msra.mxu0 %v2241
    %2342 = vmatprep.subr.bf16.mxu0 %v2246
    %2343 = vmatpush1.bf16.msra.mxu0 %v2245
    %2344 = vmatprep.subr.bf16.mxu0 %v2250
    %2345 = vmatpush1.bf16.msra.mxu0 %v2249
    %2346 = vmatprep.subr.bf16.mxu0 %v2254
    %2347 = vmatpush1.bf16.msra.mxu0 %v2253
    %2348 = vmatprep.subr.bf16.mxu0 %v2258
    %2349 = vmatpush1.bf16.msra.mxu0 %v2257
    %2350 = vmatprep.subr.bf16.mxu0 %v2262
    %2351 = vmatpush1.bf16.msra.mxu0 %v2261
    %2352 = vmatprep.subr.bf16.mxu0 0
    %2353 = vmatpush1.bf16.msra.mxu0 0
    %2354 = vmatprep.subr.bf16.mxu0 0
    %2355 = vmatpush1.bf16.msra.mxu0 0
    %2356 = vmatprep.subr.bf16.mxu0 0
    %2357 = vmatpush1.bf16.msra.mxu0 0
    %2358 = vmatprep.subr.bf16.mxu0 0
    %2359 = vmatpush1.bf16.msra.mxu0 0
    %2360 = vmatprep.subr.bf16.mxu0 0
    %2361 = vmatpush1.bf16.msra.mxu0 0
    %2362 = vmatprep.subr.bf16.mxu0 0
    %2363 = vmatpush1.bf16.msra.mxu0 0
    %2364 = vmatprep.subr.bf16.mxu0 0
    %2365 = vmatpush1.bf16.msra.mxu0 0
    %2366 = vmatprep.subr.bf16.mxu0 0
    %2367 = vmatpush1.bf16.msra.mxu0 0
    %2368 = vmatprep.mubr.bf16.mxu0 0
    %2369 = vmatmul.mubr.bf16.gmra.mrb[0].mxu0 %v1494
    %v2370 = vpop.f32.mrb[0].mxu0
    %v2371 = vadd.f32 0.0, %v2370
    %v2372 = vpop.f32.mrb[0].mxu0
    %v2373 = vadd.f32 0.0, %v2372
    %v2374 = vpop.f32.mrb[0].mxu0
    %v2375 = vpop.f32.mrb[0].mxu0
    %2376 = vdwg.mxu0
    %v2377 = vadd.f32 %v2099, %v2330
    %v2378 = vadd.f32 %v2100, %v2332
    %v2379 = vadd.f32 %v2101, %v2371
    %v2380 = vadd.f32 %v2102, %v2373
    %v2381 = vxor.u32 %v2377, 2147483648
    %v2382 = vxor.u32 %v2378, 2147483648
    %v2383 = vxor.u32 %v2379, 2147483648
    %v2384 = vmul.f32 %v2381, 1.442695
    %v2385 = vpow.pop %v2384
    %v2386 = vmul.f32 %v2382, 1.442695
    %v2387 = vpow.pop %v2386
    %v2388 = vmul.f32 %v2383, 1.442695
    %v2389 = vpow.pop %v2388
    %v2390 = vadd.f32 %v2385, 1.0
    %v2391 = vadd.f32 %v2387, 1.0
    %v2392 = vadd.f32 %v2389, 1.0
    %v2393 = vrcp.pop %v2390
    %v2394 = vmul.f32 1.0, %v2393
    %v2395 = vrcp.pop %v2391
    %v2396 = vmul.f32 1.0, %v2395
    %v2397 = vrcp.pop %v2392
    %v2398 = vmul.f32 1.0, %v2397
    %v2399 = vtanh.pop %v2380
    %v2400 = vmul.f32 %v2396, %v1491
    %v2401 = vmul.f32 %v2394, %v2399
    %v2402 = vadd.f32 %v2400, %v2401
    %v2403 = vtanh.pop %v2402
    %v2404 = vmul.f32 %v2398, %v2403
    %v2405 = vpack.c.bf16 %v2404, %v2404
    %2406 = vst [vmem:[#allocation3 + $0x8] sm:$0xff] %v2404
    %v2407 = vld [vmem:[#allocation2 + $0x40] sm:$0xff]
    %v2408 = vld [vmem:[#allocation2 + $0x48] sm:$0xff]
    %v2409 = vld [vmem:[#allocation2 + $0x50] sm:$0xff]
    %v2410 = vld [vmem:[#allocation2 + $0x58] sm:$0xff]
    %v2411 = vld [vmem:[#allocation7] sm:$0xff]
    %v2412 = vld [vmem:[#allocation7 + $0x8] sm:$0xff]
    %v2413 = vld [vmem:[#allocation7 + $0x10] sm:$0xff]
    %v2414 = vld [vmem:[#allocation7 + $0x18] sm:$0xff]
    %v2415 = vld [vmem:[#allocation7 + $0x20] sm:$0xff]
    %v2416 = vld [vmem:[#allocation7 + $0x28] sm:$0xff]
    %v2417 = vld [vmem:[#allocation7 + $0x30] sm:$0xff]
    %v2418 = vld [vmem:[#allocation7 + $0x38] sm:$0xff]
    %v2419 = vld [vmem:[#allocation7 + $0x40] sm:$0xff]
    %v2420 = vld [vmem:[#allocation7 + $0x48] sm:$0xff]
    %v2421 = vld [vmem:[#allocation7 + $0x50] sm:$0xff]
    %v2422 = vld [vmem:[#allocation7 + $0x58] sm:$0xff]
    %v2423 = vld [vmem:[#allocation7 + $0x60] sm:$0xff]
    %v2424 = vld [vmem:[#allocation7 + $0x68] sm:$0xff]
    %v2425 = vld [vmem:[#allocation7 + $0x70] sm:$0xff]
    %v2426 = vld [vmem:[#allocation7 + $0x78] sm:$0xff]
    %v2427 = vld [vmem:[#allocation7 + $0x80] sm:$0xff]
    %v2428 = vld [vmem:[#allocation7 + $0x88] sm:$0xff]
    %v2429 = vld [vmem:[#allocation7 + $0x90] sm:$0xff]
    %v2430 = vld [vmem:[#allocation7 + $0x98] sm:$0xff]
    %v2431 = vld [vmem:[#allocation7 + $0xa0] sm:$0xff]
    %v2432 = vld [vmem:[#allocation7 + $0xa8] sm:$0xff]
    %v2433 = vld [vmem:[#allocation7 + $0xb0] sm:$0xff]
    %v2434 = vld [vmem:[#allocation7 + $0xb8] sm:$0xff]
    %v2435 = vld [vmem:[#allocation7 + $0xc0] sm:$0xff]
    %v2436 = vld [vmem:[#allocation7 + $0xc8] sm:$0xff]
    %v2437 = vld [vmem:[#allocation7 + $0xd0] sm:$0xff]
    %v2438 = vld [vmem:[#allocation7 + $0xd8] sm:$0xff]
    %v2439 = vld [vmem:[#allocation7 + $0xe0] sm:$0xff]
    %v2440 = vld [vmem:[#allocation7 + $0xe8] sm:$0xff]
    %v2441 = vld [vmem:[#allocation7 + $0xf0] sm:$0xff]
    %v2442 = vld [vmem:[#allocation7 + $0xf8] sm:$0xff]
    %v2475 = vunpack.c.l.b16 %v2411
    %v2476 = vunpack.c.h.b16 %v2411
    %v2477 = vunpack.c.l.b16 %v2412
    %v2478 = vunpack.c.h.b16 %v2412
    %v2479 = vunpack.c.l.b16 %v2413
    %v2480 = vunpack.c.h.b16 %v2413
    %v2481 = vunpack.c.l.b16 %v2414
    %v2482 = vunpack.c.h.b16 %v2414
    %v2483 = vunpack.c.l.b16 %v2415
    %v2484 = vunpack.c.h.b16 %v2415
    %v2485 = vunpack.c.l.b16 %v2416
    %v2486 = vunpack.c.h.b16 %v2416
    %v2487 = vunpack.c.l.b16 %v2417
    %v2488 = vunpack.c.h.b16 %v2417
    %v2489 = vunpack.c.l.b16 %v2418
    %v2490 = vunpack.c.h.b16 %v2418
    %v2491 = vunpack.c.l.b16 %v2419
    %v2492 = vunpack.c.h.b16 %v2419
    %v2493 = vunpack.c.l.b16 %v2420
    %v2494 = vunpack.c.h.b16 %v2420
    %v2495 = vunpack.c.l.b16 %v2421
    %v2496 = vunpack.c.h.b16 %v2421
    %v2497 = vunpack.c.l.b16 %v2422
    %v2498 = vunpack.c.h.b16 %v2422
    %v2499 = vunpack.c.l.b16 %v2423
    %v2500 = vunpack.c.h.b16 %v2423
    %v2501 = vunpack.c.l.b16 %v2424
    %v2502 = vunpack.c.h.b16 %v2424
    %v2503 = vunpack.c.l.b16 %v2425
    %v2504 = vunpack.c.h.b16 %v2425
    %v2505 = vunpack.c.l.b16 %v2426
    %v2506 = vunpack.c.h.b16 %v2426
    %v2507 = vunpack.c.l.b16 %v2427
    %v2508 = vunpack.c.h.b16 %v2427
    %v2509 = vunpack.c.l.b16 %v2428
    %v2510 = vunpack.c.h.b16 %v2428
    %v2511 = vunpack.c.l.b16 %v2429
    %v2512 = vunpack.c.h.b16 %v2429
    %v2513 = vunpack.c.l.b16 %v2430
    %v2514 = vunpack.c.h.b16 %v2430
    %v2515 = vunpack.c.l.b16 %v2431
    %v2516 = vunpack.c.h.b16 %v2431
    %v2517 = vunpack.c.l.b16 %v2432
    %v2518 = vunpack.c.h.b16 %v2432
    %v2519 = vunpack.c.l.b16 %v2433
    %v2520 = vunpack.c.h.b16 %v2433
    %v2521 = vunpack.c.l.b16 %v2434
    %v2522 = vunpack.c.h.b16 %v2434
    %v2523 = vunpack.c.l.b16 %v2435
    %v2524 = vunpack.c.h.b16 %v2435
    %v2525 = vunpack.c.l.b16 %v2436
    %v2526 = vunpack.c.h.b16 %v2436
    %v2527 = vunpack.c.l.b16 %v2437
    %v2528 = vunpack.c.h.b16 %v2437
    %v2529 = vunpack.c.l.b16 %v2438
    %v2530 = vunpack.c.h.b16 %v2438
    %v2531 = vunpack.c.l.b16 %v2439
    %v2532 = vunpack.c.h.b16 %v2439
    %v2533 = vunpack.c.l.b16 %v2440
    %v2534 = vunpack.c.h.b16 %v2440
    %v2535 = vunpack.c.l.b16 %v2441
    %v2536 = vunpack.c.h.b16 %v2441
    %v2537 = vunpack.c.l.b16 %v2442
    %v2538 = vunpack.c.h.b16 %v2442
    %v2539 = vpack.c.b16 %v2479, %v2475
    %v2540 = vpack.c.b16 %v2480, %v2476
    %v2541 = vpack.c.b16 %v2481, %v2477
    %v2542 = vpack.c.b16 %v2482, %v2478
    %v2543 = vpack.c.b16 %v2487, %v2483
    %v2544 = vpack.c.b16 %v2488, %v2484
    %v2545 = vpack.c.b16 %v2489, %v2485
    %v2546 = vpack.c.b16 %v2490, %v2486
    %v2547 = vpack.c.b16 %v2495, %v2491
    %v2548 = vpack.c.b16 %v2496, %v2492
    %v2549 = vpack.c.b16 %v2497, %v2493
    %v2550 = vpack.c.b16 %v2498, %v2494
    %v2551 = vpack.c.b16 %v2503, %v2499
    %v2552 = vpack.c.b16 %v2504, %v2500
    %v2553 = vpack.c.b16 %v2505, %v2501
    %v2554 = vpack.c.b16 %v2506, %v2502
    %v2555 = vpack.c.b16 %v2511, %v2507
    %v2556 = vpack.c.b16 %v2512, %v2508
    %v2557 = vpack.c.b16 %v2513, %v2509
    %v2558 = vpack.c.b16 %v2514, %v2510
    %v2559 = vpack.c.b16 %v2519, %v2515
    %v2560 = vpack.c.b16 %v2520, %v2516
    %v2561 = vpack.c.b16 %v2521, %v2517
    %v2562 = vpack.c.b16 %v2522, %v2518
    %v2563 = vpack.c.b16 %v2527, %v2523
    %v2564 = vpack.c.b16 %v2528, %v2524
    %v2565 = vpack.c.b16 %v2529, %v2525
    %v2566 = vpack.c.b16 %v2530, %v2526
    %v2567 = vpack.c.b16 %v2535, %v2531
    %v2568 = vpack.c.b16 %v2536, %v2532
    %v2569 = vpack.c.b16 %v2537, %v2533
    %v2570 = vpack.c.b16 %v2538, %v2534
    %2603 = vmatprep.subr.bf16.mxu0 %v2540
    %2604 = vmatpush1.bf16.msra.mxu0 %v2539
    %2605 = vmatprep.subr.bf16.mxu0 %v2544
    %2606 = vmatpush1.bf16.msra.mxu0 %v2543
    %2607 = vmatprep.subr.bf16.mxu0 %v2548
    %2608 = vmatpush1.bf16.msra.mxu0 %v2547
    %2609 = vmatprep.subr.bf16.mxu0 %v2552
    %2610 = vmatpush1.bf16.msra.mxu0 %v2551
    %2611 = vmatprep.subr.bf16.mxu0 %v2556
    %2612 = vmatpush1.bf16.msra.mxu0 %v2555
    %2613 = vmatprep.subr.bf16.mxu0 %v2560
    %2614 = vmatpush1.bf16.msra.mxu0 %v2559
    %2615 = vmatprep.subr.bf16.mxu0 %v2564
    %2616 = vmatpush1.bf16.msra.mxu0 %v2563
    %2617 = vmatprep.subr.bf16.mxu0 %v2568
    %2618 = vmatpush1.bf16.msra.mxu0 %v2567
    %2619 = vmatprep.subr.bf16.mxu0 0
    %2620 = vmatpush1.bf16.msra.mxu0 0
    %2621 = vmatprep.subr.bf16.mxu0 0
    %2622 = vmatpush1.bf16.msra.mxu0 0
    %2623 = vmatprep.subr.bf16.mxu0 0
    %2624 = vmatpush1.bf16.msra.mxu0 0
    %2625 = vmatprep.subr.bf16.mxu0 0
    %2626 = vmatpush1.bf16.msra.mxu0 0
    %2627 = vmatprep.subr.bf16.mxu0 0
    %2628 = vmatpush1.bf16.msra.mxu0 0
    %2629 = vmatprep.subr.bf16.mxu0 0
    %2630 = vmatpush1.bf16.msra.mxu0 0
    %2631 = vmatprep.subr.bf16.mxu0 0
    %2632 = vmatpush1.bf16.msra.mxu0 0
    %2633 = vmatprep.subr.bf16.mxu0 0
    %2634 = vmatpush1.bf16.msra.mxu0 0
    %2635 = vmatprep.mubr.bf16.mxu0 0
    %2636 = vmatmul.mubr.bf16.gmra.mrb[0].mxu0 %v1802
    %v2637 = vpop.f32.mrb[0].mxu0
    %v2638 = vadd.f32 0.0, %v2637
    %v2639 = vpop.f32.mrb[0].mxu0
    %v2640 = vadd.f32 0.0, %v2639
    %v2641 = vpop.f32.mrb[0].mxu0
    %v2642 = vpop.f32.mrb[0].mxu0
    %2643 = vdwg.mxu0
    %2644 = vmatprep.subr.bf16.mxu0 %v2542
    %2645 = vmatpush1.bf16.msra.mxu0 %v2541
    %2646 = vmatprep.subr.bf16.mxu0 %v2546
    %2647 = vmatpush1.bf16.msra.mxu0 %v2545
    %2648 = vmatprep.subr.bf16.mxu0 %v2550
    %2649 = vmatpush1.bf16.msra.mxu0 %v2549
    %2650 = vmatprep.subr.bf16.mxu0 %v2554
    %2651 = vmatpush1.bf16.msra.mxu0 %v2553
    %2652 = vmatprep.subr.bf16.mxu0 %v2558
    %2653 = vmatpush1.bf16.msra.mxu0 %v2557
    %2654 = vmatprep.subr.bf16.mxu0 %v2562
    %2655 = vmatpush1.bf16.msra.mxu0 %v2561
    %2656 = vmatprep.subr.bf16.mxu0 %v2566
    %2657 = vmatpush1.bf16.msra.mxu0 %v2565
    %2658 = vmatprep.subr.bf16.mxu0 %v2570
    %2659 = vmatpush1.bf16.msra.mxu0 %v2569
    %2660 = vmatprep.subr.bf16.mxu0 0
    %2661 = vmatpush1.bf16.msra.mxu0 0
    %2662 = vmatprep.subr.bf16.mxu0 0
    %2663 = vmatpush1.bf16.msra.mxu0 0
    %2664 = vmatprep.subr.bf16.mxu0 0
    %2665 = vmatpush1.bf16.msra.mxu0 0
    %2666 = vmatprep.subr.bf16.mxu0 0
    %2667 = vmatpush1.bf16.msra.mxu0 0
    %2668 = vmatprep.subr.bf16.mxu0 0
    %2669 = vmatpush1.bf16.msra.mxu0 0
    %2670 = vmatprep.subr.bf16.mxu0 0
    %2671 = vmatpush1.bf16.msra.mxu0 0
    %2672 = vmatprep.subr.bf16.mxu0 0
    %2673 = vmatpush1.bf16.msra.mxu0 0
    %2674 = vmatprep.subr.bf16.mxu0 0
    %2675 = vmatpush1.bf16.msra.mxu0 0
    %2676 = vmatprep.mubr.bf16.mxu0 0
    %2677 = vmatmul.mubr.bf16.gmra.mrb[0].mxu0 %v1802
    %v2678 = vpop.f32.mrb[0].mxu0
    %v2679 = vadd.f32 0.0, %v2678
    %v2680 = vpop.f32.mrb[0].mxu0
    %v2681 = vadd.f32 0.0, %v2680
    %v2682 = vpop.f32.mrb[0].mxu0
    %v2683 = vpop.f32.mrb[0].mxu0
    %2684 = vdwg.mxu0
    %v2685 = vadd.f32 %v2407, %v2638
    %v2686 = vadd.f32 %v2408, %v2640
    %v2687 = vadd.f32 %v2409, %v2679
    %v2688 = vadd.f32 %v2410, %v2681
    %v2689 = vxor.u32 %v2685, 2147483648
    %v2690 = vxor.u32 %v2686, 2147483648
    %v2691 = vxor.u32 %v2687, 2147483648
    %v2692 = vmul.f32 %v2689, 1.442695
    %v2693 = vpow.pop %v2692
    %v2694 = vmul.f32 %v2690, 1.442695
    %v2695 = vpow.pop %v2694
    %v2696 = vmul.f32 %v2691, 1.442695
    %v2697 = vpow.pop %v2696
    %v2698 = vadd.f32 %v2693, 1.0
    %v2699 = vadd.f32 %v2695, 1.0
    %v2700 = vadd.f32 %v2697, 1.0
    %v2701 = vrcp.pop %v2698
    %v2702 = vmul.f32 1.0, %v2701
    %v2703 = vrcp.pop %v2699
    %v2704 = vmul.f32 1.0, %v2703
    %v2705 = vrcp.pop %v2700
    %v2706 = vmul.f32 1.0, %v2705
    %v2707 = vtanh.pop %v2688
    %v2708 = vmul.f32 %v2704, %v1799
    %v2709 = vmul.f32 %v2702, %v2707
    %v2710 = vadd.f32 %v2708, %v2709
    %v2711 = vtanh.pop %v2710
    %v2712 = vmul.f32 %v2706, %v2711
    %v2713 = vpack.c.bf16 %v2712, %v2712
    %v2714 = vld [vmem:[#allocation13] sm:$0xf]
    %v2715 = vld [vmem:[#allocation10] sm:$0xff]
    %v2716 = vld [vmem:[#allocation10 + $0x8] sm:$0xff]
    %v2717 = vld [vmem:[#allocation10 + $0x10] sm:$0xff]
    %v2718 = vld [vmem:[#allocation10 + $0x18] sm:$0xff]
    %v2719 = vld [vmem:[#allocation10 + $0x20] sm:$0xff]
    %v2720 = vld [vmem:[#allocation10 + $0x28] sm:$0xff]
    %v2721 = vld [vmem:[#allocation10 + $0x30] sm:$0xff]
    %v2722 = vld [vmem:[#allocation10 + $0x38] sm:$0xff]
    %v2723 = vld [vmem:[#allocation10 + $0x40] sm:$0xff]
    %v2724 = vld [vmem:[#allocation10 + $0x48] sm:$0xff]
    %v2725 = vld [vmem:[#allocation10 + $0x50] sm:$0xff]
    %v2726 = vld [vmem:[#allocation10 + $0x58] sm:$0xff]
    %v2727 = vld [vmem:[#allocation10 + $0x60] sm:$0xff]
    %v2728 = vld [vmem:[#allocation10 + $0x68] sm:$0xff]
    %v2729 = vld [vmem:[#allocation10 + $0x70] sm:$0xff]
    %v2730 = vld [vmem:[#allocation10 + $0x78] sm:$0xff]
    %v2731 = vld [vmem:[#allocation10 + $0x80] sm:$0xff]
    %v2732 = vld [vmem:[#allocation10 + $0x88] sm:$0xff]
    %v2733 = vld [vmem:[#allocation10 + $0x90] sm:$0xff]
    %v2734 = vld [vmem:[#allocation10 + $0x98] sm:$0xff]
    %v2735 = vld [vmem:[#allocation10 + $0xa0] sm:$0xff]
    %v2736 = vld [vmem:[#allocation10 + $0xa8] sm:$0xff]
    %v2737 = vld [vmem:[#allocation10 + $0xb0] sm:$0xff]
    %v2738 = vld [vmem:[#allocation10 + $0xb8] sm:$0xff]
    %v2739 = vld [vmem:[#allocation10 + $0xc0] sm:$0xff]
    %v2740 = vld [vmem:[#allocation10 + $0xc8] sm:$0xff]
    %v2741 = vld [vmem:[#allocation10 + $0xd0] sm:$0xff]
    %v2742 = vld [vmem:[#allocation10 + $0xd8] sm:$0xff]
    %v2743 = vld [vmem:[#allocation10 + $0xe0] sm:$0xff]
    %v2744 = vld [vmem:[#allocation10 + $0xe8] sm:$0xff]
    %v2745 = vld [vmem:[#allocation10 + $0xf0] sm:$0xff]
    %v2746 = vld [vmem:[#allocation10 + $0xf8] sm:$0xff]
    %v2779 = vunpack.c.l.b16 %v2715
    %v2780 = vunpack.c.h.b16 %v2715
    %v2781 = vunpack.c.l.b16 %v2716
    %v2782 = vunpack.c.h.b16 %v2716
    %v2783 = vunpack.c.l.b16 %v2717
    %v2784 = vunpack.c.h.b16 %v2717
    %v2785 = vunpack.c.l.b16 %v2718
    %v2786 = vunpack.c.h.b16 %v2718
    %v2787 = vunpack.c.l.b16 %v2719
    %v2788 = vunpack.c.h.b16 %v2719
    %v2789 = vunpack.c.l.b16 %v2720
    %v2790 = vunpack.c.h.b16 %v2720
    %v2791 = vunpack.c.l.b16 %v2721
    %v2792 = vunpack.c.h.b16 %v2721
    %v2793 = vunpack.c.l.b16 %v2722
    %v2794 = vunpack.c.h.b16 %v2722
    %v2795 = vunpack.c.l.b16 %v2723
    %v2796 = vunpack.c.h.b16 %v2723
    %v2797 = vunpack.c.l.b16 %v2724
    %v2798 = vunpack.c.h.b16 %v2724
    %v2799 = vunpack.c.l.b16 %v2725
    %v2800 = vunpack.c.h.b16 %v2725
    %v2801 = vunpack.c.l.b16 %v2726
    %v2802 = vunpack.c.h.b16 %v2726
    %v2803 = vunpack.c.l.b16 %v2727
    %v2804 = vunpack.c.h.b16 %v2727
    %v2805 = vunpack.c.l.b16 %v2728
    %v2806 = vunpack.c.h.b16 %v2728
    %v2807 = vunpack.c.l.b16 %v2729
    %v2808 = vunpack.c.h.b16 %v2729
    %v2809 = vunpack.c.l.b16 %v2730
    %v2810 = vunpack.c.h.b16 %v2730
    %v2811 = vunpack.c.l.b16 %v2731
    %v2812 = vunpack.c.h.b16 %v2731
    %v2813 = vunpack.c.l.b16 %v2732
    %v2814 = vunpack.c.h.b16 %v2732
    %v2815 = vunpack.c.l.b16 %v2733
    %v2816 = vunpack.c.h.b16 %v2733
    %v2817 = vunpack.c.l.b16 %v2734
    %v2818 = vunpack.c.h.b16 %v2734
    %v2819 = vunpack.c.l.b16 %v2735
    %v2820 = vunpack.c.h.b16 %v2735
    %v2821 = vunpack.c.l.b16 %v2736
    %v2822 = vunpack.c.h.b16 %v2736
    %v2823 = vunpack.c.l.b16 %v2737
    %v2824 = vunpack.c.h.b16 %v2737
    %v2825 = vunpack.c.l.b16 %v2738
    %v2826 = vunpack.c.h.b16 %v2738
    %v2827 = vunpack.c.l.b16 %v2739
    %v2828 = vunpack.c.h.b16 %v2739
    %v2829 = vunpack.c.l.b16 %v2740
    %v2830 = vunpack.c.h.b16 %v2740
    %v2831 = vunpack.c.l.b16 %v2741
    %v2832 = vunpack.c.h.b16 %v2741
    %v2833 = vunpack.c.l.b16 %v2742
    %v2834 = vunpack.c.h.b16 %v2742
    %v2835 = vunpack.c.l.b16 %v2743
    %v2836 = vunpack.c.h.b16 %v2743
    %v2837 = vunpack.c.l.b16 %v2744
    %v2838 = vunpack.c.h.b16 %v2744
    %v2839 = vunpack.c.l.b16 %v2745
    %v2840 = vunpack.c.h.b16 %v2745
    %v2841 = vunpack.c.l.b16 %v2746
    %v2842 = vunpack.c.h.b16 %v2746
    %v2843 = vpack.c.b16 %v2783, %v2779
    %v2844 = vpack.c.b16 %v2784, %v2780
    %v2845 = vpack.c.b16 %v2785, %v2781
    %v2846 = vpack.c.b16 %v2786, %v2782
    %v2847 = vpack.c.b16 %v2791, %v2787
    %v2848 = vpack.c.b16 %v2792, %v2788
    %v2849 = vpack.c.b16 %v2793, %v2789
    %v2850 = vpack.c.b16 %v2794, %v2790
    %v2851 = vpack.c.b16 %v2799, %v2795
    %v2852 = vpack.c.b16 %v2800, %v2796
    %v2853 = vpack.c.b16 %v2801, %v2797
    %v2854 = vpack.c.b16 %v2802, %v2798
    %v2855 = vpack.c.b16 %v2807, %v2803
    %v2856 = vpack.c.b16 %v2808, %v2804
    %v2857 = vpack.c.b16 %v2809, %v2805
    %v2858 = vpack.c.b16 %v2810, %v2806
    %v2859 = vpack.c.b16 %v2815, %v2811
    %v2860 = vpack.c.b16 %v2816, %v2812
    %v2861 = vpack.c.b16 %v2817, %v2813
    %v2862 = vpack.c.b16 %v2818, %v2814
    %v2863 = vpack.c.b16 %v2823, %v2819
    %v2864 = vpack.c.b16 %v2824, %v2820
    %v2865 = vpack.c.b16 %v2825, %v2821
    %v2866 = vpack.c.b16 %v2826, %v2822
    %v2867 = vpack.c.b16 %v2831, %v2827
    %v2868 = vpack.c.b16 %v2832, %v2828
    %v2869 = vpack.c.b16 %v2833, %v2829
    %v2870 = vpack.c.b16 %v2834, %v2830
    %v2871 = vpack.c.b16 %v2839, %v2835
    %v2872 = vpack.c.b16 %v2840, %v2836
    %v2873 = vpack.c.b16 %v2841, %v2837
    %v2874 = vpack.c.b16 %v2842, %v2838
    %2907 = vmatprep.subr.bf16.mxu0 %v2844
    %2908 = vmatpush1.bf16.msra.mxu0 %v2843
    %2909 = vmatprep.subr.bf16.mxu0 %v2848
    %2910 = vmatpush1.bf16.msra.mxu0 %v2847
    %2911 = vmatprep.subr.bf16.mxu0 %v2852
    %2912 = vmatpush1.bf16.msra.mxu0 %v2851
    %2913 = vmatprep.subr.bf16.mxu0 %v2856
    %2914 = vmatpush1.bf16.msra.mxu0 %v2855
    %2915 = vmatprep.subr.bf16.mxu0 %v2860
    %2916 = vmatpush1.bf16.msra.mxu0 %v2859
    %2917 = vmatprep.subr.bf16.mxu0 %v2864
    %2918 = vmatpush1.bf16.msra.mxu0 %v2863
    %2919 = vmatprep.subr.bf16.mxu0 %v2868
    %2920 = vmatpush1.bf16.msra.mxu0 %v2867
    %2921 = vmatprep.subr.bf16.mxu0 %v2872
    %2922 = vmatpush1.bf16.msra.mxu0 %v2871
    %2923 = vmatprep.subr.bf16.mxu0 0
    %2924 = vmatpush1.bf16.msra.mxu0 0
    %2925 = vmatprep.subr.bf16.mxu0 0
    %2926 = vmatpush1.bf16.msra.mxu0 0
    %2927 = vmatprep.subr.bf16.mxu0 0
    %2928 = vmatpush1.bf16.msra.mxu0 0
    %2929 = vmatprep.subr.bf16.mxu0 0
    %2930 = vmatpush1.bf16.msra.mxu0 0
    %2931 = vmatprep.subr.bf16.mxu0 0
    %2932 = vmatpush1.bf16.msra.mxu0 0
    %2933 = vmatprep.subr.bf16.mxu0 0
    %2934 = vmatpush1.bf16.msra.mxu0 0
    %2935 = vmatprep.subr.bf16.mxu0 0
    %2936 = vmatpush1.bf16.msra.mxu0 0
    %2937 = vmatprep.subr.bf16.mxu0 0
    %2938 = vmatpush1.bf16.msra.mxu0 0
    %2939 = vmatprep.mubr.bf16.mxu0 0
    %2940 = vmatmul.mubr.bf16.gmra.mrb[0].mxu0 %v2713
    %v2941 = vpop.f32.mrb[0].mxu0
    %v2942 = vadd.f32 0.0, %v2941
    %v2943 = vpop.f32.mrb[0].mxu0
    %v2944 = vadd.f32 0.0, %v2943
    %v2945 = vpop.f32.mrb[0].mxu0
    %v2946 = vpop.f32.mrb[0].mxu0
    %2947 = vdwg.mxu0
    %2948 = vmatprep.subr.bf16.mxu0 %v2846
    %2949 = vmatpush1.bf16.msra.mxu0 %v2845
    %2950 = vmatprep.subr.bf16.mxu0 %v2850
    %2951 = vmatpush1.bf16.msra.mxu0 %v2849
    %2952 = vmatprep.subr.bf16.mxu0 %v2854
    %2953 = vmatpush1.bf16.msra.mxu0 %v2853
    %2954 = vmatprep.subr.bf16.mxu0 %v2858
    %2955 = vmatpush1.bf16.msra.mxu0 %v2857
    %2956 = vmatprep.subr.bf16.mxu0 %v2862
    %2957 = vmatpush1.bf16.msra.mxu0 %v2861
    %2958 = vmatprep.subr.bf16.mxu0 %v2866
    %2959 = vmatpush1.bf16.msra.mxu0 %v2865
    %2960 = vmatprep.subr.bf16.mxu0 %v2870
    %2961 = vmatpush1.bf16.msra.mxu0 %v2869
    %2962 = vmatprep.subr.bf16.mxu0 %v2874
    %2963 = vmatpush1.bf16.msra.mxu0 %v2873
    %2964 = vmatprep.subr.bf16.mxu0 0
    %2965 = vmatpush1.bf16.msra.mxu0 0
    %2966 = vmatprep.subr.bf16.mxu0 0
    %2967 = vmatpush1.bf16.msra.mxu0 0
    %2968 = vmatprep.subr.bf16.mxu0 0
    %2969 = vmatpush1.bf16.msra.mxu0 0
    %2970 = vmatprep.subr.bf16.mxu0 0
    %2971 = vmatpush1.bf16.msra.mxu0 0
    %2972 = vmatprep.subr.bf16.mxu0 0
    %2973 = vmatpush1.bf16.msra.mxu0 0
    %2974 = vmatprep.subr.bf16.mxu0 0
    %2975 = vmatpush1.bf16.msra.mxu0 0
    %2976 = vmatprep.subr.bf16.mxu0 0
    %2977 = vmatpush1.bf16.msra.mxu0 0
    %2978 = vmatprep.subr.bf16.mxu0 0
    %2979 = vmatpush1.bf16.msra.mxu0 0
    %2980 = vmatprep.mubr.bf16.mxu0 0
    %2981 = vmatmul.mubr.bf16.gmra.mrb[0].mxu0 %v2713
    %v2982 = vpop.f32.mrb[0].mxu0
    %v2983 = vadd.f32 0.0, %v2982
    %v2984 = vpop.f32.mrb[0].mxu0
    %v2985 = vadd.f32 0.0, %v2984
    %v2986 = vpop.f32.mrb[0].mxu0
    %v2987 = vpop.f32.mrb[0].mxu0
    %2988 = vdwg.mxu0
    %v2990 = vlaneseq
    %v2991 = vshrl.u32 %v2990, 7
    %v2992 = vsub.s32 0, %v2991
    %v2993 = vrot.slane %v2714, %v2992
    %v2994 = vlaneseq
    %v2995 = vshrl.u32 %v2994, 7
    %v2996 = vsub.s32 1, %v2995
    %v2997 = vrot.slane %v2714, %v2996
    %v2998 = vlaneseq
    %v2999 = vshrl.u32 %v2998, 7
    %v3000 = vsub.s32 2, %v2999
    %v3001 = vrot.slane %v2714, %v3000
    %v3002 = vlaneseq
    %v3003 = vshrl.u32 %v3002, 7
    %v3004 = vsub.s32 3, %v3003
    %v3005 = vrot.slane %v2714, %v3004
    %v3010 = vadd.f32 %v2993, %v2942
    %v3011 = vadd.f32 %v2997, %v2944
    %v3012 = vadd.f32 %v3001, %v2983
    %v3013 = vadd.f32 %v3005, %v2985
    %v3014 = vld [vmem:[#allocation12] sm:$0xff]
    %v3015 = vld [vmem:[#allocation12 + $0x8] sm:$0xff]
    %v3016 = vld [vmem:[#allocation12 + $0x10] sm:$0xff]
    %v3017 = vld [vmem:[#allocation12 + $0x18] sm:$0xff]
    %v3018 = vld [vmem:[#allocation12 + $0x20] sm:$0xff]
    %v3019 = vld [vmem:[#allocation12 + $0x28] sm:$0xff]
    %v3020 = vld [vmem:[#allocation12 + $0x30] sm:$0xff]
    %v3021 = vld [vmem:[#allocation12 + $0x38] sm:$0xff]
    %v3022 = vld [vmem:[#allocation12 + $0x40] sm:$0xff]
    %v3023 = vld [vmem:[#allocation12 + $0x48] sm:$0xff]
    %v3024 = vld [vmem:[#allocation12 + $0x50] sm:$0xff]
    %v3025 = vld [vmem:[#allocation12 + $0x58] sm:$0xff]
    %v3026 = vld [vmem:[#allocation12 + $0x60] sm:$0xff]
    %v3027 = vld [vmem:[#allocation12 + $0x68] sm:$0xff]
    %v3028 = vld [vmem:[#allocation12 + $0x70] sm:$0xff]
    %v3029 = vld [vmem:[#allocation12 + $0x78] sm:$0xff]
    %v3030 = vld [vmem:[#allocation12 + $0x80] sm:$0xff]
    %v3031 = vld [vmem:[#allocation12 + $0x88] sm:$0xff]
    %v3032 = vld [vmem:[#allocation12 + $0x90] sm:$0xff]
    %v3033 = vld [vmem:[#allocation12 + $0x98] sm:$0xff]
    %v3034 = vld [vmem:[#allocation12 + $0xa0] sm:$0xff]
    %v3035 = vld [vmem:[#allocation12 + $0xa8] sm:$0xff]
    %v3036 = vld [vmem:[#allocation12 + $0xb0] sm:$0xff]
    %v3037 = vld [vmem:[#allocation12 + $0xb8] sm:$0xff]
    %v3038 = vld [vmem:[#allocation12 + $0xc0] sm:$0xff]
    %v3039 = vld [vmem:[#allocation12 + $0xc8] sm:$0xff]
    %v3040 = vld [vmem:[#allocation12 + $0xd0] sm:$0xff]
    %v3041 = vld [vmem:[#allocation12 + $0xd8] sm:$0xff]
    %v3042 = vld [vmem:[#allocation12 + $0xe0] sm:$0xff]
    %v3043 = vld [vmem:[#allocation12 + $0xe8] sm:$0xff]
    %v3044 = vld [vmem:[#allocation12 + $0xf0] sm:$0xff]
    %v3045 = vld [vmem:[#allocation12 + $0xf8] sm:$0xff]
    %v3078 = vunpack.c.l.b16 %v3014
    %v3079 = vunpack.c.h.b16 %v3014
    %v3080 = vunpack.c.l.b16 %v3015
    %v3081 = vunpack.c.h.b16 %v3015
    %v3082 = vunpack.c.l.b16 %v3016
    %v3083 = vunpack.c.h.b16 %v3016
    %v3084 = vunpack.c.l.b16 %v3017
    %v3085 = vunpack.c.h.b16 %v3017
    %v3086 = vunpack.c.l.b16 %v3018
    %v3087 = vunpack.c.h.b16 %v3018
    %v3088 = vunpack.c.l.b16 %v3019
    %v3089 = vunpack.c.h.b16 %v3019
    %v3090 = vunpack.c.l.b16 %v3020
    %v3091 = vunpack.c.h.b16 %v3020
    %v3092 = vunpack.c.l.b16 %v3021
    %v3093 = vunpack.c.h.b16 %v3021
    %v3094 = vunpack.c.l.b16 %v3022
    %v3095 = vunpack.c.h.b16 %v3022
    %v3096 = vunpack.c.l.b16 %v3023
    %v3097 = vunpack.c.h.b16 %v3023
    %v3098 = vunpack.c.l.b16 %v3024
    %v3099 = vunpack.c.h.b16 %v3024
    %v3100 = vunpack.c.l.b16 %v3025
    %v3101 = vunpack.c.h.b16 %v3025
    %v3102 = vunpack.c.l.b16 %v3026
    %v3103 = vunpack.c.h.b16 %v3026
    %v3104 = vunpack.c.l.b16 %v3027
    %v3105 = vunpack.c.h.b16 %v3027
    %v3106 = vunpack.c.l.b16 %v3028
    %v3107 = vunpack.c.h.b16 %v3028
    %v3108 = vunpack.c.l.b16 %v3029
    %v3109 = vunpack.c.h.b16 %v3029
    %v3110 = vunpack.c.l.b16 %v3030
    %v3111 = vunpack.c.h.b16 %v3030
    %v3112 = vunpack.c.l.b16 %v3031
    %v3113 = vunpack.c.h.b16 %v3031
    %v3114 = vunpack.c.l.b16 %v3032
    %v3115 = vunpack.c.h.b16 %v3032
    %v3116 = vunpack.c.l.b16 %v3033
    %v3117 = vunpack.c.h.b16 %v3033
    %v3118 = vunpack.c.l.b16 %v3034
    %v3119 = vunpack.c.h.b16 %v3034
    %v3120 = vunpack.c.l.b16 %v3035
    %v3121 = vunpack.c.h.b16 %v3035
    %v3122 = vunpack.c.l.b16 %v3036
    %v3123 = vunpack.c.h.b16 %v3036
    %v3124 = vunpack.c.l.b16 %v3037
    %v3125 = vunpack.c.h.b16 %v3037
    %v3126 = vunpack.c.l.b16 %v3038
    %v3127 = vunpack.c.h.b16 %v3038
    %v3128 = vunpack.c.l.b16 %v3039
    %v3129 = vunpack.c.h.b16 %v3039
    %v3130 = vunpack.c.l.b16 %v3040
    %v3131 = vunpack.c.h.b16 %v3040
    %v3132 = vunpack.c.l.b16 %v3041
    %v3133 = vunpack.c.h.b16 %v3041
    %v3134 = vunpack.c.l.b16 %v3042
    %v3135 = vunpack.c.h.b16 %v3042
    %v3136 = vunpack.c.l.b16 %v3043
    %v3137 = vunpack.c.h.b16 %v3043
    %v3138 = vunpack.c.l.b16 %v3044
    %v3139 = vunpack.c.h.b16 %v3044
    %v3140 = vunpack.c.l.b16 %v3045
    %v3141 = vunpack.c.h.b16 %v3045
    %v3142 = vpack.c.b16 %v3082, %v3078
    %v3143 = vpack.c.b16 %v3083, %v3079
    %v3144 = vpack.c.b16 %v3084, %v3080
    %v3145 = vpack.c.b16 %v3085, %v3081
    %v3146 = vpack.c.b16 %v3090, %v3086
    %v3147 = vpack.c.b16 %v3091, %v3087
    %v3148 = vpack.c.b16 %v3092, %v3088
    %v3149 = vpack.c.b16 %v3093, %v3089
    %v3150 = vpack.c.b16 %v3098, %v3094
    %v3151 = vpack.c.b16 %v3099, %v3095
    %v3152 = vpack.c.b16 %v3100, %v3096
    %v3153 = vpack.c.b16 %v3101, %v3097
    %v3154 = vpack.c.b16 %v3106, %v3102
    %v3155 = vpack.c.b16 %v3107, %v3103
    %v3156 = vpack.c.b16 %v3108, %v3104
    %v3157 = vpack.c.b16 %v3109, %v3105
    %v3158 = vpack.c.b16 %v3114, %v3110
    %v3159 = vpack.c.b16 %v3115, %v3111
    %v3160 = vpack.c.b16 %v3116, %v3112
    %v3161 = vpack.c.b16 %v3117, %v3113
    %v3162 = vpack.c.b16 %v3122, %v3118
    %v3163 = vpack.c.b16 %v3123, %v3119
    %v3164 = vpack.c.b16 %v3124, %v3120
    %v3165 = vpack.c.b16 %v3125, %v3121
    %v3166 = vpack.c.b16 %v3130, %v3126
    %v3167 = vpack.c.b16 %v3131, %v3127
    %v3168 = vpack.c.b16 %v3132, %v3128
    %v3169 = vpack.c.b16 %v3133, %v3129
    %v3170 = vpack.c.b16 %v3138, %v3134
    %v3171 = vpack.c.b16 %v3139, %v3135
    %v3172 = vpack.c.b16 %v3140, %v3136
    %v3173 = vpack.c.b16 %v3141, %v3137
    %3206 = vmatprep.subr.bf16.mxu0 %v3143
    %3207 = vmatpush1.bf16.msra.mxu0 %v3142
    %3208 = vmatprep.subr.bf16.mxu0 %v3147
    %3209 = vmatpush1.bf16.msra.mxu0 %v3146
    %3210 = vmatprep.subr.bf16.mxu0 %v3151
    %3211 = vmatpush1.bf16.msra.mxu0 %v3150
    %3212 = vmatprep.subr.bf16.mxu0 %v3155
    %3213 = vmatpush1.bf16.msra.mxu0 %v3154
    %3214 = vmatprep.subr.bf16.mxu0 %v3159
    %3215 = vmatpush1.bf16.msra.mxu0 %v3158
    %3216 = vmatprep.subr.bf16.mxu0 %v3163
    %3217 = vmatpush1.bf16.msra.mxu0 %v3162
    %3218 = vmatprep.subr.bf16.mxu0 %v3167
    %3219 = vmatpush1.bf16.msra.mxu0 %v3166
    %3220 = vmatprep.subr.bf16.mxu0 %v3171
    %3221 = vmatpush1.bf16.msra.mxu0 %v3170
    %3222 = vmatprep.subr.bf16.mxu0 0
    %3223 = vmatpush1.bf16.msra.mxu0 0
    %3224 = vmatprep.subr.bf16.mxu0 0
    %3225 = vmatpush1.bf16.msra.mxu0 0
    %3226 = vmatprep.subr.bf16.mxu0 0
    %3227 = vmatpush1.bf16.msra.mxu0 0
    %3228 = vmatprep.subr.bf16.mxu0 0
    %3229 = vmatpush1.bf16.msra.mxu0 0
    %3230 = vmatprep.subr.bf16.mxu0 0
    %3231 = vmatpush1.bf16.msra.mxu0 0
    %3232 = vmatprep.subr.bf16.mxu0 0
    %3233 = vmatpush1.bf16.msra.mxu0 0
    %3234 = vmatprep.subr.bf16.mxu0 0
    %3235 = vmatpush1.bf16.msra.mxu0 0
    %3236 = vmatprep.subr.bf16.mxu0 0
    %3237 = vmatpush1.bf16.msra.mxu0 0
    %3238 = vmatprep.mubr.bf16.mxu0 0
    %3239 = vmatmul.mubr.bf16.gmra.mrb[0].mxu0 %v2405
    %v3240 = vpop.f32.mrb[0].mxu0
    %v3241 = vadd.f32 0.0, %v3240
    %v3242 = vpop.f32.mrb[0].mxu0
    %v3243 = vadd.f32 0.0, %v3242
    %v3244 = vpop.f32.mrb[0].mxu0
    %v3245 = vpop.f32.mrb[0].mxu0
    %3246 = vdwg.mxu0
    %3247 = vmatprep.subr.bf16.mxu0 %v3145
    %3248 = vmatpush1.bf16.msra.mxu0 %v3144
    %3249 = vmatprep.subr.bf16.mxu0 %v3149
    %3250 = vmatpush1.bf16.msra.mxu0 %v3148
    %3251 = vmatprep.subr.bf16.mxu0 %v3153
    %3252 = vmatpush1.bf16.msra.mxu0 %v3152
    %3253 = vmatprep.subr.bf16.mxu0 %v3157
    %3254 = vmatpush1.bf16.msra.mxu0 %v3156
    %3255 = vmatprep.subr.bf16.mxu0 %v3161
    %3256 = vmatpush1.bf16.msra.mxu0 %v3160
    %3257 = vmatprep.subr.bf16.mxu0 %v3165
    %3258 = vmatpush1.bf16.msra.mxu0 %v3164
    %3259 = vmatprep.subr.bf16.mxu0 %v3169
    %3260 = vmatpush1.bf16.msra.mxu0 %v3168
    %3261 = vmatprep.subr.bf16.mxu0 %v3173
    %3262 = vmatpush1.bf16.msra.mxu0 %v3172
    %3263 = vmatprep.subr.bf16.mxu0 0
    %3264 = vmatpush1.bf16.msra.mxu0 0
    %3265 = vmatprep.subr.bf16.mxu0 0
    %3266 = vmatpush1.bf16.msra.mxu0 0
    %3267 = vmatprep.subr.bf16.mxu0 0
    %3268 = vmatpush1.bf16.msra.mxu0 0
    %3269 = vmatprep.subr.bf16.mxu0 0
    %3270 = vmatpush1.bf16.msra.mxu0 0
    %3271 = vmatprep.subr.bf16.mxu0 0
    %3272 = vmatpush1.bf16.msra.mxu0 0
    %3273 = vmatprep.subr.bf16.mxu0 0
    %3274 = vmatpush1.bf16.msra.mxu0 0
    %3275 = vmatprep.subr.bf16.mxu0 0
    %3276 = vmatpush1.bf16.msra.mxu0 0
    %3277 = vmatprep.subr.bf16.mxu0 0
    %3278 = vmatpush1.bf16.msra.mxu0 0
    %3279 = vmatprep.mubr.bf16.mxu0 0
    %3280 = vmatmul.mubr.bf16.gmra.mrb[0].mxu0 %v2405
    %v3281 = vpop.f32.mrb[0].mxu0
    %v3282 = vadd.f32 0.0, %v3281
    %v3283 = vpop.f32.mrb[0].mxu0
    %v3284 = vadd.f32 0.0, %v3283
    %v3285 = vpop.f32.mrb[0].mxu0
    %v3286 = vpop.f32.mrb[0].mxu0
    %3287 = vdwg.mxu0
    %v3288 = vadd.f32 %v3010, %v3241
    %v3289 = vadd.f32 %v3011, %v3243
    %v3290 = vadd.f32 %v3012, %v3282
    %v3291 = vadd.f32 %v3013, %v3284
    %v3292 = vxor.u32 %v3288, 2147483648
    %v3293 = vxor.u32 %v3289, 2147483648
    %v3294 = vxor.u32 %v3290, 2147483648
    %v3295 = vmul.f32 %v3292, 1.442695
    %v3296 = vpow.pop %v3295
    %v3297 = vmul.f32 %v3293, 1.442695
    %v3298 = vpow.pop %v3297
    %v3299 = vmul.f32 %v3294, 1.442695
    %v3300 = vpow.pop %v3299
    %v3301 = vadd.f32 %v3296, 1.0
    %v3302 = vadd.f32 %v3298, 1.0
    %v3303 = vadd.f32 %v3300, 1.0
    %v3304 = vrcp.pop %v3301
    %v3305 = vmul.f32 1.0, %v3304
    %v3306 = vrcp.pop %v3302
    %v3307 = vmul.f32 1.0, %v3306
    %v3308 = vrcp.pop %v3303
    %v3309 = vmul.f32 1.0, %v3308
    %v3310 = vtanh.pop %v3291
    %v3311 = vmul.f32 %v3307, %v2402
    %v3312 = vmul.f32 %v3305, %v3310
    %v3313 = vadd.f32 %v3311, %v3312
    %v3314 = vtanh.pop %v3313
    %v3315 = vmul.f32 %v3309, %v3314
    %v3316 = vpack.c.bf16 %v3315, %v3315
    %3317 = vst [vmem:[#allocation3 + $0x10] sm:$0xff] %v3315
    %v3318 = vld [vmem:[#allocation2 + $0x60] sm:$0xff]
    %v3319 = vld [vmem:[#allocation2 + $0x68] sm:$0xff]
    %v3320 = vld [vmem:[#allocation2 + $0x70] sm:$0xff]
    %v3321 = vld [vmem:[#allocation2 + $0x78] sm:$0xff]
    %v3322 = vld [vmem:[#allocation7] sm:$0xff]
    %v3323 = vld [vmem:[#allocation7 + $0x8] sm:$0xff]
    %v3324 = vld [vmem:[#allocation7 + $0x10] sm:$0xff]
    %v3325 = vld [vmem:[#allocation7 + $0x18] sm:$0xff]
    %v3326 = vld [vmem:[#allocation7 + $0x20] sm:$0xff]
    %v3327 = vld [vmem:[#allocation7 + $0x28] sm:$0xff]
    %v3328 = vld [vmem:[#allocation7 + $0x30] sm:$0xff]
    %v3329 = vld [vmem:[#allocation7 + $0x38] sm:$0xff]
    %v3330 = vld [vmem:[#allocation7 + $0x40] sm:$0xff]
    %v3331 = vld [vmem:[#allocation7 + $0x48] sm:$0xff]
    %v3332 = vld [vmem:[#allocation7 + $0x50] sm:$0xff]
    %v3333 = vld [vmem:[#allocation7 + $0x58] sm:$0xff]
    %v3334 = vld [vmem:[#allocation7 + $0x60] sm:$0xff]
    %v3335 = vld [vmem:[#allocation7 + $0x68] sm:$0xff]
    %v3336 = vld [vmem:[#allocation7 + $0x70] sm:$0xff]
    %v3337 = vld [vmem:[#allocation7 + $0x78] sm:$0xff]
    %v3338 = vld [vmem:[#allocation7 + $0x80] sm:$0xff]
    %v3339 = vld [vmem:[#allocation7 + $0x88] sm:$0xff]
    %v3340 = vld [vmem:[#allocation7 + $0x90] sm:$0xff]
    %v3341 = vld [vmem:[#allocation7 + $0x98] sm:$0xff]
    %v3342 = vld [vmem:[#allocation7 + $0xa0] sm:$0xff]
    %v3343 = vld [vmem:[#allocation7 + $0xa8] sm:$0xff]
    %v3344 = vld [vmem:[#allocation7 + $0xb0] sm:$0xff]
    %v3345 = vld [vmem:[#allocation7 + $0xb8] sm:$0xff]
    %v3346 = vld [vmem:[#allocation7 + $0xc0] sm:$0xff]
    %v3347 = vld [vmem:[#allocation7 + $0xc8] sm:$0xff]
    %v3348 = vld [vmem:[#allocation7 + $0xd0] sm:$0xff]
    %v3349 = vld [vmem:[#allocation7 + $0xd8] sm:$0xff]
    %v3350 = vld [vmem:[#allocation7 + $0xe0] sm:$0xff]
    %v3351 = vld [vmem:[#allocation7 + $0xe8] sm:$0xff]
    %v3352 = vld [vmem:[#allocation7 + $0xf0] sm:$0xff]
    %v3353 = vld [vmem:[#allocation7 + $0xf8] sm:$0xff]
    %v3386 = vunpack.c.l.b16 %v3322
    %v3387 = vunpack.c.h.b16 %v3322
    %v3388 = vunpack.c.l.b16 %v3323
    %v3389 = vunpack.c.h.b16 %v3323
    %v3390 = vunpack.c.l.b16 %v3324
    %v3391 = vunpack.c.h.b16 %v3324
    %v3392 = vunpack.c.l.b16 %v3325
    %v3393 = vunpack.c.h.b16 %v3325
    %v3394 = vunpack.c.l.b16 %v3326
    %v3395 = vunpack.c.h.b16 %v3326
    %v3396 = vunpack.c.l.b16 %v3327
    %v3397 = vunpack.c.h.b16 %v3327
    %v3398 = vunpack.c.l.b16 %v3328
    %v3399 = vunpack.c.h.b16 %v3328
    %v3400 = vunpack.c.l.b16 %v3329
    %v3401 = vunpack.c.h.b16 %v3329
    %v3402 = vunpack.c.l.b16 %v3330
    %v3403 = vunpack.c.h.b16 %v3330
    %v3404 = vunpack.c.l.b16 %v3331
    %v3405 = vunpack.c.h.b16 %v3331
    %v3406 = vunpack.c.l.b16 %v3332
    %v3407 = vunpack.c.h.b16 %v3332
    %v3408 = vunpack.c.l.b16 %v3333
    %v3409 = vunpack.c.h.b16 %v3333
    %v3410 = vunpack.c.l.b16 %v3334
    %v3411 = vunpack.c.h.b16 %v3334
    %v3412 = vunpack.c.l.b16 %v3335
    %v3413 = vunpack.c.h.b16 %v3335
    %v3414 = vunpack.c.l.b16 %v3336
    %v3415 = vunpack.c.h.b16 %v3336
    %v3416 = vunpack.c.l.b16 %v3337
    %v3417 = vunpack.c.h.b16 %v3337
    %v3418 = vunpack.c.l.b16 %v3338
    %v3419 = vunpack.c.h.b16 %v3338
    %v3420 = vunpack.c.l.b16 %v3339
    %v3421 = vunpack.c.h.b16 %v3339
    %v3422 = vunpack.c.l.b16 %v3340
    %v3423 = vunpack.c.h.b16 %v3340
    %v3424 = vunpack.c.l.b16 %v3341
    %v3425 = vunpack.c.h.b16 %v3341
    %v3426 = vunpack.c.l.b16 %v3342
    %v3427 = vunpack.c.h.b16 %v3342
    %v3428 = vunpack.c.l.b16 %v3343
    %v3429 = vunpack.c.h.b16 %v3343
    %v3430 = vunpack.c.l.b16 %v3344
    %v3431 = vunpack.c.h.b16 %v3344
    %v3432 = vunpack.c.l.b16 %v3345
    %v3433 = vunpack.c.h.b16 %v3345
    %v3434 = vunpack.c.l.b16 %v3346
    %v3435 = vunpack.c.h.b16 %v3346
    %v3436 = vunpack.c.l.b16 %v3347
    %v3437 = vunpack.c.h.b16 %v3347
    %v3438 = vunpack.c.l.b16 %v3348
    %v3439 = vunpack.c.h.b16 %v3348
    %v3440 = vunpack.c.l.b16 %v3349
    %v3441 = vunpack.c.h.b16 %v3349
    %v3442 = vunpack.c.l.b16 %v3350
    %v3443 = vunpack.c.h.b16 %v3350
    %v3444 = vunpack.c.l.b16 %v3351
    %v3445 = vunpack.c.h.b16 %v3351
    %v3446 = vunpack.c.l.b16 %v3352
    %v3447 = vunpack.c.h.b16 %v3352
    %v3448 = vunpack.c.l.b16 %v3353
    %v3449 = vunpack.c.h.b16 %v3353
    %v3450 = vpack.c.b16 %v3390, %v3386
    %v3451 = vpack.c.b16 %v3391, %v3387
    %v3452 = vpack.c.b16 %v3392, %v3388
    %v3453 = vpack.c.b16 %v3393, %v3389
    %v3454 = vpack.c.b16 %v3398, %v3394
    %v3455 = vpack.c.b16 %v3399, %v3395
    %v3456 = vpack.c.b16 %v3400, %v3396
    %v3457 = vpack.c.b16 %v3401, %v3397
    %v3458 = vpack.c.b16 %v3406, %v3402
    %v3459 = vpack.c.b16 %v3407, %v3403
    %v3460 = vpack.c.b16 %v3408, %v3404
    %v3461 = vpack.c.b16 %v3409, %v3405
    %v3462 = vpack.c.b16 %v3414, %v3410
    %v3463 = vpack.c.b16 %v3415, %v3411
    %v3464 = vpack.c.b16 %v3416, %v3412
    %v3465 = vpack.c.b16 %v3417, %v3413
    %v3466 = vpack.c.b16 %v3422, %v3418
    %v3467 = vpack.c.b16 %v3423, %v3419
    %v3468 = vpack.c.b16 %v3424, %v3420
    %v3469 = vpack.c.b16 %v3425, %v3421
    %v3470 = vpack.c.b16 %v3430, %v3426
    %v3471 = vpack.c.b16 %v3431, %v3427
    %v3472 = vpack.c.b16 %v3432, %v3428
    %v3473 = vpack.c.b16 %v3433, %v3429
    %v3474 = vpack.c.b16 %v3438, %v3434
    %v3475 = vpack.c.b16 %v3439, %v3435
    %v3476 = vpack.c.b16 %v3440, %v3436
    %v3477 = vpack.c.b16 %v3441, %v3437
    %v3478 = vpack.c.b16 %v3446, %v3442
    %v3479 = vpack.c.b16 %v3447, %v3443
    %v3480 = vpack.c.b16 %v3448, %v3444
    %v3481 = vpack.c.b16 %v3449, %v3445
    %3514 = vmatprep.subr.bf16.mxu0 %v3451
    %3515 = vmatpush1.bf16.msra.mxu0 %v3450
    %3516 = vmatprep.subr.bf16.mxu0 %v3455
    %3517 = vmatpush1.bf16.msra.mxu0 %v3454
    %3518 = vmatprep.subr.bf16.mxu0 %v3459
    %3519 = vmatpush1.bf16.msra.mxu0 %v3458
    %3520 = vmatprep.subr.bf16.mxu0 %v3463
    %3521 = vmatpush1.bf16.msra.mxu0 %v3462
    %3522 = vmatprep.subr.bf16.mxu0 %v3467
    %3523 = vmatpush1.bf16.msra.mxu0 %v3466
    %3524 = vmatprep.subr.bf16.mxu0 %v3471
    %3525 = vmatpush1.bf16.msra.mxu0 %v3470
    %3526 = vmatprep.subr.bf16.mxu0 %v3475
    %3527 = vmatpush1.bf16.msra.mxu0 %v3474
    %3528 = vmatprep.subr.bf16.mxu0 %v3479
    %3529 = vmatpush1.bf16.msra.mxu0 %v3478
    %3530 = vmatprep.subr.bf16.mxu0 0
    %3531 = vmatpush1.bf16.msra.mxu0 0
    %3532 = vmatprep.subr.bf16.mxu0 0
    %3533 = vmatpush1.bf16.msra.mxu0 0
    %3534 = vmatprep.subr.bf16.mxu0 0
    %3535 = vmatpush1.bf16.msra.mxu0 0
    %3536 = vmatprep.subr.bf16.mxu0 0
    %3537 = vmatpush1.bf16.msra.mxu0 0
    %3538 = vmatprep.subr.bf16.mxu0 0
    %3539 = vmatpush1.bf16.msra.mxu0 0
    %3540 = vmatprep.subr.bf16.mxu0 0
    %3541 = vmatpush1.bf16.msra.mxu0 0
    %3542 = vmatprep.subr.bf16.mxu0 0
    %3543 = vmatpush1.bf16.msra.mxu0 0
    %3544 = vmatprep.subr.bf16.mxu0 0
    %3545 = vmatpush1.bf16.msra.mxu0 0
    %3546 = vmatprep.mubr.bf16.mxu0 0
    %3547 = vmatmul.mubr.bf16.gmra.mrb[0].mxu0 %v2713
    %v3548 = vpop.f32.mrb[0].mxu0
    %v3549 = vadd.f32 0.0, %v3548
    %v3550 = vpop.f32.mrb[0].mxu0
    %v3551 = vadd.f32 0.0, %v3550
    %v3552 = vpop.f32.mrb[0].mxu0
    %v3553 = vpop.f32.mrb[0].mxu0
    %3554 = vdwg.mxu0
    %3555 = vmatprep.subr.bf16.mxu0 %v3453
    %3556 = vmatpush1.bf16.msra.mxu0 %v3452
    %3557 = vmatprep.subr.bf16.mxu0 %v3457
    %3558 = vmatpush1.bf16.msra.mxu0 %v3456
    %3559 = vmatprep.subr.bf16.mxu0 %v3461
    %3560 = vmatpush1.bf16.msra.mxu0 %v3460
    %3561 = vmatprep.subr.bf16.mxu0 %v3465
    %3562 = vmatpush1.bf16.msra.mxu0 %v3464
    %3563 = vmatprep.subr.bf16.mxu0 %v3469
    %3564 = vmatpush1.bf16.msra.mxu0 %v3468
    %3565 = vmatprep.subr.bf16.mxu0 %v3473
    %3566 = vmatpush1.bf16.msra.mxu0 %v3472
    %3567 = vmatprep.subr.bf16.mxu0 %v3477
    %3568 = vmatpush1.bf16.msra.mxu0 %v3476
    %3569 = vmatprep.subr.bf16.mxu0 %v3481
    %3570 = vmatpush1.bf16.msra.mxu0 %v3480
    %3571 = vmatprep.subr.bf16.mxu0 0
    %3572 = vmatpush1.bf16.msra.mxu0 0
    %3573 = vmatprep.subr.bf16.mxu0 0
    %3574 = vmatpush1.bf16.msra.mxu0 0
    %3575 = vmatprep.subr.bf16.mxu0 0
    %3576 = vmatpush1.bf16.msra.mxu0 0
    %3577 = vmatprep.subr.bf16.mxu0 0
    %3578 = vmatpush1.bf16.msra.mxu0 0
    %3579 = vmatprep.subr.bf16.mxu0 0
    %3580 = vmatpush1.bf16.msra.mxu0 0
    %3581 = vmatprep.subr.bf16.mxu0 0
    %3582 = vmatpush1.bf16.msra.mxu0 0
    %3583 = vmatprep.subr.bf16.mxu0 0
    %3584 = vmatpush1.bf16.msra.mxu0 0
    %3585 = vmatprep.subr.bf16.mxu0 0
    %3586 = vmatpush1.bf16.msra.mxu0 0
    %3587 = vmatprep.mubr.bf16.mxu0 0
    %3588 = vmatmul.mubr.bf16.gmra.mrb[0].mxu0 %v2713
    %v3589 = vpop.f32.mrb[0].mxu0
    %v3590 = vadd.f32 0.0, %v3589
    %v3591 = vpop.f32.mrb[0].mxu0
    %v3592 = vadd.f32 0.0, %v3591
    %v3593 = vpop.f32.mrb[0].mxu0
    %v3594 = vpop.f32.mrb[0].mxu0
    %3595 = vdwg.mxu0
    %v3596 = vadd.f32 %v3318, %v3549
    %v3597 = vadd.f32 %v3319, %v3551
    %v3598 = vadd.f32 %v3320, %v3590
    %v3599 = vadd.f32 %v3321, %v3592
    %v3600 = vxor.u32 %v3596, 2147483648
    %v3601 = vxor.u32 %v3597, 2147483648
    %v3602 = vxor.u32 %v3598, 2147483648
    %v3603 = vmul.f32 %v3600, 1.442695
    %v3604 = vpow.pop %v3603
    %v3605 = vmul.f32 %v3601, 1.442695
    %v3606 = vpow.pop %v3605
    %v3607 = vmul.f32 %v3602, 1.442695
    %v3608 = vpow.pop %v3607
    %v3609 = vadd.f32 %v3604, 1.0
    %v3610 = vadd.f32 %v3606, 1.0
    %v3611 = vadd.f32 %v3608, 1.0
    %v3612 = vrcp.pop %v3609
    %v3613 = vmul.f32 1.0, %v3612
    %v3614 = vrcp.pop %v3610
    %v3615 = vmul.f32 1.0, %v3614
    %v3616 = vrcp.pop %v3611
    %v3617 = vmul.f32 1.0, %v3616
    %v3618 = vtanh.pop %v3599
    %v3619 = vmul.f32 %v3615, %v2710
    %v3620 = vmul.f32 %v3613, %v3618
    %v3621 = vadd.f32 %v3619, %v3620
    %v3622 = vtanh.pop %v3621
    %v3623 = vmul.f32 %v3617, %v3622
    %v3624 = vpack.c.bf16 %v3623, %v3623
    %v3625 = vld [vmem:[#allocation13] sm:$0xf]
    %v3626 = vld [vmem:[#allocation10] sm:$0xff]
    %v3627 = vld [vmem:[#allocation10 + $0x8] sm:$0xff]
    %v3628 = vld [vmem:[#allocation10 + $0x10] sm:$0xff]
    %v3629 = vld [vmem:[#allocation10 + $0x18] sm:$0xff]
    %v3630 = vld [vmem:[#allocation10 + $0x20] sm:$0xff]
    %v3631 = vld [vmem:[#allocation10 + $0x28] sm:$0xff]
    %v3632 = vld [vmem:[#allocation10 + $0x30] sm:$0xff]
    %v3633 = vld [vmem:[#allocation10 + $0x38] sm:$0xff]
    %v3634 = vld [vmem:[#allocation10 + $0x40] sm:$0xff]
    %v3635 = vld [vmem:[#allocation10 + $0x48] sm:$0xff]
    %v3636 = vld [vmem:[#allocation10 + $0x50] sm:$0xff]
    %v3637 = vld [vmem:[#allocation10 + $0x58] sm:$0xff]
    %v3638 = vld [vmem:[#allocation10 + $0x60] sm:$0xff]
    %v3639 = vld [vmem:[#allocation10 + $0x68] sm:$0xff]
    %v3640 = vld [vmem:[#allocation10 + $0x70] sm:$0xff]
    %v3641 = vld [vmem:[#allocation10 + $0x78] sm:$0xff]
    %v3642 = vld [vmem:[#allocation10 + $0x80] sm:$0xff]
    %v3643 = vld [vmem:[#allocation10 + $0x88] sm:$0xff]
    %v3644 = vld [vmem:[#allocation10 + $0x90] sm:$0xff]
    %v3645 = vld [vmem:[#allocation10 + $0x98] sm:$0xff]
    %v3646 = vld [vmem:[#allocation10 + $0xa0] sm:$0xff]
    %v3647 = vld [vmem:[#allocation10 + $0xa8] sm:$0xff]
    %v3648 = vld [vmem:[#allocation10 + $0xb0] sm:$0xff]
    %v3649 = vld [vmem:[#allocation10 + $0xb8] sm:$0xff]
    %v3650 = vld [vmem:[#allocation10 + $0xc0] sm:$0xff]
    %v3651 = vld [vmem:[#allocation10 + $0xc8] sm:$0xff]
    %v3652 = vld [vmem:[#allocation10 + $0xd0] sm:$0xff]
    %v3653 = vld [vmem:[#allocation10 + $0xd8] sm:$0xff]
    %v3654 = vld [vmem:[#allocation10 + $0xe0] sm:$0xff]
    %v3655 = vld [vmem:[#allocation10 + $0xe8] sm:$0xff]
    %v3656 = vld [vmem:[#allocation10 + $0xf0] sm:$0xff]
    %v3657 = vld [vmem:[#allocation10 + $0xf8] sm:$0xff]
    %v3690 = vunpack.c.l.b16 %v3626
    %v3691 = vunpack.c.h.b16 %v3626
    %v3692 = vunpack.c.l.b16 %v3627
    %v3693 = vunpack.c.h.b16 %v3627
    %v3694 = vunpack.c.l.b16 %v3628
    %v3695 = vunpack.c.h.b16 %v3628
    %v3696 = vunpack.c.l.b16 %v3629
    %v3697 = vunpack.c.h.b16 %v3629
    %v3698 = vunpack.c.l.b16 %v3630
    %v3699 = vunpack.c.h.b16 %v3630
    %v3700 = vunpack.c.l.b16 %v3631
    %v3701 = vunpack.c.h.b16 %v3631
    %v3702 = vunpack.c.l.b16 %v3632
    %v3703 = vunpack.c.h.b16 %v3632
    %v3704 = vunpack.c.l.b16 %v3633
    %v3705 = vunpack.c.h.b16 %v3633
    %v3706 = vunpack.c.l.b16 %v3634
    %v3707 = vunpack.c.h.b16 %v3634
    %v3708 = vunpack.c.l.b16 %v3635
    %v3709 = vunpack.c.h.b16 %v3635
    %v3710 = vunpack.c.l.b16 %v3636
    %v3711 = vunpack.c.h.b16 %v3636
    %v3712 = vunpack.c.l.b16 %v3637
    %v3713 = vunpack.c.h.b16 %v3637
    %v3714 = vunpack.c.l.b16 %v3638
    %v3715 = vunpack.c.h.b16 %v3638
    %v3716 = vunpack.c.l.b16 %v3639
    %v3717 = vunpack.c.h.b16 %v3639
    %v3718 = vunpack.c.l.b16 %v3640
    %v3719 = vunpack.c.h.b16 %v3640
    %v3720 = vunpack.c.l.b16 %v3641
    %v3721 = vunpack.c.h.b16 %v3641
    %v3722 = vunpack.c.l.b16 %v3642
    %v3723 = vunpack.c.h.b16 %v3642
    %v3724 = vunpack.c.l.b16 %v3643
    %v3725 = vunpack.c.h.b16 %v3643
    %v3726 = vunpack.c.l.b16 %v3644
    %v3727 = vunpack.c.h.b16 %v3644
    %v3728 = vunpack.c.l.b16 %v3645
    %v3729 = vunpack.c.h.b16 %v3645
    %v3730 = vunpack.c.l.b16 %v3646
    %v3731 = vunpack.c.h.b16 %v3646
    %v3732 = vunpack.c.l.b16 %v3647
    %v3733 = vunpack.c.h.b16 %v3647
    %v3734 = vunpack.c.l.b16 %v3648
    %v3735 = vunpack.c.h.b16 %v3648
    %v3736 = vunpack.c.l.b16 %v3649
    %v3737 = vunpack.c.h.b16 %v3649
    %v3738 = vunpack.c.l.b16 %v3650
    %v3739 = vunpack.c.h.b16 %v3650
    %v3740 = vunpack.c.l.b16 %v3651
    %v3741 = vunpack.c.h.b16 %v3651
    %v3742 = vunpack.c.l.b16 %v3652
    %v3743 = vunpack.c.h.b16 %v3652
    %v3744 = vunpack.c.l.b16 %v3653
    %v3745 = vunpack.c.h.b16 %v3653
    %v3746 = vunpack.c.l.b16 %v3654
    %v3747 = vunpack.c.h.b16 %v3654
    %v3748 = vunpack.c.l.b16 %v3655
    %v3749 = vunpack.c.h.b16 %v3655
    %v3750 = vunpack.c.l.b16 %v3656
    %v3751 = vunpack.c.h.b16 %v3656
    %v3752 = vunpack.c.l.b16 %v3657
    %v3753 = vunpack.c.h.b16 %v3657
    %v3754 = vpack.c.b16 %v3694, %v3690
    %v3755 = vpack.c.b16 %v3695, %v3691
    %v3756 = vpack.c.b16 %v3696, %v3692
    %v3757 = vpack.c.b16 %v3697, %v3693
    %v3758 = vpack.c.b16 %v3702, %v3698
    %v3759 = vpack.c.b16 %v3703, %v3699
    %v3760 = vpack.c.b16 %v3704, %v3700
    %v3761 = vpack.c.b16 %v3705, %v3701
    %v3762 = vpack.c.b16 %v3710, %v3706
    %v3763 = vpack.c.b16 %v3711, %v3707
    %v3764 = vpack.c.b16 %v3712, %v3708
    %v3765 = vpack.c.b16 %v3713, %v3709
    %v3766 = vpack.c.b16 %v3718, %v3714
    %v3767 = vpack.c.b16 %v3719, %v3715
    %v3768 = vpack.c.b16 %v3720, %v3716
    %v3769 = vpack.c.b16 %v3721, %v3717
    %v3770 = vpack.c.b16 %v3726, %v3722
    %v3771 = vpack.c.b16 %v3727, %v3723
    %v3772 = vpack.c.b16 %v3728, %v3724
    %v3773 = vpack.c.b16 %v3729, %v3725
    %v3774 = vpack.c.b16 %v3734, %v3730
    %v3775 = vpack.c.b16 %v3735, %v3731
    %v3776 = vpack.c.b16 %v3736, %v3732
    %v3777 = vpack.c.b16 %v3737, %v3733
    %v3778 = vpack.c.b16 %v3742, %v3738
    %v3779 = vpack.c.b16 %v3743, %v3739
    %v3780 = vpack.c.b16 %v3744, %v3740
    %v3781 = vpack.c.b16 %v3745, %v3741
    %v3782 = vpack.c.b16 %v3750, %v3746
    %v3783 = vpack.c.b16 %v3751, %v3747
    %v3784 = vpack.c.b16 %v3752, %v3748
    %v3785 = vpack.c.b16 %v3753, %v3749
    %3818 = vmatprep.subr.bf16.mxu0 %v3755
    %3819 = vmatpush1.bf16.msra.mxu0 %v3754
    %3820 = vmatprep.subr.bf16.mxu0 %v3759
    %3821 = vmatpush1.bf16.msra.mxu0 %v3758
    %3822 = vmatprep.subr.bf16.mxu0 %v3763
    %3823 = vmatpush1.bf16.msra.mxu0 %v3762
    %3824 = vmatprep.subr.bf16.mxu0 %v3767
    %3825 = vmatpush1.bf16.msra.mxu0 %v3766
    %3826 = vmatprep.subr.bf16.mxu0 %v3771
    %3827 = vmatpush1.bf16.msra.mxu0 %v3770
    %3828 = vmatprep.subr.bf16.mxu0 %v3775
    %3829 = vmatpush1.bf16.msra.mxu0 %v3774
    %3830 = vmatprep.subr.bf16.mxu0 %v3779
    %3831 = vmatpush1.bf16.msra.mxu0 %v3778
    %3832 = vmatprep.subr.bf16.mxu0 %v3783
    %3833 = vmatpush1.bf16.msra.mxu0 %v3782
    %3834 = vmatprep.subr.bf16.mxu0 0
    %3835 = vmatpush1.bf16.msra.mxu0 0
    %3836 = vmatprep.subr.bf16.mxu0 0
    %3837 = vmatpush1.bf16.msra.mxu0 0
    %3838 = vmatprep.subr.bf16.mxu0 0
    %3839 = vmatpush1.bf16.msra.mxu0 0
    %3840 = vmatprep.subr.bf16.mxu0 0
    %3841 = vmatpush1.bf16.msra.mxu0 0
    %3842 = vmatprep.subr.bf16.mxu0 0
    %3843 = vmatpush1.bf16.msra.mxu0 0
    %3844 = vmatprep.subr.bf16.mxu0 0
    %3845 = vmatpush1.bf16.msra.mxu0 0
    %3846 = vmatprep.subr.bf16.mxu0 0
    %3847 = vmatpush1.bf16.msra.mxu0 0
    %3848 = vmatprep.subr.bf16.mxu0 0
    %3849 = vmatpush1.bf16.msra.mxu0 0
    %3850 = vmatprep.mubr.bf16.mxu0 0
    %3851 = vmatmul.mubr.bf16.gmra.mrb[0].mxu0 %v3624
    %v3852 = vpop.f32.mrb[0].mxu0
    %v3853 = vadd.f32 0.0, %v3852
    %v3854 = vpop.f32.mrb[0].mxu0
    %v3855 = vadd.f32 0.0, %v3854
    %v3856 = vpop.f32.mrb[0].mxu0
    %v3857 = vpop.f32.mrb[0].mxu0
    %3858 = vdwg.mxu0
    %3859 = vmatprep.subr.bf16.mxu0 %v3757
    %3860 = vmatpush1.bf16.msra.mxu0 %v3756
    %3861 = vmatprep.subr.bf16.mxu0 %v3761
    %3862 = vmatpush1.bf16.msra.mxu0 %v3760
    %3863 = vmatprep.subr.bf16.mxu0 %v3765
    %3864 = vmatpush1.bf16.msra.mxu0 %v3764
    %3865 = vmatprep.subr.bf16.mxu0 %v3769
    %3866 = vmatpush1.bf16.msra.mxu0 %v3768
    %3867 = vmatprep.subr.bf16.mxu0 %v3773
    %3868 = vmatpush1.bf16.msra.mxu0 %v3772
    %3869 = vmatprep.subr.bf16.mxu0 %v3777
    %3870 = vmatpush1.bf16.msra.mxu0 %v3776
    %3871 = vmatprep.subr.bf16.mxu0 %v3781
    %3872 = vmatpush1.bf16.msra.mxu0 %v3780
    %3873 = vmatprep.subr.bf16.mxu0 %v3785
    %3874 = vmatpush1.bf16.msra.mxu0 %v3784
    %3875 = vmatprep.subr.bf16.mxu0 0
    %3876 = vmatpush1.bf16.msra.mxu0 0
    %3877 = vmatprep.subr.bf16.mxu0 0
    %3878 = vmatpush1.bf16.msra.mxu0 0
    %3879 = vmatprep.subr.bf16.mxu0 0
    %3880 = vmatpush1.bf16.msra.mxu0 0
    %3881 = vmatprep.subr.bf16.mxu0 0
    %3882 = vmatpush1.bf16.msra.mxu0 0
    %3883 = vmatprep.subr.bf16.mxu0 0
    %3884 = vmatpush1.bf16.msra.mxu0 0
    %3885 = vmatprep.subr.bf16.mxu0 0
    %3886 = vmatpush1.bf16.msra.mxu0 0
    %3887 = vmatprep.subr.bf16.mxu0 0
    %3888 = vmatpush1.bf16.msra.mxu0 0
    %3889 = vmatprep.subr.bf16.mxu0 0
    %3890 = vmatpush1.bf16.msra.mxu0 0
    %3891 = vmatprep.mubr.bf16.mxu0 0
    %3892 = vmatmul.mubr.bf16.gmra.mrb[0].mxu0 %v3624
    %v3893 = vpop.f32.mrb[0].mxu0
    %v3894 = vadd.f32 0.0, %v3893
    %v3895 = vpop.f32.mrb[0].mxu0
    %v3896 = vadd.f32 0.0, %v3895
    %v3897 = vpop.f32.mrb[0].mxu0
    %v3898 = vpop.f32.mrb[0].mxu0
    %3899 = vdwg.mxu0
    %v3901 = vlaneseq
    %v3902 = vshrl.u32 %v3901, 7
    %v3903 = vsub.s32 0, %v3902
    %v3904 = vrot.slane %v3625, %v3903
    %v3905 = vlaneseq
    %v3906 = vshrl.u32 %v3905, 7
    %v3907 = vsub.s32 1, %v3906
    %v3908 = vrot.slane %v3625, %v3907
    %v3909 = vlaneseq
    %v3910 = vshrl.u32 %v3909, 7
    %v3911 = vsub.s32 2, %v3910
    %v3912 = vrot.slane %v3625, %v3911
    %v3913 = vlaneseq
    %v3914 = vshrl.u32 %v3913, 7
    %v3915 = vsub.s32 3, %v3914
    %v3916 = vrot.slane %v3625, %v3915
    %v3921 = vadd.f32 %v3904, %v3853
    %v3922 = vadd.f32 %v3908, %v3855
    %v3923 = vadd.f32 %v3912, %v3894
    %v3924 = vadd.f32 %v3916, %v3896
    %v3925 = vld [vmem:[#allocation12] sm:$0xff]
    %v3926 = vld [vmem:[#allocation12 + $0x8] sm:$0xff]
    %v3927 = vld [vmem:[#allocation12 + $0x10] sm:$0xff]
    %v3928 = vld [vmem:[#allocation12 + $0x18] sm:$0xff]
    %v3929 = vld [vmem:[#allocation12 + $0x20] sm:$0xff]
    %v3930 = vld [vmem:[#allocation12 + $0x28] sm:$0xff]
    %v3931 = vld [vmem:[#allocation12 + $0x30] sm:$0xff]
    %v3932 = vld [vmem:[#allocation12 + $0x38] sm:$0xff]
    %v3933 = vld [vmem:[#allocation12 + $0x40] sm:$0xff]
    %v3934 = vld [vmem:[#allocation12 + $0x48] sm:$0xff]
    %v3935 = vld [vmem:[#allocation12 + $0x50] sm:$0xff]
    %v3936 = vld [vmem:[#allocation12 + $0x58] sm:$0xff]
    %v3937 = vld [vmem:[#allocation12 + $0x60] sm:$0xff]
    %v3938 = vld [vmem:[#allocation12 + $0x68] sm:$0xff]
    %v3939 = vld [vmem:[#allocation12 + $0x70] sm:$0xff]
    %v3940 = vld [vmem:[#allocation12 + $0x78] sm:$0xff]
    %v3941 = vld [vmem:[#allocation12 + $0x80] sm:$0xff]
    %v3942 = vld [vmem:[#allocation12 + $0x88] sm:$0xff]
    %v3943 = vld [vmem:[#allocation12 + $0x90] sm:$0xff]
    %v3944 = vld [vmem:[#allocation12 + $0x98] sm:$0xff]
    %v3945 = vld [vmem:[#allocation12 + $0xa0] sm:$0xff]
    %v3946 = vld [vmem:[#allocation12 + $0xa8] sm:$0xff]
    %v3947 = vld [vmem:[#allocation12 + $0xb0] sm:$0xff]
    %v3948 = vld [vmem:[#allocation12 + $0xb8] sm:$0xff]
    %v3949 = vld [vmem:[#allocation12 + $0xc0] sm:$0xff]
    %v3950 = vld [vmem:[#allocation12 + $0xc8] sm:$0xff]
    %v3951 = vld [vmem:[#allocation12 + $0xd0] sm:$0xff]
    %v3952 = vld [vmem:[#allocation12 + $0xd8] sm:$0xff]
    %v3953 = vld [vmem:[#allocation12 + $0xe0] sm:$0xff]
    %v3954 = vld [vmem:[#allocation12 + $0xe8] sm:$0xff]
    %v3955 = vld [vmem:[#allocation12 + $0xf0] sm:$0xff]
    %v3956 = vld [vmem:[#allocation12 + $0xf8] sm:$0xff]
    %v3989 = vunpack.c.l.b16 %v3925
    %v3990 = vunpack.c.h.b16 %v3925
    %v3991 = vunpack.c.l.b16 %v3926
    %v3992 = vunpack.c.h.b16 %v3926
    %v3993 = vunpack.c.l.b16 %v3927
    %v3994 = vunpack.c.h.b16 %v3927
    %v3995 = vunpack.c.l.b16 %v3928
    %v3996 = vunpack.c.h.b16 %v3928
    %v3997 = vunpack.c.l.b16 %v3929
    %v3998 = vunpack.c.h.b16 %v3929
    %v3999 = vunpack.c.l.b16 %v3930
    %v4000 = vunpack.c.h.b16 %v3930
    %v4001 = vunpack.c.l.b16 %v3931
    %v4002 = vunpack.c.h.b16 %v3931
    %v4003 = vunpack.c.l.b16 %v3932
    %v4004 = vunpack.c.h.b16 %v3932
    %v4005 = vunpack.c.l.b16 %v3933
    %v4006 = vunpack.c.h.b16 %v3933
    %v4007 = vunpack.c.l.b16 %v3934
    %v4008 = vunpack.c.h.b16 %v3934
    %v4009 = vunpack.c.l.b16 %v3935
    %v4010 = vunpack.c.h.b16 %v3935
    %v4011 = vunpack.c.l.b16 %v3936
    %v4012 = vunpack.c.h.b16 %v3936
    %v4013 = vunpack.c.l.b16 %v3937
    %v4014 = vunpack.c.h.b16 %v3937
    %v4015 = vunpack.c.l.b16 %v3938
    %v4016 = vunpack.c.h.b16 %v3938
    %v4017 = vunpack.c.l.b16 %v3939
    %v4018 = vunpack.c.h.b16 %v3939
    %v4019 = vunpack.c.l.b16 %v3940
    %v4020 = vunpack.c.h.b16 %v3940
    %v4021 = vunpack.c.l.b16 %v3941
    %v4022 = vunpack.c.h.b16 %v3941
    %v4023 = vunpack.c.l.b16 %v3942
    %v4024 = vunpack.c.h.b16 %v3942
    %v4025 = vunpack.c.l.b16 %v3943
    %v4026 = vunpack.c.h.b16 %v3943
    %v4027 = vunpack.c.l.b16 %v3944
    %v4028 = vunpack.c.h.b16 %v3944
    %v4029 = vunpack.c.l.b16 %v3945
    %v4030 = vunpack.c.h.b16 %v3945
    %v4031 = vunpack.c.l.b16 %v3946
    %v4032 = vunpack.c.h.b16 %v3946
    %v4033 = vunpack.c.l.b16 %v3947
    %v4034 = vunpack.c.h.b16 %v3947
    %v4035 = vunpack.c.l.b16 %v3948
    %v4036 = vunpack.c.h.b16 %v3948
    %v4037 = vunpack.c.l.b16 %v3949
    %v4038 = vunpack.c.h.b16 %v3949
    %v4039 = vunpack.c.l.b16 %v3950
    %v4040 = vunpack.c.h.b16 %v3950
    %v4041 = vunpack.c.l.b16 %v3951
    %v4042 = vunpack.c.h.b16 %v3951
    %v4043 = vunpack.c.l.b16 %v3952
    %v4044 = vunpack.c.h.b16 %v3952
    %v4045 = vunpack.c.l.b16 %v3953
    %v4046 = vunpack.c.h.b16 %v3953
    %v4047 = vunpack.c.l.b16 %v3954
    %v4048 = vunpack.c.h.b16 %v3954
    %v4049 = vunpack.c.l.b16 %v3955
    %v4050 = vunpack.c.h.b16 %v3955
    %v4051 = vunpack.c.l.b16 %v3956
    %v4052 = vunpack.c.h.b16 %v3956
    %v4053 = vpack.c.b16 %v3993, %v3989
    %v4054 = vpack.c.b16 %v3994, %v3990
    %v4055 = vpack.c.b16 %v3995, %v3991
    %v4056 = vpack.c.b16 %v3996, %v3992
    %v4057 = vpack.c.b16 %v4001, %v3997
    %v4058 = vpack.c.b16 %v4002, %v3998
    %v4059 = vpack.c.b16 %v4003, %v3999
    %v4060 = vpack.c.b16 %v4004, %v4000
    %v4061 = vpack.c.b16 %v4009, %v4005
    %v4062 = vpack.c.b16 %v4010, %v4006
    %v4063 = vpack.c.b16 %v4011, %v4007
    %v4064 = vpack.c.b16 %v4012, %v4008
    %v4065 = vpack.c.b16 %v4017, %v4013
    %v4066 = vpack.c.b16 %v4018, %v4014
    %v4067 = vpack.c.b16 %v4019, %v4015
    %v4068 = vpack.c.b16 %v4020, %v4016
    %v4069 = vpack.c.b16 %v4025, %v4021
    %v4070 = vpack.c.b16 %v4026, %v4022
    %v4071 = vpack.c.b16 %v4027, %v4023
    %v4072 = vpack.c.b16 %v4028, %v4024
    %v4073 = vpack.c.b16 %v4033, %v4029
    %v4074 = vpack.c.b16 %v4034, %v4030
    %v4075 = vpack.c.b16 %v4035, %v4031
    %v4076 = vpack.c.b16 %v4036, %v4032
    %v4077 = vpack.c.b16 %v4041, %v4037
    %v4078 = vpack.c.b16 %v4042, %v4038
    %v4079 = vpack.c.b16 %v4043, %v4039
    %v4080 = vpack.c.b16 %v4044, %v4040
    %v4081 = vpack.c.b16 %v4049, %v4045
    %v4082 = vpack.c.b16 %v4050, %v4046
    %v4083 = vpack.c.b16 %v4051, %v4047
    %v4084 = vpack.c.b16 %v4052, %v4048
    %4117 = vmatprep.subr.bf16.mxu0 %v4054
    %4118 = vmatpush1.bf16.msra.mxu0 %v4053
    %4119 = vmatprep.subr.bf16.mxu0 %v4058
    %4120 = vmatpush1.bf16.msra.mxu0 %v4057
    %4121 = vmatprep.subr.bf16.mxu0 %v4062
    %4122 = vmatpush1.bf16.msra.mxu0 %v4061
    %4123 = vmatprep.subr.bf16.mxu0 %v4066
    %4124 = vmatpush1.bf16.msra.mxu0 %v4065
    %4125 = vmatprep.subr.bf16.mxu0 %v4070
    %4126 = vmatpush1.bf16.msra.mxu0 %v4069
    %4127 = vmatprep.subr.bf16.mxu0 %v4074
    %4128 = vmatpush1.bf16.msra.mxu0 %v4073
    %4129 = vmatprep.subr.bf16.mxu0 %v4078
    %4130 = vmatpush1.bf16.msra.mxu0 %v4077
    %4131 = vmatprep.subr.bf16.mxu0 %v4082
    %4132 = vmatpush1.bf16.msra.mxu0 %v4081
    %4133 = vmatprep.subr.bf16.mxu0 0
    %4134 = vmatpush1.bf16.msra.mxu0 0
    %4135 = vmatprep.subr.bf16.mxu0 0
    %4136 = vmatpush1.bf16.msra.mxu0 0
    %4137 = vmatprep.subr.bf16.mxu0 0
    %4138 = vmatpush1.bf16.msra.mxu0 0
    %4139 = vmatprep.subr.bf16.mxu0 0
    %4140 = vmatpush1.bf16.msra.mxu0 0
    %4141 = vmatprep.subr.bf16.mxu0 0
    %4142 = vmatpush1.bf16.msra.mxu0 0
    %4143 = vmatprep.subr.bf16.mxu0 0
    %4144 = vmatpush1.bf16.msra.mxu0 0
    %4145 = vmatprep.subr.bf16.mxu0 0
    %4146 = vmatpush1.bf16.msra.mxu0 0
    %4147 = vmatprep.subr.bf16.mxu0 0
    %4148 = vmatpush1.bf16.msra.mxu0 0
    %4149 = vmatprep.mubr.bf16.mxu0 0
    %4150 = vmatmul.mubr.bf16.gmra.mrb[0].mxu0 %v3316
    %v4151 = vpop.f32.mrb[0].mxu0
    %v4152 = vadd.f32 0.0, %v4151
    %v4153 = vpop.f32.mrb[0].mxu0
    %v4154 = vadd.f32 0.0, %v4153
    %v4155 = vpop.f32.mrb[0].mxu0
    %v4156 = vpop.f32.mrb[0].mxu0
    %4157 = vdwg.mxu0
    %4158 = vmatprep.subr.bf16.mxu0 %v4056
    %4159 = vmatpush1.bf16.msra.mxu0 %v4055
    %4160 = vmatprep.subr.bf16.mxu0 %v4060
    %4161 = vmatpush1.bf16.msra.mxu0 %v4059
    %4162 = vmatprep.subr.bf16.mxu0 %v4064
    %4163 = vmatpush1.bf16.msra.mxu0 %v4063
    %4164 = vmatprep.subr.bf16.mxu0 %v4068
    %4165 = vmatpush1.bf16.msra.mxu0 %v4067
    %4166 = vmatprep.subr.bf16.mxu0 %v4072
    %4167 = vmatpush1.bf16.msra.mxu0 %v4071
    %4168 = vmatprep.subr.bf16.mxu0 %v4076
    %4169 = vmatpush1.bf16.msra.mxu0 %v4075
    %4170 = vmatprep.subr.bf16.mxu0 %v4080
    %4171 = vmatpush1.bf16.msra.mxu0 %v4079
    %4172 = vmatprep.subr.bf16.mxu0 %v4084
    %4173 = vmatpush1.bf16.msra.mxu0 %v4083
    %4174 = vmatprep.subr.bf16.mxu0 0
    %4175 = vmatpush1.bf16.msra.mxu0 0
    %4176 = vmatprep.subr.bf16.mxu0 0
    %4177 = vmatpush1.bf16.msra.mxu0 0
    %4178 = vmatprep.subr.bf16.mxu0 0
    %4179 = vmatpush1.bf16.msra.mxu0 0
    %4180 = vmatprep.subr.bf16.mxu0 0
    %4181 = vmatpush1.bf16.msra.mxu0 0
    %4182 = vmatprep.subr.bf16.mxu0 0
    %4183 = vmatpush1.bf16.msra.mxu0 0
    %4184 = vmatprep.subr.bf16.mxu0 0
    %4185 = vmatpush1.bf16.msra.mxu0 0
    %4186 = vmatprep.subr.bf16.mxu0 0
    %4187 = vmatpush1.bf16.msra.mxu0 0
    %4188 = vmatprep.subr.bf16.mxu0 0
    %4189 = vmatpush1.bf16.msra.mxu0 0
    %4190 = vmatprep.mubr.bf16.mxu0 0
    %4191 = vmatmul.mubr.bf16.gmra.mrb[0].mxu0 %v3316
    %v4192 = vpop.f32.mrb[0].mxu0
    %v4193 = vadd.f32 0.0, %v4192
    %v4194 = vpop.f32.mrb[0].mxu0
    %v4195 = vadd.f32 0.0, %v4194
    %v4196 = vpop.f32.mrb[0].mxu0
    %v4197 = vpop.f32.mrb[0].mxu0
    %4198 = vdwg.mxu0
    %v4199 = vadd.f32 %v3921, %v4152
    %v4200 = vadd.f32 %v3922, %v4154
    %v4201 = vadd.f32 %v3923, %v4193
    %v4202 = vadd.f32 %v3924, %v4195
    %v4203 = vxor.u32 %v4199, 2147483648
    %v4204 = vxor.u32 %v4200, 2147483648
    %v4205 = vxor.u32 %v4201, 2147483648
    %v4206 = vmul.f32 %v4203, 1.442695
    %v4207 = vpow.pop %v4206
    %v4208 = vmul.f32 %v4204, 1.442695
    %v4209 = vpow.pop %v4208
    %v4210 = vmul.f32 %v4205, 1.442695
    %v4211 = vpow.pop %v4210
    %v4212 = vadd.f32 %v4207, 1.0
    %v4213 = vadd.f32 %v4209, 1.0
    %v4214 = vadd.f32 %v4211, 1.0
    %v4215 = vrcp.pop %v4212
    %v4216 = vmul.f32 1.0, %v4215
    %v4217 = vrcp.pop %v4213
    %v4218 = vmul.f32 1.0, %v4217
    %v4219 = vrcp.pop %v4214
    %v4220 = vmul.f32 1.0, %v4219
    %v4221 = vtanh.pop %v4202
    %v4222 = vmul.f32 %v4218, %v3313
    %v4223 = vmul.f32 %v4216, %v4221
    %v4224 = vadd.f32 %v4222, %v4223
    %v4225 = vtanh.pop %v4224
    %v4226 = vmul.f32 %v4220, %v4225
    %v4227 = vpack.c.bf16 %v4226, %v4226
    %4228 = vst [vmem:[#allocation3 + $0x18] sm:$0xff] %v4226
    %v4229 = vld [vmem:[#allocation2 + $0x80] sm:$0xff]
    %v4230 = vld [vmem:[#allocation2 + $0x88] sm:$0xff]
    %v4231 = vld [vmem:[#allocation2 + $0x90] sm:$0xff]
    %v4232 = vld [vmem:[#allocation2 + $0x98] sm:$0xff]
    %v4233 = vld [vmem:[#allocation7] sm:$0xff]
    %v4234 = vld [vmem:[#allocation7 + $0x8] sm:$0xff]
    %v4235 = vld [vmem:[#allocation7 + $0x10] sm:$0xff]
    %v4236 = vld [vmem:[#allocation7 + $0x18] sm:$0xff]
    %v4237 = vld [vmem:[#allocation7 + $0x20] sm:$0xff]
    %v4238 = vld [vmem:[#allocation7 + $0x28] sm:$0xff]
    %v4239 = vld [vmem:[#allocation7 + $0x30] sm:$0xff]
    %v4240 = vld [vmem:[#allocation7 + $0x38] sm:$0xff]
    %v4241 = vld [vmem:[#allocation7 + $0x40] sm:$0xff]
    %v4242 = vld [vmem:[#allocation7 + $0x48] sm:$0xff]
    %v4243 = vld [vmem:[#allocation7 + $0x50] sm:$0xff]
    %v4244 = vld [vmem:[#allocation7 + $0x58] sm:$0xff]
    %v4245 = vld [vmem:[#allocation7 + $0x60] sm:$0xff]
    %v4246 = vld [vmem:[#allocation7 + $0x68] sm:$0xff]
    %v4247 = vld [vmem:[#allocation7 + $0x70] sm:$0xff]
    %v4248 = vld [vmem:[#allocation7 + $0x78] sm:$0xff]
    %v4249 = vld [vmem:[#allocation7 + $0x80] sm:$0xff]
    %v4250 = vld [vmem:[#allocation7 + $0x88] sm:$0xff]
    %v4251 = vld [vmem:[#allocation7 + $0x90] sm:$0xff]
    %v4252 = vld [vmem:[#allocation7 + $0x98] sm:$0xff]
    %v4253 = vld [vmem:[#allocation7 + $0xa0] sm:$0xff]
    %v4254 = vld [vmem:[#allocation7 + $0xa8] sm:$0xff]
    %v4255 = vld [vmem:[#allocation7 + $0xb0] sm:$0xff]
    %v4256 = vld [vmem:[#allocation7 + $0xb8] sm:$0xff]
    %v4257 = vld [vmem:[#allocation7 + $0xc0] sm:$0xff]
    %v4258 = vld [vmem:[#allocation7 + $0xc8] sm:$0xff]
    %v4259 = vld [vmem:[#allocation7 + $0xd0] sm:$0xff]
    %v4260 = vld [vmem:[#allocation7 + $0xd8] sm:$0xff]
    %v4261 = vld [vmem:[#allocation7 + $0xe0] sm:$0xff]
    %v4262 = vld [vmem:[#allocation7 + $0xe8] sm:$0xff]
    %v4263 = vld [vmem:[#allocation7 + $0xf0] sm:$0xff]
    %v4264 = vld [vmem:[#allocation7 + $0xf8] sm:$0xff]
    %v4297 = vunpack.c.l.b16 %v4233
    %v4298 = vunpack.c.h.b16 %v4233
    %v4299 = vunpack.c.l.b16 %v4234
    %v4300 = vunpack.c.h.b16 %v4234
    %v4301 = vunpack.c.l.b16 %v4235
    %v4302 = vunpack.c.h.b16 %v4235
    %v4303 = vunpack.c.l.b16 %v4236
    %v4304 = vunpack.c.h.b16 %v4236
    %v4305 = vunpack.c.l.b16 %v4237
    %v4306 = vunpack.c.h.b16 %v4237
    %v4307 = vunpack.c.l.b16 %v4238
    %v4308 = vunpack.c.h.b16 %v4238
    %v4309 = vunpack.c.l.b16 %v4239
    %v4310 = vunpack.c.h.b16 %v4239
    %v4311 = vunpack.c.l.b16 %v4240
    %v4312 = vunpack.c.h.b16 %v4240
    %v4313 = vunpack.c.l.b16 %v4241
    %v4314 = vunpack.c.h.b16 %v4241
    %v4315 = vunpack.c.l.b16 %v4242
    %v4316 = vunpack.c.h.b16 %v4242
    %v4317 = vunpack.c.l.b16 %v4243
    %v4318 = vunpack.c.h.b16 %v4243
    %v4319 = vunpack.c.l.b16 %v4244
    %v4320 = vunpack.c.h.b16 %v4244
    %v4321 = vunpack.c.l.b16 %v4245
    %v4322 = vunpack.c.h.b16 %v4245
    %v4323 = vunpack.c.l.b16 %v4246
    %v4324 = vunpack.c.h.b16 %v4246
    %v4325 = vunpack.c.l.b16 %v4247
    %v4326 = vunpack.c.h.b16 %v4247
    %v4327 = vunpack.c.l.b16 %v4248
    %v4328 = vunpack.c.h.b16 %v4248
    %v4329 = vunpack.c.l.b16 %v4249
    %v4330 = vunpack.c.h.b16 %v4249
    %v4331 = vunpack.c.l.b16 %v4250
    %v4332 = vunpack.c.h.b16 %v4250
    %v4333 = vunpack.c.l.b16 %v4251
    %v4334 = vunpack.c.h.b16 %v4251
    %v4335 = vunpack.c.l.b16 %v4252
    %v4336 = vunpack.c.h.b16 %v4252
    %v4337 = vunpack.c.l.b16 %v4253
    %v4338 = vunpack.c.h.b16 %v4253
    %v4339 = vunpack.c.l.b16 %v4254
    %v4340 = vunpack.c.h.b16 %v4254
    %v4341 = vunpack.c.l.b16 %v4255
    %v4342 = vunpack.c.h.b16 %v4255
    %v4343 = vunpack.c.l.b16 %v4256
    %v4344 = vunpack.c.h.b16 %v4256
    %v4345 = vunpack.c.l.b16 %v4257
    %v4346 = vunpack.c.h.b16 %v4257
    %v4347 = vunpack.c.l.b16 %v4258
    %v4348 = vunpack.c.h.b16 %v4258
    %v4349 = vunpack.c.l.b16 %v4259
    %v4350 = vunpack.c.h.b16 %v4259
    %v4351 = vunpack.c.l.b16 %v4260
    %v4352 = vunpack.c.h.b16 %v4260
    %v4353 = vunpack.c.l.b16 %v4261
    %v4354 = vunpack.c.h.b16 %v4261
    %v4355 = vunpack.c.l.b16 %v4262
    %v4356 = vunpack.c.h.b16 %v4262
    %v4357 = vunpack.c.l.b16 %v4263
    %v4358 = vunpack.c.h.b16 %v4263
    %v4359 = vunpack.c.l.b16 %v4264
    %v4360 = vunpack.c.h.b16 %v4264
    %v4361 = vpack.c.b16 %v4301, %v4297
    %v4362 = vpack.c.b16 %v4302, %v4298
    %v4363 = vpack.c.b16 %v4303, %v4299
    %v4364 = vpack.c.b16 %v4304, %v4300
    %v4365 = vpack.c.b16 %v4309, %v4305
    %v4366 = vpack.c.b16 %v4310, %v4306
    %v4367 = vpack.c.b16 %v4311, %v4307
    %v4368 = vpack.c.b16 %v4312, %v4308
    %v4369 = vpack.c.b16 %v4317, %v4313
    %v4370 = vpack.c.b16 %v4318, %v4314
    %v4371 = vpack.c.b16 %v4319, %v4315
    %v4372 = vpack.c.b16 %v4320, %v4316
    %v4373 = vpack.c.b16 %v4325, %v4321
    %v4374 = vpack.c.b16 %v4326, %v4322
    %v4375 = vpack.c.b16 %v4327, %v4323
    %v4376 = vpack.c.b16 %v4328, %v4324
    %v4377 = vpack.c.b16 %v4333, %v4329
    %v4378 = vpack.c.b16 %v4334, %v4330
    %v4379 = vpack.c.b16 %v4335, %v4331
    %v4380 = vpack.c.b16 %v4336, %v4332
    %v4381 = vpack.c.b16 %v4341, %v4337
    %v4382 = vpack.c.b16 %v4342, %v4338
    %v4383 = vpack.c.b16 %v4343, %v4339
    %v4384 = vpack.c.b16 %v4344, %v4340
    %v4385 = vpack.c.b16 %v4349, %v4345
    %v4386 = vpack.c.b16 %v4350, %v4346
    %v4387 = vpack.c.b16 %v4351, %v4347
    %v4388 = vpack.c.b16 %v4352, %v4348
    %v4389 = vpack.c.b16 %v4357, %v4353
    %v4390 = vpack.c.b16 %v4358, %v4354
    %v4391 = vpack.c.b16 %v4359, %v4355
    %v4392 = vpack.c.b16 %v4360, %v4356
    %4425 = vmatprep.subr.bf16.mxu0 %v4362
    %4426 = vmatpush1.bf16.msra.mxu0 %v4361
    %4427 = vmatprep.subr.bf16.mxu0 %v4366
    %4428 = vmatpush1.bf16.msra.mxu0 %v4365
    %4429 = vmatprep.subr.bf16.mxu0 %v4370
    %4430 = vmatpush1.bf16.msra.mxu0 %v4369
    %4431 = vmatprep.subr.bf16.mxu0 %v4374
    %4432 = vmatpush1.bf16.msra.mxu0 %v4373
    %4433 = vmatprep.subr.bf16.mxu0 %v4378
    %4434 = vmatpush1.bf16.msra.mxu0 %v4377
    %4435 = vmatprep.subr.bf16.mxu0 %v4382
    %4436 = vmatpush1.bf16.msra.mxu0 %v4381
    %4437 = vmatprep.subr.bf16.mxu0 %v4386
    %4438 = vmatpush1.bf16.msra.mxu0 %v4385
    %4439 = vmatprep.subr.bf16.mxu0 %v4390
    %4440 = vmatpush1.bf16.msra.mxu0 %v4389
    %4441 = vmatprep.subr.bf16.mxu0 0
    %4442 = vmatpush1.bf16.msra.mxu0 0
    %4443 = vmatprep.subr.bf16.mxu0 0
    %4444 = vmatpush1.bf16.msra.mxu0 0
    %4445 = vmatprep.subr.bf16.mxu0 0
    %4446 = vmatpush1.bf16.msra.mxu0 0
    %4447 = vmatprep.subr.bf16.mxu0 0
    %4448 = vmatpush1.bf16.msra.mxu0 0
    %4449 = vmatprep.subr.bf16.mxu0 0
    %4450 = vmatpush1.bf16.msra.mxu0 0
    %4451 = vmatprep.subr.bf16.mxu0 0
    %4452 = vmatpush1.bf16.msra.mxu0 0
    %4453 = vmatprep.subr.bf16.mxu0 0
    %4454 = vmatpush1.bf16.msra.mxu0 0
    %4455 = vmatprep.subr.bf16.mxu0 0
    %4456 = vmatpush1.bf16.msra.mxu0 0
    %4457 = vmatprep.mubr.bf16.mxu0 0
    %4458 = vmatmul.mubr.bf16.gmra.mrb[0].mxu0 %v3624
    %v4459 = vpop.f32.mrb[0].mxu0
    %v4460 = vadd.f32 0.0, %v4459
    %v4461 = vpop.f32.mrb[0].mxu0
    %v4462 = vadd.f32 0.0, %v4461
    %v4463 = vpop.f32.mrb[0].mxu0
    %v4464 = vpop.f32.mrb[0].mxu0
    %4465 = vdwg.mxu0
    %4466 = vmatprep.subr.bf16.mxu0 %v4364
    %4467 = vmatpush1.bf16.msra.mxu0 %v4363
    %4468 = vmatprep.subr.bf16.mxu0 %v4368
    %4469 = vmatpush1.bf16.msra.mxu0 %v4367
    %4470 = vmatprep.subr.bf16.mxu0 %v4372
    %4471 = vmatpush1.bf16.msra.mxu0 %v4371
    %4472 = vmatprep.subr.bf16.mxu0 %v4376
    %4473 = vmatpush1.bf16.msra.mxu0 %v4375
    %4474 = vmatprep.subr.bf16.mxu0 %v4380
    %4475 = vmatpush1.bf16.msra.mxu0 %v4379
    %4476 = vmatprep.subr.bf16.mxu0 %v4384
    %4477 = vmatpush1.bf16.msra.mxu0 %v4383
    %4478 = vmatprep.subr.bf16.mxu0 %v4388
    %4479 = vmatpush1.bf16.msra.mxu0 %v4387
    %4480 = vmatprep.subr.bf16.mxu0 %v4392
    %4481 = vmatpush1.bf16.msra.mxu0 %v4391
    %4482 = vmatprep.subr.bf16.mxu0 0
    %4483 = vmatpush1.bf16.msra.mxu0 0
    %4484 = vmatprep.subr.bf16.mxu0 0
    %4485 = vmatpush1.bf16.msra.mxu0 0
    %4486 = vmatprep.subr.bf16.mxu0 0
    %4487 = vmatpush1.bf16.msra.mxu0 0
    %4488 = vmatprep.subr.bf16.mxu0 0
    %4489 = vmatpush1.bf16.msra.mxu0 0
    %4490 = vmatprep.subr.bf16.mxu0 0
    %4491 = vmatpush1.bf16.msra.mxu0 0
    %4492 = vmatprep.subr.bf16.mxu0 0
    %4493 = vmatpush1.bf16.msra.mxu0 0
    %4494 = vmatprep.subr.bf16.mxu0 0
    %4495 = vmatpush1.bf16.msra.mxu0 0
    %4496 = vmatprep.subr.bf16.mxu0 0
    %4497 = vmatpush1.bf16.msra.mxu0 0
    %4498 = vmatprep.mubr.bf16.mxu0 0
    %4499 = vmatmul.mubr.bf16.gmra.mrb[0].mxu0 %v3624
    %v4500 = vpop.f32.mrb[0].mxu0
    %v4501 = vadd.f32 0.0, %v4500
    %v4502 = vpop.f32.mrb[0].mxu0
    %v4503 = vadd.f32 0.0, %v4502
    %v4504 = vpop.f32.mrb[0].mxu0
    %v4505 = vpop.f32.mrb[0].mxu0
    %4506 = vdwg.mxu0
    %v4507 = vadd.f32 %v4229, %v4460
    %v4508 = vadd.f32 %v4230, %v4462
    %v4509 = vadd.f32 %v4231, %v4501
    %v4510 = vadd.f32 %v4232, %v4503
    %v4511 = vxor.u32 %v4507, 2147483648
    %v4512 = vxor.u32 %v4508, 2147483648
    %v4513 = vxor.u32 %v4509, 2147483648
    %v4514 = vmul.f32 %v4511, 1.442695
    %v4515 = vpow.pop %v4514
    %v4516 = vmul.f32 %v4512, 1.442695
    %v4517 = vpow.pop %v4516
    %v4518 = vmul.f32 %v4513, 1.442695
    %v4519 = vpow.pop %v4518
    %v4520 = vadd.f32 %v4515, 1.0
    %v4521 = vadd.f32 %v4517, 1.0
    %v4522 = vadd.f32 %v4519, 1.0
    %v4523 = vrcp.pop %v4520
    %v4524 = vmul.f32 1.0, %v4523
    %v4525 = vrcp.pop %v4521
    %v4526 = vmul.f32 1.0, %v4525
    %v4527 = vrcp.pop %v4522
    %v4528 = vmul.f32 1.0, %v4527
    %v4529 = vtanh.pop %v4510
    %v4530 = vmul.f32 %v4526, %v3621
    %v4531 = vmul.f32 %v4524, %v4529
    %v4532 = vadd.f32 %v4530, %v4531
    %v4533 = vtanh.pop %v4532
    %v4534 = vmul.f32 %v4528, %v4533
    %v4535 = vpack.c.bf16 %v4534, %v4534
    %v4536 = vld [vmem:[#allocation13] sm:$0xf]
    %v4537 = vld [vmem:[#allocation10] sm:$0xff]
    %v4538 = vld [vmem:[#allocation10 + $0x8] sm:$0xff]
    %v4539 = vld [vmem:[#allocation10 + $0x10] sm:$0xff]
    %v4540 = vld [vmem:[#allocation10 + $0x18] sm:$0xff]
    %v4541 = vld [vmem:[#allocation10 + $0x20] sm:$0xff]
    %v4542 = vld [vmem:[#allocation10 + $0x28] sm:$0xff]
    %v4543 = vld [vmem:[#allocation10 + $0x30] sm:$0xff]
    %v4544 = vld [vmem:[#allocation10 + $0x38] sm:$0xff]
    %v4545 = vld [vmem:[#allocation10 + $0x40] sm:$0xff]
    %v4546 = vld [vmem:[#allocation10 + $0x48] sm:$0xff]
    %v4547 = vld [vmem:[#allocation10 + $0x50] sm:$0xff]
    %v4548 = vld [vmem:[#allocation10 + $0x58] sm:$0xff]
    %v4549 = vld [vmem:[#allocation10 + $0x60] sm:$0xff]
    %v4550 = vld [vmem:[#allocation10 + $0x68] sm:$0xff]
    %v4551 = vld [vmem:[#allocation10 + $0x70] sm:$0xff]
    %v4552 = vld [vmem:[#allocation10 + $0x78] sm:$0xff]
    %v4553 = vld [vmem:[#allocation10 + $0x80] sm:$0xff]
    %v4554 = vld [vmem:[#allocation10 + $0x88] sm:$0xff]
    %v4555 = vld [vmem:[#allocation10 + $0x90] sm:$0xff]
    %v4556 = vld [vmem:[#allocation10 + $0x98] sm:$0xff]
    %v4557 = vld [vmem:[#allocation10 + $0xa0] sm:$0xff]
    %v4558 = vld [vmem:[#allocation10 + $0xa8] sm:$0xff]
    %v4559 = vld [vmem:[#allocation10 + $0xb0] sm:$0xff]
    %v4560 = vld [vmem:[#allocation10 + $0xb8] sm:$0xff]
    %v4561 = vld [vmem:[#allocation10 + $0xc0] sm:$0xff]
    %v4562 = vld [vmem:[#allocation10 + $0xc8] sm:$0xff]
    %v4563 = vld [vmem:[#allocation10 + $0xd0] sm:$0xff]
    %v4564 = vld [vmem:[#allocation10 + $0xd8] sm:$0xff]
    %v4565 = vld [vmem:[#allocation10 + $0xe0] sm:$0xff]
    %v4566 = vld [vmem:[#allocation10 + $0xe8] sm:$0xff]
    %v4567 = vld [vmem:[#allocation10 + $0xf0] sm:$0xff]
    %v4568 = vld [vmem:[#allocation10 + $0xf8] sm:$0xff]
    %v4601 = vunpack.c.l.b16 %v4537
    %v4602 = vunpack.c.h.b16 %v4537
    %v4603 = vunpack.c.l.b16 %v4538
    %v4604 = vunpack.c.h.b16 %v4538
    %v4605 = vunpack.c.l.b16 %v4539
    %v4606 = vunpack.c.h.b16 %v4539
    %v4607 = vunpack.c.l.b16 %v4540
    %v4608 = vunpack.c.h.b16 %v4540
    %v4609 = vunpack.c.l.b16 %v4541
    %v4610 = vunpack.c.h.b16 %v4541
    %v4611 = vunpack.c.l.b16 %v4542
    %v4612 = vunpack.c.h.b16 %v4542
    %v4613 = vunpack.c.l.b16 %v4543
    %v4614 = vunpack.c.h.b16 %v4543
    %v4615 = vunpack.c.l.b16 %v4544
    %v4616 = vunpack.c.h.b16 %v4544
    %v4617 = vunpack.c.l.b16 %v4545
    %v4618 = vunpack.c.h.b16 %v4545
    %v4619 = vunpack.c.l.b16 %v4546
    %v4620 = vunpack.c.h.b16 %v4546
    %v4621 = vunpack.c.l.b16 %v4547
    %v4622 = vunpack.c.h.b16 %v4547
    %v4623 = vunpack.c.l.b16 %v4548
    %v4624 = vunpack.c.h.b16 %v4548
    %v4625 = vunpack.c.l.b16 %v4549
    %v4626 = vunpack.c.h.b16 %v4549
    %v4627 = vunpack.c.l.b16 %v4550
    %v4628 = vunpack.c.h.b16 %v4550
    %v4629 = vunpack.c.l.b16 %v4551
    %v4630 = vunpack.c.h.b16 %v4551
    %v4631 = vunpack.c.l.b16 %v4552
    %v4632 = vunpack.c.h.b16 %v4552
    %v4633 = vunpack.c.l.b16 %v4553
    %v4634 = vunpack.c.h.b16 %v4553
    %v4635 = vunpack.c.l.b16 %v4554
    %v4636 = vunpack.c.h.b16 %v4554
    %v4637 = vunpack.c.l.b16 %v4555
    %v4638 = vunpack.c.h.b16 %v4555
    %v4639 = vunpack.c.l.b16 %v4556
    %v4640 = vunpack.c.h.b16 %v4556
    %v4641 = vunpack.c.l.b16 %v4557
    %v4642 = vunpack.c.h.b16 %v4557
    %v4643 = vunpack.c.l.b16 %v4558
    %v4644 = vunpack.c.h.b16 %v4558
    %v4645 = vunpack.c.l.b16 %v4559
    %v4646 = vunpack.c.h.b16 %v4559
    %v4647 = vunpack.c.l.b16 %v4560
    %v4648 = vunpack.c.h.b16 %v4560
    %v4649 = vunpack.c.l.b16 %v4561
    %v4650 = vunpack.c.h.b16 %v4561
    %v4651 = vunpack.c.l.b16 %v4562
    %v4652 = vunpack.c.h.b16 %v4562
    %v4653 = vunpack.c.l.b16 %v4563
    %v4654 = vunpack.c.h.b16 %v4563
    %v4655 = vunpack.c.l.b16 %v4564
    %v4656 = vunpack.c.h.b16 %v4564
    %v4657 = vunpack.c.l.b16 %v4565
    %v4658 = vunpack.c.h.b16 %v4565
    %v4659 = vunpack.c.l.b16 %v4566
    %v4660 = vunpack.c.h.b16 %v4566
    %v4661 = vunpack.c.l.b16 %v4567
    %v4662 = vunpack.c.h.b16 %v4567
    %v4663 = vunpack.c.l.b16 %v4568
    %v4664 = vunpack.c.h.b16 %v4568
    %v4665 = vpack.c.b16 %v4605, %v4601
    %v4666 = vpack.c.b16 %v4606, %v4602
    %v4667 = vpack.c.b16 %v4607, %v4603
    %v4668 = vpack.c.b16 %v4608, %v4604
    %v4669 = vpack.c.b16 %v4613, %v4609
    %v4670 = vpack.c.b16 %v4614, %v4610
    %v4671 = vpack.c.b16 %v4615, %v4611
    %v4672 = vpack.c.b16 %v4616, %v4612
    %v4673 = vpack.c.b16 %v4621, %v4617
    %v4674 = vpack.c.b16 %v4622, %v4618
    %v4675 = vpack.c.b16 %v4623, %v4619
    %v4676 = vpack.c.b16 %v4624, %v4620
    %v4677 = vpack.c.b16 %v4629, %v4625
    %v4678 = vpack.c.b16 %v4630, %v4626
    %v4679 = vpack.c.b16 %v4631, %v4627
    %v4680 = vpack.c.b16 %v4632, %v4628
    %v4681 = vpack.c.b16 %v4637, %v4633
    %v4682 = vpack.c.b16 %v4638, %v4634
    %v4683 = vpack.c.b16 %v4639, %v4635
    %v4684 = vpack.c.b16 %v4640, %v4636
    %v4685 = vpack.c.b16 %v4645, %v4641
    %v4686 = vpack.c.b16 %v4646, %v4642
    %v4687 = vpack.c.b16 %v4647, %v4643
    %v4688 = vpack.c.b16 %v4648, %v4644
    %v4689 = vpack.c.b16 %v4653, %v4649
    %v4690 = vpack.c.b16 %v4654, %v4650
    %v4691 = vpack.c.b16 %v4655, %v4651
    %v4692 = vpack.c.b16 %v4656, %v4652
    %v4693 = vpack.c.b16 %v4661, %v4657
    %v4694 = vpack.c.b16 %v4662, %v4658
    %v4695 = vpack.c.b16 %v4663, %v4659
    %v4696 = vpack.c.b16 %v4664, %v4660
    %4729 = vmatprep.subr.bf16.mxu0 %v4666
    %4730 = vmatpush1.bf16.msra.mxu0 %v4665
    %4731 = vmatprep.subr.bf16.mxu0 %v4670
    %4732 = vmatpush1.bf16.msra.mxu0 %v4669
    %4733 = vmatprep.subr.bf16.mxu0 %v4674
    %4734 = vmatpush1.bf16.msra.mxu0 %v4673
    %4735 = vmatprep.subr.bf16.mxu0 %v4678
    %4736 = vmatpush1.bf16.msra.mxu0 %v4677
    %4737 = vmatprep.subr.bf16.mxu0 %v4682
    %4738 = vmatpush1.bf16.msra.mxu0 %v4681
    %4739 = vmatprep.subr.bf16.mxu0 %v4686
    %4740 = vmatpush1.bf16.msra.mxu0 %v4685
    %4741 = vmatprep.subr.bf16.mxu0 %v4690
    %4742 = vmatpush1.bf16.msra.mxu0 %v4689
    %4743 = vmatprep.subr.bf16.mxu0 %v4694
    %4744 = vmatpush1.bf16.msra.mxu0 %v4693
    %4745 = vmatprep.subr.bf16.mxu0 0
    %4746 = vmatpush1.bf16.msra.mxu0 0
    %4747 = vmatprep.subr.bf16.mxu0 0
    %4748 = vmatpush1.bf16.msra.mxu0 0
    %4749 = vmatprep.subr.bf16.mxu0 0
    %4750 = vmatpush1.bf16.msra.mxu0 0
    %4751 = vmatprep.subr.bf16.mxu0 0
    %4752 = vmatpush1.bf16.msra.mxu0 0
    %4753 = vmatprep.subr.bf16.mxu0 0
    %4754 = vmatpush1.bf16.msra.mxu0 0
    %4755 = vmatprep.subr.bf16.mxu0 0
    %4756 = vmatpush1.bf16.msra.mxu0 0
    %4757 = vmatprep.subr.bf16.mxu0 0
    %4758 = vmatpush1.bf16.msra.mxu0 0
    %4759 = vmatprep.subr.bf16.mxu0 0
    %4760 = vmatpush1.bf16.msra.mxu0 0
    %4761 = vmatprep.mubr.bf16.mxu0 0
    %4762 = vmatmul.mubr.bf16.gmra.mrb[0].mxu0 %v4535
    %v4763 = vpop.f32.mrb[0].mxu0
    %v4764 = vadd.f32 0.0, %v4763
    %v4765 = vpop.f32.mrb[0].mxu0
    %v4766 = vadd.f32 0.0, %v4765
    %v4767 = vpop.f32.mrb[0].mxu0
    %v4768 = vpop.f32.mrb[0].mxu0
    %4769 = vdwg.mxu0
    %4770 = vmatprep.subr.bf16.mxu0 %v4668
    %4771 = vmatpush1.bf16.msra.mxu0 %v4667
    %4772 = vmatprep.subr.bf16.mxu0 %v4672
    %4773 = vmatpush1.bf16.msra.mxu0 %v4671
    %4774 = vmatprep.subr.bf16.mxu0 %v4676
    %4775 = vmatpush1.bf16.msra.mxu0 %v4675
    %4776 = vmatprep.subr.bf16.mxu0 %v4680
    %4777 = vmatpush1.bf16.msra.mxu0 %v4679
    %4778 = vmatprep.subr.bf16.mxu0 %v4684
    %4779 = vmatpush1.bf16.msra.mxu0 %v4683
    %4780 = vmatprep.subr.bf16.mxu0 %v4688
    %4781 = vmatpush1.bf16.msra.mxu0 %v4687
    %4782 = vmatprep.subr.bf16.mxu0 %v4692
    %4783 = vmatpush1.bf16.msra.mxu0 %v4691
    %4784 = vmatprep.subr.bf16.mxu0 %v4696
    %4785 = vmatpush1.bf16.msra.mxu0 %v4695
    %4786 = vmatprep.subr.bf16.mxu0 0
    %4787 = vmatpush1.bf16.msra.mxu0 0
    %4788 = vmatprep.subr.bf16.mxu0 0
    %4789 = vmatpush1.bf16.msra.mxu0 0
    %4790 = vmatprep.subr.bf16.mxu0 0
    %4791 = vmatpush1.bf16.msra.mxu0 0
    %4792 = vmatprep.subr.bf16.mxu0 0
    %4793 = vmatpush1.bf16.msra.mxu0 0
    %4794 = vmatprep.subr.bf16.mxu0 0
    %4795 = vmatpush1.bf16.msra.mxu0 0
    %4796 = vmatprep.subr.bf16.mxu0 0
    %4797 = vmatpush1.bf16.msra.mxu0 0
    %4798 = vmatprep.subr.bf16.mxu0 0
    %4799 = vmatpush1.bf16.msra.mxu0 0
    %4800 = vmatprep.subr.bf16.mxu0 0
    %4801 = vmatpush1.bf16.msra.mxu0 0
    %4802 = vmatprep.mubr.bf16.mxu0 0
    %4803 = vmatmul.mubr.bf16.gmra.mrb[0].mxu0 %v4535
    %v4804 = vpop.f32.mrb[0].mxu0
    %v4805 = vadd.f32 0.0, %v4804
    %v4806 = vpop.f32.mrb[0].mxu0
    %v4807 = vadd.f32 0.0, %v4806
    %v4808 = vpop.f32.mrb[0].mxu0
    %v4809 = vpop.f32.mrb[0].mxu0
    %4810 = vdwg.mxu0
    %v4812 = vlaneseq
    %v4813 = vshrl.u32 %v4812, 7
    %v4814 = vsub.s32 0, %v4813
    %v4815 = vrot.slane %v4536, %v4814
    %v4816 = vlaneseq
    %v4817 = vshrl.u32 %v4816, 7
    %v4818 = vsub.s32 1, %v4817
    %v4819 = vrot.slane %v4536, %v4818
    %v4820 = vlaneseq
    %v4821 = vshrl.u32 %v4820, 7
    %v4822 = vsub.s32 2, %v4821
    %v4823 = vrot.slane %v4536, %v4822
    %v4824 = vlaneseq
    %v4825 = vshrl.u32 %v4824, 7
    %v4826 = vsub.s32 3, %v4825
    %v4827 = vrot.slane %v4536, %v4826
    %v4832 = vadd.f32 %v4815, %v4764
    %v4833 = vadd.f32 %v4819, %v4766
    %v4834 = vadd.f32 %v4823, %v4805
    %v4835 = vadd.f32 %v4827, %v4807
    %v4836 = vld [vmem:[#allocation12] sm:$0xff]
    %v4837 = vld [vmem:[#allocation12 + $0x8] sm:$0xff]
    %v4838 = vld [vmem:[#allocation12 + $0x10] sm:$0xff]
    %v4839 = vld [vmem:[#allocation12 + $0x18] sm:$0xff]
    %v4840 = vld [vmem:[#allocation12 + $0x20] sm:$0xff]
    %v4841 = vld [vmem:[#allocation12 + $0x28] sm:$0xff]
    %v4842 = vld [vmem:[#allocation12 + $0x30] sm:$0xff]
    %v4843 = vld [vmem:[#allocation12 + $0x38] sm:$0xff]
    %v4844 = vld [vmem:[#allocation12 + $0x40] sm:$0xff]
    %v4845 = vld [vmem:[#allocation12 + $0x48] sm:$0xff]
    %v4846 = vld [vmem:[#allocation12 + $0x50] sm:$0xff]
    %v4847 = vld [vmem:[#allocation12 + $0x58] sm:$0xff]
    %v4848 = vld [vmem:[#allocation12 + $0x60] sm:$0xff]
    %v4849 = vld [vmem:[#allocation12 + $0x68] sm:$0xff]
    %v4850 = vld [vmem:[#allocation12 + $0x70] sm:$0xff]
    %v4851 = vld [vmem:[#allocation12 + $0x78] sm:$0xff]
    %v4852 = vld [vmem:[#allocation12 + $0x80] sm:$0xff]
    %v4853 = vld [vmem:[#allocation12 + $0x88] sm:$0xff]
    %v4854 = vld [vmem:[#allocation12 + $0x90] sm:$0xff]
    %v4855 = vld [vmem:[#allocation12 + $0x98] sm:$0xff]
    %v4856 = vld [vmem:[#allocation12 + $0xa0] sm:$0xff]
    %v4857 = vld [vmem:[#allocation12 + $0xa8] sm:$0xff]
    %v4858 = vld [vmem:[#allocation12 + $0xb0] sm:$0xff]
    %v4859 = vld [vmem:[#allocation12 + $0xb8] sm:$0xff]
    %v4860 = vld [vmem:[#allocation12 + $0xc0] sm:$0xff]
    %v4861 = vld [vmem:[#allocation12 + $0xc8] sm:$0xff]
    %v4862 = vld [vmem:[#allocation12 + $0xd0] sm:$0xff]
    %v4863 = vld [vmem:[#allocation12 + $0xd8] sm:$0xff]
    %v4864 = vld [vmem:[#allocation12 + $0xe0] sm:$0xff]
    %v4865 = vld [vmem:[#allocation12 + $0xe8] sm:$0xff]
    %v4866 = vld [vmem:[#allocation12 + $0xf0] sm:$0xff]
    %v4867 = vld [vmem:[#allocation12 + $0xf8] sm:$0xff]
    %v4900 = vunpack.c.l.b16 %v4836
    %v4901 = vunpack.c.h.b16 %v4836
    %v4902 = vunpack.c.l.b16 %v4837
    %v4903 = vunpack.c.h.b16 %v4837
    %v4904 = vunpack.c.l.b16 %v4838
    %v4905 = vunpack.c.h.b16 %v4838
    %v4906 = vunpack.c.l.b16 %v4839
    %v4907 = vunpack.c.h.b16 %v4839
    %v4908 = vunpack.c.l.b16 %v4840
    %v4909 = vunpack.c.h.b16 %v4840
    %v4910 = vunpack.c.l.b16 %v4841
    %v4911 = vunpack.c.h.b16 %v4841
    %v4912 = vunpack.c.l.b16 %v4842
    %v4913 = vunpack.c.h.b16 %v4842
    %v4914 = vunpack.c.l.b16 %v4843
    %v4915 = vunpack.c.h.b16 %v4843
    %v4916 = vunpack.c.l.b16 %v4844
    %v4917 = vunpack.c.h.b16 %v4844
    %v4918 = vunpack.c.l.b16 %v4845
    %v4919 = vunpack.c.h.b16 %v4845
    %v4920 = vunpack.c.l.b16 %v4846
    %v4921 = vunpack.c.h.b16 %v4846
    %v4922 = vunpack.c.l.b16 %v4847
    %v4923 = vunpack.c.h.b16 %v4847
    %v4924 = vunpack.c.l.b16 %v4848
    %v4925 = vunpack.c.h.b16 %v4848
    %v4926 = vunpack.c.l.b16 %v4849
    %v4927 = vunpack.c.h.b16 %v4849
    %v4928 = vunpack.c.l.b16 %v4850
    %v4929 = vunpack.c.h.b16 %v4850
    %v4930 = vunpack.c.l.b16 %v4851
    %v4931 = vunpack.c.h.b16 %v4851
    %v4932 = vunpack.c.l.b16 %v4852
    %v4933 = vunpack.c.h.b16 %v4852
    %v4934 = vunpack.c.l.b16 %v4853
    %v4935 = vunpack.c.h.b16 %v4853
    %v4936 = vunpack.c.l.b16 %v4854
    %v4937 = vunpack.c.h.b16 %v4854
    %v4938 = vunpack.c.l.b16 %v4855
    %v4939 = vunpack.c.h.b16 %v4855
    %v4940 = vunpack.c.l.b16 %v4856
    %v4941 = vunpack.c.h.b16 %v4856
    %v4942 = vunpack.c.l.b16 %v4857
    %v4943 = vunpack.c.h.b16 %v4857
    %v4944 = vunpack.c.l.b16 %v4858
    %v4945 = vunpack.c.h.b16 %v4858
    %v4946 = vunpack.c.l.b16 %v4859
    %v4947 = vunpack.c.h.b16 %v4859
    %v4948 = vunpack.c.l.b16 %v4860
    %v4949 = vunpack.c.h.b16 %v4860
    %v4950 = vunpack.c.l.b16 %v4861
    %v4951 = vunpack.c.h.b16 %v4861
    %v4952 = vunpack.c.l.b16 %v4862
    %v4953 = vunpack.c.h.b16 %v4862
    %v4954 = vunpack.c.l.b16 %v4863
    %v4955 = vunpack.c.h.b16 %v4863
    %v4956 = vunpack.c.l.b16 %v4864
    %v4957 = vunpack.c.h.b16 %v4864
    %v4958 = vunpack.c.l.b16 %v4865
    %v4959 = vunpack.c.h.b16 %v4865
    %v4960 = vunpack.c.l.b16 %v4866
    %v4961 = vunpack.c.h.b16 %v4866
    %v4962 = vunpack.c.l.b16 %v4867
    %v4963 = vunpack.c.h.b16 %v4867
    %v4964 = vpack.c.b16 %v4904, %v4900
    %v4965 = vpack.c.b16 %v4905, %v4901
    %v4966 = vpack.c.b16 %v4906, %v4902
    %v4967 = vpack.c.b16 %v4907, %v4903
    %v4968 = vpack.c.b16 %v4912, %v4908
    %v4969 = vpack.c.b16 %v4913, %v4909
    %v4970 = vpack.c.b16 %v4914, %v4910
    %v4971 = vpack.c.b16 %v4915, %v4911
    %v4972 = vpack.c.b16 %v4920, %v4916
    %v4973 = vpack.c.b16 %v4921, %v4917
    %v4974 = vpack.c.b16 %v4922, %v4918
    %v4975 = vpack.c.b16 %v4923, %v4919
    %v4976 = vpack.c.b16 %v4928, %v4924
    %v4977 = vpack.c.b16 %v4929, %v4925
    %v4978 = vpack.c.b16 %v4930, %v4926
    %v4979 = vpack.c.b16 %v4931, %v4927
    %v4980 = vpack.c.b16 %v4936, %v4932
    %v4981 = vpack.c.b16 %v4937, %v4933
    %v4982 = vpack.c.b16 %v4938, %v4934
    %v4983 = vpack.c.b16 %v4939, %v4935
    %v4984 = vpack.c.b16 %v4944, %v4940
    %v4985 = vpack.c.b16 %v4945, %v4941
    %v4986 = vpack.c.b16 %v4946, %v4942
    %v4987 = vpack.c.b16 %v4947, %v4943
    %v4988 = vpack.c.b16 %v4952, %v4948
    %v4989 = vpack.c.b16 %v4953, %v4949
    %v4990 = vpack.c.b16 %v4954, %v4950
    %v4991 = vpack.c.b16 %v4955, %v4951
    %v4992 = vpack.c.b16 %v4960, %v4956
    %v4993 = vpack.c.b16 %v4961, %v4957
    %v4994 = vpack.c.b16 %v4962, %v4958
    %v4995 = vpack.c.b16 %v4963, %v4959
    %5028 = vmatprep.subr.bf16.mxu0 %v4965
    %5029 = vmatpush1.bf16.msra.mxu0 %v4964
    %5030 = vmatprep.subr.bf16.mxu0 %v4969
    %5031 = vmatpush1.bf16.msra.mxu0 %v4968
    %5032 = vmatprep.subr.bf16.mxu0 %v4973
    %5033 = vmatpush1.bf16.msra.mxu0 %v4972
    %5034 = vmatprep.subr.bf16.mxu0 %v4977
    %5035 = vmatpush1.bf16.msra.mxu0 %v4976
    %5036 = vmatprep.subr.bf16.mxu0 %v4981
    %5037 = vmatpush1.bf16.msra.mxu0 %v4980
    %5038 = vmatprep.subr.bf16.mxu0 %v4985
    %5039 = vmatpush1.bf16.msra.mxu0 %v4984
    %5040 = vmatprep.subr.bf16.mxu0 %v4989
    %5041 = vmatpush1.bf16.msra.mxu0 %v4988
    %5042 = vmatprep.subr.bf16.mxu0 %v4993
    %5043 = vmatpush1.bf16.msra.mxu0 %v4992
    %5044 = vmatprep.subr.bf16.mxu0 0
    %5045 = vmatpush1.bf16.msra.mxu0 0
    %5046 = vmatprep.subr.bf16.mxu0 0
    %5047 = vmatpush1.bf16.msra.mxu0 0
    %5048 = vmatprep.subr.bf16.mxu0 0
    %5049 = vmatpush1.bf16.msra.mxu0 0
    %5050 = vmatprep.subr.bf16.mxu0 0
    %5051 = vmatpush1.bf16.msra.mxu0 0
    %5052 = vmatprep.subr.bf16.mxu0 0
    %5053 = vmatpush1.bf16.msra.mxu0 0
    %5054 = vmatprep.subr.bf16.mxu0 0
    %5055 = vmatpush1.bf16.msra.mxu0 0
    %5056 = vmatprep.subr.bf16.mxu0 0
    %5057 = vmatpush1.bf16.msra.mxu0 0
    %5058 = vmatprep.subr.bf16.mxu0 0
    %5059 = vmatpush1.bf16.msra.mxu0 0
    %5060 = vmatprep.mubr.bf16.mxu0 0
    %5061 = vmatmul.mubr.bf16.gmra.mrb[0].mxu0 %v4227
    %v5062 = vpop.f32.mrb[0].mxu0
    %v5063 = vadd.f32 0.0, %v5062
    %v5064 = vpop.f32.mrb[0].mxu0
    %v5065 = vadd.f32 0.0, %v5064
    %v5066 = vpop.f32.mrb[0].mxu0
    %v5067 = vpop.f32.mrb[0].mxu0
    %5068 = vdwg.mxu0
    %5069 = vmatprep.subr.bf16.mxu0 %v4967
    %5070 = vmatpush1.bf16.msra.mxu0 %v4966
    %5071 = vmatprep.subr.bf16.mxu0 %v4971
    %5072 = vmatpush1.bf16.msra.mxu0 %v4970
    %5073 = vmatprep.subr.bf16.mxu0 %v4975
    %5074 = vmatpush1.bf16.msra.mxu0 %v4974
    %5075 = vmatprep.subr.bf16.mxu0 %v4979
    %5076 = vmatpush1.bf16.msra.mxu0 %v4978
    %5077 = vmatprep.subr.bf16.mxu0 %v4983
    %5078 = vmatpush1.bf16.msra.mxu0 %v4982
    %5079 = vmatprep.subr.bf16.mxu0 %v4987
    %5080 = vmatpush1.bf16.msra.mxu0 %v4986
    %5081 = vmatprep.subr.bf16.mxu0 %v4991
    %5082 = vmatpush1.bf16.msra.mxu0 %v4990
    %5083 = vmatprep.subr.bf16.mxu0 %v4995
    %5084 = vmatpush1.bf16.msra.mxu0 %v4994
    %5085 = vmatprep.subr.bf16.mxu0 0
    %5086 = vmatpush1.bf16.msra.mxu0 0
    %5087 = vmatprep.subr.bf16.mxu0 0
    %5088 = vmatpush1.bf16.msra.mxu0 0
    %5089 = vmatprep.subr.bf16.mxu0 0
    %5090 = vmatpush1.bf16.msra.mxu0 0
    %5091 = vmatprep.subr.bf16.mxu0 0
    %5092 = vmatpush1.bf16.msra.mxu0 0
    %5093 = vmatprep.subr.bf16.mxu0 0
    %5094 = vmatpush1.bf16.msra.mxu0 0
    %5095 = vmatprep.subr.bf16.mxu0 0
    %5096 = vmatpush1.bf16.msra.mxu0 0
    %5097 = vmatprep.subr.bf16.mxu0 0
    %5098 = vmatpush1.bf16.msra.mxu0 0
    %5099 = vmatprep.subr.bf16.mxu0 0
    %5100 = vmatpush1.bf16.msra.mxu0 0
    %5101 = vmatprep.mubr.bf16.mxu0 0
    %5102 = vmatmul.mubr.bf16.gmra.mrb[0].mxu0 %v4227
    %v5103 = vpop.f32.mrb[0].mxu0
    %v5104 = vadd.f32 0.0, %v5103
    %v5105 = vpop.f32.mrb[0].mxu0
    %v5106 = vadd.f32 0.0, %v5105
    %v5107 = vpop.f32.mrb[0].mxu0
    %v5108 = vpop.f32.mrb[0].mxu0
    %5109 = vdwg.mxu0
    %v5110 = vadd.f32 %v4832, %v5063
    %v5111 = vadd.f32 %v4833, %v5065
    %v5112 = vadd.f32 %v4834, %v5104
    %v5113 = vadd.f32 %v4835, %v5106
    %v5114 = vxor.u32 %v5110, 2147483648
    %v5115 = vxor.u32 %v5111, 2147483648
    %v5116 = vxor.u32 %v5112, 2147483648
    %v5117 = vmul.f32 %v5114, 1.442695
    %v5118 = vpow.pop %v5117
    %v5119 = vmul.f32 %v5115, 1.442695
    %v5120 = vpow.pop %v5119
    %v5121 = vmul.f32 %v5116, 1.442695
    %v5122 = vpow.pop %v5121
    %v5123 = vadd.f32 %v5118, 1.0
    %v5124 = vadd.f32 %v5120, 1.0
    %v5125 = vadd.f32 %v5122, 1.0
    %v5126 = vrcp.pop %v5123
    %v5127 = vmul.f32 1.0, %v5126
    %v5128 = vrcp.pop %v5124
    %v5129 = vmul.f32 1.0, %v5128
    %v5130 = vrcp.pop %v5125
    %v5131 = vmul.f32 1.0, %v5130
    %v5132 = vtanh.pop %v5113
    %v5133 = vmul.f32 %v5129, %v4224
    %v5134 = vmul.f32 %v5127, %v5132
    %v5135 = vadd.f32 %v5133, %v5134
    %v5136 = vtanh.pop %v5135
    %v5137 = vmul.f32 %v5131, %v5136
    %v5138 = vpack.c.bf16 %v5137, %v5137
    %5139 = vst [vmem:[#allocation3 + $0x20] sm:$0xff] %v5137
    %v5140 = vld [vmem:[#allocation2 + $0xa0] sm:$0xff]
    %v5141 = vld [vmem:[#allocation2 + $0xa8] sm:$0xff]
    %v5142 = vld [vmem:[#allocation2 + $0xb0] sm:$0xff]
    %v5143 = vld [vmem:[#allocation2 + $0xb8] sm:$0xff]
    %v5144 = vld [vmem:[#allocation7] sm:$0xff]
    %v5145 = vld [vmem:[#allocation7 + $0x8] sm:$0xff]
    %v5146 = vld [vmem:[#allocation7 + $0x10] sm:$0xff]
    %v5147 = vld [vmem:[#allocation7 + $0x18] sm:$0xff]
    %v5148 = vld [vmem:[#allocation7 + $0x20] sm:$0xff]
    %v5149 = vld [vmem:[#allocation7 + $0x28] sm:$0xff]
    %v5150 = vld [vmem:[#allocation7 + $0x30] sm:$0xff]
    %v5151 = vld [vmem:[#allocation7 + $0x38] sm:$0xff]
    %v5152 = vld [vmem:[#allocation7 + $0x40] sm:$0xff]
    %v5153 = vld [vmem:[#allocation7 + $0x48] sm:$0xff]
    %v5154 = vld [vmem:[#allocation7 + $0x50] sm:$0xff]
    %v5155 = vld [vmem:[#allocation7 + $0x58] sm:$0xff]
    %v5156 = vld [vmem:[#allocation7 + $0x60] sm:$0xff]
    %v5157 = vld [vmem:[#allocation7 + $0x68] sm:$0xff]
    %v5158 = vld [vmem:[#allocation7 + $0x70] sm:$0xff]
    %v5159 = vld [vmem:[#allocation7 + $0x78] sm:$0xff]
    %v5160 = vld [vmem:[#allocation7 + $0x80] sm:$0xff]
    %v5161 = vld [vmem:[#allocation7 + $0x88] sm:$0xff]
    %v5162 = vld [vmem:[#allocation7 + $0x90] sm:$0xff]
    %v5163 = vld [vmem:[#allocation7 + $0x98] sm:$0xff]
    %v5164 = vld [vmem:[#allocation7 + $0xa0] sm:$0xff]
    %v5165 = vld [vmem:[#allocation7 + $0xa8] sm:$0xff]
    %v5166 = vld [vmem:[#allocation7 + $0xb0] sm:$0xff]
    %v5167 = vld [vmem:[#allocation7 + $0xb8] sm:$0xff]
    %v5168 = vld [vmem:[#allocation7 + $0xc0] sm:$0xff]
    %v5169 = vld [vmem:[#allocation7 + $0xc8] sm:$0xff]
    %v5170 = vld [vmem:[#allocation7 + $0xd0] sm:$0xff]
    %v5171 = vld [vmem:[#allocation7 + $0xd8] sm:$0xff]
    %v5172 = vld [vmem:[#allocation7 + $0xe0] sm:$0xff]
    %v5173 = vld [vmem:[#allocation7 + $0xe8] sm:$0xff]
    %v5174 = vld [vmem:[#allocation7 + $0xf0] sm:$0xff]
    %v5175 = vld [vmem:[#allocation7 + $0xf8] sm:$0xff]
    %v5208 = vunpack.c.l.b16 %v5144
    %v5209 = vunpack.c.h.b16 %v5144
    %v5210 = vunpack.c.l.b16 %v5145
    %v5211 = vunpack.c.h.b16 %v5145
    %v5212 = vunpack.c.l.b16 %v5146
    %v5213 = vunpack.c.h.b16 %v5146
    %v5214 = vunpack.c.l.b16 %v5147
    %v5215 = vunpack.c.h.b16 %v5147
    %v5216 = vunpack.c.l.b16 %v5148
    %v5217 = vunpack.c.h.b16 %v5148
    %v5218 = vunpack.c.l.b16 %v5149
    %v5219 = vunpack.c.h.b16 %v5149
    %v5220 = vunpack.c.l.b16 %v5150
    %v5221 = vunpack.c.h.b16 %v5150
    %v5222 = vunpack.c.l.b16 %v5151
    %v5223 = vunpack.c.h.b16 %v5151
    %v5224 = vunpack.c.l.b16 %v5152
    %v5225 = vunpack.c.h.b16 %v5152
    %v5226 = vunpack.c.l.b16 %v5153
    %v5227 = vunpack.c.h.b16 %v5153
    %v5228 = vunpack.c.l.b16 %v5154
    %v5229 = vunpack.c.h.b16 %v5154
    %v5230 = vunpack.c.l.b16 %v5155
    %v5231 = vunpack.c.h.b16 %v5155
    %v5232 = vunpack.c.l.b16 %v5156
    %v5233 = vunpack.c.h.b16 %v5156
    %v5234 = vunpack.c.l.b16 %v5157
    %v5235 = vunpack.c.h.b16 %v5157
    %v5236 = vunpack.c.l.b16 %v5158
    %v5237 = vunpack.c.h.b16 %v5158
    %v5238 = vunpack.c.l.b16 %v5159
    %v5239 = vunpack.c.h.b16 %v5159
    %v5240 = vunpack.c.l.b16 %v5160
    %v5241 = vunpack.c.h.b16 %v5160
    %v5242 = vunpack.c.l.b16 %v5161
    %v5243 = vunpack.c.h.b16 %v5161
    %v5244 = vunpack.c.l.b16 %v5162
    %v5245 = vunpack.c.h.b16 %v5162
    %v5246 = vunpack.c.l.b16 %v5163
    %v5247 = vunpack.c.h.b16 %v5163
    %v5248 = vunpack.c.l.b16 %v5164
    %v5249 = vunpack.c.h.b16 %v5164
    %v5250 = vunpack.c.l.b16 %v5165
    %v5251 = vunpack.c.h.b16 %v5165
    %v5252 = vunpack.c.l.b16 %v5166
    %v5253 = vunpack.c.h.b16 %v5166
    %v5254 = vunpack.c.l.b16 %v5167
    %v5255 = vunpack.c.h.b16 %v5167
    %v5256 = vunpack.c.l.b16 %v5168
    %v5257 = vunpack.c.h.b16 %v5168
    %v5258 = vunpack.c.l.b16 %v5169
    %v5259 = vunpack.c.h.b16 %v5169
    %v5260 = vunpack.c.l.b16 %v5170
    %v5261 = vunpack.c.h.b16 %v5170
    %v5262 = vunpack.c.l.b16 %v5171
    %v5263 = vunpack.c.h.b16 %v5171
    %v5264 = vunpack.c.l.b16 %v5172
    %v5265 = vunpack.c.h.b16 %v5172
    %v5266 = vunpack.c.l.b16 %v5173
    %v5267 = vunpack.c.h.b16 %v5173
    %v5268 = vunpack.c.l.b16 %v5174
    %v5269 = vunpack.c.h.b16 %v5174
    %v5270 = vunpack.c.l.b16 %v5175
    %v5271 = vunpack.c.h.b16 %v5175
    %v5272 = vpack.c.b16 %v5212, %v5208
    %v5273 = vpack.c.b16 %v5213, %v5209
    %v5274 = vpack.c.b16 %v5214, %v5210
    %v5275 = vpack.c.b16 %v5215, %v5211
    %v5276 = vpack.c.b16 %v5220, %v5216
    %v5277 = vpack.c.b16 %v5221, %v5217
    %v5278 = vpack.c.b16 %v5222, %v5218
    %v5279 = vpack.c.b16 %v5223, %v5219
    %v5280 = vpack.c.b16 %v5228, %v5224
    %v5281 = vpack.c.b16 %v5229, %v5225
    %v5282 = vpack.c.b16 %v5230, %v5226
    %v5283 = vpack.c.b16 %v5231, %v5227
    %v5284 = vpack.c.b16 %v5236, %v5232
    %v5285 = vpack.c.b16 %v5237, %v5233
    %v5286 = vpack.c.b16 %v5238, %v5234
    %v5287 = vpack.c.b16 %v5239, %v5235
    %v5288 = vpack.c.b16 %v5244, %v5240
    %v5289 = vpack.c.b16 %v5245, %v5241
    %v5290 = vpack.c.b16 %v5246, %v5242
    %v5291 = vpack.c.b16 %v5247, %v5243
    %v5292 = vpack.c.b16 %v5252, %v5248
    %v5293 = vpack.c.b16 %v5253, %v5249
    %v5294 = vpack.c.b16 %v5254, %v5250
    %v5295 = vpack.c.b16 %v5255, %v5251
    %v5296 = vpack.c.b16 %v5260, %v5256
    %v5297 = vpack.c.b16 %v5261, %v5257
    %v5298 = vpack.c.b16 %v5262, %v5258
    %v5299 = vpack.c.b16 %v5263, %v5259
    %v5300 = vpack.c.b16 %v5268, %v5264
    %v5301 = vpack.c.b16 %v5269, %v5265
    %v5302 = vpack.c.b16 %v5270, %v5266
    %v5303 = vpack.c.b16 %v5271, %v5267
    %5336 = vmatprep.subr.bf16.mxu0 %v5273
    %5337 = vmatpush1.bf16.msra.mxu0 %v5272
    %5338 = vmatprep.subr.bf16.mxu0 %v5277
    %5339 = vmatpush1.bf16.msra.mxu0 %v5276
    %5340 = vmatprep.subr.bf16.mxu0 %v5281
    %5341 = vmatpush1.bf16.msra.mxu0 %v5280
    %5342 = vmatprep.subr.bf16.mxu0 %v5285
    %5343 = vmatpush1.bf16.msra.mxu0 %v5284
    %5344 = vmatprep.subr.bf16.mxu0 %v5289
    %5345 = vmatpush1.bf16.msra.mxu0 %v5288
    %5346 = vmatprep.subr.bf16.mxu0 %v5293
    %5347 = vmatpush1.bf16.msra.mxu0 %v5292
    %5348 = vmatprep.subr.bf16.mxu0 %v5297
    %5349 = vmatpush1.bf16.msra.mxu0 %v5296
    %5350 = vmatprep.subr.bf16.mxu0 %v5301
    %5351 = vmatpush1.bf16.msra.mxu0 %v5300
    %5352 = vmatprep.subr.bf16.mxu0 0
    %5353 = vmatpush1.bf16.msra.mxu0 0
    %5354 = vmatprep.subr.bf16.mxu0 0
    %5355 = vmatpush1.bf16.msra.mxu0 0
    %5356 = vmatprep.subr.bf16.mxu0 0
    %5357 = vmatpush1.bf16.msra.mxu0 0
    %5358 = vmatprep.subr.bf16.mxu0 0
    %5359 = vmatpush1.bf16.msra.mxu0 0
    %5360 = vmatprep.subr.bf16.mxu0 0
    %5361 = vmatpush1.bf16.msra.mxu0 0
    %5362 = vmatprep.subr.bf16.mxu0 0
    %5363 = vmatpush1.bf16.msra.mxu0 0
    %5364 = vmatprep.subr.bf16.mxu0 0
    %5365 = vmatpush1.bf16.msra.mxu0 0
    %5366 = vmatprep.subr.bf16.mxu0 0
    %5367 = vmatpush1.bf16.msra.mxu0 0
    %5368 = vmatprep.mubr.bf16.mxu0 0
    %5369 = vmatmul.mubr.bf16.gmra.mrb[0].mxu0 %v4535
    %v5370 = vpop.f32.mrb[0].mxu0
    %v5371 = vadd.f32 0.0, %v5370
    %v5372 = vpop.f32.mrb[0].mxu0
    %v5373 = vadd.f32 0.0, %v5372
    %v5374 = vpop.f32.mrb[0].mxu0
    %v5375 = vpop.f32.mrb[0].mxu0
    %5376 = vdwg.mxu0
    %5377 = vmatprep.subr.bf16.mxu0 %v5275
    %5378 = vmatpush1.bf16.msra.mxu0 %v5274
    %5379 = vmatprep.subr.bf16.mxu0 %v5279
    %5380 = vmatpush1.bf16.msra.mxu0 %v5278
    %5381 = vmatprep.subr.bf16.mxu0 %v5283
    %5382 = vmatpush1.bf16.msra.mxu0 %v5282
    %5383 = vmatprep.subr.bf16.mxu0 %v5287
    %5384 = vmatpush1.bf16.msra.mxu0 %v5286
    %5385 = vmatprep.subr.bf16.mxu0 %v5291
    %5386 = vmatpush1.bf16.msra.mxu0 %v5290
    %5387 = vmatprep.subr.bf16.mxu0 %v5295
    %5388 = vmatpush1.bf16.msra.mxu0 %v5294
    %5389 = vmatprep.subr.bf16.mxu0 %v5299
    %5390 = vmatpush1.bf16.msra.mxu0 %v5298
    %5391 = vmatprep.subr.bf16.mxu0 %v5303
    %5392 = vmatpush1.bf16.msra.mxu0 %v5302
    %5393 = vmatprep.subr.bf16.mxu0 0
    %5394 = vmatpush1.bf16.msra.mxu0 0
    %5395 = vmatprep.subr.bf16.mxu0 0
    %5396 = vmatpush1.bf16.msra.mxu0 0
    %5397 = vmatprep.subr.bf16.mxu0 0
    %5398 = vmatpush1.bf16.msra.mxu0 0
    %5399 = vmatprep.subr.bf16.mxu0 0
    %5400 = vmatpush1.bf16.msra.mxu0 0
    %5401 = vmatprep.subr.bf16.mxu0 0
    %5402 = vmatpush1.bf16.msra.mxu0 0
    %5403 = vmatprep.subr.bf16.mxu0 0
    %5404 = vmatpush1.bf16.msra.mxu0 0
    %5405 = vmatprep.subr.bf16.mxu0 0
    %5406 = vmatpush1.bf16.msra.mxu0 0
    %5407 = vmatprep.subr.bf16.mxu0 0
    %5408 = vmatpush1.bf16.msra.mxu0 0
    %5409 = vmatprep.mubr.bf16.mxu0 0
    %5410 = vmatmul.mubr.bf16.gmra.mrb[0].mxu0 %v4535
    %v5411 = vpop.f32.mrb[0].mxu0
    %v5412 = vadd.f32 0.0, %v5411
    %v5413 = vpop.f32.mrb[0].mxu0
    %v5414 = vadd.f32 0.0, %v5413
    %v5415 = vpop.f32.mrb[0].mxu0
    %v5416 = vpop.f32.mrb[0].mxu0
    %5417 = vdwg.mxu0
    %v5418 = vadd.f32 %v5140, %v5371
    %v5419 = vadd.f32 %v5141, %v5373
    %v5420 = vadd.f32 %v5142, %v5412
    %v5421 = vadd.f32 %v5143, %v5414
    %v5422 = vxor.u32 %v5418, 2147483648
    %v5423 = vxor.u32 %v5419, 2147483648
    %v5424 = vxor.u32 %v5420, 2147483648
    %v5425 = vmul.f32 %v5422, 1.442695
    %v5426 = vpow.pop %v5425
    %v5427 = vmul.f32 %v5423, 1.442695
    %v5428 = vpow.pop %v5427
    %v5429 = vmul.f32 %v5424, 1.442695
    %v5430 = vpow.pop %v5429
    %v5431 = vadd.f32 %v5426, 1.0
    %v5432 = vadd.f32 %v5428, 1.0
    %v5433 = vadd.f32 %v5430, 1.0
    %v5434 = vrcp.pop %v5431
    %v5435 = vmul.f32 1.0, %v5434
    %v5436 = vrcp.pop %v5432
    %v5437 = vmul.f32 1.0, %v5436
    %v5438 = vrcp.pop %v5433
    %v5439 = vmul.f32 1.0, %v5438
    %v5440 = vtanh.pop %v5421
    %v5441 = vmul.f32 %v5437, %v4532
    %v5442 = vmul.f32 %v5435, %v5440
    %v5443 = vadd.f32 %v5441, %v5442
    %v5444 = vtanh.pop %v5443
    %v5445 = vmul.f32 %v5439, %v5444
    %v5446 = vpack.c.bf16 %v5445, %v5445
    %v5447 = vld [vmem:[#allocation13] sm:$0xf]
    %v5448 = vld [vmem:[#allocation10] sm:$0xff]
    %v5449 = vld [vmem:[#allocation10 + $0x8] sm:$0xff]
    %v5450 = vld [vmem:[#allocation10 + $0x10] sm:$0xff]
    %v5451 = vld [vmem:[#allocation10 + $0x18] sm:$0xff]
    %v5452 = vld [vmem:[#allocation10 + $0x20] sm:$0xff]
    %v5453 = vld [vmem:[#allocation10 + $0x28] sm:$0xff]
    %v5454 = vld [vmem:[#allocation10 + $0x30] sm:$0xff]
    %v5455 = vld [vmem:[#allocation10 + $0x38] sm:$0xff]
    %v5456 = vld [vmem:[#allocation10 + $0x40] sm:$0xff]
    %v5457 = vld [vmem:[#allocation10 + $0x48] sm:$0xff]
    %v5458 = vld [vmem:[#allocation10 + $0x50] sm:$0xff]
    %v5459 = vld [vmem:[#allocation10 + $0x58] sm:$0xff]
    %v5460 = vld [vmem:[#allocation10 + $0x60] sm:$0xff]
    %v5461 = vld [vmem:[#allocation10 + $0x68] sm:$0xff]
    %v5462 = vld [vmem:[#allocation10 + $0x70] sm:$0xff]
    %v5463 = vld [vmem:[#allocation10 + $0x78] sm:$0xff]
    %v5464 = vld [vmem:[#allocation10 + $0x80] sm:$0xff]
    %v5465 = vld [vmem:[#allocation10 + $0x88] sm:$0xff]
    %v5466 = vld [vmem:[#allocation10 + $0x90] sm:$0xff]
    %v5467 = vld [vmem:[#allocation10 + $0x98] sm:$0xff]
    %v5468 = vld [vmem:[#allocation10 + $0xa0] sm:$0xff]
    %v5469 = vld [vmem:[#allocation10 + $0xa8] sm:$0xff]
    %v5470 = vld [vmem:[#allocation10 + $0xb0] sm:$0xff]
    %v5471 = vld [vmem:[#allocation10 + $0xb8] sm:$0xff]
    %v5472 = vld [vmem:[#allocation10 + $0xc0] sm:$0xff]
    %v5473 = vld [vmem:[#allocation10 + $0xc8] sm:$0xff]
    %v5474 = vld [vmem:[#allocation10 + $0xd0] sm:$0xff]
    %v5475 = vld [vmem:[#allocation10 + $0xd8] sm:$0xff]
    %v5476 = vld [vmem:[#allocation10 + $0xe0] sm:$0xff]
    %v5477 = vld [vmem:[#allocation10 + $0xe8] sm:$0xff]
    %v5478 = vld [vmem:[#allocation10 + $0xf0] sm:$0xff]
    %v5479 = vld [vmem:[#allocation10 + $0xf8] sm:$0xff]
    %v5512 = vunpack.c.l.b16 %v5448
    %v5513 = vunpack.c.h.b16 %v5448
    %v5514 = vunpack.c.l.b16 %v5449
    %v5515 = vunpack.c.h.b16 %v5449
    %v5516 = vunpack.c.l.b16 %v5450
    %v5517 = vunpack.c.h.b16 %v5450
    %v5518 = vunpack.c.l.b16 %v5451
    %v5519 = vunpack.c.h.b16 %v5451
    %v5520 = vunpack.c.l.b16 %v5452
    %v5521 = vunpack.c.h.b16 %v5452
    %v5522 = vunpack.c.l.b16 %v5453
    %v5523 = vunpack.c.h.b16 %v5453
    %v5524 = vunpack.c.l.b16 %v5454
    %v5525 = vunpack.c.h.b16 %v5454
    %v5526 = vunpack.c.l.b16 %v5455
    %v5527 = vunpack.c.h.b16 %v5455
    %v5528 = vunpack.c.l.b16 %v5456
    %v5529 = vunpack.c.h.b16 %v5456
    %v5530 = vunpack.c.l.b16 %v5457
    %v5531 = vunpack.c.h.b16 %v5457
    %v5532 = vunpack.c.l.b16 %v5458
    %v5533 = vunpack.c.h.b16 %v5458
    %v5534 = vunpack.c.l.b16 %v5459
    %v5535 = vunpack.c.h.b16 %v5459
    %v5536 = vunpack.c.l.b16 %v5460
    %v5537 = vunpack.c.h.b16 %v5460
    %v5538 = vunpack.c.l.b16 %v5461
    %v5539 = vunpack.c.h.b16 %v5461
    %v5540 = vunpack.c.l.b16 %v5462
    %v5541 = vunpack.c.h.b16 %v5462
    %v5542 = vunpack.c.l.b16 %v5463
    %v5543 = vunpack.c.h.b16 %v5463
    %v5544 = vunpack.c.l.b16 %v5464
    %v5545 = vunpack.c.h.b16 %v5464
    %v5546 = vunpack.c.l.b16 %v5465
    %v5547 = vunpack.c.h.b16 %v5465
    %v5548 = vunpack.c.l.b16 %v5466
    %v5549 = vunpack.c.h.b16 %v5466
    %v5550 = vunpack.c.l.b16 %v5467
    %v5551 = vunpack.c.h.b16 %v5467
    %v5552 = vunpack.c.l.b16 %v5468
    %v5553 = vunpack.c.h.b16 %v5468
    %v5554 = vunpack.c.l.b16 %v5469
    %v5555 = vunpack.c.h.b16 %v5469
    %v5556 = vunpack.c.l.b16 %v5470
    %v5557 = vunpack.c.h.b16 %v5470
    %v5558 = vunpack.c.l.b16 %v5471
    %v5559 = vunpack.c.h.b16 %v5471
    %v5560 = vunpack.c.l.b16 %v5472
    %v5561 = vunpack.c.h.b16 %v5472
    %v5562 = vunpack.c.l.b16 %v5473
    %v5563 = vunpack.c.h.b16 %v5473
    %v5564 = vunpack.c.l.b16 %v5474
    %v5565 = vunpack.c.h.b16 %v5474
    %v5566 = vunpack.c.l.b16 %v5475
    %v5567 = vunpack.c.h.b16 %v5475
    %v5568 = vunpack.c.l.b16 %v5476
    %v5569 = vunpack.c.h.b16 %v5476
    %v5570 = vunpack.c.l.b16 %v5477
    %v5571 = vunpack.c.h.b16 %v5477
    %v5572 = vunpack.c.l.b16 %v5478
    %v5573 = vunpack.c.h.b16 %v5478
    %v5574 = vunpack.c.l.b16 %v5479
    %v5575 = vunpack.c.h.b16 %v5479
    %v5576 = vpack.c.b16 %v5516, %v5512
    %v5577 = vpack.c.b16 %v5517, %v5513
    %v5578 = vpack.c.b16 %v5518, %v5514
    %v5579 = vpack.c.b16 %v5519, %v5515
    %v5580 = vpack.c.b16 %v5524, %v5520
    %v5581 = vpack.c.b16 %v5525, %v5521
    %v5582 = vpack.c.b16 %v5526, %v5522
    %v5583 = vpack.c.b16 %v5527, %v5523
    %v5584 = vpack.c.b16 %v5532, %v5528
    %v5585 = vpack.c.b16 %v5533, %v5529
    %v5586 = vpack.c.b16 %v5534, %v5530
    %v5587 = vpack.c.b16 %v5535, %v5531
    %v5588 = vpack.c.b16 %v5540, %v5536
    %v5589 = vpack.c.b16 %v5541, %v5537
    %v5590 = vpack.c.b16 %v5542, %v5538
    %v5591 = vpack.c.b16 %v5543, %v5539
    %v5592 = vpack.c.b16 %v5548, %v5544
    %v5593 = vpack.c.b16 %v5549, %v5545
    %v5594 = vpack.c.b16 %v5550, %v5546
    %v5595 = vpack.c.b16 %v5551, %v5547
    %v5596 = vpack.c.b16 %v5556, %v5552
    %v5597 = vpack.c.b16 %v5557, %v5553
    %v5598 = vpack.c.b16 %v5558, %v5554
    %v5599 = vpack.c.b16 %v5559, %v5555
    %v5600 = vpack.c.b16 %v5564, %v5560
    %v5601 = vpack.c.b16 %v5565, %v5561
    %v5602 = vpack.c.b16 %v5566, %v5562
    %v5603 = vpack.c.b16 %v5567, %v5563
    %v5604 = vpack.c.b16 %v5572, %v5568
    %v5605 = vpack.c.b16 %v5573, %v5569
    %v5606 = vpack.c.b16 %v5574, %v5570
    %v5607 = vpack.c.b16 %v5575, %v5571
    %5640 = vmatprep.subr.bf16.mxu0 %v5577
    %5641 = vmatpush1.bf16.msra.mxu0 %v5576
    %5642 = vmatprep.subr.bf16.mxu0 %v5581
    %5643 = vmatpush1.bf16.msra.mxu0 %v5580
    %5644 = vmatprep.subr.bf16.mxu0 %v5585
    %5645 = vmatpush1.bf16.msra.mxu0 %v5584
    %5646 = vmatprep.subr.bf16.mxu0 %v5589
    %5647 = vmatpush1.bf16.msra.mxu0 %v5588
    %5648 = vmatprep.subr.bf16.mxu0 %v5593
    %5649 = vmatpush1.bf16.msra.mxu0 %v5592
    %5650 = vmatprep.subr.bf16.mxu0 %v5597
    %5651 = vmatpush1.bf16.msra.mxu0 %v5596
    %5652 = vmatprep.subr.bf16.mxu0 %v5601
    %5653 = vmatpush1.bf16.msra.mxu0 %v5600
    %5654 = vmatprep.subr.bf16.mxu0 %v5605
    %5655 = vmatpush1.bf16.msra.mxu0 %v5604
    %5656 = vmatprep.subr.bf16.mxu0 0
    %5657 = vmatpush1.bf16.msra.mxu0 0
    %5658 = vmatprep.subr.bf16.mxu0 0
    %5659 = vmatpush1.bf16.msra.mxu0 0
    %5660 = vmatprep.subr.bf16.mxu0 0
    %5661 = vmatpush1.bf16.msra.mxu0 0
    %5662 = vmatprep.subr.bf16.mxu0 0
    %5663 = vmatpush1.bf16.msra.mxu0 0
    %5664 = vmatprep.subr.bf16.mxu0 0
    %5665 = vmatpush1.bf16.msra.mxu0 0
    %5666 = vmatprep.subr.bf16.mxu0 0
    %5667 = vmatpush1.bf16.msra.mxu0 0
    %5668 = vmatprep.subr.bf16.mxu0 0
    %5669 = vmatpush1.bf16.msra.mxu0 0
    %5670 = vmatprep.subr.bf16.mxu0 0
    %5671 = vmatpush1.bf16.msra.mxu0 0
    %5672 = vmatprep.mubr.bf16.mxu0 0
    %5673 = vmatmul.mubr.bf16.gmra.mrb[0].mxu0 %v5446
    %v5674 = vpop.f32.mrb[0].mxu0
    %v5675 = vadd.f32 0.0, %v5674
    %v5676 = vpop.f32.mrb[0].mxu0
    %v5677 = vadd.f32 0.0, %v5676
    %v5678 = vpop.f32.mrb[0].mxu0
    %v5679 = vpop.f32.mrb[0].mxu0
    %5680 = vdwg.mxu0
    %5681 = vmatprep.subr.bf16.mxu0 %v5579
    %5682 = vmatpush1.bf16.msra.mxu0 %v5578
    %5683 = vmatprep.subr.bf16.mxu0 %v5583
    %5684 = vmatpush1.bf16.msra.mxu0 %v5582
    %5685 = vmatprep.subr.bf16.mxu0 %v5587
    %5686 = vmatpush1.bf16.msra.mxu0 %v5586
    %5687 = vmatprep.subr.bf16.mxu0 %v5591
    %5688 = vmatpush1.bf16.msra.mxu0 %v5590
    %5689 = vmatprep.subr.bf16.mxu0 %v5595
    %5690 = vmatpush1.bf16.msra.mxu0 %v5594
    %5691 = vmatprep.subr.bf16.mxu0 %v5599
    %5692 = vmatpush1.bf16.msra.mxu0 %v5598
    %5693 = vmatprep.subr.bf16.mxu0 %v5603
    %5694 = vmatpush1.bf16.msra.mxu0 %v5602
    %5695 = vmatprep.subr.bf16.mxu0 %v5607
    %5696 = vmatpush1.bf16.msra.mxu0 %v5606
    %5697 = vmatprep.subr.bf16.mxu0 0
    %5698 = vmatpush1.bf16.msra.mxu0 0
    %5699 = vmatprep.subr.bf16.mxu0 0
    %5700 = vmatpush1.bf16.msra.mxu0 0
    %5701 = vmatprep.subr.bf16.mxu0 0
    %5702 = vmatpush1.bf16.msra.mxu0 0
    %5703 = vmatprep.subr.bf16.mxu0 0
    %5704 = vmatpush1.bf16.msra.mxu0 0
    %5705 = vmatprep.subr.bf16.mxu0 0
    %5706 = vmatpush1.bf16.msra.mxu0 0
    %5707 = vmatprep.subr.bf16.mxu0 0
    %5708 = vmatpush1.bf16.msra.mxu0 0
    %5709 = vmatprep.subr.bf16.mxu0 0
    %5710 = vmatpush1.bf16.msra.mxu0 0
    %5711 = vmatprep.subr.bf16.mxu0 0
    %5712 = vmatpush1.bf16.msra.mxu0 0
    %5713 = vmatprep.mubr.bf16.mxu0 0
    %5714 = vmatmul.mubr.bf16.gmra.mrb[0].mxu0 %v5446
    %v5715 = vpop.f32.mrb[0].mxu0
    %v5716 = vadd.f32 0.0, %v5715
    %v5717 = vpop.f32.mrb[0].mxu0
    %v5718 = vadd.f32 0.0, %v5717
    %v5719 = vpop.f32.mrb[0].mxu0
    %v5720 = vpop.f32.mrb[0].mxu0
    %5721 = vdwg.mxu0
    %v5723 = vlaneseq
    %v5724 = vshrl.u32 %v5723, 7
    %v5725 = vsub.s32 0, %v5724
    %v5726 = vrot.slane %v5447, %v5725
    %v5727 = vlaneseq
    %v5728 = vshrl.u32 %v5727, 7
    %v5729 = vsub.s32 1, %v5728
    %v5730 = vrot.slane %v5447, %v5729
    %v5731 = vlaneseq
    %v5732 = vshrl.u32 %v5731, 7
    %v5733 = vsub.s32 2, %v5732
    %v5734 = vrot.slane %v5447, %v5733
    %v5735 = vlaneseq
    %v5736 = vshrl.u32 %v5735, 7
    %v5737 = vsub.s32 3, %v5736
    %v5738 = vrot.slane %v5447, %v5737
    %v5743 = vadd.f32 %v5726, %v5675
    %v5744 = vadd.f32 %v5730, %v5677
    %v5745 = vadd.f32 %v5734, %v5716
    %v5746 = vadd.f32 %v5738, %v5718
    %v5747 = vld [vmem:[#allocation12] sm:$0xff]
    %v5748 = vld [vmem:[#allocation12 + $0x8] sm:$0xff]
    %v5749 = vld [vmem:[#allocation12 + $0x10] sm:$0xff]
    %v5750 = vld [vmem:[#allocation12 + $0x18] sm:$0xff]
    %v5751 = vld [vmem:[#allocation12 + $0x20] sm:$0xff]
    %v5752 = vld [vmem:[#allocation12 + $0x28] sm:$0xff]
    %v5753 = vld [vmem:[#allocation12 + $0x30] sm:$0xff]
    %v5754 = vld [vmem:[#allocation12 + $0x38] sm:$0xff]
    %v5755 = vld [vmem:[#allocation12 + $0x40] sm:$0xff]
    %v5756 = vld [vmem:[#allocation12 + $0x48] sm:$0xff]
    %v5757 = vld [vmem:[#allocation12 + $0x50] sm:$0xff]
    %v5758 = vld [vmem:[#allocation12 + $0x58] sm:$0xff]
    %v5759 = vld [vmem:[#allocation12 + $0x60] sm:$0xff]
    %v5760 = vld [vmem:[#allocation12 + $0x68] sm:$0xff]
    %v5761 = vld [vmem:[#allocation12 + $0x70] sm:$0xff]
    %v5762 = vld [vmem:[#allocation12 + $0x78] sm:$0xff]
    %v5763 = vld [vmem:[#allocation12 + $0x80] sm:$0xff]
    %v5764 = vld [vmem:[#allocation12 + $0x88] sm:$0xff]
    %v5765 = vld [vmem:[#allocation12 + $0x90] sm:$0xff]
    %v5766 = vld [vmem:[#allocation12 + $0x98] sm:$0xff]
    %v5767 = vld [vmem:[#allocation12 + $0xa0] sm:$0xff]
    %v5768 = vld [vmem:[#allocation12 + $0xa8] sm:$0xff]
    %v5769 = vld [vmem:[#allocation12 + $0xb0] sm:$0xff]
    %v5770 = vld [vmem:[#allocation12 + $0xb8] sm:$0xff]
    %v5771 = vld [vmem:[#allocation12 + $0xc0] sm:$0xff]
    %v5772 = vld [vmem:[#allocation12 + $0xc8] sm:$0xff]
    %v5773 = vld [vmem:[#allocation12 + $0xd0] sm:$0xff]
    %v5774 = vld [vmem:[#allocation12 + $0xd8] sm:$0xff]
    %v5775 = vld [vmem:[#allocation12 + $0xe0] sm:$0xff]
    %v5776 = vld [vmem:[#allocation12 + $0xe8] sm:$0xff]
    %v5777 = vld [vmem:[#allocation12 + $0xf0] sm:$0xff]
    %v5778 = vld [vmem:[#allocation12 + $0xf8] sm:$0xff]
    %v5811 = vunpack.c.l.b16 %v5747
    %v5812 = vunpack.c.h.b16 %v5747
    %v5813 = vunpack.c.l.b16 %v5748
    %v5814 = vunpack.c.h.b16 %v5748
    %v5815 = vunpack.c.l.b16 %v5749
    %v5816 = vunpack.c.h.b16 %v5749
    %v5817 = vunpack.c.l.b16 %v5750
    %v5818 = vunpack.c.h.b16 %v5750
    %v5819 = vunpack.c.l.b16 %v5751
    %v5820 = vunpack.c.h.b16 %v5751
    %v5821 = vunpack.c.l.b16 %v5752
    %v5822 = vunpack.c.h.b16 %v5752
    %v5823 = vunpack.c.l.b16 %v5753
    %v5824 = vunpack.c.h.b16 %v5753
    %v5825 = vunpack.c.l.b16 %v5754
    %v5826 = vunpack.c.h.b16 %v5754
    %v5827 = vunpack.c.l.b16 %v5755
    %v5828 = vunpack.c.h.b16 %v5755
    %v5829 = vunpack.c.l.b16 %v5756
    %v5830 = vunpack.c.h.b16 %v5756
    %v5831 = vunpack.c.l.b16 %v5757
    %v5832 = vunpack.c.h.b16 %v5757
    %v5833 = vunpack.c.l.b16 %v5758
    %v5834 = vunpack.c.h.b16 %v5758
    %v5835 = vunpack.c.l.b16 %v5759
    %v5836 = vunpack.c.h.b16 %v5759
    %v5837 = vunpack.c.l.b16 %v5760
    %v5838 = vunpack.c.h.b16 %v5760
    %v5839 = vunpack.c.l.b16 %v5761
    %v5840 = vunpack.c.h.b16 %v5761
    %v5841 = vunpack.c.l.b16 %v5762
    %v5842 = vunpack.c.h.b16 %v5762
    %v5843 = vunpack.c.l.b16 %v5763
    %v5844 = vunpack.c.h.b16 %v5763
    %v5845 = vunpack.c.l.b16 %v5764
    %v5846 = vunpack.c.h.b16 %v5764
    %v5847 = vunpack.c.l.b16 %v5765
    %v5848 = vunpack.c.h.b16 %v5765
    %v5849 = vunpack.c.l.b16 %v5766
    %v5850 = vunpack.c.h.b16 %v5766
    %v5851 = vunpack.c.l.b16 %v5767
    %v5852 = vunpack.c.h.b16 %v5767
    %v5853 = vunpack.c.l.b16 %v5768
    %v5854 = vunpack.c.h.b16 %v5768
    %v5855 = vunpack.c.l.b16 %v5769
    %v5856 = vunpack.c.h.b16 %v5769
    %v5857 = vunpack.c.l.b16 %v5770
    %v5858 = vunpack.c.h.b16 %v5770
    %v5859 = vunpack.c.l.b16 %v5771
    %v5860 = vunpack.c.h.b16 %v5771
    %v5861 = vunpack.c.l.b16 %v5772
    %v5862 = vunpack.c.h.b16 %v5772
    %v5863 = vunpack.c.l.b16 %v5773
    %v5864 = vunpack.c.h.b16 %v5773
    %v5865 = vunpack.c.l.b16 %v5774
    %v5866 = vunpack.c.h.b16 %v5774
    %v5867 = vunpack.c.l.b16 %v5775
    %v5868 = vunpack.c.h.b16 %v5775
    %v5869 = vunpack.c.l.b16 %v5776
    %v5870 = vunpack.c.h.b16 %v5776
    %v5871 = vunpack.c.l.b16 %v5777
    %v5872 = vunpack.c.h.b16 %v5777
    %v5873 = vunpack.c.l.b16 %v5778
    %v5874 = vunpack.c.h.b16 %v5778
    %v5875 = vpack.c.b16 %v5815, %v5811
    %v5876 = vpack.c.b16 %v5816, %v5812
    %v5877 = vpack.c.b16 %v5817, %v5813
    %v5878 = vpack.c.b16 %v5818, %v5814
    %v5879 = vpack.c.b16 %v5823, %v5819
    %v5880 = vpack.c.b16 %v5824, %v5820
    %v5881 = vpack.c.b16 %v5825, %v5821
    %v5882 = vpack.c.b16 %v5826, %v5822
    %v5883 = vpack.c.b16 %v5831, %v5827
    %v5884 = vpack.c.b16 %v5832, %v5828
    %v5885 = vpack.c.b16 %v5833, %v5829
    %v5886 = vpack.c.b16 %v5834, %v5830
    %v5887 = vpack.c.b16 %v5839, %v5835
    %v5888 = vpack.c.b16 %v5840, %v5836
    %v5889 = vpack.c.b16 %v5841, %v5837
    %v5890 = vpack.c.b16 %v5842, %v5838
    %v5891 = vpack.c.b16 %v5847, %v5843
    %v5892 = vpack.c.b16 %v5848, %v5844
    %v5893 = vpack.c.b16 %v5849, %v5845
    %v5894 = vpack.c.b16 %v5850, %v5846
    %v5895 = vpack.c.b16 %v5855, %v5851
    %v5896 = vpack.c.b16 %v5856, %v5852
    %v5897 = vpack.c.b16 %v5857, %v5853
    %v5898 = vpack.c.b16 %v5858, %v5854
    %v5899 = vpack.c.b16 %v5863, %v5859
    %v5900 = vpack.c.b16 %v5864, %v5860
    %v5901 = vpack.c.b16 %v5865, %v5861
    %v5902 = vpack.c.b16 %v5866, %v5862
    %v5903 = vpack.c.b16 %v5871, %v5867
    %v5904 = vpack.c.b16 %v5872, %v5868
    %v5905 = vpack.c.b16 %v5873, %v5869
    %v5906 = vpack.c.b16 %v5874, %v5870
    %5939 = vmatprep.subr.bf16.mxu0 %v5876
    %5940 = vmatpush1.bf16.msra.mxu0 %v5875
    %5941 = vmatprep.subr.bf16.mxu0 %v5880
    %5942 = vmatpush1.bf16.msra.mxu0 %v5879
    %5943 = vmatprep.subr.bf16.mxu0 %v5884
    %5944 = vmatpush1.bf16.msra.mxu0 %v5883
    %5945 = vmatprep.subr.bf16.mxu0 %v5888
    %5946 = vmatpush1.bf16.msra.mxu0 %v5887
    %5947 = vmatprep.subr.bf16.mxu0 %v5892
    %5948 = vmatpush1.bf16.msra.mxu0 %v5891
    %5949 = vmatprep.subr.bf16.mxu0 %v5896
    %5950 = vmatpush1.bf16.msra.mxu0 %v5895
    %5951 = vmatprep.subr.bf16.mxu0 %v5900
    %5952 = vmatpush1.bf16.msra.mxu0 %v5899
    %5953 = vmatprep.subr.bf16.mxu0 %v5904
    %5954 = vmatpush1.bf16.msra.mxu0 %v5903
    %5955 = vmatprep.subr.bf16.mxu0 0
    %5956 = vmatpush1.bf16.msra.mxu0 0
    %5957 = vmatprep.subr.bf16.mxu0 0
    %5958 = vmatpush1.bf16.msra.mxu0 0
    %5959 = vmatprep.subr.bf16.mxu0 0
    %5960 = vmatpush1.bf16.msra.mxu0 0
    %5961 = vmatprep.subr.bf16.mxu0 0
    %5962 = vmatpush1.bf16.msra.mxu0 0
    %5963 = vmatprep.subr.bf16.mxu0 0
    %5964 = vmatpush1.bf16.msra.mxu0 0
    %5965 = vmatprep.subr.bf16.mxu0 0
    %5966 = vmatpush1.bf16.msra.mxu0 0
    %5967 = vmatprep.subr.bf16.mxu0 0
    %5968 = vmatpush1.bf16.msra.mxu0 0
    %5969 = vmatprep.subr.bf16.mxu0 0
    %5970 = vmatpush1.bf16.msra.mxu0 0
    %5971 = vmatprep.mubr.bf16.mxu0 0
    %5972 = vmatmul.mubr.bf16.gmra.mrb[0].mxu0 %v5138
    %v5973 = vpop.f32.mrb[0].mxu0
    %v5974 = vadd.f32 0.0, %v5973
    %v5975 = vpop.f32.mrb[0].mxu0
    %v5976 = vadd.f32 0.0, %v5975
    %v5977 = vpop.f32.mrb[0].mxu0
    %v5978 = vpop.f32.mrb[0].mxu0
    %5979 = vdwg.mxu0
    %5980 = vmatprep.subr.bf16.mxu0 %v5878
    %5981 = vmatpush1.bf16.msra.mxu0 %v5877
    %5982 = vmatprep.subr.bf16.mxu0 %v5882
    %5983 = vmatpush1.bf16.msra.mxu0 %v5881
    %5984 = vmatprep.subr.bf16.mxu0 %v5886
    %5985 = vmatpush1.bf16.msra.mxu0 %v5885
    %5986 = vmatprep.subr.bf16.mxu0 %v5890
    %5987 = vmatpush1.bf16.msra.mxu0 %v5889
    %5988 = vmatprep.subr.bf16.mxu0 %v5894
    %5989 = vmatpush1.bf16.msra.mxu0 %v5893
    %5990 = vmatprep.subr.bf16.mxu0 %v5898
    %5991 = vmatpush1.bf16.msra.mxu0 %v5897
    %5992 = vmatprep.subr.bf16.mxu0 %v5902
    %5993 = vmatpush1.bf16.msra.mxu0 %v5901
    %5994 = vmatprep.subr.bf16.mxu0 %v5906
    %5995 = vmatpush1.bf16.msra.mxu0 %v5905
    %5996 = vmatprep.subr.bf16.mxu0 0
    %5997 = vmatpush1.bf16.msra.mxu0 0
    %5998 = vmatprep.subr.bf16.mxu0 0
    %5999 = vmatpush1.bf16.msra.mxu0 0
    %6000 = vmatprep.subr.bf16.mxu0 0
    %6001 = vmatpush1.bf16.msra.mxu0 0
    %6002 = vmatprep.subr.bf16.mxu0 0
    %6003 = vmatpush1.bf16.msra.mxu0 0
    %6004 = vmatprep.subr.bf16.mxu0 0
    %6005 = vmatpush1.bf16.msra.mxu0 0
    %6006 = vmatprep.subr.bf16.mxu0 0
    %6007 = vmatpush1.bf16.msra.mxu0 0
    %6008 = vmatprep.subr.bf16.mxu0 0
    %6009 = vmatpush1.bf16.msra.mxu0 0
    %6010 = vmatprep.subr.bf16.mxu0 0
    %6011 = vmatpush1.bf16.msra.mxu0 0
    %6012 = vmatprep.mubr.bf16.mxu0 0
    %6013 = vmatmul.mubr.bf16.gmra.mrb[0].mxu0 %v5138
    %v6014 = vpop.f32.mrb[0].mxu0
    %v6015 = vadd.f32 0.0, %v6014
    %v6016 = vpop.f32.mrb[0].mxu0
    %v6017 = vadd.f32 0.0, %v6016
    %v6018 = vpop.f32.mrb[0].mxu0
    %v6019 = vpop.f32.mrb[0].mxu0
    %6020 = vdwg.mxu0
    %v6021 = vadd.f32 %v5743, %v5974
    %v6022 = vadd.f32 %v5744, %v5976
    %v6023 = vadd.f32 %v5745, %v6015
    %v6024 = vadd.f32 %v5746, %v6017
    %v6025 = vxor.u32 %v6021, 2147483648
    %v6026 = vxor.u32 %v6022, 2147483648
    %v6027 = vxor.u32 %v6023, 2147483648
    %v6028 = vmul.f32 %v6025, 1.442695
    %v6029 = vpow.pop %v6028
    %v6030 = vmul.f32 %v6026, 1.442695
    %v6031 = vpow.pop %v6030
    %v6032 = vmul.f32 %v6027, 1.442695
    %v6033 = vpow.pop %v6032
    %v6034 = vadd.f32 %v6029, 1.0
    %v6035 = vadd.f32 %v6031, 1.0
    %v6036 = vadd.f32 %v6033, 1.0
    %v6037 = vrcp.pop %v6034
    %v6038 = vmul.f32 1.0, %v6037
    %v6039 = vrcp.pop %v6035
    %v6040 = vmul.f32 1.0, %v6039
    %v6041 = vrcp.pop %v6036
    %v6042 = vmul.f32 1.0, %v6041
    %v6043 = vtanh.pop %v6024
    %v6044 = vmul.f32 %v6040, %v5135
    %v6045 = vmul.f32 %v6038, %v6043
    %v6046 = vadd.f32 %v6044, %v6045
    %v6047 = vtanh.pop %v6046
    %v6048 = vmul.f32 %v6042, %v6047
    %v6049 = vpack.c.bf16 %v6048, %v6048
    %6050 = vst [vmem:[#allocation3 + $0x28] sm:$0xff] %v6048
    %v6051 = vld [vmem:[#allocation2 + $0xc0] sm:$0xff]
    %v6052 = vld [vmem:[#allocation2 + $0xc8] sm:$0xff]
    %v6053 = vld [vmem:[#allocation2 + $0xd0] sm:$0xff]
    %v6054 = vld [vmem:[#allocation2 + $0xd8] sm:$0xff]
    %v6055 = vld [vmem:[#allocation7] sm:$0xff]
    %v6056 = vld [vmem:[#allocation7 + $0x8] sm:$0xff]
    %v6057 = vld [vmem:[#allocation7 + $0x10] sm:$0xff]
    %v6058 = vld [vmem:[#allocation7 + $0x18] sm:$0xff]
    %v6059 = vld [vmem:[#allocation7 + $0x20] sm:$0xff]
    %v6060 = vld [vmem:[#allocation7 + $0x28] sm:$0xff]
    %v6061 = vld [vmem:[#allocation7 + $0x30] sm:$0xff]
    %v6062 = vld [vmem:[#allocation7 + $0x38] sm:$0xff]
    %v6063 = vld [vmem:[#allocation7 + $0x40] sm:$0xff]
    %v6064 = vld [vmem:[#allocation7 + $0x48] sm:$0xff]
    %v6065 = vld [vmem:[#allocation7 + $0x50] sm:$0xff]
    %v6066 = vld [vmem:[#allocation7 + $0x58] sm:$0xff]
    %v6067 = vld [vmem:[#allocation7 + $0x60] sm:$0xff]
    %v6068 = vld [vmem:[#allocation7 + $0x68] sm:$0xff]
    %v6069 = vld [vmem:[#allocation7 + $0x70] sm:$0xff]
    %v6070 = vld [vmem:[#allocation7 + $0x78] sm:$0xff]
    %v6071 = vld [vmem:[#allocation7 + $0x80] sm:$0xff]
    %v6072 = vld [vmem:[#allocation7 + $0x88] sm:$0xff]
    %v6073 = vld [vmem:[#allocation7 + $0x90] sm:$0xff]
    %v6074 = vld [vmem:[#allocation7 + $0x98] sm:$0xff]
    %v6075 = vld [vmem:[#allocation7 + $0xa0] sm:$0xff]
    %v6076 = vld [vmem:[#allocation7 + $0xa8] sm:$0xff]
    %v6077 = vld [vmem:[#allocation7 + $0xb0] sm:$0xff]
    %v6078 = vld [vmem:[#allocation7 + $0xb8] sm:$0xff]
    %v6079 = vld [vmem:[#allocation7 + $0xc0] sm:$0xff]
    %v6080 = vld [vmem:[#allocation7 + $0xc8] sm:$0xff]
    %v6081 = vld [vmem:[#allocation7 + $0xd0] sm:$0xff]
    %v6082 = vld [vmem:[#allocation7 + $0xd8] sm:$0xff]
    %v6083 = vld [vmem:[#allocation7 + $0xe0] sm:$0xff]
    %v6084 = vld [vmem:[#allocation7 + $0xe8] sm:$0xff]
    %v6085 = vld [vmem:[#allocation7 + $0xf0] sm:$0xff]
    %v6086 = vld [vmem:[#allocation7 + $0xf8] sm:$0xff]
    %v6119 = vunpack.c.l.b16 %v6055
    %v6120 = vunpack.c.h.b16 %v6055
    %v6121 = vunpack.c.l.b16 %v6056
    %v6122 = vunpack.c.h.b16 %v6056
    %v6123 = vunpack.c.l.b16 %v6057
    %v6124 = vunpack.c.h.b16 %v6057
    %v6125 = vunpack.c.l.b16 %v6058
    %v6126 = vunpack.c.h.b16 %v6058
    %v6127 = vunpack.c.l.b16 %v6059
    %v6128 = vunpack.c.h.b16 %v6059
    %v6129 = vunpack.c.l.b16 %v6060
    %v6130 = vunpack.c.h.b16 %v6060
    %v6131 = vunpack.c.l.b16 %v6061
    %v6132 = vunpack.c.h.b16 %v6061
    %v6133 = vunpack.c.l.b16 %v6062
    %v6134 = vunpack.c.h.b16 %v6062
    %v6135 = vunpack.c.l.b16 %v6063
    %v6136 = vunpack.c.h.b16 %v6063
    %v6137 = vunpack.c.l.b16 %v6064
    %v6138 = vunpack.c.h.b16 %v6064
    %v6139 = vunpack.c.l.b16 %v6065
    %v6140 = vunpack.c.h.b16 %v6065
    %v6141 = vunpack.c.l.b16 %v6066
    %v6142 = vunpack.c.h.b16 %v6066
    %v6143 = vunpack.c.l.b16 %v6067
    %v6144 = vunpack.c.h.b16 %v6067
    %v6145 = vunpack.c.l.b16 %v6068
    %v6146 = vunpack.c.h.b16 %v6068
    %v6147 = vunpack.c.l.b16 %v6069
    %v6148 = vunpack.c.h.b16 %v6069
    %v6149 = vunpack.c.l.b16 %v6070
    %v6150 = vunpack.c.h.b16 %v6070
    %v6151 = vunpack.c.l.b16 %v6071
    %v6152 = vunpack.c.h.b16 %v6071
    %v6153 = vunpack.c.l.b16 %v6072
    %v6154 = vunpack.c.h.b16 %v6072
    %v6155 = vunpack.c.l.b16 %v6073
    %v6156 = vunpack.c.h.b16 %v6073
    %v6157 = vunpack.c.l.b16 %v6074
    %v6158 = vunpack.c.h.b16 %v6074
    %v6159 = vunpack.c.l.b16 %v6075
    %v6160 = vunpack.c.h.b16 %v6075
    %v6161 = vunpack.c.l.b16 %v6076
    %v6162 = vunpack.c.h.b16 %v6076
    %v6163 = vunpack.c.l.b16 %v6077
    %v6164 = vunpack.c.h.b16 %v6077
    %v6165 = vunpack.c.l.b16 %v6078
    %v6166 = vunpack.c.h.b16 %v6078
    %v6167 = vunpack.c.l.b16 %v6079
    %v6168 = vunpack.c.h.b16 %v6079
    %v6169 = vunpack.c.l.b16 %v6080
    %v6170 = vunpack.c.h.b16 %v6080
    %v6171 = vunpack.c.l.b16 %v6081
    %v6172 = vunpack.c.h.b16 %v6081
    %v6173 = vunpack.c.l.b16 %v6082
    %v6174 = vunpack.c.h.b16 %v6082
    %v6175 = vunpack.c.l.b16 %v6083
    %v6176 = vunpack.c.h.b16 %v6083
    %v6177 = vunpack.c.l.b16 %v6084
    %v6178 = vunpack.c.h.b16 %v6084
    %v6179 = vunpack.c.l.b16 %v6085
    %v6180 = vunpack.c.h.b16 %v6085
    %v6181 = vunpack.c.l.b16 %v6086
    %v6182 = vunpack.c.h.b16 %v6086
    %v6183 = vpack.c.b16 %v6123, %v6119
    %v6184 = vpack.c.b16 %v6124, %v6120
    %v6185 = vpack.c.b16 %v6125, %v6121
    %v6186 = vpack.c.b16 %v6126, %v6122
    %v6187 = vpack.c.b16 %v6131, %v6127
    %v6188 = vpack.c.b16 %v6132, %v6128
    %v6189 = vpack.c.b16 %v6133, %v6129
    %v6190 = vpack.c.b16 %v6134, %v6130
    %v6191 = vpack.c.b16 %v6139, %v6135
    %v6192 = vpack.c.b16 %v6140, %v6136
    %v6193 = vpack.c.b16 %v6141, %v6137
    %v6194 = vpack.c.b16 %v6142, %v6138
    %v6195 = vpack.c.b16 %v6147, %v6143
    %v6196 = vpack.c.b16 %v6148, %v6144
    %v6197 = vpack.c.b16 %v6149, %v6145
    %v6198 = vpack.c.b16 %v6150, %v6146
    %v6199 = vpack.c.b16 %v6155, %v6151
    %v6200 = vpack.c.b16 %v6156, %v6152
    %v6201 = vpack.c.b16 %v6157, %v6153
    %v6202 = vpack.c.b16 %v6158, %v6154
    %v6203 = vpack.c.b16 %v6163, %v6159
    %v6204 = vpack.c.b16 %v6164, %v6160
    %v6205 = vpack.c.b16 %v6165, %v6161
    %v6206 = vpack.c.b16 %v6166, %v6162
    %v6207 = vpack.c.b16 %v6171, %v6167
    %v6208 = vpack.c.b16 %v6172, %v6168
    %v6209 = vpack.c.b16 %v6173, %v6169
    %v6210 = vpack.c.b16 %v6174, %v6170
    %v6211 = vpack.c.b16 %v6179, %v6175
    %v6212 = vpack.c.b16 %v6180, %v6176
    %v6213 = vpack.c.b16 %v6181, %v6177
    %v6214 = vpack.c.b16 %v6182, %v6178
    %6247 = vmatprep.subr.bf16.mxu0 %v6184
    %6248 = vmatpush1.bf16.msra.mxu0 %v6183
    %6249 = vmatprep.subr.bf16.mxu0 %v6188
    %6250 = vmatpush1.bf16.msra.mxu0 %v6187
    %6251 = vmatprep.subr.bf16.mxu0 %v6192
    %6252 = vmatpush1.bf16.msra.mxu0 %v6191
    %6253 = vmatprep.subr.bf16.mxu0 %v6196
    %6254 = vmatpush1.bf16.msra.mxu0 %v6195
    %6255 = vmatprep.subr.bf16.mxu0 %v6200
    %6256 = vmatpush1.bf16.msra.mxu0 %v6199
    %6257 = vmatprep.subr.bf16.mxu0 %v6204
    %6258 = vmatpush1.bf16.msra.mxu0 %v6203
    %6259 = vmatprep.subr.bf16.mxu0 %v6208
    %6260 = vmatpush1.bf16.msra.mxu0 %v6207
    %6261 = vmatprep.subr.bf16.mxu0 %v6212
    %6262 = vmatpush1.bf16.msra.mxu0 %v6211
    %6263 = vmatprep.subr.bf16.mxu0 0
    %6264 = vmatpush1.bf16.msra.mxu0 0
    %6265 = vmatprep.subr.bf16.mxu0 0
    %6266 = vmatpush1.bf16.msra.mxu0 0
    %6267 = vmatprep.subr.bf16.mxu0 0
    %6268 = vmatpush1.bf16.msra.mxu0 0
    %6269 = vmatprep.subr.bf16.mxu0 0
    %6270 = vmatpush1.bf16.msra.mxu0 0
    %6271 = vmatprep.subr.bf16.mxu0 0
    %6272 = vmatpush1.bf16.msra.mxu0 0
    %6273 = vmatprep.subr.bf16.mxu0 0
    %6274 = vmatpush1.bf16.msra.mxu0 0
    %6275 = vmatprep.subr.bf16.mxu0 0
    %6276 = vmatpush1.bf16.msra.mxu0 0
    %6277 = vmatprep.subr.bf16.mxu0 0
    %6278 = vmatpush1.bf16.msra.mxu0 0
    %6279 = vmatprep.mubr.bf16.mxu0 0
    %6280 = vmatmul.mubr.bf16.gmra.mrb[0].mxu0 %v5446
    %v6281 = vpop.f32.mrb[0].mxu0
    %v6282 = vadd.f32 0.0, %v6281
    %v6283 = vpop.f32.mrb[0].mxu0
    %v6284 = vadd.f32 0.0, %v6283
    %v6285 = vpop.f32.mrb[0].mxu0
    %v6286 = vpop.f32.mrb[0].mxu0
    %6287 = vdwg.mxu0
    %6288 = vmatprep.subr.bf16.mxu0 %v6186
    %6289 = vmatpush1.bf16.msra.mxu0 %v6185
    %6290 = vmatprep.subr.bf16.mxu0 %v6190
    %6291 = vmatpush1.bf16.msra.mxu0 %v6189
    %6292 = vmatprep.subr.bf16.mxu0 %v6194
    %6293 = vmatpush1.bf16.msra.mxu0 %v6193
    %6294 = vmatprep.subr.bf16.mxu0 %v6198
    %6295 = vmatpush1.bf16.msra.mxu0 %v6197
    %6296 = vmatprep.subr.bf16.mxu0 %v6202
    %6297 = vmatpush1.bf16.msra.mxu0 %v6201
    %6298 = vmatprep.subr.bf16.mxu0 %v6206
    %6299 = vmatpush1.bf16.msra.mxu0 %v6205
    %6300 = vmatprep.subr.bf16.mxu0 %v6210
    %6301 = vmatpush1.bf16.msra.mxu0 %v6209
    %6302 = vmatprep.subr.bf16.mxu0 %v6214
    %6303 = vmatpush1.bf16.msra.mxu0 %v6213
    %6304 = vmatprep.subr.bf16.mxu0 0
    %6305 = vmatpush1.bf16.msra.mxu0 0
    %6306 = vmatprep.subr.bf16.mxu0 0
    %6307 = vmatpush1.bf16.msra.mxu0 0
    %6308 = vmatprep.subr.bf16.mxu0 0
    %6309 = vmatpush1.bf16.msra.mxu0 0
    %6310 = vmatprep.subr.bf16.mxu0 0
    %6311 = vmatpush1.bf16.msra.mxu0 0
    %6312 = vmatprep.subr.bf16.mxu0 0
    %6313 = vmatpush1.bf16.msra.mxu0 0
    %6314 = vmatprep.subr.bf16.mxu0 0
    %6315 = vmatpush1.bf16.msra.mxu0 0
    %6316 = vmatprep.subr.bf16.mxu0 0
    %6317 = vmatpush1.bf16.msra.mxu0 0
    %6318 = vmatprep.subr.bf16.mxu0 0
    %6319 = vmatpush1.bf16.msra.mxu0 0
    %6320 = vmatprep.mubr.bf16.mxu0 0
    %6321 = vmatmul.mubr.bf16.gmra.mrb[0].mxu0 %v5446
    %v6322 = vpop.f32.mrb[0].mxu0
    %v6323 = vadd.f32 0.0, %v6322
    %v6324 = vpop.f32.mrb[0].mxu0
    %v6325 = vadd.f32 0.0, %v6324
    %v6326 = vpop.f32.mrb[0].mxu0
    %v6327 = vpop.f32.mrb[0].mxu0
    %6328 = vdwg.mxu0
    %v6329 = vadd.f32 %v6051, %v6282
    %v6330 = vadd.f32 %v6052, %v6284
    %v6331 = vadd.f32 %v6053, %v6323
    %v6332 = vadd.f32 %v6054, %v6325
    %v6333 = vxor.u32 %v6329, 2147483648
    %v6334 = vxor.u32 %v6330, 2147483648
    %v6335 = vxor.u32 %v6331, 2147483648
    %v6336 = vmul.f32 %v6333, 1.442695
    %v6337 = vpow.pop %v6336
    %v6338 = vmul.f32 %v6334, 1.442695
    %v6339 = vpow.pop %v6338
    %v6340 = vmul.f32 %v6335, 1.442695
    %v6341 = vpow.pop %v6340
    %v6342 = vadd.f32 %v6337, 1.0
    %v6343 = vadd.f32 %v6339, 1.0
    %v6344 = vadd.f32 %v6341, 1.0
    %v6345 = vrcp.pop %v6342
    %v6346 = vmul.f32 1.0, %v6345
    %v6347 = vrcp.pop %v6343
    %v6348 = vmul.f32 1.0, %v6347
    %v6349 = vrcp.pop %v6344
    %v6350 = vmul.f32 1.0, %v6349
    %v6351 = vtanh.pop %v6332
    %v6352 = vmul.f32 %v6348, %v5443
    %v6353 = vmul.f32 %v6346, %v6351
    %v6354 = vadd.f32 %v6352, %v6353
    %v6355 = vtanh.pop %v6354
    %v6356 = vmul.f32 %v6350, %v6355
    %v6357 = vpack.c.bf16 %v6356, %v6356
    %v6358 = vld [vmem:[#allocation13] sm:$0xf]
    %v6359 = vld [vmem:[#allocation10] sm:$0xff]
    %v6360 = vld [vmem:[#allocation10 + $0x8] sm:$0xff]
    %v6361 = vld [vmem:[#allocation10 + $0x10] sm:$0xff]
    %v6362 = vld [vmem:[#allocation10 + $0x18] sm:$0xff]
    %v6363 = vld [vmem:[#allocation10 + $0x20] sm:$0xff]
    %v6364 = vld [vmem:[#allocation10 + $0x28] sm:$0xff]
    %v6365 = vld [vmem:[#allocation10 + $0x30] sm:$0xff]
    %v6366 = vld [vmem:[#allocation10 + $0x38] sm:$0xff]
    %v6367 = vld [vmem:[#allocation10 + $0x40] sm:$0xff]
    %v6368 = vld [vmem:[#allocation10 + $0x48] sm:$0xff]
    %v6369 = vld [vmem:[#allocation10 + $0x50] sm:$0xff]
    %v6370 = vld [vmem:[#allocation10 + $0x58] sm:$0xff]
    %v6371 = vld [vmem:[#allocation10 + $0x60] sm:$0xff]
    %v6372 = vld [vmem:[#allocation10 + $0x68] sm:$0xff]
    %v6373 = vld [vmem:[#allocation10 + $0x70] sm:$0xff]
    %v6374 = vld [vmem:[#allocation10 + $0x78] sm:$0xff]
    %v6375 = vld [vmem:[#allocation10 + $0x80] sm:$0xff]
    %v6376 = vld [vmem:[#allocation10 + $0x88] sm:$0xff]
    %v6377 = vld [vmem:[#allocation10 + $0x90] sm:$0xff]
    %v6378 = vld [vmem:[#allocation10 + $0x98] sm:$0xff]
    %v6379 = vld [vmem:[#allocation10 + $0xa0] sm:$0xff]
    %v6380 = vld [vmem:[#allocation10 + $0xa8] sm:$0xff]
    %v6381 = vld [vmem:[#allocation10 + $0xb0] sm:$0xff]
    %v6382 = vld [vmem:[#allocation10 + $0xb8] sm:$0xff]
    %v6383 = vld [vmem:[#allocation10 + $0xc0] sm:$0xff]
    %v6384 = vld [vmem:[#allocation10 + $0xc8] sm:$0xff]
    %v6385 = vld [vmem:[#allocation10 + $0xd0] sm:$0xff]
    %v6386 = vld [vmem:[#allocation10 + $0xd8] sm:$0xff]
    %v6387 = vld [vmem:[#allocation10 + $0xe0] sm:$0xff]
    %v6388 = vld [vmem:[#allocation10 + $0xe8] sm:$0xff]
    %v6389 = vld [vmem:[#allocation10 + $0xf0] sm:$0xff]
    %v6390 = vld [vmem:[#allocation10 + $0xf8] sm:$0xff]
    %v6423 = vunpack.c.l.b16 %v6359
    %v6424 = vunpack.c.h.b16 %v6359
    %v6425 = vunpack.c.l.b16 %v6360
    %v6426 = vunpack.c.h.b16 %v6360
    %v6427 = vunpack.c.l.b16 %v6361
    %v6428 = vunpack.c.h.b16 %v6361
    %v6429 = vunpack.c.l.b16 %v6362
    %v6430 = vunpack.c.h.b16 %v6362
    %v6431 = vunpack.c.l.b16 %v6363
    %v6432 = vunpack.c.h.b16 %v6363
    %v6433 = vunpack.c.l.b16 %v6364
    %v6434 = vunpack.c.h.b16 %v6364
    %v6435 = vunpack.c.l.b16 %v6365
    %v6436 = vunpack.c.h.b16 %v6365
    %v6437 = vunpack.c.l.b16 %v6366
    %v6438 = vunpack.c.h.b16 %v6366
    %v6439 = vunpack.c.l.b16 %v6367
    %v6440 = vunpack.c.h.b16 %v6367
    %v6441 = vunpack.c.l.b16 %v6368
    %v6442 = vunpack.c.h.b16 %v6368
    %v6443 = vunpack.c.l.b16 %v6369
    %v6444 = vunpack.c.h.b16 %v6369
    %v6445 = vunpack.c.l.b16 %v6370
    %v6446 = vunpack.c.h.b16 %v6370
    %v6447 = vunpack.c.l.b16 %v6371
    %v6448 = vunpack.c.h.b16 %v6371
    %v6449 = vunpack.c.l.b16 %v6372
    %v6450 = vunpack.c.h.b16 %v6372
    %v6451 = vunpack.c.l.b16 %v6373
    %v6452 = vunpack.c.h.b16 %v6373
    %v6453 = vunpack.c.l.b16 %v6374
    %v6454 = vunpack.c.h.b16 %v6374
    %v6455 = vunpack.c.l.b16 %v6375
    %v6456 = vunpack.c.h.b16 %v6375
    %v6457 = vunpack.c.l.b16 %v6376
    %v6458 = vunpack.c.h.b16 %v6376
    %v6459 = vunpack.c.l.b16 %v6377
    %v6460 = vunpack.c.h.b16 %v6377
    %v6461 = vunpack.c.l.b16 %v6378
    %v6462 = vunpack.c.h.b16 %v6378
    %v6463 = vunpack.c.l.b16 %v6379
    %v6464 = vunpack.c.h.b16 %v6379
    %v6465 = vunpack.c.l.b16 %v6380
    %v6466 = vunpack.c.h.b16 %v6380
    %v6467 = vunpack.c.l.b16 %v6381
    %v6468 = vunpack.c.h.b16 %v6381
    %v6469 = vunpack.c.l.b16 %v6382
    %v6470 = vunpack.c.h.b16 %v6382
    %v6471 = vunpack.c.l.b16 %v6383
    %v6472 = vunpack.c.h.b16 %v6383
    %v6473 = vunpack.c.l.b16 %v6384
    %v6474 = vunpack.c.h.b16 %v6384
    %v6475 = vunpack.c.l.b16 %v6385
    %v6476 = vunpack.c.h.b16 %v6385
    %v6477 = vunpack.c.l.b16 %v6386
    %v6478 = vunpack.c.h.b16 %v6386
    %v6479 = vunpack.c.l.b16 %v6387
    %v6480 = vunpack.c.h.b16 %v6387
    %v6481 = vunpack.c.l.b16 %v6388
    %v6482 = vunpack.c.h.b16 %v6388
    %v6483 = vunpack.c.l.b16 %v6389
    %v6484 = vunpack.c.h.b16 %v6389
    %v6485 = vunpack.c.l.b16 %v6390
    %v6486 = vunpack.c.h.b16 %v6390
    %v6487 = vpack.c.b16 %v6427, %v6423
    %v6488 = vpack.c.b16 %v6428, %v6424
    %v6489 = vpack.c.b16 %v6429, %v6425
    %v6490 = vpack.c.b16 %v6430, %v6426
    %v6491 = vpack.c.b16 %v6435, %v6431
    %v6492 = vpack.c.b16 %v6436, %v6432
    %v6493 = vpack.c.b16 %v6437, %v6433
    %v6494 = vpack.c.b16 %v6438, %v6434
    %v6495 = vpack.c.b16 %v6443, %v6439
    %v6496 = vpack.c.b16 %v6444, %v6440
    %v6497 = vpack.c.b16 %v6445, %v6441
    %v6498 = vpack.c.b16 %v6446, %v6442
    %v6499 = vpack.c.b16 %v6451, %v6447
    %v6500 = vpack.c.b16 %v6452, %v6448
    %v6501 = vpack.c.b16 %v6453, %v6449
    %v6502 = vpack.c.b16 %v6454, %v6450
    %v6503 = vpack.c.b16 %v6459, %v6455
    %v6504 = vpack.c.b16 %v6460, %v6456
    %v6505 = vpack.c.b16 %v6461, %v6457
    %v6506 = vpack.c.b16 %v6462, %v6458
    %v6507 = vpack.c.b16 %v6467, %v6463
    %v6508 = vpack.c.b16 %v6468, %v6464
    %v6509 = vpack.c.b16 %v6469, %v6465
    %v6510 = vpack.c.b16 %v6470, %v6466
    %v6511 = vpack.c.b16 %v6475, %v6471
    %v6512 = vpack.c.b16 %v6476, %v6472
    %v6513 = vpack.c.b16 %v6477, %v6473
    %v6514 = vpack.c.b16 %v6478, %v6474
    %v6515 = vpack.c.b16 %v6483, %v6479
    %v6516 = vpack.c.b16 %v6484, %v6480
    %v6517 = vpack.c.b16 %v6485, %v6481
    %v6518 = vpack.c.b16 %v6486, %v6482
    %6551 = vmatprep.subr.bf16.mxu0 %v6488
    %6552 = vmatpush1.bf16.msra.mxu0 %v6487
    %6553 = vmatprep.subr.bf16.mxu0 %v6492
    %6554 = vmatpush1.bf16.msra.mxu0 %v6491
    %6555 = vmatprep.subr.bf16.mxu0 %v6496
    %6556 = vmatpush1.bf16.msra.mxu0 %v6495
    %6557 = vmatprep.subr.bf16.mxu0 %v6500
    %6558 = vmatpush1.bf16.msra.mxu0 %v6499
    %6559 = vmatprep.subr.bf16.mxu0 %v6504
    %6560 = vmatpush1.bf16.msra.mxu0 %v6503
    %6561 = vmatprep.subr.bf16.mxu0 %v6508
    %6562 = vmatpush1.bf16.msra.mxu0 %v6507
    %6563 = vmatprep.subr.bf16.mxu0 %v6512
    %6564 = vmatpush1.bf16.msra.mxu0 %v6511
    %6565 = vmatprep.subr.bf16.mxu0 %v6516
    %6566 = vmatpush1.bf16.msra.mxu0 %v6515
    %6567 = vmatprep.subr.bf16.mxu0 0
    %6568 = vmatpush1.bf16.msra.mxu0 0
    %6569 = vmatprep.subr.bf16.mxu0 0
    %6570 = vmatpush1.bf16.msra.mxu0 0
    %6571 = vmatprep.subr.bf16.mxu0 0
    %6572 = vmatpush1.bf16.msra.mxu0 0
    %6573 = vmatprep.subr.bf16.mxu0 0
    %6574 = vmatpush1.bf16.msra.mxu0 0
    %6575 = vmatprep.subr.bf16.mxu0 0
    %6576 = vmatpush1.bf16.msra.mxu0 0
    %6577 = vmatprep.subr.bf16.mxu0 0
    %6578 = vmatpush1.bf16.msra.mxu0 0
    %6579 = vmatprep.subr.bf16.mxu0 0
    %6580 = vmatpush1.bf16.msra.mxu0 0
    %6581 = vmatprep.subr.bf16.mxu0 0
    %6582 = vmatpush1.bf16.msra.mxu0 0
    %6583 = vmatprep.mubr.bf16.mxu0 0
    %6584 = vmatmul.mubr.bf16.gmra.mrb[0].mxu0 %v6357
    %v6585 = vpop.f32.mrb[0].mxu0
    %v6586 = vadd.f32 0.0, %v6585
    %v6587 = vpop.f32.mrb[0].mxu0
    %v6588 = vadd.f32 0.0, %v6587
    %v6589 = vpop.f32.mrb[0].mxu0
    %v6590 = vpop.f32.mrb[0].mxu0
    %6591 = vdwg.mxu0
    %6592 = vmatprep.subr.bf16.mxu0 %v6490
    %6593 = vmatpush1.bf16.msra.mxu0 %v6489
    %6594 = vmatprep.subr.bf16.mxu0 %v6494
    %6595 = vmatpush1.bf16.msra.mxu0 %v6493
    %6596 = vmatprep.subr.bf16.mxu0 %v6498
    %6597 = vmatpush1.bf16.msra.mxu0 %v6497
    %6598 = vmatprep.subr.bf16.mxu0 %v6502
    %6599 = vmatpush1.bf16.msra.mxu0 %v6501
    %6600 = vmatprep.subr.bf16.mxu0 %v6506
    %6601 = vmatpush1.bf16.msra.mxu0 %v6505
    %6602 = vmatprep.subr.bf16.mxu0 %v6510
    %6603 = vmatpush1.bf16.msra.mxu0 %v6509
    %6604 = vmatprep.subr.bf16.mxu0 %v6514
    %6605 = vmatpush1.bf16.msra.mxu0 %v6513
    %6606 = vmatprep.subr.bf16.mxu0 %v6518
    %6607 = vmatpush1.bf16.msra.mxu0 %v6517
    %6608 = vmatprep.subr.bf16.mxu0 0
    %6609 = vmatpush1.bf16.msra.mxu0 0
    %6610 = vmatprep.subr.bf16.mxu0 0
    %6611 = vmatpush1.bf16.msra.mxu0 0
    %6612 = vmatprep.subr.bf16.mxu0 0
    %6613 = vmatpush1.bf16.msra.mxu0 0
    %6614 = vmatprep.subr.bf16.mxu0 0
    %6615 = vmatpush1.bf16.msra.mxu0 0
    %6616 = vmatprep.subr.bf16.mxu0 0
    %6617 = vmatpush1.bf16.msra.mxu0 0
    %6618 = vmatprep.subr.bf16.mxu0 0
    %6619 = vmatpush1.bf16.msra.mxu0 0
    %6620 = vmatprep.subr.bf16.mxu0 0
    %6621 = vmatpush1.bf16.msra.mxu0 0
    %6622 = vmatprep.subr.bf16.mxu0 0
    %6623 = vmatpush1.bf16.msra.mxu0 0
    %6624 = vmatprep.mubr.bf16.mxu0 0
    %6625 = vmatmul.mubr.bf16.gmra.mrb[0].mxu0 %v6357
    %v6626 = vpop.f32.mrb[0].mxu0
    %v6627 = vadd.f32 0.0, %v6626
    %v6628 = vpop.f32.mrb[0].mxu0
    %v6629 = vadd.f32 0.0, %v6628
    %v6630 = vpop.f32.mrb[0].mxu0
    %v6631 = vpop.f32.mrb[0].mxu0
    %6632 = vdwg.mxu0
    %v6634 = vlaneseq
    %v6635 = vshrl.u32 %v6634, 7
    %v6636 = vsub.s32 0, %v6635
    %v6637 = vrot.slane %v6358, %v6636
    %v6638 = vlaneseq
    %v6639 = vshrl.u32 %v6638, 7
    %v6640 = vsub.s32 1, %v6639
    %v6641 = vrot.slane %v6358, %v6640
    %v6642 = vlaneseq
    %v6643 = vshrl.u32 %v6642, 7
    %v6644 = vsub.s32 2, %v6643
    %v6645 = vrot.slane %v6358, %v6644
    %v6646 = vlaneseq
    %v6647 = vshrl.u32 %v6646, 7
    %v6648 = vsub.s32 3, %v6647
    %v6649 = vrot.slane %v6358, %v6648
    %v6654 = vadd.f32 %v6637, %v6586
    %v6655 = vadd.f32 %v6641, %v6588
    %v6656 = vadd.f32 %v6645, %v6627
    %v6657 = vadd.f32 %v6649, %v6629
    %v6658 = vld [vmem:[#allocation12] sm:$0xff]
    %v6659 = vld [vmem:[#allocation12 + $0x8] sm:$0xff]
    %v6660 = vld [vmem:[#allocation12 + $0x10] sm:$0xff]
    %v6661 = vld [vmem:[#allocation12 + $0x18] sm:$0xff]
    %v6662 = vld [vmem:[#allocation12 + $0x20] sm:$0xff]
    %v6663 = vld [vmem:[#allocation12 + $0x28] sm:$0xff]
    %v6664 = vld [vmem:[#allocation12 + $0x30] sm:$0xff]
    %v6665 = vld [vmem:[#allocation12 + $0x38] sm:$0xff]
    %v6666 = vld [vmem:[#allocation12 + $0x40] sm:$0xff]
    %v6667 = vld [vmem:[#allocation12 + $0x48] sm:$0xff]
    %v6668 = vld [vmem:[#allocation12 + $0x50] sm:$0xff]
    %v6669 = vld [vmem:[#allocation12 + $0x58] sm:$0xff]
    %v6670 = vld [vmem:[#allocation12 + $0x60] sm:$0xff]
    %v6671 = vld [vmem:[#allocation12 + $0x68] sm:$0xff]
    %v6672 = vld [vmem:[#allocation12 + $0x70] sm:$0xff]
    %v6673 = vld [vmem:[#allocation12 + $0x78] sm:$0xff]
    %v6674 = vld [vmem:[#allocation12 + $0x80] sm:$0xff]
    %v6675 = vld [vmem:[#allocation12 + $0x88] sm:$0xff]
    %v6676 = vld [vmem:[#allocation12 + $0x90] sm:$0xff]
    %v6677 = vld [vmem:[#allocation12 + $0x98] sm:$0xff]
    %v6678 = vld [vmem:[#allocation12 + $0xa0] sm:$0xff]
    %v6679 = vld [vmem:[#allocation12 + $0xa8] sm:$0xff]
    %v6680 = vld [vmem:[#allocation12 + $0xb0] sm:$0xff]
    %v6681 = vld [vmem:[#allocation12 + $0xb8] sm:$0xff]
    %v6682 = vld [vmem:[#allocation12 + $0xc0] sm:$0xff]
    %v6683 = vld [vmem:[#allocation12 + $0xc8] sm:$0xff]
    %v6684 = vld [vmem:[#allocation12 + $0xd0] sm:$0xff]
    %v6685 = vld [vmem:[#allocation12 + $0xd8] sm:$0xff]
    %v6686 = vld [vmem:[#allocation12 + $0xe0] sm:$0xff]
    %v6687 = vld [vmem:[#allocation12 + $0xe8] sm:$0xff]
    %v6688 = vld [vmem:[#allocation12 + $0xf0] sm:$0xff]
    %v6689 = vld [vmem:[#allocation12 + $0xf8] sm:$0xff]
    %v6722 = vunpack.c.l.b16 %v6658
    %v6723 = vunpack.c.h.b16 %v6658
    %v6724 = vunpack.c.l.b16 %v6659
    %v6725 = vunpack.c.h.b16 %v6659
    %v6726 = vunpack.c.l.b16 %v6660
    %v6727 = vunpack.c.h.b16 %v6660
    %v6728 = vunpack.c.l.b16 %v6661
    %v6729 = vunpack.c.h.b16 %v6661
    %v6730 = vunpack.c.l.b16 %v6662
    %v6731 = vunpack.c.h.b16 %v6662
    %v6732 = vunpack.c.l.b16 %v6663
    %v6733 = vunpack.c.h.b16 %v6663
    %v6734 = vunpack.c.l.b16 %v6664
    %v6735 = vunpack.c.h.b16 %v6664
    %v6736 = vunpack.c.l.b16 %v6665
    %v6737 = vunpack.c.h.b16 %v6665
    %v6738 = vunpack.c.l.b16 %v6666
    %v6739 = vunpack.c.h.b16 %v6666
    %v6740 = vunpack.c.l.b16 %v6667
    %v6741 = vunpack.c.h.b16 %v6667
    %v6742 = vunpack.c.l.b16 %v6668
    %v6743 = vunpack.c.h.b16 %v6668
    %v6744 = vunpack.c.l.b16 %v6669
    %v6745 = vunpack.c.h.b16 %v6669
    %v6746 = vunpack.c.l.b16 %v6670
    %v6747 = vunpack.c.h.b16 %v6670
    %v6748 = vunpack.c.l.b16 %v6671
    %v6749 = vunpack.c.h.b16 %v6671
    %v6750 = vunpack.c.l.b16 %v6672
    %v6751 = vunpack.c.h.b16 %v6672
    %v6752 = vunpack.c.l.b16 %v6673
    %v6753 = vunpack.c.h.b16 %v6673
    %v6754 = vunpack.c.l.b16 %v6674
    %v6755 = vunpack.c.h.b16 %v6674
    %v6756 = vunpack.c.l.b16 %v6675
    %v6757 = vunpack.c.h.b16 %v6675
    %v6758 = vunpack.c.l.b16 %v6676
    %v6759 = vunpack.c.h.b16 %v6676
    %v6760 = vunpack.c.l.b16 %v6677
    %v6761 = vunpack.c.h.b16 %v6677
    %v6762 = vunpack.c.l.b16 %v6678
    %v6763 = vunpack.c.h.b16 %v6678
    %v6764 = vunpack.c.l.b16 %v6679
    %v6765 = vunpack.c.h.b16 %v6679
    %v6766 = vunpack.c.l.b16 %v6680
    %v6767 = vunpack.c.h.b16 %v6680
    %v6768 = vunpack.c.l.b16 %v6681
    %v6769 = vunpack.c.h.b16 %v6681
    %v6770 = vunpack.c.l.b16 %v6682
    %v6771 = vunpack.c.h.b16 %v6682
    %v6772 = vunpack.c.l.b16 %v6683
    %v6773 = vunpack.c.h.b16 %v6683
    %v6774 = vunpack.c.l.b16 %v6684
    %v6775 = vunpack.c.h.b16 %v6684
    %v6776 = vunpack.c.l.b16 %v6685
    %v6777 = vunpack.c.h.b16 %v6685
    %v6778 = vunpack.c.l.b16 %v6686
    %v6779 = vunpack.c.h.b16 %v6686
    %v6780 = vunpack.c.l.b16 %v6687
    %v6781 = vunpack.c.h.b16 %v6687
    %v6782 = vunpack.c.l.b16 %v6688
    %v6783 = vunpack.c.h.b16 %v6688
    %v6784 = vunpack.c.l.b16 %v6689
    %v6785 = vunpack.c.h.b16 %v6689
    %v6786 = vpack.c.b16 %v6726, %v6722
    %v6787 = vpack.c.b16 %v6727, %v6723
    %v6788 = vpack.c.b16 %v6728, %v6724
    %v6789 = vpack.c.b16 %v6729, %v6725
    %v6790 = vpack.c.b16 %v6734, %v6730
    %v6791 = vpack.c.b16 %v6735, %v6731
    %v6792 = vpack.c.b16 %v6736, %v6732
    %v6793 = vpack.c.b16 %v6737, %v6733
    %v6794 = vpack.c.b16 %v6742, %v6738
    %v6795 = vpack.c.b16 %v6743, %v6739
    %v6796 = vpack.c.b16 %v6744, %v6740
    %v6797 = vpack.c.b16 %v6745, %v6741
    %v6798 = vpack.c.b16 %v6750, %v6746
    %v6799 = vpack.c.b16 %v6751, %v6747
    %v6800 = vpack.c.b16 %v6752, %v6748
    %v6801 = vpack.c.b16 %v6753, %v6749
    %v6802 = vpack.c.b16 %v6758, %v6754
    %v6803 = vpack.c.b16 %v6759, %v6755
    %v6804 = vpack.c.b16 %v6760, %v6756
    %v6805 = vpack.c.b16 %v6761, %v6757
    %v6806 = vpack.c.b16 %v6766, %v6762
    %v6807 = vpack.c.b16 %v6767, %v6763
    %v6808 = vpack.c.b16 %v6768, %v6764
    %v6809 = vpack.c.b16 %v6769, %v6765
    %v6810 = vpack.c.b16 %v6774, %v6770
    %v6811 = vpack.c.b16 %v6775, %v6771
    %v6812 = vpack.c.b16 %v6776, %v6772
    %v6813 = vpack.c.b16 %v6777, %v6773
    %v6814 = vpack.c.b16 %v6782, %v6778
    %v6815 = vpack.c.b16 %v6783, %v6779
    %v6816 = vpack.c.b16 %v6784, %v6780
    %v6817 = vpack.c.b16 %v6785, %v6781
    %6850 = vmatprep.subr.bf16.mxu0 %v6787
    %6851 = vmatpush1.bf16.msra.mxu0 %v6786
    %6852 = vmatprep.subr.bf16.mxu0 %v6791
    %6853 = vmatpush1.bf16.msra.mxu0 %v6790
    %6854 = vmatprep.subr.bf16.mxu0 %v6795
    %6855 = vmatpush1.bf16.msra.mxu0 %v6794
    %6856 = vmatprep.subr.bf16.mxu0 %v6799
    %6857 = vmatpush1.bf16.msra.mxu0 %v6798
    %6858 = vmatprep.subr.bf16.mxu0 %v6803
    %6859 = vmatpush1.bf16.msra.mxu0 %v6802
    %6860 = vmatprep.subr.bf16.mxu0 %v6807
    %6861 = vmatpush1.bf16.msra.mxu0 %v6806
    %6862 = vmatprep.subr.bf16.mxu0 %v6811
    %6863 = vmatpush1.bf16.msra.mxu0 %v6810
    %6864 = vmatprep.subr.bf16.mxu0 %v6815
    %6865 = vmatpush1.bf16.msra.mxu0 %v6814
    %6866 = vmatprep.subr.bf16.mxu0 0
    %6867 = vmatpush1.bf16.msra.mxu0 0
    %6868 = vmatprep.subr.bf16.mxu0 0
    %6869 = vmatpush1.bf16.msra.mxu0 0
    %6870 = vmatprep.subr.bf16.mxu0 0
    %6871 = vmatpush1.bf16.msra.mxu0 0
    %6872 = vmatprep.subr.bf16.mxu0 0
    %6873 = vmatpush1.bf16.msra.mxu0 0
    %6874 = vmatprep.subr.bf16.mxu0 0
    %6875 = vmatpush1.bf16.msra.mxu0 0
    %6876 = vmatprep.subr.bf16.mxu0 0
    %6877 = vmatpush1.bf16.msra.mxu0 0
    %6878 = vmatprep.subr.bf16.mxu0 0
    %6879 = vmatpush1.bf16.msra.mxu0 0
    %6880 = vmatprep.subr.bf16.mxu0 0
    %6881 = vmatpush1.bf16.msra.mxu0 0
    %6882 = vmatprep.mubr.bf16.mxu0 0
    %6883 = vmatmul.mubr.bf16.gmra.mrb[0].mxu0 %v6049
    %v6884 = vpop.f32.mrb[0].mxu0
    %v6885 = vadd.f32 0.0, %v6884
    %v6886 = vpop.f32.mrb[0].mxu0
    %v6887 = vadd.f32 0.0, %v6886
    %v6888 = vpop.f32.mrb[0].mxu0
    %v6889 = vpop.f32.mrb[0].mxu0
    %6890 = vdwg.mxu0
    %6891 = vmatprep.subr.bf16.mxu0 %v6789
    %6892 = vmatpush1.bf16.msra.mxu0 %v6788
    %6893 = vmatprep.subr.bf16.mxu0 %v6793
    %6894 = vmatpush1.bf16.msra.mxu0 %v6792
    %6895 = vmatprep.subr.bf16.mxu0 %v6797
    %6896 = vmatpush1.bf16.msra.mxu0 %v6796
    %6897 = vmatprep.subr.bf16.mxu0 %v6801
    %6898 = vmatpush1.bf16.msra.mxu0 %v6800
    %6899 = vmatprep.subr.bf16.mxu0 %v6805
    %6900 = vmatpush1.bf16.msra.mxu0 %v6804
    %6901 = vmatprep.subr.bf16.mxu0 %v6809
    %6902 = vmatpush1.bf16.msra.mxu0 %v6808
    %6903 = vmatprep.subr.bf16.mxu0 %v6813
    %6904 = vmatpush1.bf16.msra.mxu0 %v6812
    %6905 = vmatprep.subr.bf16.mxu0 %v6817
    %6906 = vmatpush1.bf16.msra.mxu0 %v6816
    %6907 = vmatprep.subr.bf16.mxu0 0
    %6908 = vmatpush1.bf16.msra.mxu0 0
    %6909 = vmatprep.subr.bf16.mxu0 0
    %6910 = vmatpush1.bf16.msra.mxu0 0
    %6911 = vmatprep.subr.bf16.mxu0 0
    %6912 = vmatpush1.bf16.msra.mxu0 0
    %6913 = vmatprep.subr.bf16.mxu0 0
    %6914 = vmatpush1.bf16.msra.mxu0 0
    %6915 = vmatprep.subr.bf16.mxu0 0
    %6916 = vmatpush1.bf16.msra.mxu0 0
    %6917 = vmatprep.subr.bf16.mxu0 0
    %6918 = vmatpush1.bf16.msra.mxu0 0
    %6919 = vmatprep.subr.bf16.mxu0 0
    %6920 = vmatpush1.bf16.msra.mxu0 0
    %6921 = vmatprep.subr.bf16.mxu0 0
    %6922 = vmatpush1.bf16.msra.mxu0 0
    %6923 = vmatprep.mubr.bf16.mxu0 0
    %6924 = vmatmul.mubr.bf16.gmra.mrb[0].mxu0 %v6049
    %v6925 = vpop.f32.mrb[0].mxu0
    %v6926 = vadd.f32 0.0, %v6925
    %v6927 = vpop.f32.mrb[0].mxu0
    %v6928 = vadd.f32 0.0, %v6927
    %v6929 = vpop.f32.mrb[0].mxu0
    %v6930 = vpop.f32.mrb[0].mxu0
    %6931 = vdwg.mxu0
    %v6932 = vadd.f32 %v6654, %v6885
    %v6933 = vadd.f32 %v6655, %v6887
    %v6934 = vadd.f32 %v6656, %v6926
    %v6935 = vadd.f32 %v6657, %v6928
    %v6936 = vxor.u32 %v6932, 2147483648
    %v6937 = vxor.u32 %v6933, 2147483648
    %v6938 = vxor.u32 %v6934, 2147483648
    %v6939 = vmul.f32 %v6936, 1.442695
    %v6940 = vpow.pop %v6939
    %v6941 = vmul.f32 %v6937, 1.442695
    %v6942 = vpow.pop %v6941
    %v6943 = vmul.f32 %v6938, 1.442695
    %v6944 = vpow.pop %v6943
    %v6945 = vadd.f32 %v6940, 1.0
    %v6946 = vadd.f32 %v6942, 1.0
    %v6947 = vadd.f32 %v6944, 1.0
    %v6948 = vrcp.pop %v6945
    %v6949 = vmul.f32 1.0, %v6948
    %v6950 = vrcp.pop %v6946
    %v6951 = vmul.f32 1.0, %v6950
    %v6952 = vrcp.pop %v6947
    %v6953 = vmul.f32 1.0, %v6952
    %v6954 = vtanh.pop %v6935
    %v6955 = vmul.f32 %v6951, %v6046
    %v6956 = vmul.f32 %v6949, %v6954
    %v6957 = vadd.f32 %v6955, %v6956
    %v6958 = vtanh.pop %v6957
    %v6959 = vmul.f32 %v6953, %v6958
    %v6960 = vpack.c.bf16 %v6959, %v6959
    %6961 = vst [vmem:[#allocation3 + $0x30] sm:$0xff] %v6959
    %v6962 = vld [vmem:[#allocation2 + $0xe0] sm:$0xff]
    %v6963 = vld [vmem:[#allocation2 + $0xe8] sm:$0xff]
    %v6964 = vld [vmem:[#allocation2 + $0xf0] sm:$0xff]
    %v6965 = vld [vmem:[#allocation2 + $0xf8] sm:$0xff]
    %v6966 = vld [vmem:[#allocation7] sm:$0xff]
    %v6967 = vld [vmem:[#allocation7 + $0x8] sm:$0xff]
    %v6968 = vld [vmem:[#allocation7 + $0x10] sm:$0xff]
    %v6969 = vld [vmem:[#allocation7 + $0x18] sm:$0xff]
    %v6970 = vld [vmem:[#allocation7 + $0x20] sm:$0xff]
    %v6971 = vld [vmem:[#allocation7 + $0x28] sm:$0xff]
    %v6972 = vld [vmem:[#allocation7 + $0x30] sm:$0xff]
    %v6973 = vld [vmem:[#allocation7 + $0x38] sm:$0xff]
    %v6974 = vld [vmem:[#allocation7 + $0x40] sm:$0xff]
    %v6975 = vld [vmem:[#allocation7 + $0x48] sm:$0xff]
    %v6976 = vld [vmem:[#allocation7 + $0x50] sm:$0xff]
    %v6977 = vld [vmem:[#allocation7 + $0x58] sm:$0xff]
    %v6978 = vld [vmem:[#allocation7 + $0x60] sm:$0xff]
    %v6979 = vld [vmem:[#allocation7 + $0x68] sm:$0xff]
    %v6980 = vld [vmem:[#allocation7 + $0x70] sm:$0xff]
    %v6981 = vld [vmem:[#allocation7 + $0x78] sm:$0xff]
    %v6982 = vld [vmem:[#allocation7 + $0x80] sm:$0xff]
    %v6983 = vld [vmem:[#allocation7 + $0x88] sm:$0xff]
    %v6984 = vld [vmem:[#allocation7 + $0x90] sm:$0xff]
    %v6985 = vld [vmem:[#allocation7 + $0x98] sm:$0xff]
    %v6986 = vld [vmem:[#allocation7 + $0xa0] sm:$0xff]
    %v6987 = vld [vmem:[#allocation7 + $0xa8] sm:$0xff]
    %v6988 = vld [vmem:[#allocation7 + $0xb0] sm:$0xff]
    %v6989 = vld [vmem:[#allocation7 + $0xb8] sm:$0xff]
    %v6990 = vld [vmem:[#allocation7 + $0xc0] sm:$0xff]
    %v6991 = vld [vmem:[#allocation7 + $0xc8] sm:$0xff]
    %v6992 = vld [vmem:[#allocation7 + $0xd0] sm:$0xff]
    %v6993 = vld [vmem:[#allocation7 + $0xd8] sm:$0xff]
    %v6994 = vld [vmem:[#allocation7 + $0xe0] sm:$0xff]
    %v6995 = vld [vmem:[#allocation7 + $0xe8] sm:$0xff]
    %v6996 = vld [vmem:[#allocation7 + $0xf0] sm:$0xff]
    %v6997 = vld [vmem:[#allocation7 + $0xf8] sm:$0xff]
    %v7030 = vunpack.c.l.b16 %v6966
    %v7031 = vunpack.c.h.b16 %v6966
    %v7032 = vunpack.c.l.b16 %v6967
    %v7033 = vunpack.c.h.b16 %v6967
    %v7034 = vunpack.c.l.b16 %v6968
    %v7035 = vunpack.c.h.b16 %v6968
    %v7036 = vunpack.c.l.b16 %v6969
    %v7037 = vunpack.c.h.b16 %v6969
    %v7038 = vunpack.c.l.b16 %v6970
    %v7039 = vunpack.c.h.b16 %v6970
    %v7040 = vunpack.c.l.b16 %v6971
    %v7041 = vunpack.c.h.b16 %v6971
    %v7042 = vunpack.c.l.b16 %v6972
    %v7043 = vunpack.c.h.b16 %v6972
    %v7044 = vunpack.c.l.b16 %v6973
    %v7045 = vunpack.c.h.b16 %v6973
    %v7046 = vunpack.c.l.b16 %v6974
    %v7047 = vunpack.c.h.b16 %v6974
    %v7048 = vunpack.c.l.b16 %v6975
    %v7049 = vunpack.c.h.b16 %v6975
    %v7050 = vunpack.c.l.b16 %v6976
    %v7051 = vunpack.c.h.b16 %v6976
    %v7052 = vunpack.c.l.b16 %v6977
    %v7053 = vunpack.c.h.b16 %v6977
    %v7054 = vunpack.c.l.b16 %v6978
    %v7055 = vunpack.c.h.b16 %v6978
    %v7056 = vunpack.c.l.b16 %v6979
    %v7057 = vunpack.c.h.b16 %v6979
    %v7058 = vunpack.c.l.b16 %v6980
    %v7059 = vunpack.c.h.b16 %v6980
    %v7060 = vunpack.c.l.b16 %v6981
    %v7061 = vunpack.c.h.b16 %v6981
    %v7062 = vunpack.c.l.b16 %v6982
    %v7063 = vunpack.c.h.b16 %v6982
    %v7064 = vunpack.c.l.b16 %v6983
    %v7065 = vunpack.c.h.b16 %v6983
    %v7066 = vunpack.c.l.b16 %v6984
    %v7067 = vunpack.c.h.b16 %v6984
    %v7068 = vunpack.c.l.b16 %v6985
    %v7069 = vunpack.c.h.b16 %v6985
    %v7070 = vunpack.c.l.b16 %v6986
    %v7071 = vunpack.c.h.b16 %v6986
    %v7072 = vunpack.c.l.b16 %v6987
    %v7073 = vunpack.c.h.b16 %v6987
    %v7074 = vunpack.c.l.b16 %v6988
    %v7075 = vunpack.c.h.b16 %v6988
    %v7076 = vunpack.c.l.b16 %v6989
    %v7077 = vunpack.c.h.b16 %v6989
    %v7078 = vunpack.c.l.b16 %v6990
    %v7079 = vunpack.c.h.b16 %v6990
    %v7080 = vunpack.c.l.b16 %v6991
    %v7081 = vunpack.c.h.b16 %v6991
    %v7082 = vunpack.c.l.b16 %v6992
    %v7083 = vunpack.c.h.b16 %v6992
    %v7084 = vunpack.c.l.b16 %v6993
    %v7085 = vunpack.c.h.b16 %v6993
    %v7086 = vunpack.c.l.b16 %v6994
    %v7087 = vunpack.c.h.b16 %v6994
    %v7088 = vunpack.c.l.b16 %v6995
    %v7089 = vunpack.c.h.b16 %v6995
    %v7090 = vunpack.c.l.b16 %v6996
    %v7091 = vunpack.c.h.b16 %v6996
    %v7092 = vunpack.c.l.b16 %v6997
    %v7093 = vunpack.c.h.b16 %v6997
    %v7094 = vpack.c.b16 %v7034, %v7030
    %v7095 = vpack.c.b16 %v7035, %v7031
    %v7096 = vpack.c.b16 %v7036, %v7032
    %v7097 = vpack.c.b16 %v7037, %v7033
    %v7098 = vpack.c.b16 %v7042, %v7038
    %v7099 = vpack.c.b16 %v7043, %v7039
    %v7100 = vpack.c.b16 %v7044, %v7040
    %v7101 = vpack.c.b16 %v7045, %v7041
    %v7102 = vpack.c.b16 %v7050, %v7046
    %v7103 = vpack.c.b16 %v7051, %v7047
    %v7104 = vpack.c.b16 %v7052, %v7048
    %v7105 = vpack.c.b16 %v7053, %v7049
    %v7106 = vpack.c.b16 %v7058, %v7054
    %v7107 = vpack.c.b16 %v7059, %v7055
    %v7108 = vpack.c.b16 %v7060, %v7056
    %v7109 = vpack.c.b16 %v7061, %v7057
    %v7110 = vpack.c.b16 %v7066, %v7062
    %v7111 = vpack.c.b16 %v7067, %v7063
    %v7112 = vpack.c.b16 %v7068, %v7064
    %v7113 = vpack.c.b16 %v7069, %v7065
    %v7114 = vpack.c.b16 %v7074, %v7070
    %v7115 = vpack.c.b16 %v7075, %v7071
    %v7116 = vpack.c.b16 %v7076, %v7072
    %v7117 = vpack.c.b16 %v7077, %v7073
    %v7118 = vpack.c.b16 %v7082, %v7078
    %v7119 = vpack.c.b16 %v7083, %v7079
    %v7120 = vpack.c.b16 %v7084, %v7080
    %v7121 = vpack.c.b16 %v7085, %v7081
    %v7122 = vpack.c.b16 %v7090, %v7086
    %v7123 = vpack.c.b16 %v7091, %v7087
    %v7124 = vpack.c.b16 %v7092, %v7088
    %v7125 = vpack.c.b16 %v7093, %v7089
    %7158 = vmatprep.subr.bf16.mxu0 %v7095
    %7159 = vmatpush1.bf16.msra.mxu0 %v7094
    %7160 = vmatprep.subr.bf16.mxu0 %v7099
    %7161 = vmatpush1.bf16.msra.mxu0 %v7098
    %7162 = vmatprep.subr.bf16.mxu0 %v7103
    %7163 = vmatpush1.bf16.msra.mxu0 %v7102
    %7164 = vmatprep.subr.bf16.mxu0 %v7107
    %7165 = vmatpush1.bf16.msra.mxu0 %v7106
    %7166 = vmatprep.subr.bf16.mxu0 %v7111
    %7167 = vmatpush1.bf16.msra.mxu0 %v7110
    %7168 = vmatprep.subr.bf16.mxu0 %v7115
    %7169 = vmatpush1.bf16.msra.mxu0 %v7114
    %7170 = vmatprep.subr.bf16.mxu0 %v7119
    %7171 = vmatpush1.bf16.msra.mxu0 %v7118
    %7172 = vmatprep.subr.bf16.mxu0 %v7123
    %7173 = vmatpush1.bf16.msra.mxu0 %v7122
    %7174 = vmatprep.subr.bf16.mxu0 0
    %7175 = vmatpush1.bf16.msra.mxu0 0
    %7176 = vmatprep.subr.bf16.mxu0 0
    %7177 = vmatpush1.bf16.msra.mxu0 0
    %7178 = vmatprep.subr.bf16.mxu0 0
    %7179 = vmatpush1.bf16.msra.mxu0 0
    %7180 = vmatprep.subr.bf16.mxu0 0
    %7181 = vmatpush1.bf16.msra.mxu0 0
    %7182 = vmatprep.subr.bf16.mxu0 0
    %7183 = vmatpush1.bf16.msra.mxu0 0
    %7184 = vmatprep.subr.bf16.mxu0 0
    %7185 = vmatpush1.bf16.msra.mxu0 0
    %7186 = vmatprep.subr.bf16.mxu0 0
    %7187 = vmatpush1.bf16.msra.mxu0 0
    %7188 = vmatprep.subr.bf16.mxu0 0
    %7189 = vmatpush1.bf16.msra.mxu0 0
    %7190 = vmatprep.mubr.bf16.mxu0 0
    %7191 = vmatmul.mubr.bf16.gmra.mrb[0].mxu0 %v6357
    %v7192 = vpop.f32.mrb[0].mxu0
    %v7193 = vadd.f32 0.0, %v7192
    %v7194 = vpop.f32.mrb[0].mxu0
    %v7195 = vadd.f32 0.0, %v7194
    %v7196 = vpop.f32.mrb[0].mxu0
    %v7197 = vpop.f32.mrb[0].mxu0
    %7198 = vdwg.mxu0
    %7199 = vmatprep.subr.bf16.mxu0 %v7097
    %7200 = vmatpush1.bf16.msra.mxu0 %v7096
    %7201 = vmatprep.subr.bf16.mxu0 %v7101
    %7202 = vmatpush1.bf16.msra.mxu0 %v7100
    %7203 = vmatprep.subr.bf16.mxu0 %v7105
    %7204 = vmatpush1.bf16.msra.mxu0 %v7104
    %7205 = vmatprep.subr.bf16.mxu0 %v7109
    %7206 = vmatpush1.bf16.msra.mxu0 %v7108
    %7207 = vmatprep.subr.bf16.mxu0 %v7113
    %7208 = vmatpush1.bf16.msra.mxu0 %v7112
    %7209 = vmatprep.subr.bf16.mxu0 %v7117
    %7210 = vmatpush1.bf16.msra.mxu0 %v7116
    %7211 = vmatprep.subr.bf16.mxu0 %v7121
    %7212 = vmatpush1.bf16.msra.mxu0 %v7120
    %7213 = vmatprep.subr.bf16.mxu0 %v7125
    %7214 = vmatpush1.bf16.msra.mxu0 %v7124
    %7215 = vmatprep.subr.bf16.mxu0 0
    %7216 = vmatpush1.bf16.msra.mxu0 0
    %7217 = vmatprep.subr.bf16.mxu0 0
    %7218 = vmatpush1.bf16.msra.mxu0 0
    %7219 = vmatprep.subr.bf16.mxu0 0
    %7220 = vmatpush1.bf16.msra.mxu0 0
    %7221 = vmatprep.subr.bf16.mxu0 0
    %7222 = vmatpush1.bf16.msra.mxu0 0
    %7223 = vmatprep.subr.bf16.mxu0 0
    %7224 = vmatpush1.bf16.msra.mxu0 0
    %7225 = vmatprep.subr.bf16.mxu0 0
    %7226 = vmatpush1.bf16.msra.mxu0 0
    %7227 = vmatprep.subr.bf16.mxu0 0
    %7228 = vmatpush1.bf16.msra.mxu0 0
    %7229 = vmatprep.subr.bf16.mxu0 0
    %7230 = vmatpush1.bf16.msra.mxu0 0
    %7231 = vmatprep.mubr.bf16.mxu0 0
    %7232 = vmatmul.mubr.bf16.gmra.mrb[0].mxu0 %v6357
    %v7233 = vpop.f32.mrb[0].mxu0
    %v7234 = vadd.f32 0.0, %v7233
    %v7235 = vpop.f32.mrb[0].mxu0
    %v7236 = vadd.f32 0.0, %v7235
    %v7237 = vpop.f32.mrb[0].mxu0
    %v7238 = vpop.f32.mrb[0].mxu0
    %7239 = vdwg.mxu0
    %v7240 = vadd.f32 %v6962, %v7193
    %v7241 = vadd.f32 %v6963, %v7195
    %v7242 = vadd.f32 %v6964, %v7234
    %v7243 = vadd.f32 %v6965, %v7236
    %v7244 = vxor.u32 %v7240, 2147483648
    %v7245 = vxor.u32 %v7241, 2147483648
    %v7246 = vxor.u32 %v7242, 2147483648
    %v7247 = vmul.f32 %v7244, 1.442695
    %v7248 = vpow.pop %v7247
    %v7249 = vmul.f32 %v7245, 1.442695
    %v7250 = vpow.pop %v7249
    %v7251 = vmul.f32 %v7246, 1.442695
    %v7252 = vpow.pop %v7251
    %v7253 = vadd.f32 %v7248, 1.0
    %v7254 = vadd.f32 %v7250, 1.0
    %v7255 = vadd.f32 %v7252, 1.0
    %v7256 = vrcp.pop %v7253
    %v7257 = vmul.f32 1.0, %v7256
    %v7258 = vrcp.pop %v7254
    %v7259 = vmul.f32 1.0, %v7258
    %v7260 = vrcp.pop %v7255
    %v7261 = vmul.f32 1.0, %v7260
    %v7262 = vtanh.pop %v7243
    %v7263 = vmul.f32 %v7259, %v6354
    %v7264 = vmul.f32 %v7257, %v7262
    %v7265 = vadd.f32 %v7263, %v7264
    %v7266 = vtanh.pop %v7265
    %v7267 = vmul.f32 %v7261, %v7266
    %v7268 = vpack.c.bf16 %v7267, %v7267
    %v7269 = vld [vmem:[#allocation13] sm:$0xf]
    %v7270 = vld [vmem:[#allocation10] sm:$0xff]
    %v7271 = vld [vmem:[#allocation10 + $0x8] sm:$0xff]
    %v7272 = vld [vmem:[#allocation10 + $0x10] sm:$0xff]
    %v7273 = vld [vmem:[#allocation10 + $0x18] sm:$0xff]
    %v7274 = vld [vmem:[#allocation10 + $0x20] sm:$0xff]
    %v7275 = vld [vmem:[#allocation10 + $0x28] sm:$0xff]
    %v7276 = vld [vmem:[#allocation10 + $0x30] sm:$0xff]
    %v7277 = vld [vmem:[#allocation10 + $0x38] sm:$0xff]
    %v7278 = vld [vmem:[#allocation10 + $0x40] sm:$0xff]
    %v7279 = vld [vmem:[#allocation10 + $0x48] sm:$0xff]
    %v7280 = vld [vmem:[#allocation10 + $0x50] sm:$0xff]
    %v7281 = vld [vmem:[#allocation10 + $0x58] sm:$0xff]
    %v7282 = vld [vmem:[#allocation10 + $0x60] sm:$0xff]
    %v7283 = vld [vmem:[#allocation10 + $0x68] sm:$0xff]
    %v7284 = vld [vmem:[#allocation10 + $0x70] sm:$0xff]
    %v7285 = vld [vmem:[#allocation10 + $0x78] sm:$0xff]
    %v7286 = vld [vmem:[#allocation10 + $0x80] sm:$0xff]
    %v7287 = vld [vmem:[#allocation10 + $0x88] sm:$0xff]
    %v7288 = vld [vmem:[#allocation10 + $0x90] sm:$0xff]
    %v7289 = vld [vmem:[#allocation10 + $0x98] sm:$0xff]
    %v7290 = vld [vmem:[#allocation10 + $0xa0] sm:$0xff]
    %v7291 = vld [vmem:[#allocation10 + $0xa8] sm:$0xff]
    %v7292 = vld [vmem:[#allocation10 + $0xb0] sm:$0xff]
    %v7293 = vld [vmem:[#allocation10 + $0xb8] sm:$0xff]
    %v7294 = vld [vmem:[#allocation10 + $0xc0] sm:$0xff]
    %v7295 = vld [vmem:[#allocation10 + $0xc8] sm:$0xff]
    %v7296 = vld [vmem:[#allocation10 + $0xd0] sm:$0xff]
    %v7297 = vld [vmem:[#allocation10 + $0xd8] sm:$0xff]
    %v7298 = vld [vmem:[#allocation10 + $0xe0] sm:$0xff]
    %v7299 = vld [vmem:[#allocation10 + $0xe8] sm:$0xff]
    %v7300 = vld [vmem:[#allocation10 + $0xf0] sm:$0xff]
    %v7301 = vld [vmem:[#allocation10 + $0xf8] sm:$0xff]
    %v7334 = vunpack.c.l.b16 %v7270
    %v7335 = vunpack.c.h.b16 %v7270
    %v7336 = vunpack.c.l.b16 %v7271
    %v7337 = vunpack.c.h.b16 %v7271
    %v7338 = vunpack.c.l.b16 %v7272
    %v7339 = vunpack.c.h.b16 %v7272
    %v7340 = vunpack.c.l.b16 %v7273
    %v7341 = vunpack.c.h.b16 %v7273
    %v7342 = vunpack.c.l.b16 %v7274
    %v7343 = vunpack.c.h.b16 %v7274
    %v7344 = vunpack.c.l.b16 %v7275
    %v7345 = vunpack.c.h.b16 %v7275
    %v7346 = vunpack.c.l.b16 %v7276
    %v7347 = vunpack.c.h.b16 %v7276
    %v7348 = vunpack.c.l.b16 %v7277
    %v7349 = vunpack.c.h.b16 %v7277
    %v7350 = vunpack.c.l.b16 %v7278
    %v7351 = vunpack.c.h.b16 %v7278
    %v7352 = vunpack.c.l.b16 %v7279
    %v7353 = vunpack.c.h.b16 %v7279
    %v7354 = vunpack.c.l.b16 %v7280
    %v7355 = vunpack.c.h.b16 %v7280
    %v7356 = vunpack.c.l.b16 %v7281
    %v7357 = vunpack.c.h.b16 %v7281
    %v7358 = vunpack.c.l.b16 %v7282
    %v7359 = vunpack.c.h.b16 %v7282
    %v7360 = vunpack.c.l.b16 %v7283
    %v7361 = vunpack.c.h.b16 %v7283
    %v7362 = vunpack.c.l.b16 %v7284
    %v7363 = vunpack.c.h.b16 %v7284
    %v7364 = vunpack.c.l.b16 %v7285
    %v7365 = vunpack.c.h.b16 %v7285
    %v7366 = vunpack.c.l.b16 %v7286
    %v7367 = vunpack.c.h.b16 %v7286
    %v7368 = vunpack.c.l.b16 %v7287
    %v7369 = vunpack.c.h.b16 %v7287
    %v7370 = vunpack.c.l.b16 %v7288
    %v7371 = vunpack.c.h.b16 %v7288
    %v7372 = vunpack.c.l.b16 %v7289
    %v7373 = vunpack.c.h.b16 %v7289
    %v7374 = vunpack.c.l.b16 %v7290
    %v7375 = vunpack.c.h.b16 %v7290
    %v7376 = vunpack.c.l.b16 %v7291
    %v7377 = vunpack.c.h.b16 %v7291
    %v7378 = vunpack.c.l.b16 %v7292
    %v7379 = vunpack.c.h.b16 %v7292
    %v7380 = vunpack.c.l.b16 %v7293
    %v7381 = vunpack.c.h.b16 %v7293
    %v7382 = vunpack.c.l.b16 %v7294
    %v7383 = vunpack.c.h.b16 %v7294
    %v7384 = vunpack.c.l.b16 %v7295
    %v7385 = vunpack.c.h.b16 %v7295
    %v7386 = vunpack.c.l.b16 %v7296
    %v7387 = vunpack.c.h.b16 %v7296
    %v7388 = vunpack.c.l.b16 %v7297
    %v7389 = vunpack.c.h.b16 %v7297
    %v7390 = vunpack.c.l.b16 %v7298
    %v7391 = vunpack.c.h.b16 %v7298
    %v7392 = vunpack.c.l.b16 %v7299
    %v7393 = vunpack.c.h.b16 %v7299
    %v7394 = vunpack.c.l.b16 %v7300
    %v7395 = vunpack.c.h.b16 %v7300
    %v7396 = vunpack.c.l.b16 %v7301
    %v7397 = vunpack.c.h.b16 %v7301
    %v7398 = vpack.c.b16 %v7338, %v7334
    %v7399 = vpack.c.b16 %v7339, %v7335
    %v7400 = vpack.c.b16 %v7340, %v7336
    %v7401 = vpack.c.b16 %v7341, %v7337
    %v7402 = vpack.c.b16 %v7346, %v7342
    %v7403 = vpack.c.b16 %v7347, %v7343
    %v7404 = vpack.c.b16 %v7348, %v7344
    %v7405 = vpack.c.b16 %v7349, %v7345
    %v7406 = vpack.c.b16 %v7354, %v7350
    %v7407 = vpack.c.b16 %v7355, %v7351
    %v7408 = vpack.c.b16 %v7356, %v7352
    %v7409 = vpack.c.b16 %v7357, %v7353
    %v7410 = vpack.c.b16 %v7362, %v7358
    %v7411 = vpack.c.b16 %v7363, %v7359
    %v7412 = vpack.c.b16 %v7364, %v7360
    %v7413 = vpack.c.b16 %v7365, %v7361
    %v7414 = vpack.c.b16 %v7370, %v7366
    %v7415 = vpack.c.b16 %v7371, %v7367
    %v7416 = vpack.c.b16 %v7372, %v7368
    %v7417 = vpack.c.b16 %v7373, %v7369
    %v7418 = vpack.c.b16 %v7378, %v7374
    %v7419 = vpack.c.b16 %v7379, %v7375
    %v7420 = vpack.c.b16 %v7380, %v7376
    %v7421 = vpack.c.b16 %v7381, %v7377
    %v7422 = vpack.c.b16 %v7386, %v7382
    %v7423 = vpack.c.b16 %v7387, %v7383
    %v7424 = vpack.c.b16 %v7388, %v7384
    %v7425 = vpack.c.b16 %v7389, %v7385
    %v7426 = vpack.c.b16 %v7394, %v7390
    %v7427 = vpack.c.b16 %v7395, %v7391
    %v7428 = vpack.c.b16 %v7396, %v7392
    %v7429 = vpack.c.b16 %v7397, %v7393
    %7462 = vmatprep.subr.bf16.mxu0 %v7399
    %7463 = vmatpush1.bf16.msra.mxu0 %v7398
    %7464 = vmatprep.subr.bf16.mxu0 %v7403
    %7465 = vmatpush1.bf16.msra.mxu0 %v7402
    %7466 = vmatprep.subr.bf16.mxu0 %v7407
    %7467 = vmatpush1.bf16.msra.mxu0 %v7406
    %7468 = vmatprep.subr.bf16.mxu0 %v7411
    %7469 = vmatpush1.bf16.msra.mxu0 %v7410
    %7470 = vmatprep.subr.bf16.mxu0 %v7415
    %7471 = vmatpush1.bf16.msra.mxu0 %v7414
    %7472 = vmatprep.subr.bf16.mxu0 %v7419
    %7473 = vmatpush1.bf16.msra.mxu0 %v7418
    %7474 = vmatprep.subr.bf16.mxu0 %v7423
    %7475 = vmatpush1.bf16.msra.mxu0 %v7422
    %7476 = vmatprep.subr.bf16.mxu0 %v7427
    %7477 = vmatpush1.bf16.msra.mxu0 %v7426
    %7478 = vmatprep.subr.bf16.mxu0 0
    %7479 = vmatpush1.bf16.msra.mxu0 0
    %7480 = vmatprep.subr.bf16.mxu0 0
    %7481 = vmatpush1.bf16.msra.mxu0 0
    %7482 = vmatprep.subr.bf16.mxu0 0
    %7483 = vmatpush1.bf16.msra.mxu0 0
    %7484 = vmatprep.subr.bf16.mxu0 0
    %7485 = vmatpush1.bf16.msra.mxu0 0
    %7486 = vmatprep.subr.bf16.mxu0 0
    %7487 = vmatpush1.bf16.msra.mxu0 0
    %7488 = vmatprep.subr.bf16.mxu0 0
    %7489 = vmatpush1.bf16.msra.mxu0 0
    %7490 = vmatprep.subr.bf16.mxu0 0
    %7491 = vmatpush1.bf16.msra.mxu0 0
    %7492 = vmatprep.subr.bf16.mxu0 0
    %7493 = vmatpush1.bf16.msra.mxu0 0
    %7494 = vmatprep.mubr.bf16.mxu0 0
    %7495 = vmatmul.mubr.bf16.gmra.mrb[0].mxu0 %v7268
    %v7496 = vpop.f32.mrb[0].mxu0
    %v7497 = vadd.f32 0.0, %v7496
    %v7498 = vpop.f32.mrb[0].mxu0
    %v7499 = vadd.f32 0.0, %v7498
    %v7500 = vpop.f32.mrb[0].mxu0
    %v7501 = vpop.f32.mrb[0].mxu0
    %7502 = vdwg.mxu0
    %7503 = vmatprep.subr.bf16.mxu0 %v7401
    %7504 = vmatpush1.bf16.msra.mxu0 %v7400
    %7505 = vmatprep.subr.bf16.mxu0 %v7405
    %7506 = vmatpush1.bf16.msra.mxu0 %v7404
    %7507 = vmatprep.subr.bf16.mxu0 %v7409
    %7508 = vmatpush1.bf16.msra.mxu0 %v7408
    %7509 = vmatprep.subr.bf16.mxu0 %v7413
    %7510 = vmatpush1.bf16.msra.mxu0 %v7412
    %7511 = vmatprep.subr.bf16.mxu0 %v7417
    %7512 = vmatpush1.bf16.msra.mxu0 %v7416
    %7513 = vmatprep.subr.bf16.mxu0 %v7421
    %7514 = vmatpush1.bf16.msra.mxu0 %v7420
    %7515 = vmatprep.subr.bf16.mxu0 %v7425
    %7516 = vmatpush1.bf16.msra.mxu0 %v7424
    %7517 = vmatprep.subr.bf16.mxu0 %v7429
    %7518 = vmatpush1.bf16.msra.mxu0 %v7428
    %7519 = vmatprep.subr.bf16.mxu0 0
    %7520 = vmatpush1.bf16.msra.mxu0 0
    %7521 = vmatprep.subr.bf16.mxu0 0
    %7522 = vmatpush1.bf16.msra.mxu0 0
    %7523 = vmatprep.subr.bf16.mxu0 0
    %7524 = vmatpush1.bf16.msra.mxu0 0
    %7525 = vmatprep.subr.bf16.mxu0 0
    %7526 = vmatpush1.bf16.msra.mxu0 0
    %7527 = vmatprep.subr.bf16.mxu0 0
    %7528 = vmatpush1.bf16.msra.mxu0 0
    %7529 = vmatprep.subr.bf16.mxu0 0
    %7530 = vmatpush1.bf16.msra.mxu0 0
    %7531 = vmatprep.subr.bf16.mxu0 0
    %7532 = vmatpush1.bf16.msra.mxu0 0
    %7533 = vmatprep.subr.bf16.mxu0 0
    %7534 = vmatpush1.bf16.msra.mxu0 0
    %7535 = vmatprep.mubr.bf16.mxu0 0
    %7536 = vmatmul.mubr.bf16.gmra.mrb[0].mxu0 %v7268
    %v7537 = vpop.f32.mrb[0].mxu0
    %v7538 = vadd.f32 0.0, %v7537
    %v7539 = vpop.f32.mrb[0].mxu0
    %v7540 = vadd.f32 0.0, %v7539
    %v7541 = vpop.f32.mrb[0].mxu0
    %v7542 = vpop.f32.mrb[0].mxu0
    %7543 = vdwg.mxu0
    %v7545 = vlaneseq
    %v7546 = vshrl.u32 %v7545, 7
    %v7547 = vsub.s32 0, %v7546
    %v7548 = vrot.slane %v7269, %v7547
    %v7549 = vlaneseq
    %v7550 = vshrl.u32 %v7549, 7
    %v7551 = vsub.s32 1, %v7550
    %v7552 = vrot.slane %v7269, %v7551
    %v7553 = vlaneseq
    %v7554 = vshrl.u32 %v7553, 7
    %v7555 = vsub.s32 2, %v7554
    %v7556 = vrot.slane %v7269, %v7555
    %v7557 = vlaneseq
    %v7558 = vshrl.u32 %v7557, 7
    %v7559 = vsub.s32 3, %v7558
    %v7560 = vrot.slane %v7269, %v7559
    %v7565 = vadd.f32 %v7548, %v7497
    %v7566 = vadd.f32 %v7552, %v7499
    %v7567 = vadd.f32 %v7556, %v7538
    %v7568 = vadd.f32 %v7560, %v7540
    %v7569 = vld [vmem:[#allocation12] sm:$0xff]
    %v7570 = vld [vmem:[#allocation12 + $0x8] sm:$0xff]
    %v7571 = vld [vmem:[#allocation12 + $0x10] sm:$0xff]
    %v7572 = vld [vmem:[#allocation12 + $0x18] sm:$0xff]
    %v7573 = vld [vmem:[#allocation12 + $0x20] sm:$0xff]
    %v7574 = vld [vmem:[#allocation12 + $0x28] sm:$0xff]
    %v7575 = vld [vmem:[#allocation12 + $0x30] sm:$0xff]
    %v7576 = vld [vmem:[#allocation12 + $0x38] sm:$0xff]
    %v7577 = vld [vmem:[#allocation12 + $0x40] sm:$0xff]
    %v7578 = vld [vmem:[#allocation12 + $0x48] sm:$0xff]
    %v7579 = vld [vmem:[#allocation12 + $0x50] sm:$0xff]
    %v7580 = vld [vmem:[#allocation12 + $0x58] sm:$0xff]
    %v7581 = vld [vmem:[#allocation12 + $0x60] sm:$0xff]
    %v7582 = vld [vmem:[#allocation12 + $0x68] sm:$0xff]
    %v7583 = vld [vmem:[#allocation12 + $0x70] sm:$0xff]
    %v7584 = vld [vmem:[#allocation12 + $0x78] sm:$0xff]
    %v7585 = vld [vmem:[#allocation12 + $0x80] sm:$0xff]
    %v7586 = vld [vmem:[#allocation12 + $0x88] sm:$0xff]
    %v7587 = vld [vmem:[#allocation12 + $0x90] sm:$0xff]
    %v7588 = vld [vmem:[#allocation12 + $0x98] sm:$0xff]
    %v7589 = vld [vmem:[#allocation12 + $0xa0] sm:$0xff]
    %v7590 = vld [vmem:[#allocation12 + $0xa8] sm:$0xff]
    %v7591 = vld [vmem:[#allocation12 + $0xb0] sm:$0xff]
    %v7592 = vld [vmem:[#allocation12 + $0xb8] sm:$0xff]
    %v7593 = vld [vmem:[#allocation12 + $0xc0] sm:$0xff]
    %v7594 = vld [vmem:[#allocation12 + $0xc8] sm:$0xff]
    %v7595 = vld [vmem:[#allocation12 + $0xd0] sm:$0xff]
    %v7596 = vld [vmem:[#allocation12 + $0xd8] sm:$0xff]
    %v7597 = vld [vmem:[#allocation12 + $0xe0] sm:$0xff]
    %v7598 = vld [vmem:[#allocation12 + $0xe8] sm:$0xff]
    %v7599 = vld [vmem:[#allocation12 + $0xf0] sm:$0xff]
    %v7600 = vld [vmem:[#allocation12 + $0xf8] sm:$0xff]
    %v7633 = vunpack.c.l.b16 %v7569
    %v7634 = vunpack.c.h.b16 %v7569
    %v7635 = vunpack.c.l.b16 %v7570
    %v7636 = vunpack.c.h.b16 %v7570
    %v7637 = vunpack.c.l.b16 %v7571
    %v7638 = vunpack.c.h.b16 %v7571
    %v7639 = vunpack.c.l.b16 %v7572
    %v7640 = vunpack.c.h.b16 %v7572
    %v7641 = vunpack.c.l.b16 %v7573
    %v7642 = vunpack.c.h.b16 %v7573
    %v7643 = vunpack.c.l.b16 %v7574
    %v7644 = vunpack.c.h.b16 %v7574
    %v7645 = vunpack.c.l.b16 %v7575
    %v7646 = vunpack.c.h.b16 %v7575
    %v7647 = vunpack.c.l.b16 %v7576
    %v7648 = vunpack.c.h.b16 %v7576
    %v7649 = vunpack.c.l.b16 %v7577
    %v7650 = vunpack.c.h.b16 %v7577
    %v7651 = vunpack.c.l.b16 %v7578
    %v7652 = vunpack.c.h.b16 %v7578
    %v7653 = vunpack.c.l.b16 %v7579
    %v7654 = vunpack.c.h.b16 %v7579
    %v7655 = vunpack.c.l.b16 %v7580
    %v7656 = vunpack.c.h.b16 %v7580
    %v7657 = vunpack.c.l.b16 %v7581
    %v7658 = vunpack.c.h.b16 %v7581
    %v7659 = vunpack.c.l.b16 %v7582
    %v7660 = vunpack.c.h.b16 %v7582
    %v7661 = vunpack.c.l.b16 %v7583
    %v7662 = vunpack.c.h.b16 %v7583
    %v7663 = vunpack.c.l.b16 %v7584
    %v7664 = vunpack.c.h.b16 %v7584
    %v7665 = vunpack.c.l.b16 %v7585
    %v7666 = vunpack.c.h.b16 %v7585
    %v7667 = vunpack.c.l.b16 %v7586
    %v7668 = vunpack.c.h.b16 %v7586
    %v7669 = vunpack.c.l.b16 %v7587
    %v7670 = vunpack.c.h.b16 %v7587
    %v7671 = vunpack.c.l.b16 %v7588
    %v7672 = vunpack.c.h.b16 %v7588
    %v7673 = vunpack.c.l.b16 %v7589
    %v7674 = vunpack.c.h.b16 %v7589
    %v7675 = vunpack.c.l.b16 %v7590
    %v7676 = vunpack.c.h.b16 %v7590
    %v7677 = vunpack.c.l.b16 %v7591
    %v7678 = vunpack.c.h.b16 %v7591
    %v7679 = vunpack.c.l.b16 %v7592
    %v7680 = vunpack.c.h.b16 %v7592
    %v7681 = vunpack.c.l.b16 %v7593
    %v7682 = vunpack.c.h.b16 %v7593
    %v7683 = vunpack.c.l.b16 %v7594
    %v7684 = vunpack.c.h.b16 %v7594
    %v7685 = vunpack.c.l.b16 %v7595
    %v7686 = vunpack.c.h.b16 %v7595
    %v7687 = vunpack.c.l.b16 %v7596
    %v7688 = vunpack.c.h.b16 %v7596
    %v7689 = vunpack.c.l.b16 %v7597
    %v7690 = vunpack.c.h.b16 %v7597
    %v7691 = vunpack.c.l.b16 %v7598
    %v7692 = vunpack.c.h.b16 %v7598
    %v7693 = vunpack.c.l.b16 %v7599
    %v7694 = vunpack.c.h.b16 %v7599
    %v7695 = vunpack.c.l.b16 %v7600
    %v7696 = vunpack.c.h.b16 %v7600
    %v7697 = vpack.c.b16 %v7637, %v7633
    %v7698 = vpack.c.b16 %v7638, %v7634
    %v7699 = vpack.c.b16 %v7639, %v7635
    %v7700 = vpack.c.b16 %v7640, %v7636
    %v7701 = vpack.c.b16 %v7645, %v7641
    %v7702 = vpack.c.b16 %v7646, %v7642
    %v7703 = vpack.c.b16 %v7647, %v7643
    %v7704 = vpack.c.b16 %v7648, %v7644
    %v7705 = vpack.c.b16 %v7653, %v7649
    %v7706 = vpack.c.b16 %v7654, %v7650
    %v7707 = vpack.c.b16 %v7655, %v7651
    %v7708 = vpack.c.b16 %v7656, %v7652
    %v7709 = vpack.c.b16 %v7661, %v7657
    %v7710 = vpack.c.b16 %v7662, %v7658
    %v7711 = vpack.c.b16 %v7663, %v7659
    %v7712 = vpack.c.b16 %v7664, %v7660
    %v7713 = vpack.c.b16 %v7669, %v7665
    %v7714 = vpack.c.b16 %v7670, %v7666
    %v7715 = vpack.c.b16 %v7671, %v7667
    %v7716 = vpack.c.b16 %v7672, %v7668
    %v7717 = vpack.c.b16 %v7677, %v7673
    %v7718 = vpack.c.b16 %v7678, %v7674
    %v7719 = vpack.c.b16 %v7679, %v7675
    %v7720 = vpack.c.b16 %v7680, %v7676
    %v7721 = vpack.c.b16 %v7685, %v7681
    %v7722 = vpack.c.b16 %v7686, %v7682
    %v7723 = vpack.c.b16 %v7687, %v7683
    %v7724 = vpack.c.b16 %v7688, %v7684
    %v7725 = vpack.c.b16 %v7693, %v7689
    %v7726 = vpack.c.b16 %v7694, %v7690
    %v7727 = vpack.c.b16 %v7695, %v7691
    %v7728 = vpack.c.b16 %v7696, %v7692
    %7761 = vmatprep.subr.bf16.mxu0 %v7698
    %7762 = vmatpush1.bf16.msra.mxu0 %v7697
    %7763 = vmatprep.subr.bf16.mxu0 %v7702
    %7764 = vmatpush1.bf16.msra.mxu0 %v7701
    %7765 = vmatprep.subr.bf16.mxu0 %v7706
    %7766 = vmatpush1.bf16.msra.mxu0 %v7705
    %7767 = vmatprep.subr.bf16.mxu0 %v7710
    %7768 = vmatpush1.bf16.msra.mxu0 %v7709
    %7769 = vmatprep.subr.bf16.mxu0 %v7714
    %7770 = vmatpush1.bf16.msra.mxu0 %v7713
    %7771 = vmatprep.subr.bf16.mxu0 %v7718
    %7772 = vmatpush1.bf16.msra.mxu0 %v7717
    %7773 = vmatprep.subr.bf16.mxu0 %v7722
    %7774 = vmatpush1.bf16.msra.mxu0 %v7721
    %7775 = vmatprep.subr.bf16.mxu0 %v7726
    %7776 = vmatpush1.bf16.msra.mxu0 %v7725
    %7777 = vmatprep.subr.bf16.mxu0 0
    %7778 = vmatpush1.bf16.msra.mxu0 0
    %7779 = vmatprep.subr.bf16.mxu0 0
    %7780 = vmatpush1.bf16.msra.mxu0 0
    %7781 = vmatprep.subr.bf16.mxu0 0
    %7782 = vmatpush1.bf16.msra.mxu0 0
    %7783 = vmatprep.subr.bf16.mxu0 0
    %7784 = vmatpush1.bf16.msra.mxu0 0
    %7785 = vmatprep.subr.bf16.mxu0 0
    %7786 = vmatpush1.bf16.msra.mxu0 0
    %7787 = vmatprep.subr.bf16.mxu0 0
    %7788 = vmatpush1.bf16.msra.mxu0 0
    %7789 = vmatprep.subr.bf16.mxu0 0
    %7790 = vmatpush1.bf16.msra.mxu0 0
    %7791 = vmatprep.subr.bf16.mxu0 0
    %7792 = vmatpush1.bf16.msra.mxu0 0
    %7793 = vmatprep.mubr.bf16.mxu0 0
    %7794 = vmatmul.mubr.bf16.gmra.mrb[0].mxu0 %v6960
    %v7795 = vpop.f32.mrb[0].mxu0
    %v7796 = vadd.f32 0.0, %v7795
    %v7797 = vpop.f32.mrb[0].mxu0
    %v7798 = vadd.f32 0.0, %v7797
    %v7799 = vpop.f32.mrb[0].mxu0
    %v7800 = vpop.f32.mrb[0].mxu0
    %7801 = vdwg.mxu0
    %7802 = vmatprep.subr.bf16.mxu0 %v7700
    %7803 = vmatpush1.bf16.msra.mxu0 %v7699
    %7804 = vmatprep.subr.bf16.mxu0 %v7704
    %7805 = vmatpush1.bf16.msra.mxu0 %v7703
    %7806 = vmatprep.subr.bf16.mxu0 %v7708
    %7807 = vmatpush1.bf16.msra.mxu0 %v7707
    %7808 = vmatprep.subr.bf16.mxu0 %v7712
    %7809 = vmatpush1.bf16.msra.mxu0 %v7711
    %7810 = vmatprep.subr.bf16.mxu0 %v7716
    %7811 = vmatpush1.bf16.msra.mxu0 %v7715
    %7812 = vmatprep.subr.bf16.mxu0 %v7720
    %7813 = vmatpush1.bf16.msra.mxu0 %v7719
    %7814 = vmatprep.subr.bf16.mxu0 %v7724
    %7815 = vmatpush1.bf16.msra.mxu0 %v7723
    %7816 = vmatprep.subr.bf16.mxu0 %v7728
    %7817 = vmatpush1.bf16.msra.mxu0 %v7727
    %7818 = vmatprep.subr.bf16.mxu0 0
    %7819 = vmatpush1.bf16.msra.mxu0 0
    %7820 = vmatprep.subr.bf16.mxu0 0
    %7821 = vmatpush1.bf16.msra.mxu0 0
    %7822 = vmatprep.subr.bf16.mxu0 0
    %7823 = vmatpush1.bf16.msra.mxu0 0
    %7824 = vmatprep.subr.bf16.mxu0 0
    %7825 = vmatpush1.bf16.msra.mxu0 0
    %7826 = vmatprep.subr.bf16.mxu0 0
    %7827 = vmatpush1.bf16.msra.mxu0 0
    %7828 = vmatprep.subr.bf16.mxu0 0
    %7829 = vmatpush1.bf16.msra.mxu0 0
    %7830 = vmatprep.subr.bf16.mxu0 0
    %7831 = vmatpush1.bf16.msra.mxu0 0
    %7832 = vmatprep.subr.bf16.mxu0 0
    %7833 = vmatpush1.bf16.msra.mxu0 0
    %7834 = vmatprep.mubr.bf16.mxu0 0
    %7835 = vmatmul.mubr.bf16.gmra.mrb[0].mxu0 %v6960
    %v7836 = vpop.f32.mrb[0].mxu0
    %v7837 = vadd.f32 0.0, %v7836
    %v7838 = vpop.f32.mrb[0].mxu0
    %v7839 = vadd.f32 0.0, %v7838
    %v7840 = vpop.f32.mrb[0].mxu0
    %v7841 = vpop.f32.mrb[0].mxu0
    %7842 = vdwg.mxu0
    %v7843 = vadd.f32 %v7565, %v7796
    %v7844 = vadd.f32 %v7566, %v7798
    %v7845 = vadd.f32 %v7567, %v7837
    %v7846 = vadd.f32 %v7568, %v7839
    %v7847 = vxor.u32 %v7843, 2147483648
    %v7848 = vxor.u32 %v7844, 2147483648
    %v7849 = vxor.u32 %v7845, 2147483648
    %v7850 = vmul.f32 %v7847, 1.442695
    %v7851 = vpow.pop %v7850
    %v7852 = vmul.f32 %v7848, 1.442695
    %v7853 = vpow.pop %v7852
    %v7854 = vmul.f32 %v7849, 1.442695
    %v7855 = vpow.pop %v7854
    %v7856 = vadd.f32 %v7851, 1.0
    %v7857 = vadd.f32 %v7853, 1.0
    %v7858 = vadd.f32 %v7855, 1.0
    %v7859 = vrcp.pop %v7856
    %v7860 = vmul.f32 1.0, %v7859
    %v7861 = vrcp.pop %v7857
    %v7862 = vmul.f32 1.0, %v7861
    %v7863 = vrcp.pop %v7858
    %v7864 = vmul.f32 1.0, %v7863
    %v7865 = vtanh.pop %v7846
    %v7866 = vmul.f32 %v7862, %v6957
    %v7867 = vmul.f32 %v7860, %v7865
    %v7868 = vadd.f32 %v7866, %v7867
    %v7869 = vtanh.pop %v7868
    %v7870 = vmul.f32 %v7864, %v7869
    %7871 = vst [vmem:[#allocation3 + $0x38] sm:$0xff] %v7870
    %7872 = vst [vmem:[%s17] sm:$0xff] %v7267
    %7873 = vst [vmem:[%s579] sm:$0xff] %v7870
    %7874 = vst [vmem:[%s18] sm:$0xff] %v7265
    %7875 = vst [vmem:[%s581] sm:$0xff] %v7868
    %v7876 = vld [vmem:[#allocation3] sm:$0xff]
    %v7877 = vld [vmem:[#allocation3 + $0x8] sm:$0xff]
    %v7878 = vld [vmem:[#allocation3 + $0x10] sm:$0xff]
    %v7879 = vld [vmem:[#allocation3 + $0x18] sm:$0xff]
    %v7880 = vld [vmem:[#allocation3 + $0x20] sm:$0xff]
    %v7881 = vld [vmem:[#allocation3 + $0x28] sm:$0xff]
    %v7882 = vld [vmem:[#allocation3 + $0x30] sm:$0xff]
    %v7883 = vld [vmem:[#allocation3 + $0x38] sm:$0xff]
    %v7884 = vpack.c.bf16 %v7877, %v7876
    %v7885 = vpack.c.bf16 %v7879, %v7878
    %v7886 = vpack.c.bf16 %v7881, %v7880
    %v7887 = vpack.c.bf16 %v7883, %v7882
    %v7888 = vld [vmem:[%s9] sm:$0xf]
    %v7889 = vld [vmem:[%s9 + $0x4] sm:$0xf]
    %v7890 = vld [vmem:[%s9 + $0x8] sm:$0xf]
    %v7891 = vld [vmem:[%s9 + $0xc] sm:$0xf]
    %v7892 = vld [vmem:[%s9 + $0x10] sm:$0xf]
    %v7893 = vld [vmem:[%s9 + $0x14] sm:$0xf]
    %v7894 = vld [vmem:[%s9 + $0x18] sm:$0xf]
    %v7895 = vld [vmem:[%s9 + $0x1c] sm:$0xf]
    %v7896 = vld [vmem:[%s9 + $0x20] sm:$0xf]
    %v7897 = vld [vmem:[%s9 + $0x24] sm:$0xf]
    %v7898 = vld [vmem:[%s9 + $0x28] sm:$0xf]
    %v7899 = vld [vmem:[%s9 + $0x2c] sm:$0xf]
    %v7900 = vld [vmem:[%s9 + $0x30] sm:$0xf]
    %v7901 = vld [vmem:[%s9 + $0x34] sm:$0xf]
    %v7902 = vld [vmem:[%s9 + $0x38] sm:$0xf]
    %v7903 = vld [vmem:[%s9 + $0x3c] sm:$0xf]
    %v7904 = vld [vmem:[%s10] sm:$0xf]
    %v7905 = vld [vmem:[%s10 + $0x4] sm:$0xf]
    %v7906 = vld [vmem:[%s10 + $0x8] sm:$0xf]
    %v7907 = vld [vmem:[%s10 + $0xc] sm:$0xf]
    %v7908 = vld [vmem:[%s10 + $0x10] sm:$0xf]
    %v7909 = vld [vmem:[%s10 + $0x14] sm:$0xf]
    %v7910 = vld [vmem:[%s10 + $0x18] sm:$0xf]
    %v7911 = vld [vmem:[%s10 + $0x1c] sm:$0xf]
    %v7912 = vld [vmem:[%s10 + $0x20] sm:$0xf]
    %v7913 = vld [vmem:[%s10 + $0x24] sm:$0xf]
    %v7914 = vld [vmem:[%s10 + $0x28] sm:$0xf]
    %v7915 = vld [vmem:[%s10 + $0x2c] sm:$0xf]
    %v7916 = vld [vmem:[%s10 + $0x30] sm:$0xf]
    %v7917 = vld [vmem:[%s10 + $0x34] sm:$0xf]
    %v7918 = vld [vmem:[%s10 + $0x38] sm:$0xf]
    %v7919 = vld [vmem:[%s10 + $0x3c] sm:$0xf]
    %v7936 = vunpack.c.l.b16 %v7904
    %v7937 = vunpack.c.l.b16 %v7905
    %v7938 = vunpack.c.l.b16 %v7906
    %v7939 = vunpack.c.l.b16 %v7907
    %v7940 = vunpack.c.l.b16 %v7908
    %v7941 = vunpack.c.l.b16 %v7909
    %v7942 = vunpack.c.l.b16 %v7910
    %v7943 = vunpack.c.l.b16 %v7911
    %v7944 = vunpack.c.l.b16 %v7912
    %v7945 = vunpack.c.l.b16 %v7913
    %v7946 = vunpack.c.l.b16 %v7914
    %v7947 = vunpack.c.l.b16 %v7915
    %v7948 = vunpack.c.l.b16 %v7916
    %v7949 = vunpack.c.l.b16 %v7917
    %v7950 = vunpack.c.l.b16 %v7918
    %v7951 = vunpack.c.l.b16 %v7919
    %v7952 = vpack.c.b16 %v7937, %v7936
    %v7953 = vpack.c.b16 %v7939, %v7938
    %v7954 = vpack.c.b16 %v7941, %v7940
    %v7955 = vpack.c.b16 %v7943, %v7942
    %v7956 = vpack.c.b16 %v7945, %v7944
    %v7957 = vpack.c.b16 %v7947, %v7946
    %v7958 = vpack.c.b16 %v7949, %v7948
    %v7959 = vpack.c.b16 %v7951, %v7950
    %7968 = vmatprep.subr.bf16.mxu0 0
    %7969 = vmatpush1.bf16.msra.mxu0 %v7952
    %7970 = vmatprep.subr.bf16.mxu0 0
    %7971 = vmatpush1.bf16.msra.mxu0 %v7953
    %7972 = vmatprep.subr.bf16.mxu0 0
    %7973 = vmatpush1.bf16.msra.mxu0 %v7954
    %7974 = vmatprep.subr.bf16.mxu0 0
    %7975 = vmatpush1.bf16.msra.mxu0 %v7955
    %7976 = vmatprep.subr.bf16.mxu0 0
    %7977 = vmatpush1.bf16.msra.mxu0 %v7956
    %7978 = vmatprep.subr.bf16.mxu0 0
    %7979 = vmatpush1.bf16.msra.mxu0 %v7957
    %7980 = vmatprep.subr.bf16.mxu0 0
    %7981 = vmatpush1.bf16.msra.mxu0 %v7958
    %7982 = vmatprep.subr.bf16.mxu0 0
    %7983 = vmatpush1.bf16.msra.mxu0 %v7959
    %7984 = vmatprep.subr.bf16.mxu0 0
    %7985 = vmatpush1.bf16.msra.mxu0 0
    %7986 = vmatprep.subr.bf16.mxu0 0
    %7987 = vmatpush1.bf16.msra.mxu0 0
    %7988 = vmatprep.subr.bf16.mxu0 0
    %7989 = vmatpush1.bf16.msra.mxu0 0
    %7990 = vmatprep.subr.bf16.mxu0 0
    %7991 = vmatpush1.bf16.msra.mxu0 0
    %7992 = vmatprep.subr.bf16.mxu0 0
    %7993 = vmatpush1.bf16.msra.mxu0 0
    %7994 = vmatprep.subr.bf16.mxu0 0
    %7995 = vmatpush1.bf16.msra.mxu0 0
    %7996 = vmatprep.subr.bf16.mxu0 0
    %7997 = vmatpush1.bf16.msra.mxu0 0
    %7998 = vmatprep.subr.bf16.mxu0 0
    %7999 = vmatpush1.bf16.msra.mxu0 0
    %8000 = vmatprep.mubr.bf16.mxu0 0
    %8001 = vmatmul.mubr.bf16.gmra.mrb[0].mxu0 %v7884
    %v8002 = vpop.f32.mrb[0].mxu0
    %v8003 = vadd.f32 0.0, %v8002
    %v8004 = vpop.f32.mrb[0].mxu0
    %v8005 = vpop.f32.mrb[0].mxu0
    %v8006 = vadd.f32 0.0, %v8005
    %v8007 = vpop.f32.mrb[0].mxu0
    %8008 = vmatprep.mubr.bf16.mxu0 0
    %8009 = vmatmul.mubr.bf16.gmra.mrb[0].mxu0 %v7885
    %v8010 = vpop.f32.mrb[0].mxu0
    %v8011 = vadd.f32 0.0, %v8010
    %v8012 = vpop.f32.mrb[0].mxu0
    %v8013 = vpop.f32.mrb[0].mxu0
    %v8014 = vadd.f32 0.0, %v8013
    %v8015 = vpop.f32.mrb[0].mxu0
    %8016 = vmatprep.mubr.bf16.mxu0 0
    %8017 = vmatmul.mubr.bf16.gmra.mrb[0].mxu0 %v7886
    %v8018 = vpop.f32.mrb[0].mxu0
    %v8019 = vadd.f32 0.0, %v8018
    %v8020 = vpop.f32.mrb[0].mxu0
    %v8021 = vpop.f32.mrb[0].mxu0
    %v8022 = vadd.f32 0.0, %v8021
    %v8023 = vpop.f32.mrb[0].mxu0
    %8024 = vmatprep.mubr.bf16.mxu0 0
    %8025 = vmatmul.mubr.bf16.gmra.mrb[0].mxu0 %v7887
    %v8026 = vpop.f32.mrb[0].mxu0
    %v8027 = vadd.f32 0.0, %v8026
    %v8028 = vpop.f32.mrb[0].mxu0
    %v8029 = vpop.f32.mrb[0].mxu0
    %v8030 = vadd.f32 0.0, %v8029
    %v8031 = vpop.f32.mrb[0].mxu0
    %8032 = vdwg.mxu0
    %v8049 = vunpack.c.l.b16 %v7888
    %v8050 = vunpack.c.l.b16 %v7889
    %v8051 = vunpack.c.l.b16 %v7890
    %v8052 = vunpack.c.l.b16 %v7891
    %v8053 = vunpack.c.l.b16 %v7892
    %v8054 = vunpack.c.l.b16 %v7893
    %v8055 = vunpack.c.l.b16 %v7894
    %v8056 = vunpack.c.l.b16 %v7895
    %v8057 = vunpack.c.l.b16 %v7896
    %v8058 = vunpack.c.l.b16 %v7897
    %v8059 = vunpack.c.l.b16 %v7898
    %v8060 = vunpack.c.l.b16 %v7899
    %v8061 = vunpack.c.l.b16 %v7900
    %v8062 = vunpack.c.l.b16 %v7901
    %v8063 = vunpack.c.l.b16 %v7902
    %v8064 = vunpack.c.l.b16 %v7903
    %v8065 = vpack.c.b16 %v8050, %v8049
    %v8066 = vpack.c.b16 %v8052, %v8051
    %v8067 = vpack.c.b16 %v8054, %v8053
    %v8068 = vpack.c.b16 %v8056, %v8055
    %v8069 = vpack.c.b16 %v8058, %v8057
    %v8070 = vpack.c.b16 %v8060, %v8059
    %v8071 = vpack.c.b16 %v8062, %v8061
    %v8072 = vpack.c.b16 %v8064, %v8063
    %8081 = vmatprep.subr.bf16.mxu0 0
    %8082 = vmatpush1.bf16.msra.mxu0 %v8065
    %8083 = vmatprep.subr.bf16.mxu0 0
    %8084 = vmatpush1.bf16.msra.mxu0 %v8066
    %8085 = vmatprep.subr.bf16.mxu0 0
    %8086 = vmatpush1.bf16.msra.mxu0 %v8067
    %8087 = vmatprep.subr.bf16.mxu0 0
    %8088 = vmatpush1.bf16.msra.mxu0 %v8068
    %8089 = vmatprep.subr.bf16.mxu0 0
    %8090 = vmatpush1.bf16.msra.mxu0 %v8069
    %8091 = vmatprep.subr.bf16.mxu0 0
    %8092 = vmatpush1.bf16.msra.mxu0 %v8070
    %8093 = vmatprep.subr.bf16.mxu0 0
    %8094 = vmatpush1.bf16.msra.mxu0 %v8071
    %8095 = vmatprep.subr.bf16.mxu0 0
    %8096 = vmatpush1.bf16.msra.mxu0 %v8072
    %8097 = vmatprep.subr.bf16.mxu0 0
    %8098 = vmatpush1.bf16.msra.mxu0 0
    %8099 = vmatprep.subr.bf16.mxu0 0
    %8100 = vmatpush1.bf16.msra.mxu0 0
    %8101 = vmatprep.subr.bf16.mxu0 0
    %8102 = vmatpush1.bf16.msra.mxu0 0
    %8103 = vmatprep.subr.bf16.mxu0 0
    %8104 = vmatpush1.bf16.msra.mxu0 0
    %8105 = vmatprep.subr.bf16.mxu0 0
    %8106 = vmatpush1.bf16.msra.mxu0 0
    %8107 = vmatprep.subr.bf16.mxu0 0
    %8108 = vmatpush1.bf16.msra.mxu0 0
    %8109 = vmatprep.subr.bf16.mxu0 0
    %8110 = vmatpush1.bf16.msra.mxu0 0
    %8111 = vmatprep.subr.bf16.mxu0 0
    %8112 = vmatpush1.bf16.msra.mxu0 0
    %8113 = vmatprep.mubr.bf16.mxu0 0
    %8114 = vmatmul.mubr.bf16.gmra.mrb[0].mxu0 %v181
    %v8115 = vpop.f32.mrb[0].mxu0
    %v8116 = vadd.f32 %v8003, %v8115
    %v8117 = vpop.f32.mrb[0].mxu0
    %v8118 = vpop.f32.mrb[0].mxu0
    %v8119 = vadd.f32 %v8006, %v8118
    %v8120 = vpop.f32.mrb[0].mxu0
    %8121 = vmatprep.mubr.bf16.mxu0 0
    %8122 = vmatmul.mubr.bf16.gmra.mrb[0].mxu0 %v182
    %v8123 = vpop.f32.mrb[0].mxu0
    %v8124 = vadd.f32 %v8011, %v8123
    %v8125 = vpop.f32.mrb[0].mxu0
    %v8126 = vpop.f32.mrb[0].mxu0
    %v8127 = vadd.f32 %v8014, %v8126
    %v8128 = vpop.f32.mrb[0].mxu0
    %8129 = vmatprep.mubr.bf16.mxu0 0
    %8130 = vmatmul.mubr.bf16.gmra.mrb[0].mxu0 %v183
    %v8131 = vpop.f32.mrb[0].mxu0
    %v8132 = vadd.f32 %v8019, %v8131
    %v8133 = vpop.f32.mrb[0].mxu0
    %v8134 = vpop.f32.mrb[0].mxu0
    %v8135 = vadd.f32 %v8022, %v8134
    %v8136 = vpop.f32.mrb[0].mxu0
    %8137 = vmatprep.mubr.bf16.mxu0 0
    %8138 = vmatmul.mubr.bf16.gmra.mrb[0].mxu0 %v184
    %v8139 = vpop.f32.mrb[0].mxu0
    %v8140 = vadd.f32 %v8027, %v8139
    %v8141 = vpop.f32.mrb[0].mxu0
    %v8142 = vpop.f32.mrb[0].mxu0
    %v8143 = vadd.f32 %v8030, %v8142
    %v8144 = vpop.f32.mrb[0].mxu0
    %8145 = vdwg.mxu0
    %v8146 = vld [vmem:[%s11] sm:$0x1]
    %v8148 = vlaneseq
    %v8149 = vshrl.u32 %v8148, 7
    %v8150 = vsub.s32 0, %v8149
    %v8151 = vrot.slane %v8146, %v8150
    %v8153 = vadd.f32 %v8116, %v8151
    %v8154 = vadd.f32 %v8119, %v8151
    %v8155 = vadd.f32 %v8124, %v8151
    %v8156 = vadd.f32 %v8127, %v8151
    %v8157 = vadd.f32 %v8132, %v8151
    %v8158 = vadd.f32 %v8135, %v8151
    %v8159 = vadd.f32 %v8140, %v8151
    %v8160 = vadd.f32 %v8143, %v8151
    %v8161 = vmul.f32 %v8153, 0.01
    %v8162 = vmul.f32 %v8154, 0.01
    %v8163 = vmul.f32 %v8155, 0.01
    %v8164 = vmul.f32 %v8156, 0.01
    %v8165 = vmul.f32 %v8157, 0.01
    %v8166 = vmul.f32 %v8158, 0.01
    %v8167 = vmul.f32 %v8159, 0.01
    %v8168 = vmul.f32 %v8160, 0.01
    %v8169 = vmax.f32 %v8153, %v8161
    %v8170 = vmax.f32 %v8154, %v8162
    %v8171 = vmax.f32 %v8155, %v8163
    %v8172 = vmax.f32 %v8156, %v8164
    %v8173 = vmax.f32 %v8157, %v8165
    %v8174 = vmax.f32 %v8158, %v8166
    %v8175 = vmax.f32 %v8159, %v8167
    %v8176 = vmax.f32 %v8160, %v8168
    %v8177 = vpack.c.bf16 %v8170, %v8169
    %v8178 = vpack.c.bf16 %v8172, %v8171
    %v8179 = vpack.c.bf16 %v8174, %v8173
    %v8180 = vpack.c.bf16 %v8176, %v8175
    %v8181 = vld [vmem:[%s12] sm:$0xf]
    %v8182 = vld [vmem:[%s12 + $0x4] sm:$0xf]
    %v8183 = vld [vmem:[%s12 + $0x8] sm:$0xf]
    %v8184 = vld [vmem:[%s12 + $0xc] sm:$0xf]
    %v8185 = vld [vmem:[%s12 + $0x10] sm:$0xf]
    %v8186 = vld [vmem:[%s12 + $0x14] sm:$0xf]
    %v8187 = vld [vmem:[%s12 + $0x18] sm:$0xf]
    %v8188 = vld [vmem:[%s12 + $0x1c] sm:$0xf]
    %v8189 = vld [vmem:[%s12 + $0x20] sm:$0xf]
    %v8190 = vld [vmem:[%s12 + $0x24] sm:$0xf]
    %v8191 = vld [vmem:[%s12 + $0x28] sm:$0xf]
    %v8192 = vld [vmem:[%s12 + $0x2c] sm:$0xf]
    %v8193 = vld [vmem:[%s12 + $0x30] sm:$0xf]
    %v8194 = vld [vmem:[%s12 + $0x34] sm:$0xf]
    %v8195 = vld [vmem:[%s12 + $0x38] sm:$0xf]
    %v8196 = vld [vmem:[%s12 + $0x3c] sm:$0xf]
    %v8197 = vld [vmem:[%s13] sm:$0x1]
    %v8199 = vlaneseq
    %v8200 = vshrl.u32 %v8199, 7
    %v8201 = vsub.s32 0, %v8200
    %v8202 = vrot.slane %v8197, %v8201
    %v8220 = vunpack.c.l.b16 %v8181
    %v8221 = vunpack.c.l.b16 %v8182
    %v8222 = vunpack.c.l.b16 %v8183
    %v8223 = vunpack.c.l.b16 %v8184
    %v8224 = vunpack.c.l.b16 %v8185
    %v8225 = vunpack.c.l.b16 %v8186
    %v8226 = vunpack.c.l.b16 %v8187
    %v8227 = vunpack.c.l.b16 %v8188
    %v8228 = vunpack.c.l.b16 %v8189
    %v8229 = vunpack.c.l.b16 %v8190
    %v8230 = vunpack.c.l.b16 %v8191
    %v8231 = vunpack.c.l.b16 %v8192
    %v8232 = vunpack.c.l.b16 %v8193
    %v8233 = vunpack.c.l.b16 %v8194
    %v8234 = vunpack.c.l.b16 %v8195
    %v8235 = vunpack.c.l.b16 %v8196
    %v8236 = vpack.c.b16 %v8221, %v8220
    %v8237 = vpack.c.b16 %v8223, %v8222
    %v8238 = vpack.c.b16 %v8225, %v8224
    %v8239 = vpack.c.b16 %v8227, %v8226
    %v8240 = vpack.c.b16 %v8229, %v8228
    %v8241 = vpack.c.b16 %v8231, %v8230
    %v8242 = vpack.c.b16 %v8233, %v8232
    %v8243 = vpack.c.b16 %v8235, %v8234
    %8252 = vmatprep.subr.bf16.mxu0 0
    %8253 = vmatpush1.bf16.msra.mxu0 %v8236
    %8254 = vmatprep.subr.bf16.mxu0 0
    %8255 = vmatpush1.bf16.msra.mxu0 %v8237
    %8256 = vmatprep.subr.bf16.mxu0 0
    %8257 = vmatpush1.bf16.msra.mxu0 %v8238
    %8258 = vmatprep.subr.bf16.mxu0 0
    %8259 = vmatpush1.bf16.msra.mxu0 %v8239
    %8260 = vmatprep.subr.bf16.mxu0 0
    %8261 = vmatpush1.bf16.msra.mxu0 %v8240
    %8262 = vmatprep.subr.bf16.mxu0 0
    %8263 = vmatpush1.bf16.msra.mxu0 %v8241
    %8264 = vmatprep.subr.bf16.mxu0 0
    %8265 = vmatpush1.bf16.msra.mxu0 %v8242
    %8266 = vmatprep.subr.bf16.mxu0 0
    %8267 = vmatpush1.bf16.msra.mxu0 %v8243
    %8268 = vmatprep.subr.bf16.mxu0 0
    %8269 = vmatpush1.bf16.msra.mxu0 0
    %8270 = vmatprep.subr.bf16.mxu0 0
    %8271 = vmatpush1.bf16.msra.mxu0 0
    %8272 = vmatprep.subr.bf16.mxu0 0
    %8273 = vmatpush1.bf16.msra.mxu0 0
    %8274 = vmatprep.subr.bf16.mxu0 0
    %8275 = vmatpush1.bf16.msra.mxu0 0
    %8276 = vmatprep.subr.bf16.mxu0 0
    %8277 = vmatpush1.bf16.msra.mxu0 0
    %8278 = vmatprep.subr.bf16.mxu0 0
    %8279 = vmatpush1.bf16.msra.mxu0 0
    %8280 = vmatprep.subr.bf16.mxu0 0
    %8281 = vmatpush1.bf16.msra.mxu0 0
    %8282 = vmatprep.subr.bf16.mxu0 0
    %8283 = vmatpush1.bf16.msra.mxu0 0
    %8284 = vmatprep.mubr.bf16.mxu0 0
    %8285 = vmatmul.mubr.bf16.gmra.mrb[0].mxu0 %v8177
    %v8286 = vpop.f32.mrb[0].mxu0
    %v8287 = vadd.f32 %v8202, %v8286
    %v8288 = vpop.f32.mrb[0].mxu0
    %v8289 = vpop.f32.mrb[0].mxu0
    %v8290 = vadd.f32 %v8202, %v8289
    %v8291 = vpop.f32.mrb[0].mxu0
    %8292 = vmatprep.mubr.bf16.mxu0 0
    %8293 = vmatmul.mubr.bf16.gmra.mrb[0].mxu0 %v8178
    %v8294 = vpop.f32.mrb[0].mxu0
    %v8295 = vadd.f32 %v8202, %v8294
    %v8296 = vpop.f32.mrb[0].mxu0
    %v8297 = vpop.f32.mrb[0].mxu0
    %v8298 = vadd.f32 %v8202, %v8297
    %v8299 = vpop.f32.mrb[0].mxu0
    %8300 = vmatprep.mubr.bf16.mxu0 0
    %8301 = vmatmul.mubr.bf16.gmra.mrb[0].mxu0 %v8179
    %v8302 = vpop.f32.mrb[0].mxu0
    %v8303 = vadd.f32 %v8202, %v8302
    %v8304 = vpop.f32.mrb[0].mxu0
    %v8305 = vpop.f32.mrb[0].mxu0
    %v8306 = vadd.f32 %v8202, %v8305
    %v8307 = vpop.f32.mrb[0].mxu0
    %8308 = vmatprep.mubr.bf16.mxu0 0
    %8309 = vmatmul.mubr.bf16.gmra.mrb[0].mxu0 %v8180
    %v8310 = vpop.f32.mrb[0].mxu0
    %v8311 = vadd.f32 %v8202, %v8310
    %v8312 = vpop.f32.mrb[0].mxu0
    %v8313 = vpop.f32.mrb[0].mxu0
    %v8314 = vadd.f32 %v8202, %v8313
    %v8315 = vpop.f32.mrb[0].mxu0
    %8316 = vdwg.mxu0
    %v8317 = vmul.f32 %v8287, 0.01
    %v8318 = vmul.f32 %v8290, 0.01
    %v8319 = vmul.f32 %v8295, 0.01
    %v8320 = vmul.f32 %v8298, 0.01
    %v8321 = vmul.f32 %v8303, 0.01
    %v8322 = vmul.f32 %v8306, 0.01
    %v8323 = vmul.f32 %v8311, 0.01
    %v8324 = vmul.f32 %v8314, 0.01
    %v8325 = vmax.f32 %v8287, %v8317
    %v8326 = vmax.f32 %v8290, %v8318
    %v8327 = vmax.f32 %v8295, %v8319
    %v8328 = vmax.f32 %v8298, %v8320
    %v8329 = vmax.f32 %v8303, %v8321
    %v8330 = vmax.f32 %v8306, %v8322
    %v8331 = vmax.f32 %v8311, %v8323
    %v8332 = vmax.f32 %v8314, %v8324
    %v8333 = vpack.c.bf16 %v8326, %v8325
    %v8334 = vpack.c.bf16 %v8328, %v8327
    %v8335 = vpack.c.bf16 %v8330, %v8329
    %v8336 = vpack.c.bf16 %v8332, %v8331
    %v8337 = vld [vmem:[#allocation15] sm:$0xf]
    %v8338 = vld [vmem:[#allocation15 + $0x4] sm:$0xf]
    %v8339 = vld [vmem:[#allocation15 + $0x8] sm:$0xf]
    %v8340 = vld [vmem:[#allocation15 + $0xc] sm:$0xf]
    %v8341 = vld [vmem:[#allocation15 + $0x10] sm:$0xf]
    %v8342 = vld [vmem:[#allocation15 + $0x14] sm:$0xf]
    %v8343 = vld [vmem:[#allocation15 + $0x18] sm:$0xf]
    %v8344 = vld [vmem:[#allocation15 + $0x1c] sm:$0xf]
    %v8345 = vld [vmem:[#allocation15 + $0x20] sm:$0xf]
    %v8346 = vld [vmem:[#allocation15 + $0x24] sm:$0xf]
    %v8347 = vld [vmem:[#allocation15 + $0x28] sm:$0xf]
    %v8348 = vld [vmem:[#allocation15 + $0x2c] sm:$0xf]
    %v8349 = vld [vmem:[#allocation15 + $0x30] sm:$0xf]
    %v8350 = vld [vmem:[#allocation15 + $0x34] sm:$0xf]
    %v8351 = vld [vmem:[#allocation15 + $0x38] sm:$0xf]
    %v8352 = vld [vmem:[#allocation15 + $0x3c] sm:$0xf]
    %v8353 = vld [vmem:[#allocation16] sm:$0x1]
    %v8355 = vlaneseq
    %v8356 = vshrl.u32 %v8355, 7
    %v8357 = vsub.s32 0, %v8356
    %v8358 = vrot.slane %v8353, %v8357
    %v8376 = vunpack.c.l.b16 %v8337
    %v8377 = vunpack.c.l.b16 %v8338
    %v8378 = vunpack.c.l.b16 %v8339
    %v8379 = vunpack.c.l.b16 %v8340
    %v8380 = vunpack.c.l.b16 %v8341
    %v8381 = vunpack.c.l.b16 %v8342
    %v8382 = vunpack.c.l.b16 %v8343
    %v8383 = vunpack.c.l.b16 %v8344
    %v8384 = vunpack.c.l.b16 %v8345
    %v8385 = vunpack.c.l.b16 %v8346
    %v8386 = vunpack.c.l.b16 %v8347
    %v8387 = vunpack.c.l.b16 %v8348
    %v8388 = vunpack.c.l.b16 %v8349
    %v8389 = vunpack.c.l.b16 %v8350
    %v8390 = vunpack.c.l.b16 %v8351
    %v8391 = vunpack.c.l.b16 %v8352
    %v8392 = vpack.c.b16 %v8377, %v8376
    %v8393 = vpack.c.b16 %v8379, %v8378
    %v8394 = vpack.c.b16 %v8381, %v8380
    %v8395 = vpack.c.b16 %v8383, %v8382
    %v8396 = vpack.c.b16 %v8385, %v8384
    %v8397 = vpack.c.b16 %v8387, %v8386
    %v8398 = vpack.c.b16 %v8389, %v8388
    %v8399 = vpack.c.b16 %v8391, %v8390
    %8408 = vmatprep.subr.bf16.mxu0 0
    %8409 = vmatpush1.bf16.msra.mxu0 %v8392
    %8410 = vmatprep.subr.bf16.mxu0 0
    %8411 = vmatpush1.bf16.msra.mxu0 %v8393
    %8412 = vmatprep.subr.bf16.mxu0 0
    %8413 = vmatpush1.bf16.msra.mxu0 %v8394
    %8414 = vmatprep.subr.bf16.mxu0 0
    %8415 = vmatpush1.bf16.msra.mxu0 %v8395
    %8416 = vmatprep.subr.bf16.mxu0 0
    %8417 = vmatpush1.bf16.msra.mxu0 %v8396
    %8418 = vmatprep.subr.bf16.mxu0 0
    %8419 = vmatpush1.bf16.msra.mxu0 %v8397
    %8420 = vmatprep.subr.bf16.mxu0 0
    %8421 = vmatpush1.bf16.msra.mxu0 %v8398
    %8422 = vmatprep.subr.bf16.mxu0 0
    %8423 = vmatpush1.bf16.msra.mxu0 %v8399
    %8424 = vmatprep.subr.bf16.mxu0 0
    %8425 = vmatpush1.bf16.msra.mxu0 0
    %8426 = vmatprep.subr.bf16.mxu0 0
    %8427 = vmatpush1.bf16.msra.mxu0 0
    %8428 = vmatprep.subr.bf16.mxu0 0
    %8429 = vmatpush1.bf16.msra.mxu0 0
    %8430 = vmatprep.subr.bf16.mxu0 0
    %8431 = vmatpush1.bf16.msra.mxu0 0
    %8432 = vmatprep.subr.bf16.mxu0 0
    %8433 = vmatpush1.bf16.msra.mxu0 0
    %8434 = vmatprep.subr.bf16.mxu0 0
    %8435 = vmatpush1.bf16.msra.mxu0 0
    %8436 = vmatprep.subr.bf16.mxu0 0
    %8437 = vmatpush1.bf16.msra.mxu0 0
    %8438 = vmatprep.subr.bf16.mxu0 0
    %8439 = vmatpush1.bf16.msra.mxu0 0
    %8440 = vmatprep.mubr.bf16.mxu0 0
    %8441 = vmatmul.mubr.bf16.gmra.mrb[0].mxu0 %v8333
    %v8442 = vpop.f32.mrb[0].mxu0
    %v8443 = vadd.f32 %v8358, %v8442
    %v8444 = vpop.f32.mrb[0].mxu0
    %v8445 = vpop.f32.mrb[0].mxu0
    %v8446 = vadd.f32 %v8358, %v8445
    %v8447 = vpop.f32.mrb[0].mxu0
    %8448 = vmatprep.mubr.bf16.mxu0 0
    %8449 = vmatmul.mubr.bf16.gmra.mrb[0].mxu0 %v8334
    %v8450 = vpop.f32.mrb[0].mxu0
    %v8451 = vadd.f32 %v8358, %v8450
    %v8452 = vpop.f32.mrb[0].mxu0
    %v8453 = vpop.f32.mrb[0].mxu0
    %v8454 = vadd.f32 %v8358, %v8453
    %v8455 = vpop.f32.mrb[0].mxu0
    %8456 = vmatprep.mubr.bf16.mxu0 0
    %8457 = vmatmul.mubr.bf16.gmra.mrb[0].mxu0 %v8335
    %v8458 = vpop.f32.mrb[0].mxu0
    %v8459 = vadd.f32 %v8358, %v8458
    %v8460 = vpop.f32.mrb[0].mxu0
    %v8461 = vpop.f32.mrb[0].mxu0
    %v8462 = vadd.f32 %v8358, %v8461
    %v8463 = vpop.f32.mrb[0].mxu0
    %8464 = vmatprep.mubr.bf16.mxu0 0
    %8465 = vmatmul.mubr.bf16.gmra.mrb[0].mxu0 %v8336
    %v8466 = vpop.f32.mrb[0].mxu0
    %v8467 = vadd.f32 %v8358, %v8466
    %v8468 = vpop.f32.mrb[0].mxu0
    %v8469 = vpop.f32.mrb[0].mxu0
    %v8470 = vadd.f32 %v8358, %v8469
    %v8471 = vpop.f32.mrb[0].mxu0
    %8472 = vdwg.mxu0
    %v8473 = vmul.f32 %v8443, %v8443
    %v8474 = vmul.f32 %v8446, %v8446
    %v8475 = vmul.f32 %v8451, %v8451
    %v8476 = vmul.f32 %v8454, %v8454
    %v8477 = vmul.f32 %v8459, %v8459
    %v8478 = vmul.f32 %v8462, %v8462
    %v8479 = vmul.f32 %v8467, %v8467
    %v8480 = vmul.f32 %v8470, %v8470
    %8481 = vadd.xlane.f32.xlu0 %v8473
    %v8482 = vpop.xlane.xlu0 %8481
    %8483 = vadd.xlane.f32.xlu0 %v8474
    %v8484 = vpop.xlane.xlu0 %8483
    %8485 = vadd.xlane.f32.xlu0 %v8475
    %v8486 = vpop.xlane.xlu0 %8485
    %8487 = vadd.xlane.f32.xlu0 %v8476
    %v8488 = vpop.xlane.xlu0 %8487
    %8489 = vadd.xlane.f32.xlu0 %v8477
    %v8490 = vpop.xlane.xlu0 %8489
    %8491 = vadd.xlane.f32.xlu0 %v8478
    %v8492 = vpop.xlane.xlu0 %8491
    %8493 = vadd.xlane.f32.xlu0 %v8479
    %v8494 = vpop.xlane.xlu0 %8493
    %8495 = vadd.xlane.f32.xlu0 %v8480
    %v8496 = vpop.xlane.xlu0 %8495
    %v8497 = vmax.f32 %v8482, 1e-24
    %v8498 = vmax.f32 %v8484, 1e-24
    %v8499 = vmax.f32 %v8486, 1e-24
    %v8500 = vmax.f32 %v8488, 1e-24
    %v8501 = vmax.f32 %v8490, 1e-24
    %v8502 = vmax.f32 %v8492, 1e-24
    %v8503 = vmax.f32 %v8494, 1e-24
    %v8504 = vmax.f32 %v8496, 1e-24
    %v8505 = vrsqrt.pop %v8497
    %v8506 = vrsqrt.pop %v8498
    %v8507 = vrsqrt.pop %v8499
    %v8508 = vrsqrt.pop %v8500
    %v8509 = vrsqrt.pop %v8501
    %v8510 = vrsqrt.pop %v8502
    %v8511 = vrsqrt.pop %v8503
    %v8512 = vrsqrt.pop %v8504
    %v8513 = vmul.f32 %v8443, %v8505
    %v8514 = vmul.f32 %v8446, %v8506
    %v8515 = vmul.f32 %v8451, %v8507
    %v8516 = vmul.f32 %v8454, %v8508
    %v8517 = vmul.f32 %v8459, %v8509
    %v8518 = vmul.f32 %v8462, %v8510
    %v8519 = vmul.f32 %v8467, %v8511
    %v8520 = vmul.f32 %v8470, %v8512
    %8521 = vst [vmem:[#allocation18] sm:$0xff] %v8513
    %8522 = vst [vmem:[#allocation18 + $0x8] sm:$0xff] %v8514
    %8523 = vst [vmem:[#allocation18 + $0x10] sm:$0xff] %v8515
    %8524 = vst [vmem:[#allocation18 + $0x18] sm:$0xff] %v8516
    %8525 = vst [vmem:[#allocation18 + $0x20] sm:$0xff] %v8517
    %8526 = vst [vmem:[#allocation18 + $0x28] sm:$0xff] %v8518
    %8527 = vst [vmem:[#allocation18 + $0x30] sm:$0xff] %v8519
    %8528 = vst [vmem:[#allocation18 + $0x38] sm:$0xff] %v8520
    // Predicated region
    $region102: #{stateful_key_orthogonalizer_sequence.1} parent=1 // pred_check
      _
    $region103: #{stateful_key_orthogonalizer_sequence.1} parent=1 // pred_check_branch
      %8530 = sbr.rel (0) target = $region105
    $region104: #{stateful_key_orthogonalizer_sequence.1} parent=1 // pred_region
      %s8532 = ssub.s32 1024, 1024
      %8533 = vsyncadd [#allocation6], %s8532
      %s8534 = sshll.u32 [#allocation18], 4
      %s8535 = int_to_ptr.vmem [resolvable:$true] %s8534
      %8540 = dma.vmem_to_hbm [thread:$0]  %s8535, 1024, %s16, [#allocation6], 128, 128, 8
    $region105: #{stateful_key_orthogonalizer_sequence.1} parent=1 // pred_fallthru
      _
    // Predicated region
    $region106: #{stateful_key_orthogonalizer_sequence.1} parent=1 // pred_check
      _
    $region107: #{stateful_key_orthogonalizer_sequence.1} parent=1 // pred_check_branch
      %8542 = sbr.rel (0) target = $region109
    $region108: #{stateful_key_orthogonalizer_sequence.1} parent=1 // pred_region
      _
    $region109: #{stateful_key_orthogonalizer_sequence.1} parent=1 // pred_fallthru
      _
    // Predicated region
    $region110: #{stateful_key_orthogonalizer_sequence.1} parent=1 // pred_check
      _
    $region111: #{stateful_key_orthogonalizer_sequence.1} parent=1 // pred_check_branch
      %8544 = sbr.rel (0) target = $region113
    $region112: #{stateful_key_orthogonalizer_sequence.1} parent=1 // pred_region
      _
    $region113: #{stateful_key_orthogonalizer_sequence.1} parent=1 // pred_fallthru
      _
    // Predicated region
    $region114: #{stateful_key_orthogonalizer_sequence.1} parent=1 // pred_check
      _
    $region115: #{stateful_key_orthogonalizer_sequence.1} parent=1 // pred_check_branch
      %8546 = sbr.rel (0) target = $region117
    $region116: #{stateful_key_orthogonalizer_sequence.1} parent=1 // pred_region
      %8547 = dma.done [#allocation6], 1024
    $region117: #{stateful_key_orthogonalizer_sequence.1} parent=1 // pred_fallthru
      _
    // Predicated region
    $region118: #{stateful_key_orthogonalizer_sequence.1} parent=1 // pred_check
      _
    $region119: #{stateful_key_orthogonalizer_sequence.1} parent=1 // pred_check_branch
      %8549 = sbr.rel (0) target = $region121
    $region120: #{stateful_key_orthogonalizer_sequence.1} parent=1 // pred_region
      _
    $region121: #{stateful_key_orthogonalizer_sequence.1} parent=1 // pred_fallthru
      _
    // Predicated region
    $region122: #{stateful_key_orthogonalizer_sequence.1} parent=1 // pred_check
      _
    $region123: #{stateful_key_orthogonalizer_sequence.1} parent=1 // pred_check_branch
      %8551 = sbr.rel (0) target = $region125
    $region124: #{stateful_key_orthogonalizer_sequence.1} parent=1 // pred_region
      _
    $region125: #{stateful_key_orthogonalizer_sequence.1} parent=1 // pred_fallthru
      _
    %8552 = vsyncpa [#allocation5], 1
    %8553 = vsyncpa [#allocation8], 1
    %8554 = vsyncpa [#allocation11], 1
    %8555 = vsyncpa [#allocation14], 1
    %8556 = vsyncpa [#allocation17], 1
    %8557 = vsyncpa [#allocation6], 1

</llo_original>
